<compile_context>
chip_gen: v5e
topology: v5e:2x2
jax: 0.10.0
libtpu: 0.0.40
codegen_flags: <defaults>
</compile_context>

<pallas_src>
import functools

import jax
import jax.numpy as jnp
from jax.experimental import pallas as pl
from jax.experimental.pallas import tpu as pltpu

HEAD_INDEX = [1, 2, 3, 4, 5, 6, 7, 8, 9, 10, 11, 12, 13, 17, 18]
_N_HEAD_REGIONS = 8


# ----------------------------- tiling helpers -----------------------------

def _flat_row_tile(M, target=512):
    """Fixed row tile over the flattened pixel axis (pad the tail)."""
    if M <= target:
        return M, M
    TM = target
    return TM, pl.cdiv(M, TM) * TM


def _choose_row_tile(N, scratch_budget=4 << 20):
    """Row tile for the correlation kernel.

    Keeps the (TM, N) f32 scratch under `scratch_budget` and prefers >= 2 row
    tiles so a second 'parallel' grid axis exists (v7x: 2 TensorCores)."""
    best = None
    for t in (1024, 512, 256, 128, 64, 32, 16, 8):
        if N % t == 0 and t * N * 4 <= scratch_budget:
            if N // t >= 2:
                return t
            if best is None:
                best = t
    return best if best is not None else N


def _corre_vmem_limit(TM, N, C):
    tile = TM * N * 4                                 # s scratch / softmax temporaries
    blocks = 2 * (TM * C * 2 + N * C * 2              # bf16 feature blocks (double-buffered)
                  + (TM + N) * 4                      # region mask blocks
                  + N * 3 * 4 + 2 * TM * 3 * 4)       # I_t block + two gen blocks
    est = 6 * tile + blocks + (1 << 20)
    return int(min(max(est, 32 << 20), 64 << 20))


# ----------------------------- Pallas kernels -----------------------------

def _feature_kernel(x_ref, fw_ref, fb_ref, pw_ref, pb_ref, o_ref, *, eps):
    # Fused: stand-in feature 1x1 conv + ReLU, phi/theta 1x1 conv, and the
    # per-pixel channel normalization of Generator.normlize (one HBM round trip).
    x = x_ref[0]                                                      # (TM, 3)
    h = jnp.dot(x, fw_ref[...], preferred_element_type=jnp.float32) + fb_ref[...]
    h = jnp.maximum(h, 0.0)
    f = jnp.dot(h, pw_ref[0], preferred_element_type=jnp.float32) + pb_ref[0]
    mu = jnp.mean(f, axis=-1, keepdims=True)
    fc = f - mu
    nrm = jnp.sqrt(jnp.sum(fc * fc, axis=-1, keepdims=True)) + eps
    o_ref[0] = (fc / nrm).astype(o_ref.dtype)


def features_pair(xa_bnc, xt_bnc, fw, fb, phi_w, phi_b, theta_w, theta_b, eps):
    """Fused feature path for both images: (B, N, 3) -> normalized bf16 features."""
    B, N, Cin = xa_bnc.shape
    Cmid, Cout = fw.shape[1], phi_w.shape[1]
    M = B * N
    xa = xa_bnc.reshape(M, Cin)
    xt = xt_bnc.reshape(M, Cin)
    TM, Mp = _flat_row_tile(M)
    if Mp != M:
        pad = ((0, Mp - M), (0, 0))
        xa = jnp.pad(xa, pad)
        xt = jnp.pad(xt, pad)
    x2 = jnp.stack([xa, xt], 0)                         # (2, Mp, Cin)
    pw = jnp.stack([phi_w, theta_w], 0)                 # (2, Cmid, Cout)
    pb = jnp.stack([phi_b, theta_b], 0)                 # (2, 1, Cout)
    out = pl.pallas_call(
        functools.partial(_feature_kernel, eps=eps),
        out_shape=jax.ShapeDtypeStruct((2, Mp, Cout), jnp.bfloat16),
        grid=(2, Mp // TM),
        in_specs=[
            pl.BlockSpec((1, TM, Cin), lambda s, i: (s, i, 0)),
            pl.BlockSpec((Cin, Cmid), lambda s, i: (0, 0)),
            pl.BlockSpec((1, Cmid), lambda s, i: (0, 0)),
            pl.BlockSpec((1, Cmid, Cout), lambda s, i: (s, 0, 0)),
            pl.BlockSpec((1, 1, Cout), lambda s, i: (s, 0, 0)),
        ],
        out_specs=pl.BlockSpec((1, TM, Cout), lambda s, i: (s, i, 0)),
        compiler_params=pltpu.CompilerParams(
            dimension_semantics=("parallel", "parallel")),
    )(x2, fw, fb, pw, pb)
    fA = out[0, :M].reshape(B, N, Cout)
    fT = out[1, :M].reshape(B, N, Cout)
    return fA, fT


def _corre_kernel(fa_ref, ft_ref, ma_ref, mt_ref, it_ref, gh_ref, gi_ref, s_ref,
                  *, inv_temp, n_head):
    # grid = (batch, row_tile, region); region innermost ("arbitrary").
    # Both gen outputs stay resident across the region axis (accumulators),
    # matching the chained `gen` of Generator.compute_corre / RCNet.
    r = pl.program_id(2)

    @pl.when(r == 0)
    def _():
        gh_ref[...] = jnp.zeros_like(gh_ref)
        gi_ref[...] = jnp.zeros_like(gi_ref)
        # Region-independent correlation: compute once per (batch, row-tile).
        a = fa_ref[0]                                  # (TM, C) bf16
        t = ft_ref[0]                                  # (N, C)  bf16
        s_ref[...] = jax.lax.dot_general(
            a, t, (((1,), (1,)), ((), ())), preferred_element_type=jnp.float32)

    ma = ma_ref[0, 0]                                  # (TM, 1) rows / scatter target
    mt = mt_ref[0, 0]                                  # (1, N)  cols / softmax support
    col_ok = mt > 0.5
    row_ok = ma > 0.5

    logits = jnp.where(col_ok, s_ref[...] * inv_temp, jnp.float32(-1e30))
    mmax = jnp.max(logits, axis=-1, keepdims=True)
    p = jnp.where(col_ok, jnp.exp(logits - mmax), 0.0)
    denom = jnp.sum(p, axis=-1, keepdims=True)
    w = p * pl.reciprocal(denom + 1e-30, approx=True)
    ref = jnp.dot(w, it_ref[0], preferred_element_type=jnp.float32)   # (TM, 3)

    @pl.when(r < n_head)
    def _():  # head regions: chained masked_scatter into gen_h
        gh_ref[0] = jnp.where(row_ok, ref, gh_ref[0])

    @pl.when(r >= n_head)
    def _():  # inpainting region: masked_scatter into gen_i
        gi_ref[0] = jnp.where(row_ok, ref, gi_ref[0])


def masked_correlation(fa_n, ft_n, ma_rbn, mt_rbn, it_bn3, temperature):
    """All 9 region correlations (8 head + 1 inpainting) in one pallas_call."""
    R, B, N = ma_rbn.shape
    C = fa_n.shape[-1]
    TM = _choose_row_tile(N)
    NM = N // TM
    ma4 = ma_rbn.reshape(R, B, N, 1)
    mt4 = mt_rbn.reshape(R, B, 1, N)
    return pl.pallas_call(
        functools.partial(_corre_kernel, inv_temp=1.0 / temperature,
                          n_head=_N_HEAD_REGIONS),
        out_shape=(jax.ShapeDtypeStruct((B, N, 3), jnp.float32),
                   jax.ShapeDtypeStruct((B, N, 3), jnp.float32)),
        grid=(B, NM, R),
        in_specs=[
            pl.BlockSpec((1, TM, C), lambda b, m, r: (b, m, 0)),
            pl.BlockSpec((1, N, C), lambda b, m, r: (b, 0, 0)),
            pl.BlockSpec((1, 1, TM, 1), lambda b, m, r: (r, b, m, 0)),
            pl.BlockSpec((1, 1, 1, N), lambda b, m, r: (r, b, 0, 0)),
            pl.BlockSpec((1, N, 3), lambda b, m, r: (b, 0, 0)),
        ],
        out_specs=(
            pl.BlockSpec((1, TM, 3), lambda b, m, r: (b, m, 0)),
            pl.BlockSpec((1, TM, 3), lambda b, m, r: (b, m, 0)),
        ),
        scratch_shapes=[pltpu.VMEM((TM, N), jnp.float32)],
        compiler_params=pltpu.CompilerParams(
            dimension_semantics=("parallel", "parallel", "arbitrary"),
            vmem_limit_bytes=_corre_vmem_limit(TM, N, C)),
    )(fa_n, ft_n, ma4, mt4, it_bn3)


def _decoder_kernel(gh_ref, gi_ref, mah_ref, gt_ref, mad_ref, mai_ref, ig_ref,
                    wgh_ref, wgi_ref, wmah_ref, witb_ref, wmai_ref, wiag_ref,
                    b_ref, o_ref):
    # Fused decoder-input assembly + 12->3 1x1 conv + tanh. The torch.cat of
    # [gen_h, gen_i, M_Ah, I_tb, M_Ai, I_ag] is realized as partial matmuls /
    # broadcast products against row-slices of the decoder weight.
    mah = mah_ref[...]                                   # (TM, 1)
    itb = gt_ref[...] * (1.0 - mad_ref[...])             # gt * (1 - M_Ad)
    iag = ig_ref[...] * mah                              # I_gray * M_Ah
    y = (jnp.dot(gh_ref[...], wgh_ref[...], preferred_element_type=jnp.float32)
         + jnp.dot(gi_ref[...], wgi_ref[...], preferred_element_type=jnp.float32)
         + jnp.dot(itb, witb_ref[...], preferred_element_type=jnp.float32)
         + mah * wmah_ref[...]
         + mai_ref[...] * wmai_ref[...]
         + iag * wiag_ref[...]
         + b_ref[...])
    o_ref[...] = jnp.tanh(y)


def decode(gen_h, gen_i, M_Ah, gt, M_Ad, M_Ai, I_gray, dec_w, dec_b):
    B, N, _ = gen_h.shape
    M = B * N
    gh = gen_h.reshape(M, 3)
    gi = gen_i.reshape(M, 3)
    mah = M_Ah.reshape(M, 1)
    mad = M_Ad.reshape(M, 1)
    mai = M_Ai.reshape(M, 1)
    gtc = jnp.transpose(gt, (0, 2, 3, 1)).reshape(M, 3)
    ig = I_gray[:, 0].reshape(M, 1)

    # Row-slices of the (12, 3) decoder weight, matching the torch.cat order
    # [gen_h(3), gen_i(3), M_Ah(1), I_tb(3), M_Ai(1), I_ag(1)].
    w_gh, w_gi, w_mah = dec_w[0:3], dec_w[3:6], dec_w[6:7]
    w_itb, w_mai, w_iag = dec_w[7:10], dec_w[10:11], dec_w[11:12]

    TM, Mp = _flat_row_tile(M)
    data = [gh, gi, mah, gtc, mad, mai, ig]
    if Mp != M:
        data = [jnp.pad(x, ((0, Mp - M), (0, 0))) for x in data]
    weights = [w_gh, w_gi, w_mah, w_itb, w_mai, w_iag, dec_b]

    in_specs = ([pl.BlockSpec((TM, x.shape[1]), lambda i: (i, 0)) for x in data]
                + [pl.BlockSpec(w.shape, lambda i: (0, 0)) for w in weights])
    out = pl.pallas_call(
        _decoder_kernel,
        out_shape=jax.ShapeDtypeStruct((Mp, 3), jnp.float32),
        grid=(Mp // TM,),
        in_specs=in_specs,
        out_specs=pl.BlockSpec((TM, 3), lambda i: (i, 0)),
        compiler_params=pltpu.CompilerParams(dimension_semantics=("parallel",)),
    )(*data, *weights)
    return out[:M].reshape(B, N, 3)


# ------------------------------- JAX glue ---------------------------------
# Mask construction is plain XLA (tiny tensors; per-batch pallas launches were
# pure overhead at these sizes).

def get_mask(m, idxs):
    out = jnp.zeros(m.shape, jnp.bool_)
    for i in idxs:
        out = out | (m == i)
    return out.astype(jnp.float32)


def get_multi_mask(m):
    return [get_mask(m, [1]), get_mask(m, [17, 18]), get_mask(m, [4, 5, 6]),
            get_mask(m, [2, 3]), get_mask(m, [7, 8, 9]), get_mask(m, [10]),
            get_mask(m, [12, 13]), get_mask(m, [11])]


def dilate3(m_bhw):
    # nn.MaxPool2d(kernel_size=3, stride=1, padding=1)
    return jax.lax.reduce_window(
        m_bhw, jnp.array(-jnp.inf, m_bhw.dtype), jax.lax.max,
        window_dimensions=(1, 3, 3), window_strides=(1, 1, 1),
        padding=((0, 0), (1, 1), (1, 1)))


def get_inpainting(m, head=None):
    mc = jnp.clip(m, 0.0, 1.0)
    md = dilate3(mc)
    mi = md - (mc if head is None else head)
    return mi, md


def init_params(f_in_channels=16, f_inter_channels=32, decoder_ic=12, decoder_oc=3):
    ks = jax.random.split(jax.random.PRNGKey(42), 4)
    w = lambda k, s: (0.1 * jax.random.normal(k, s)).astype(jnp.float32)
    return {
        "feat_w": w(ks[0], (3, f_in_channels)),
        "feat_b": jnp.zeros((1, f_in_channels), jnp.float32),
        "phi_w": w(ks[1], (f_in_channels, f_inter_channels)),
        "phi_b": jnp.zeros((1, f_inter_channels), jnp.float32),
        "theta_w": w(ks[2], (f_in_channels, f_inter_channels)),
        "theta_b": jnp.zeros((1, f_inter_channels), jnp.float32),
        "dec_w": w(ks[3], (decoder_ic, decoder_oc)),
        "dec_b": jnp.zeros((1, decoder_oc), jnp.float32),
    }


def generator_forward(params, I_a, I_gray, I_t, M_a, M_t, gt,
                      temperature=0.01, eps=1e-8):
    B, _, H, W = I_a.shape
    N = H * W
    to_bnc = lambda x: jnp.transpose(x, (0, 2, 3, 1)).reshape(B, N, x.shape[1])

    I_a_bnc = to_bnc(I_a)
    I_t_bnc = to_bnc(I_t)

    # TODO(synk): VGG19_pytorch is not defined in the reference file; stand-in
    # is a deterministic, resolution-preserving 1x1 conv + ReLU, fused with
    # self.phi / self.theta and the per-pixel normalization (bf16 outputs).
    fA_n, fT_n = features_pair(I_a_bnc, I_t_bnc, params["feat_w"], params["feat_b"],
                               params["phi_w"], params["phi_b"],
                               params["theta_w"], params["theta_b"], eps)

    # ---- RCNet mask construction (plain XLA) ----
    ma = M_a[:, 0]                                    # (B, H, W) label maps
    mt = M_t[:, 0]
    M_Ah = get_mask(ma, HEAD_INDEX)
    M_Th = get_mask(mt, HEAD_INDEX)
    M_Ti, M_Td = get_inpainting(M_Th)
    M_Ai, M_Ad = get_inpainting(M_Ah + M_Th, head=M_Ah)
    M_Ar = get_multi_mask(ma)
    M_Tr = get_multi_mask(mt)

    # ---- merged masked correlation (hot path): 8 head regions + inpainting ----
    ma_stack = jnp.stack([m.reshape(B, N) for m in M_Ar] + [M_Ai.reshape(B, N)], 0)
    mt_stack = jnp.stack([m.reshape(B, N) for m in M_Tr] + [M_Ti.reshape(B, N)], 0)
    # adaptive_avg_pool2d / nearest resize to (h, w) are identities at this resolution.
    gen_h, gen_i = masked_correlation(fA_n, fT_n, ma_stack, mt_stack, I_t_bnc,
                                      temperature)

    # ---- fused decoder-input assembly + decoder ----
    # TODO(synk): Decoder(ic=12) is not defined in the reference file; stand-in
    # is a deterministic 1x1 conv (12 -> 3) + tanh, fused with the concat.
    out_bnc = decode(gen_h, gen_i, M_Ah, gt, M_Ad, M_Ai, I_gray,
                     params["dec_w"], params["dec_b"])
    return jnp.transpose(out_bnc.reshape(B, H, W, 3), (0, 3, 1, 2))


if __name__ == "__main__":
    B, H, W = 2, 16, 16
    k1, k2, k3, k4, k5, k6 = jax.random.split(jax.random.PRNGKey(0), 6)
    I_a = jax.random.uniform(k1, (B, 3, H, W), jnp.float32)
    I_t = jax.random.uniform(k2, (B, 3, H, W), jnp.float32)
    I_gray = jax.random.uniform(k3, (B, 1, H, W), jnp.float32)
    gt = jax.random.uniform(k4, (B, 3, H, W), jnp.float32)
    M_a = jax.random.randint(k5, (B, 1, H, W), 0, 19).astype(jnp.float32)
    M_t = jax.random.randint(k6, (B, 1, H, W), 0, 19).astype(jnp.float32)

    params = init_params()
    out = jax.jit(generator_forward)(params, I_a, I_gray, I_t, M_a, M_t, gt)
    jax.block_until_ready(out)
    assert out.shape == (B, 3, H, W) and out.dtype == jnp.float32
    assert bool(jnp.all(jnp.isfinite(out)))
    print("KERNEL_OK")
</pallas_src>

<mosaic_0001>
module attributes {stable_mosaic.version = 11 : i64} {
  func.func @_feature_kernel(%arg0: i32, %arg1: i32, %arg2: memref<1x512x3xf32, #tpu.memory_space<vmem>>, %arg3: memref<3x16xf32, #tpu.memory_space<vmem>>, %arg4: memref<1x16xf32, #tpu.memory_space<vmem>>, %arg5: memref<1x16x32xf32, #tpu.memory_space<vmem>>, %arg6: memref<1x1x32xf32, #tpu.memory_space<vmem>>, %arg7: memref<1x512x32xbf16, #tpu.memory_space<vmem>>) attributes {dimension_semantics = [#tpu.dimension_semantics<parallel>, #tpu.dimension_semantics<parallel>], iteration_bounds = array<i64: 2, 1>, scalar_prefetch = 0 : i64, scratch_operands = 0 : i64, tpu.core_type = #tpu.core_type<tc>, window_params = [{transform_indices = @transform_0, window_bounds = array<i64: 1, 512, 3>}, {pipeline_mode = #tpu.pipeline_mode<synchronous>, transform_indices = @transform_1, window_bounds = array<i64: 3, 16>}, {pipeline_mode = #tpu.pipeline_mode<synchronous>, transform_indices = @transform_2, window_bounds = array<i64: 1, 16>}, {transform_indices = @transform_3, window_bounds = array<i64: 1, 16, 32>}, {transform_indices = @transform_4, window_bounds = array<i64: 1, 1, 32>}, {transform_indices = @transform_5, window_bounds = array<i64: 1, 512, 32>}]} {
    %c0 = arith.constant 0 : index
    %c0_0 = arith.constant 0 : index
    %c0_1 = arith.constant 0 : index
    %0 = vector.load %arg2[%c0, %c0_0, %c0_1] : memref<1x512x3xf32, #tpu.memory_space<vmem>>, vector<1x512x3xf32>
    %1 = vector.shape_cast %0 : vector<1x512x3xf32> to vector<512x3xf32>
    %c0_2 = arith.constant 0 : index
    %c0_3 = arith.constant 0 : index
    %2 = vector.load %arg3[%c0_2, %c0_3] : memref<3x16xf32, #tpu.memory_space<vmem>>, vector<3x16xf32>
    %cst = arith.constant dense<0.000000e+00> : vector<512x16xf32>
    %3 = tpu.matmul %1, %2, %cst {dimension_numbers = #tpu.dot_dimension_numbers<[1], [0], [0], [1], [0, 0, 1, 1], [], []>} : vector<512x3xf32>, vector<3x16xf32>, vector<512x16xf32> -> vector<512x16xf32>
    %c0_4 = arith.constant 0 : index
    %c0_5 = arith.constant 0 : index
    %4 = vector.load %arg4[%c0_4, %c0_5] : memref<1x16xf32, #tpu.memory_space<vmem>>, vector<1x16xf32>
    %5 = vector.broadcast %4 : vector<1x16xf32> to vector<512x16xf32>
    %6 = arith.addf %3, %5 : vector<512x16xf32>
    %cst_6 = arith.constant 0.000000e+00 : f32
    %7 = vector.broadcast %cst_6 : f32 to vector<512x16xf32>
    %8 = arith.maximumf %6, %7 : vector<512x16xf32>
    %c0_7 = arith.constant 0 : index
    %c0_8 = arith.constant 0 : index
    %c0_9 = arith.constant 0 : index
    %9 = vector.load %arg5[%c0_7, %c0_8, %c0_9] : memref<1x16x32xf32, #tpu.memory_space<vmem>>, vector<1x16x32xf32>
    %10 = vector.shape_cast %9 : vector<1x16x32xf32> to vector<16x32xf32>
    %cst_10 = arith.constant dense<0.000000e+00> : vector<512x32xf32>
    %11 = tpu.matmul %8, %10, %cst_10 {dimension_numbers = #tpu.dot_dimension_numbers<[1], [0], [0], [1], [0, 0, 1, 1], [], []>} : vector<512x16xf32>, vector<16x32xf32>, vector<512x32xf32> -> vector<512x32xf32>
    %c0_11 = arith.constant 0 : index
    %c0_12 = arith.constant 0 : index
    %c0_13 = arith.constant 0 : index
    %12 = vector.load %arg6[%c0_11, %c0_12, %c0_13] : memref<1x1x32xf32, #tpu.memory_space<vmem>>, vector<1x1x32xf32>
    %13 = vector.shape_cast %12 : vector<1x1x32xf32> to vector<1x32xf32>
    %14 = vector.broadcast %13 : vector<1x32xf32> to vector<512x32xf32>
    %15 = arith.addf %11, %14 : vector<512x32xf32>
    %cst_14 = arith.constant dense<0.000000e+00> : vector<512xf32>
    %16 = vector.multi_reduction <add>, %15, %cst_14 [1] : vector<512x32xf32> to vector<512xf32>
    %17 = vector.shape_cast %16 : vector<512xf32> to vector<512x1xf32>
    %cst_15 = arith.constant 3.200000e+01 : f32
    %18 = vector.broadcast %cst_15 : f32 to vector<512x1xf32>
    %19 = arith.divf %17, %18 : vector<512x1xf32>
    %20 = vector.broadcast %19 : vector<512x1xf32> to vector<512x32xf32>
    %21 = arith.subf %15, %20 : vector<512x32xf32>
    %22 = arith.mulf %21, %21 : vector<512x32xf32>
    %cst_16 = arith.constant dense<0.000000e+00> : vector<512xf32>
    %23 = vector.multi_reduction <add>, %22, %cst_16 [1] : vector<512x32xf32> to vector<512xf32>
    %24 = vector.shape_cast %23 : vector<512xf32> to vector<512x1xf32>
    %25 = math.sqrt %24 : vector<512x1xf32>
    %cst_17 = arith.constant 9.99999993E-9 : f32
    %26 = vector.broadcast %cst_17 : f32 to vector<512x1xf32>
    %27 = arith.addf %25, %26 : vector<512x1xf32>
    %28 = vector.broadcast %27 : vector<512x1xf32> to vector<512x32xf32>
    %29 = arith.divf %21, %28 : vector<512x32xf32>
    %30 = arith.truncf %29 : vector<512x32xf32> to vector<512x32xbf16>
    %c0_18 = arith.constant 0 : index
    %c0_19 = arith.constant 0 : index
    %c0_20 = arith.constant 0 : index
    %31 = vector.load %arg7[%c0_18, %c0_19, %c0_20] : memref<1x512x32xbf16, #tpu.memory_space<vmem>>, vector<1x512x32xbf16>
    %32 = vector.shape_cast %31 : vector<1x512x32xbf16> to vector<512x32xbf16>
    %33 = vector.shape_cast %30 : vector<512x32xbf16> to vector<1x512x32xbf16>
    tpu.vector_store %arg7[%c0_18, %c0_19, %c0_20], %33 {strides = array<i32>} : memref<1x512x32xbf16, #tpu.memory_space<vmem>>, vector<1x512x32xbf16>,
    return
  }
  func.func @transform_0(%arg0: i32, %arg1: i32) -> (i32, i32, i32) {
    %c0_i32 = arith.constant 0 : i32
    %c0_i32_0 = arith.constant 0 : i32
    return %arg0, %arg1, %c0_i32 : i32, i32, i32
  }
  func.func @transform_1(%arg0: i32, %arg1: i32) -> (i32, i32) {
    %c0_i32 = arith.constant 0 : i32
    %c0_i32_0 = arith.constant 0 : i32
    %c0_i32_1 = arith.constant 0 : i32
    return %c0_i32, %c0_i32_0 : i32, i32
  }
  func.func @transform_2(%arg0: i32, %arg1: i32) -> (i32, i32) {
    %c0_i32 = arith.constant 0 : i32
    %c0_i32_0 = arith.constant 0 : i32
    %c0_i32_1 = arith.constant 0 : i32
    return %c0_i32, %c0_i32_0 : i32, i32
  }
  func.func @transform_3(%arg0: i32, %arg1: i32) -> (i32, i32, i32) {
    %c0_i32 = arith.constant 0 : i32
    %c0_i32_0 = arith.constant 0 : i32
    %c0_i32_1 = arith.constant 0 : i32
    return %arg0, %c0_i32, %c0_i32_0 : i32, i32, i32
  }
  func.func @transform_4(%arg0: i32, %arg1: i32) -> (i32, i32, i32) {
    %c0_i32 = arith.constant 0 : i32
    %c0_i32_0 = arith.constant 0 : i32
    %c0_i32_1 = arith.constant 0 : i32
    return %arg0, %c0_i32, %c0_i32_0 : i32, i32, i32
  }
  func.func @transform_5(%arg0: i32, %arg1: i32) -> (i32, i32, i32) {
    %c0_i32 = arith.constant 0 : i32
    %c0_i32_0 = arith.constant 0 : i32
    return %arg0, %arg1, %c0_i32 : i32, i32, i32
  }
}

module attributes {stable_mosaic.version = 11 : i64} {
  func.func @_corre_kernel(%arg0: i32, %arg1: i32, %arg2: i32, %arg3: memref<1x128x32xbf16, #tpu.memory_space<vmem>>, %arg4: memref<1x256x32xbf16, #tpu.memory_space<vmem>>, %arg5: memref<1x1x128x1xf32, #tpu.memory_space<vmem>>, %arg6: memref<1x1x1x256xf32, #tpu.memory_space<vmem>>, %arg7: memref<1x256x3xf32, #tpu.memory_space<vmem>>, %arg8: memref<1x128x3xf32, #tpu.memory_space<vmem>>, %arg9: memref<1x128x3xf32, #tpu.memory_space<vmem>>, %arg10: memref<128x256xf32, #tpu.memory_space<vmem>>) attributes {dimension_semantics = [#tpu.dimension_semantics<parallel>, #tpu.dimension_semantics<parallel>, #tpu.dimension_semantics<arbitrary>], iteration_bounds = array<i64: 2, 2, 9>, scalar_prefetch = 0 : i64, scratch_operands = 1 : i64, tpu.core_type = #tpu.core_type<tc>, window_params = [{transform_indices = @transform_0, window_bounds = array<i64: 1, 128, 32>}, {transform_indices = @transform_1, window_bounds = array<i64: 1, 256, 32>}, {transform_indices = @transform_2, window_bounds = array<i64: 1, 1, 128, 1>}, {transform_indices = @transform_3, window_bounds = array<i64: 1, 1, 1, 256>}, {transform_indices = @transform_4, window_bounds = array<i64: 1, 256, 3>}, {transform_indices = @transform_5, window_bounds = array<i64: 1, 128, 3>}, {transform_indices = @transform_6, window_bounds = array<i64: 1, 128, 3>}]} {
    %c0_i32 = arith.constant 0 : i32
    %0 = arith.cmpi eq, %arg2, %c0_i32 : i32
    %1 = arith.extui %0 : i1 to i32
    %c0_i32_0 = arith.constant 0 : i32
    %2 = arith.cmpi ne, %1, %c0_i32_0 : i32
    scf.if %2 {
      %cst_24 = arith.constant 0.000000e+00 : f32
      %43 = vector.broadcast %cst_24 : f32 to vector<1x128x3xf32>
      %c0_25 = arith.constant 0 : index
      %c0_26 = arith.constant 0 : index
      %c0_27 = arith.constant 0 : index
      %44 = vector.load %arg8[%c0_25, %c0_26, %c0_27] : memref<1x128x3xf32, #tpu.memory_space<vmem>>, vector<1x128x3xf32>
      tpu.vector_store %arg8[%c0_25, %c0_26, %c0_27], %43 {strides = array<i32>} : memref<1x128x3xf32, #tpu.memory_space<vmem>>, vector<1x128x3xf32>,
      %cst_28 = arith.constant 0.000000e+00 : f32
      %45 = vector.broadcast %cst_28 : f32 to vector<1x128x3xf32>
      %c0_29 = arith.constant 0 : index
      %c0_30 = arith.constant 0 : index
      %c0_31 = arith.constant 0 : index
      %46 = vector.load %arg9[%c0_29, %c0_30, %c0_31] : memref<1x128x3xf32, #tpu.memory_space<vmem>>, vector<1x128x3xf32>
      tpu.vector_store %arg9[%c0_29, %c0_30, %c0_31], %45 {strides = array<i32>} : memref<1x128x3xf32, #tpu.memory_space<vmem>>, vector<1x128x3xf32>,
      %c0_32 = arith.constant 0 : index
      %c0_33 = arith.constant 0 : index
      %c0_34 = arith.constant 0 : index
      %47 = vector.load %arg3[%c0_32, %c0_33, %c0_34] : memref<1x128x32xbf16, #tpu.memory_space<vmem>>, vector<1x128x32xbf16>
      %48 = vector.shape_cast %47 : vector<1x128x32xbf16> to vector<128x32xbf16>
      %c0_35 = arith.constant 0 : index
      %c0_36 = arith.constant 0 : index
      %c0_37 = arith.constant 0 : index
      %49 = vector.load %arg4[%c0_35, %c0_36, %c0_37] : memref<1x256x32xbf16, #tpu.memory_space<vmem>>, vector<1x256x32xbf16>
      %50 = vector.shape_cast %49 : vector<1x256x32xbf16> to vector<256x32xbf16>
      %cst_38 = arith.constant dense<0.000000e+00> : vector<128x256xf32>
      %51 = tpu.matmul %48, %50, %cst_38 {dimension_numbers = #tpu.dot_dimension_numbers<[1], [1], [0], [0], [0, 0, 1, 0], [], []>} : vector<128x32xbf16>, vector<256x32xbf16>, vector<128x256xf32> -> vector<128x256xf32>
      %c0_39 = arith.constant 0 : index
      %c0_40 = arith.constant 0 : index
      %52 = vector.load %arg10[%c0_39, %c0_40] : memref<128x256xf32, #tpu.memory_space<vmem>>, vector<128x256xf32>
      tpu.vector_store %arg10[%c0_39, %c0_40], %51 {strides = array<i32>} : memref<128x256xf32, #tpu.memory_space<vmem>>, vector<128x256xf32>,
    } else {
    }
    %c0 = arith.constant 0 : index
    %c0_1 = arith.constant 0 : index
    %c0_2 = arith.constant 0 : index
    %c0_3 = arith.constant 0 : index
    %3 = vector.load %arg5[%c0, %c0_1, %c0_2, %c0_3] : memref<1x1x128x1xf32, #tpu.memory_space<vmem>>, vector<1x1x128x1xf32>
    %4 = vector.shape_cast %3 : vector<1x1x128x1xf32> to vector<128x1xf32>
    %c0_4 = arith.constant 0 : index
    %c0_5 = arith.constant 0 : index
    %c0_6 = arith.constant 0 : index
    %c0_7 = arith.constant 0 : index
    %5 = vector.load %arg6[%c0_4, %c0_5, %c0_6, %c0_7] : memref<1x1x1x256xf32, #tpu.memory_space<vmem>>, vector<1x1x1x256xf32>
    %6 = vector.shape_cast %5 : vector<1x1x1x256xf32> to vector<1x256xf32>
    %cst = arith.constant 5.000000e-01 : f32
    %7 = vector.broadcast %cst : f32 to vector<1x256xf32>
    %8 = arith.cmpf ogt, %6, %7 : vector<1x256xf32>
    %cst_8 = arith.constant 5.000000e-01 : f32
    %9 = vector.broadcast %cst_8 : f32 to vector<128x1xf32>
    %10 = arith.cmpf ogt, %4, %9 : vector<128x1xf32>
    %c0_9 = arith.constant 0 : index
    %c0_10 = arith.constant 0 : index
    %11 = vector.load %arg10[%c0_9, %c0_10] : memref<128x256xf32, #tpu.memory_space<vmem>>, vector<128x256xf32>
    %cst_11 = arith.constant 1.000000e+02 : f32
    %12 = vector.broadcast %cst_11 : f32 to vector<128x256xf32>
    %13 = arith.mulf %11, %12 : vector<128x256xf32>
    %cst_12 = arith.constant -1.000000e+30 : f32
    %14 = vector.shape_cast %8 : vector<1x256xi1> to vector<1x256xi1>
    %15 = vector.broadcast %14 : vector<1x256xi1> to vector<128x256xi1>
    %16 = vector.broadcast %cst_12 : f32 to vector<128x256xf32>
    %17 = arith.select %15, %13, %16 : vector<128x256xi1>, vector<128x256xf32>
    %cst_13 = arith.constant dense<0xFF800000> : vector<128xf32>
    %18 = vector.multi_reduction <maximumf>, %17, %cst_13 [1] : vector<128x256xf32> to vector<128xf32>
    %19 = vector.shape_cast %18 : vector<128xf32> to vector<128x1xf32>
    %20 = vector.broadcast %19 : vector<128x1xf32> to vector<128x256xf32>
    %21 = arith.subf %17, %20 : vector<128x256xf32>
    %22 = math.exp %21 : vector<128x256xf32>
    %cst_14 = arith.constant 0.000000e+00 : f32
    %23 = vector.shape_cast %8 : vector<1x256xi1> to vector<1x256xi1>
    %24 = vector.broadcast %23 : vector<1x256xi1> to vector<128x256xi1>
    %25 = vector.broadcast %cst_14 : f32 to vector<128x256xf32>
    %26 = arith.select %24, %22, %25 : vector<128x256xi1>, vector<128x256xf32>
    %cst_15 = arith.constant dense<0.000000e+00> : vector<128xf32>
    %27 = vector.multi_reduction <add>, %26, %cst_15 [1] : vector<128x256xf32> to vector<128xf32>
    %28 = vector.shape_cast %27 : vector<128xf32> to vector<128x1xf32>
    %cst_16 = arith.constant 1.000000e-30 : f32
    %29 = vector.broadcast %cst_16 : f32 to vector<128x1xf32>
    %30 = arith.addf %28, %29 : vector<128x1xf32>
    %31 = tpu.reciprocal %30 {approx = true} : vector<128x1xf32> -> vector<128x1xf32>
    %32 = vector.broadcast %31 : vector<128x1xf32> to vector<128x256xf32>
    %33 = arith.mulf %26, %32 : vector<128x256xf32>
    %c0_17 = arith.constant 0 : index
    %c0_18 = arith.constant 0 : index
    %c0_19 = arith.constant 0 : index
    %34 = vector.load %arg7[%c0_17, %c0_18, %c0_19] : memref<1x256x3xf32, #tpu.memory_space<vmem>>, vector<1x256x3xf32>
    %35 = vector.shape_cast %34 : vector<1x256x3xf32> to vector<256x3xf32>
    %cst_20 = arith.constant dense<0.000000e+00> : vector<128x3xf32>
    %36 = tpu.matmul %33, %35, %cst_20 {dimension_numbers = #tpu.dot_dimension_numbers<[1], [0], [0], [1], [0, 0, 1, 1], [], []>} : vector<128x256xf32>, vector<256x3xf32>, vector<128x3xf32> -> vector<128x3xf32>
    %c8_i32 = arith.constant 8 : i32
    %37 = arith.cmpi slt, %arg2, %c8_i32 : i32
    %38 = arith.extui %37 : i1 to i32
    %c0_i32_21 = arith.constant 0 : i32
    %39 = arith.cmpi ne, %38, %c0_i32_21 : i32
    scf.if %39 {
      %c0_24 = arith.constant 0 : index
      %c0_25 = arith.constant 0 : index
      %c0_26 = arith.constant 0 : index
      %43 = vector.load %arg8[%c0_24, %c0_25, %c0_26] : memref<1x128x3xf32, #tpu.memory_space<vmem>>, vector<1x128x3xf32>
      %44 = vector.shape_cast %43 : vector<1x128x3xf32> to vector<128x3xf32>
      %45 = vector.shape_cast %10 : vector<128x1xi1> to vector<128x1xi1>
      %46 = vector.broadcast %45 : vector<128x1xi1> to vector<128x3xi1>
      %47 = arith.select %46, %36, %44 : vector<128x3xi1>, vector<128x3xf32>
      %c0_27 = arith.constant 0 : index
      %c0_28 = arith.constant 0 : index
      %c0_29 = arith.constant 0 : index
      %48 = vector.load %arg8[%c0_27, %c0_28, %c0_29] : memref<1x128x3xf32, #tpu.memory_space<vmem>>, vector<1x128x3xf32>
      %49 = vector.shape_cast %48 : vector<1x128x3xf32> to vector<128x3xf32>
      %50 = vector.shape_cast %47 : vector<128x3xf32> to vector<1x128x3xf32>
      tpu.vector_store %arg8[%c0_27, %c0_28, %c0_29], %50 {strides = array<i32>} : memref<1x128x3xf32, #tpu.memory_space<vmem>>, vector<1x128x3xf32>,
    } else {
    }
    %c8_i32_22 = arith.constant 8 : i32
    %40 = arith.cmpi sge, %arg2, %c8_i32_22 : i32
    %41 = arith.extui %40 : i1 to i32
    %c0_i32_23 = arith.constant 0 : i32
    %42 = arith.cmpi ne, %41, %c0_i32_23 : i32
    scf.if %42 {
      %c0_24 = arith.constant 0 : index
      %c0_25 = arith.constant 0 : index
      %c0_26 = arith.constant 0 : index
      %43 = vector.load %arg9[%c0_24, %c0_25, %c0_26] : memref<1x128x3xf32, #tpu.memory_space<vmem>>, vector<1x128x3xf32>
      %44 = vector.shape_cast %43 : vector<1x128x3xf32> to vector<128x3xf32>
      %45 = vector.shape_cast %10 : vector<128x1xi1> to vector<128x1xi1>
      %46 = vector.broadcast %45 : vector<128x1xi1> to vector<128x3xi1>
      %47 = arith.select %46, %36, %44 : vector<128x3xi1>, vector<128x3xf32>
      %c0_27 = arith.constant 0 : index
      %c0_28 = arith.constant 0 : index
      %c0_29 = arith.constant 0 : index
      %48 = vector.load %arg9[%c0_27, %c0_28, %c0_29] : memref<1x128x3xf32, #tpu.memory_space<vmem>>, vector<1x128x3xf32>
      %49 = vector.shape_cast %48 : vector<1x128x3xf32> to vector<128x3xf32>
      %50 = vector.shape_cast %47 : vector<128x3xf32> to vector<1x128x3xf32>
      tpu.vector_store %arg9[%c0_27, %c0_28, %c0_29], %50 {strides = array<i32>} : memref<1x128x3xf32, #tpu.memory_space<vmem>>, vector<1x128x3xf32>,
    } else {
    }
    return
  }
  func.func @transform_0(%arg0: i32, %arg1: i32, %arg2: i32) -> (i32, i32, i32) {
    %c0_i32 = arith.constant 0 : i32
    %c0_i32_0 = arith.constant 0 : i32
    return %arg0, %arg1, %c0_i32 : i32, i32, i32
  }
  func.func @transform_1(%arg0: i32, %arg1: i32, %arg2: i32) -> (i32, i32, i32) {
    %c0_i32 = arith.constant 0 : i32
    %c0_i32_0 = arith.constant 0 : i32
    %c0_i32_1 = arith.constant 0 : i32
    return %arg0, %c0_i32, %c0_i32_0 : i32, i32, i32
  }
  func.func @transform_2(%arg0: i32, %arg1: i32, %arg2: i32) -> (i32, i32, i32, i32) {
    %c0_i32 = arith.constant 0 : i32
    %c0_i32_0 = arith.constant 0 : i32
    return %arg2, %arg0, %arg1, %c0_i32 : i32, i32, i32, i32
  }
  func.func @transform_3(%arg0: i32, %arg1: i32, %arg2: i32) -> (i32, i32, i32, i32) {
    %c0_i32 = arith.constant 0 : i32
    %c0_i32_0 = arith.constant 0 : i32
    %c0_i32_1 = arith.constant 0 : i32
    return %arg2, %arg0, %c0_i32, %c0_i32_0 : i32, i32, i32, i32
  }
  func.func @transform_4(%arg0: i32, %arg1: i32, %arg2: i32) -> (i32, i32, i32) {
    %c0_i32 = arith.constant 0 : i32
    %c0_i32_0 = arith.constant 0 : i32
    %c0_i32_1 = arith.constant 0 : i32
    return %arg0, %c0_i32, %c0_i32_0 : i32, i32, i32
  }
  func.func @transform_5(%arg0: i32, %arg1: i32, %arg2: i32) -> (i32, i32, i32) {
    %c0_i32 = arith.constant 0 : i32
    %c0_i32_0 = arith.constant 0 : i32
    return %arg0, %arg1, %c0_i32 : i32, i32, i32
  }
  func.func @transform_6(%arg0: i32, %arg1: i32, %arg2: i32) -> (i32, i32, i32) {
    %c0_i32 = arith.constant 0 : i32
    %c0_i32_0 = arith.constant 0 : i32
    return %arg0, %arg1, %c0_i32 : i32, i32, i32
  }
}

module attributes {stable_mosaic.version = 11 : i64} {
  func.func @_decoder_kernel(%arg0: i32, %arg1: memref<512x3xf32, #tpu.memory_space<vmem>>, %arg2: memref<512x3xf32, #tpu.memory_space<vmem>>, %arg3: memref<512x1xf32, #tpu.memory_space<vmem>>, %arg4: memref<512x3xf32, #tpu.memory_space<vmem>>, %arg5: memref<512x1xf32, #tpu.memory_space<vmem>>, %arg6: memref<512x1xf32, #tpu.memory_space<vmem>>, %arg7: memref<512x1xf32, #tpu.memory_space<vmem>>, %arg8: memref<3x3xf32, #tpu.memory_space<vmem>>, %arg9: memref<3x3xf32, #tpu.memory_space<vmem>>, %arg10: memref<1x3xf32, #tpu.memory_space<vmem>>, %arg11: memref<3x3xf32, #tpu.memory_space<vmem>>, %arg12: memref<1x3xf32, #tpu.memory_space<vmem>>, %arg13: memref<1x3xf32, #tpu.memory_space<vmem>>, %arg14: memref<1x3xf32, #tpu.memory_space<vmem>>, %arg15: memref<512x3xf32, #tpu.memory_space<vmem>>) attributes {dimension_semantics = [#tpu.dimension_semantics<parallel>], iteration_bounds = array<i64: 1>, scalar_prefetch = 0 : i64, scratch_operands = 0 : i64, tpu.core_type = #tpu.core_type<tc>, window_params = [{transform_indices = @transform_0, window_bounds = array<i64: 512, 3>}, {transform_indices = @transform_1, window_bounds = array<i64: 512, 3>}, {transform_indices = @transform_2, window_bounds = array<i64: 512, 1>}, {transform_indices = @transform_3, window_bounds = array<i64: 512, 3>}, {transform_indices = @transform_4, window_bounds = array<i64: 512, 1>}, {transform_indices = @transform_5, window_bounds = array<i64: 512, 1>}, {transform_indices = @transform_6, window_bounds = array<i64: 512, 1>}, {pipeline_mode = #tpu.pipeline_mode<synchronous>, transform_indices = @transform_7, window_bounds = array<i64: 3, 3>}, {pipeline_mode = #tpu.pipeline_mode<synchronous>, transform_indices = @transform_8, window_bounds = array<i64: 3, 3>}, {pipeline_mode = #tpu.pipeline_mode<synchronous>, transform_indices = @transform_9, window_bounds = array<i64: 1, 3>}, {pipeline_mode = #tpu.pipeline_mode<synchronous>, transform_indices = @transform_10, window_bounds = array<i64: 3, 3>}, {pipeline_mode = #tpu.pipeline_mode<synchronous>, transform_indices = @transform_11, window_bounds = array<i64: 1, 3>}, {pipeline_mode = #tpu.pipeline_mode<synchronous>, transform_indices = @transform_12, window_bounds = array<i64: 1, 3>}, {pipeline_mode = #tpu.pipeline_mode<synchronous>, transform_indices = @transform_13, window_bounds = array<i64: 1, 3>}, {transform_indices = @transform_14, window_bounds = array<i64: 512, 3>}]} {
    %c0 = arith.constant 0 : index
    %c0_0 = arith.constant 0 : index
    %0 = vector.load %arg3[%c0, %c0_0] : memref<512x1xf32, #tpu.memory_space<vmem>>, vector<512x1xf32>
    %c0_1 = arith.constant 0 : index
    %c0_2 = arith.constant 0 : index
    %1 = vector.load %arg4[%c0_1, %c0_2] : memref<512x3xf32, #tpu.memory_space<vmem>>, vector<512x3xf32>
    %c0_3 = arith.constant 0 : index
    %c0_4 = arith.constant 0 : index
    %2 = vector.load %arg5[%c0_3, %c0_4] : memref<512x1xf32, #tpu.memory_space<vmem>>, vector<512x1xf32>
    %cst = arith.constant 1.000000e+00 : f32
    %3 = vector.broadcast %cst : f32 to vector<512x1xf32>
    %4 = arith.subf %3, %2 : vector<512x1xf32>
    %5 = vector.broadcast %4 : vector<512x1xf32> to vector<512x3xf32>
    %6 = arith.mulf %1, %5 : vector<512x3xf32>
    %c0_5 = arith.constant 0 : index
    %c0_6 = arith.constant 0 : index
    %7 = vector.load %arg7[%c0_5, %c0_6] : memref<512x1xf32, #tpu.memory_space<vmem>>, vector<512x1xf32>
    %8 = arith.mulf %7, %0 : vector<512x1xf32>
    %c0_7 = arith.constant 0 : index
    %c0_8 = arith.constant 0 : index
    %9 = vector.load %arg1[%c0_7, %c0_8] : memref<512x3xf32, #tpu.memory_space<vmem>>, vector<512x3xf32>
    %c0_9 = arith.constant 0 : index
    %c0_10 = arith.constant 0 : index
    %10 = vector.load %arg8[%c0_9, %c0_10] : memref<3x3xf32, #tpu.memory_space<vmem>>, vector<3x3xf32>
    %cst_11 = arith.constant dense<0.000000e+00> : vector<512x3xf32>
    %11 = tpu.matmul %9, %10, %cst_11 {dimension_numbers = #tpu.dot_dimension_numbers<[1], [0], [0], [1], [0, 0, 1, 1], [], []>} : vector<512x3xf32>, vector<3x3xf32>, vector<512x3xf32> -> vector<512x3xf32>
    %c0_12 = arith.constant 0 : index
    %c0_13 = arith.constant 0 : index
    %12 = vector.load %arg2[%c0_12, %c0_13] : memref<512x3xf32, #tpu.memory_space<vmem>>, vector<512x3xf32>
    %c0_14 = arith.constant 0 : index
    %c0_15 = arith.constant 0 : index
    %13 = vector.load %arg9[%c0_14, %c0_15] : memref<3x3xf32, #tpu.memory_space<vmem>>, vector<3x3xf32>
    %cst_16 = arith.constant dense<0.000000e+00> : vector<512x3xf32>
    %14 = tpu.matmul %12, %13, %cst_16 {dimension_numbers = #tpu.dot_dimension_numbers<[1], [0], [0], [1], [0, 0, 1, 1], [], []>} : vector<512x3xf32>, vector<3x3xf32>, vector<512x3xf32> -> vector<512x3xf32>
    %15 = arith.addf %11, %14 : vector<512x3xf32>
    %c0_17 = arith.constant 0 : index
    %c0_18 = arith.constant 0 : index
    %16 = vector.load %arg11[%c0_17, %c0_18] : memref<3x3xf32, #tpu.memory_space<vmem>>, vector<3x3xf32>
    %cst_19 = arith.constant dense<0.000000e+00> : vector<512x3xf32>
    %17 = tpu.matmul %6, %16, %cst_19 {dimension_numbers = #tpu.dot_dimension_numbers<[1], [0], [0], [1], [0, 0, 1, 1], [], []>} : vector<512x3xf32>, vector<3x3xf32>, vector<512x3xf32> -> vector<512x3xf32>
    %18 = arith.addf %15, %17 : vector<512x3xf32>
    %c0_20 = arith.constant 0 : index
    %c0_21 = arith.constant 0 : index
    %19 = vector.load %arg10[%c0_20, %c0_21] : memref<1x3xf32, #tpu.memory_space<vmem>>, vector<1x3xf32>
    %20 = vector.broadcast %0 : vector<512x1xf32> to vector<512x3xf32>
    %21 = vector.broadcast %19 : vector<1x3xf32> to vector<512x3xf32>
    %22 = arith.mulf %20, %21 : vector<512x3xf32>
    %23 = arith.addf %18, %22 : vector<512x3xf32>
    %c0_22 = arith.constant 0 : index
    %c0_23 = arith.constant 0 : index
    %24 = vector.load %arg6[%c0_22, %c0_23] : memref<512x1xf32, #tpu.memory_space<vmem>>, vector<512x1xf32>
    %c0_24 = arith.constant 0 : index
    %c0_25 = arith.constant 0 : index
    %25 = vector.load %arg12[%c0_24, %c0_25] : memref<1x3xf32, #tpu.memory_space<vmem>>, vector<1x3xf32>
    %26 = vector.broadcast %24 : vector<512x1xf32> to vector<512x3xf32>
    %27 = vector.broadcast %25 : vector<1x3xf32> to vector<512x3xf32>
    %28 = arith.mulf %26, %27 : vector<512x3xf32>
    %29 = arith.addf %23, %28 : vector<512x3xf32>
    %c0_26 = arith.constant 0 : index
    %c0_27 = arith.constant 0 : index
    %30 = vector.load %arg13[%c0_26, %c0_27] : memref<1x3xf32, #tpu.memory_space<vmem>>, vector<1x3xf32>
    %31 = vector.broadcast %8 : vector<512x1xf32> to vector<512x3xf32>
    %32 = vector.broadcast %30 : vector<1x3xf32> to vector<512x3xf32>
    %33 = arith.mulf %31, %32 : vector<512x3xf32>
    %34 = arith.addf %29, %33 : vector<512x3xf32>
    %c0_28 = arith.constant 0 : index
    %c0_29 = arith.constant 0 : index
    %35 = vector.load %arg14[%c0_28, %c0_29] : memref<1x3xf32, #tpu.memory_space<vmem>>, vector<1x3xf32>
    %36 = vector.broadcast %35 : vector<1x3xf32> to vector<512x3xf32>
    %37 = arith.addf %34, %36 : vector<512x3xf32>
    %38 = math.tanh %37 : vector<512x3xf32>
    %c0_30 = arith.constant 0 : index
    %c0_31 = arith.constant 0 : index
    %39 = vector.load %arg15[%c0_30, %c0_31] : memref<512x3xf32, #tpu.memory_space<vmem>>, vector<512x3xf32>
    tpu.vector_store %arg15[%c0_30, %c0_31], %38 {strides = array<i32>} : memref<512x3xf32, #tpu.memory_space<vmem>>, vector<512x3xf32>,
    return
  }
  func.func @transform_0(%arg0: i32) -> (i32, i32) {
    %c0_i32 = arith.constant 0 : i32
    %c0_i32_0 = arith.constant 0 : i32
    return %arg0, %c0_i32 : i32, i32
  }
  func.func @transform_1(%arg0: i32) -> (i32, i32) {
    %c0_i32 = arith.constant 0 : i32
    %c0_i32_0 = arith.constant 0 : i32
    return %arg0, %c0_i32 : i32, i32
  }
  func.func @transform_2(%arg0: i32) -> (i32, i32) {
    %c0_i32 = arith.constant 0 : i32
    %c0_i32_0 = arith.constant 0 : i32
    return %arg0, %c0_i32 : i32, i32
  }
  func.func @transform_3(%arg0: i32) -> (i32, i32) {
    %c0_i32 = arith.constant 0 : i32
    %c0_i32_0 = arith.constant 0 : i32
    return %arg0, %c0_i32 : i32, i32
  }
  func.func @transform_4(%arg0: i32) -> (i32, i32) {
    %c0_i32 = arith.constant 0 : i32
    %c0_i32_0 = arith.constant 0 : i32
    return %arg0, %c0_i32 : i32, i32
  }
  func.func @transform_5(%arg0: i32) -> (i32, i32) {
    %c0_i32 = arith.constant 0 : i32
    %c0_i32_0 = arith.constant 0 : i32
    return %arg0, %c0_i32 : i32, i32
  }
  func.func @transform_6(%arg0: i32) -> (i32, i32) {
    %c0_i32 = arith.constant 0 : i32
    %c0_i32_0 = arith.constant 0 : i32
    return %arg0, %c0_i32 : i32, i32
  }
  func.func @transform_7(%arg0: i32) -> (i32, i32) {
    %c0_i32 = arith.constant 0 : i32
    %c0_i32_0 = arith.constant 0 : i32
    %c0_i32_1 = arith.constant 0 : i32
    return %c0_i32, %c0_i32_0 : i32, i32
  }
  func.func @transform_8(%arg0: i32) -> (i32, i32) {
    %c0_i32 = arith.constant 0 : i32
    %c0_i32_0 = arith.constant 0 : i32
    %c0_i32_1 = arith.constant 0 : i32
    return %c0_i32, %c0_i32_0 : i32, i32
  }
  func.func @transform_9(%arg0: i32) -> (i32, i32) {
    %c0_i32 = arith.constant 0 : i32
    %c0_i32_0 = arith.constant 0 : i32
    %c0_i32_1 = arith.constant 0 : i32
    return %c0_i32, %c0_i32_0 : i32, i32
  }
  func.func @transform_10(%arg0: i32) -> (i32, i32) {
    %c0_i32 = arith.constant 0 : i32
    %c0_i32_0 = arith.constant 0 : i32
    %c0_i32_1 = arith.constant 0 : i32
    return %c0_i32, %c0_i32_0 : i32, i32
  }
  func.func @transform_11(%arg0: i32) -> (i32, i32) {
    %c0_i32 = arith.constant 0 : i32
    %c0_i32_0 = arith.constant 0 : i32
    %c0_i32_1 = arith.constant 0 : i32
    return %c0_i32, %c0_i32_0 : i32, i32
  }
  func.func @transform_12(%arg0: i32) -> (i32, i32) {
    %c0_i32 = arith.constant 0 : i32
    %c0_i32_0 = arith.constant 0 : i32
    %c0_i32_1 = arith.constant 0 : i32
    return %c0_i32, %c0_i32_0 : i32, i32
  }
  func.func @transform_13(%arg0: i32) -> (i32, i32) {
    %c0_i32 = arith.constant 0 : i32
    %c0_i32_0 = arith.constant 0 : i32
    %c0_i32_1 = arith.constant 0 : i32
    return %c0_i32, %c0_i32_0 : i32, i32
  }
  func.func @transform_14(%arg0: i32) -> (i32, i32) {
    %c0_i32 = arith.constant 0 : i32
    %c0_i32_0 = arith.constant 0 : i32
    return %arg0, %c0_i32 : i32, i32
  }
}

</mosaic_0001>

<llo_original>
// kernel: sub.4
$region0: #{sub.4}
  #allocation0 [shape = 's32[1]{0}', space=sflag, size = 0x4, scoped, tag = 'scoped memory for sub.4']
  %s0 = inlined_call_operand.vmem [shape: f32[512,1], index: 0, kind: input, shape index: {}]
  %s1 = inlined_call_operand.vmem [shape: f32[512,1], index: 1, kind: input, shape index: {}]
  %s2 = inlined_call_operand.vmem [shape: f32[512,1], index: 2, kind: output, shape index: {}]
  %v3 = vld [vmem:[%s0] sm:$0x1]
  %v4 = vld [vmem:[%s1] sm:$0x1]
  %5 = xla_tuple %v3, %v4
  %6 = xla_tuple %5
  %v7 = vsub.f32 %v3, %v4
  %8 = xla_tuple %v7
  %9 = vst [vmem:[%s2] sm:$0x1] %v7
  %s10 = scalar_lea.vmem %s0, 1
  %v11 = vld [vmem:[%s10] sm:$0x1]
  %s12 = scalar_lea.vmem %s1, 1
  %v13 = vld [vmem:[%s12] sm:$0x1]
  %14 = xla_tuple %v11, %v13
  %15 = xla_tuple %14
  %v16 = vsub.f32 %v11, %v13
  %17 = xla_tuple %v16
  %s18 = scalar_lea.vmem %s2, 1
  %19 = vst [vmem:[%s18] sm:$0x1] %v16
  %s20 = scalar_lea.vmem %s0, 2
  %v21 = vld [vmem:[%s20] sm:$0x1]
  %s22 = scalar_lea.vmem %s1, 2
  %v23 = vld [vmem:[%s22] sm:$0x1]
  %24 = xla_tuple %v21, %v23
  %25 = xla_tuple %24
  %v26 = vsub.f32 %v21, %v23
  %27 = xla_tuple %v26
  %s28 = scalar_lea.vmem %s2, 2
  %29 = vst [vmem:[%s28] sm:$0x1] %v26
  %s30 = scalar_lea.vmem %s0, 3
  %v31 = vld [vmem:[%s30] sm:$0x1]
  %s32 = scalar_lea.vmem %s1, 3
  %v33 = vld [vmem:[%s32] sm:$0x1]
  %34 = xla_tuple %v31, %v33
  %35 = xla_tuple %34
  %v36 = vsub.f32 %v31, %v33
  %37 = xla_tuple %v36
  %s38 = scalar_lea.vmem %s2, 3
  %39 = vst [vmem:[%s38] sm:$0x1] %v36

// kernel: squeeze.0
$region0: #{squeeze.0}
  %s0 = inlined_call_operand.vmem [shape: f32[2,1,16,16], index: 0, kind: input, shape index: {}]
  %s1 = inlined_call_operand.vmem [shape: f32[512,1], index: 1, kind: output, shape index: {}]
  %v2 = vld [vmem:[%s0] sm:$0xff]
  %vm3 = vcmask 7168
  %4 = vst.msk [vmem:[%s1] ss:$16 sm:$0x3] %vm3, %v2
  %5 = vst.msk [vmem:[%s1] ss:$16 sm:$0xc] %vm3, %v2
  %6 = vst.msk [vmem:[%s1] ss:$16 sm:$0x30] %vm3, %v2
  %7 = vst.msk [vmem:[%s1] ss:$16 sm:$0xc0] %vm3, %v2
  %s8 = scalar_lea.vmem %s0, 8
  %v9 = vld [vmem:[%s8] sm:$0xff]
  %vm10 = vcmask 7168
  %s11 = scalar_lea.vmem %s1, 128
  %12 = vst.msk [vmem:[%s11] ss:$16 sm:$0x3] %vm10, %v9
  %s13 = scalar_lea.vmem %s1, 128
  %14 = vst.msk [vmem:[%s13] ss:$16 sm:$0xc] %vm10, %v9
  %s15 = scalar_lea.vmem %s1, 128
  %16 = vst.msk [vmem:[%s15] ss:$16 sm:$0x30] %vm10, %v9
  %s17 = scalar_lea.vmem %s1, 128
  %18 = vst.msk [vmem:[%s17] ss:$16 sm:$0xc0] %vm10, %v9
  %s19 = scalar_lea.vmem %s0, 16
  %v20 = vld [vmem:[%s19] sm:$0xff]
  %vm21 = vcmask 7168
  %s22 = scalar_lea.vmem %s1, 256
  %23 = vst.msk [vmem:[%s22] ss:$16 sm:$0x3] %vm21, %v20
  %s24 = scalar_lea.vmem %s1, 256
  %25 = vst.msk [vmem:[%s24] ss:$16 sm:$0xc] %vm21, %v20
  %s26 = scalar_lea.vmem %s1, 256
  %27 = vst.msk [vmem:[%s26] ss:$16 sm:$0x30] %vm21, %v20
  %s28 = scalar_lea.vmem %s1, 256
  %29 = vst.msk [vmem:[%s28] ss:$16 sm:$0xc0] %vm21, %v20
  %s30 = scalar_lea.vmem %s0, 24
  %v31 = vld [vmem:[%s30] sm:$0xff]
  %vm32 = vcmask 7168
  %s33 = scalar_lea.vmem %s1, 384
  %34 = vst.msk [vmem:[%s33] ss:$16 sm:$0x3] %vm32, %v31
  %s35 = scalar_lea.vmem %s1, 384
  %36 = vst.msk [vmem:[%s35] ss:$16 sm:$0xc] %vm32, %v31
  %s37 = scalar_lea.vmem %s1, 384
  %38 = vst.msk [vmem:[%s37] ss:$16 sm:$0x30] %vm32, %v31
  %s39 = scalar_lea.vmem %s1, 384
  %40 = vst.msk [vmem:[%s39] ss:$16 sm:$0xc0] %vm32, %v31
  %v41 = vld [vmem:[%s0] sm:$0xff]
  %42 = vrot.lane.b32.xlu0 %v41, 127
  %v43 = vpop.permute.xlu0 %42
  %vm44 = vcmask 7168
  %s45 = scalar_lea.vmem %s1, 1
  %46 = vst.msk [vmem:[%s45] ss:$16 sm:$0x3] %vm44, %v43
  %s47 = scalar_lea.vmem %s1, 1
  %48 = vst.msk [vmem:[%s47] ss:$16 sm:$0xc] %vm44, %v43
  %s49 = scalar_lea.vmem %s1, 1
  %50 = vst.msk [vmem:[%s49] ss:$16 sm:$0x30] %vm44, %v43
  %s51 = scalar_lea.vmem %s1, 1
  %52 = vst.msk [vmem:[%s51] ss:$16 sm:$0xc0] %vm44, %v43
  %s53 = scalar_lea.vmem %s0, 8
  %v54 = vld [vmem:[%s53] sm:$0xff]
  %55 = vrot.lane.b32.xlu0 %v54, 127
  %v56 = vpop.permute.xlu0 %55
  %vm57 = vcmask 7168
  %s58 = scalar_lea.vmem %s1, 129
  %59 = vst.msk [vmem:[%s58] ss:$16 sm:$0x3] %vm57, %v56
  %s60 = scalar_lea.vmem %s1, 129
  %61 = vst.msk [vmem:[%s60] ss:$16 sm:$0xc] %vm57, %v56
  %s62 = scalar_lea.vmem %s1, 129
  %63 = vst.msk [vmem:[%s62] ss:$16 sm:$0x30] %vm57, %v56
  %s64 = scalar_lea.vmem %s1, 129
  %65 = vst.msk [vmem:[%s64] ss:$16 sm:$0xc0] %vm57, %v56
  %s66 = scalar_lea.vmem %s0, 16
  %v67 = vld [vmem:[%s66] sm:$0xff]
  %68 = vrot.lane.b32.xlu0 %v67, 127
  %v69 = vpop.permute.xlu0 %68
  %vm70 = vcmask 7168
  %s71 = scalar_lea.vmem %s1, 257
  %72 = vst.msk [vmem:[%s71] ss:$16 sm:$0x3] %vm70, %v69
  %s73 = scalar_lea.vmem %s1, 257
  %74 = vst.msk [vmem:[%s73] ss:$16 sm:$0xc] %vm70, %v69
  %s75 = scalar_lea.vmem %s1, 257
  %76 = vst.msk [vmem:[%s75] ss:$16 sm:$0x30] %vm70, %v69
  %s77 = scalar_lea.vmem %s1, 257
  %78 = vst.msk [vmem:[%s77] ss:$16 sm:$0xc0] %vm70, %v69
  %s79 = scalar_lea.vmem %s0, 24
  %v80 = vld [vmem:[%s79] sm:$0xff]
  %81 = vrot.lane.b32.xlu0 %v80, 127
  %v82 = vpop.permute.xlu0 %81
  %vm83 = vcmask 7168
  %s84 = scalar_lea.vmem %s1, 385
  %85 = vst.msk [vmem:[%s84] ss:$16 sm:$0x3] %vm83, %v82
  %s86 = scalar_lea.vmem %s1, 385
  %87 = vst.msk [vmem:[%s86] ss:$16 sm:$0xc] %vm83, %v82
  %s88 = scalar_lea.vmem %s1, 385
  %89 = vst.msk [vmem:[%s88] ss:$16 sm:$0x30] %vm83, %v82
  %s90 = scalar_lea.vmem %s1, 385
  %91 = vst.msk [vmem:[%s90] ss:$16 sm:$0xc0] %vm83, %v82
  %v92 = vld [vmem:[%s0] sm:$0xff]
  %93 = vrot.lane.b32.xlu0 %v92, 126
  %v94 = vpop.permute.xlu0 %93
  %vm95 = vcmask 7168
  %s96 = scalar_lea.vmem %s1, 2
  %97 = vst.msk [vmem:[%s96] ss:$16 sm:$0x3] %vm95, %v94
  %s98 = scalar_lea.vmem %s1, 2
  %99 = vst.msk [vmem:[%s98] ss:$16 sm:$0xc] %vm95, %v94
  %s100 = scalar_lea.vmem %s1, 2
  %101 = vst.msk [vmem:[%s100] ss:$16 sm:$0x30] %vm95, %v94
  %s102 = scalar_lea.vmem %s1, 2
  %103 = vst.msk [vmem:[%s102] ss:$16 sm:$0xc0] %vm95, %v94
  %s104 = scalar_lea.vmem %s0, 8
  %v105 = vld [vmem:[%s104] sm:$0xff]
  %106 = vrot.lane.b32.xlu0 %v105, 126
  %v107 = vpop.permute.xlu0 %106
  %vm108 = vcmask 7168
  %s109 = scalar_lea.vmem %s1, 130
  %110 = vst.msk [vmem:[%s109] ss:$16 sm:$0x3] %vm108, %v107
  %s111 = scalar_lea.vmem %s1, 130
  %112 = vst.msk [vmem:[%s111] ss:$16 sm:$0xc] %vm108, %v107
  %s113 = scalar_lea.vmem %s1, 130
  %114 = vst.msk [vmem:[%s113] ss:$16 sm:$0x30] %vm108, %v107
  %s115 = scalar_lea.vmem %s1, 130
  %116 = vst.msk [vmem:[%s115] ss:$16 sm:$0xc0] %vm108, %v107
  %s117 = scalar_lea.vmem %s0, 16
  %v118 = vld [vmem:[%s117] sm:$0xff]
  %119 = vrot.lane.b32.xlu0 %v118, 126
  %v120 = vpop.permute.xlu0 %119
  %vm121 = vcmask 7168
  %s122 = scalar_lea.vmem %s1, 258
  %123 = vst.msk [vmem:[%s122] ss:$16 sm:$0x3] %vm121, %v120
  %s124 = scalar_lea.vmem %s1, 258
  %125 = vst.msk [vmem:[%s124] ss:$16 sm:$0xc] %vm121, %v120
  %s126 = scalar_lea.vmem %s1, 258
  %127 = vst.msk [vmem:[%s126] ss:$16 sm:$0x30] %vm121, %v120
  %s128 = scalar_lea.vmem %s1, 258
  %129 = vst.msk [vmem:[%s128] ss:$16 sm:$0xc0] %vm121, %v120
  %s130 = scalar_lea.vmem %s0, 24
  %v131 = vld [vmem:[%s130] sm:$0xff]
  %132 = vrot.lane.b32.xlu0 %v131, 126
  %v133 = vpop.permute.xlu0 %132
  %vm134 = vcmask 7168
  %s135 = scalar_lea.vmem %s1, 386
  %136 = vst.msk [vmem:[%s135] ss:$16 sm:$0x3] %vm134, %v133
  %s137 = scalar_lea.vmem %s1, 386
  %138 = vst.msk [vmem:[%s137] ss:$16 sm:$0xc] %vm134, %v133
  %s139 = scalar_lea.vmem %s1, 386
  %140 = vst.msk [vmem:[%s139] ss:$16 sm:$0x30] %vm134, %v133
  %s141 = scalar_lea.vmem %s1, 386
  %142 = vst.msk [vmem:[%s141] ss:$16 sm:$0xc0] %vm134, %v133
  %v143 = vld [vmem:[%s0] sm:$0xff]
  %144 = vrot.lane.b32.xlu0 %v143, 125
  %v145 = vpop.permute.xlu0 %144
  %vm146 = vcmask 7168
  %s147 = scalar_lea.vmem %s1, 3
  %148 = vst.msk [vmem:[%s147] ss:$16 sm:$0x3] %vm146, %v145
  %s149 = scalar_lea.vmem %s1, 3
  %150 = vst.msk [vmem:[%s149] ss:$16 sm:$0xc] %vm146, %v145
  %s151 = scalar_lea.vmem %s1, 3
  %152 = vst.msk [vmem:[%s151] ss:$16 sm:$0x30] %vm146, %v145
  %s153 = scalar_lea.vmem %s1, 3
  %154 = vst.msk [vmem:[%s153] ss:$16 sm:$0xc0] %vm146, %v145
  %s155 = scalar_lea.vmem %s0, 8
  %v156 = vld [vmem:[%s155] sm:$0xff]
  %157 = vrot.lane.b32.xlu0 %v156, 125
  %v158 = vpop.permute.xlu0 %157
  %vm159 = vcmask 7168
  %s160 = scalar_lea.vmem %s1, 131
  %161 = vst.msk [vmem:[%s160] ss:$16 sm:$0x3] %vm159, %v158
  %s162 = scalar_lea.vmem %s1, 131
  %163 = vst.msk [vmem:[%s162] ss:$16 sm:$0xc] %vm159, %v158
  %s164 = scalar_lea.vmem %s1, 131
  %165 = vst.msk [vmem:[%s164] ss:$16 sm:$0x30] %vm159, %v158
  %s166 = scalar_lea.vmem %s1, 131
  %167 = vst.msk [vmem:[%s166] ss:$16 sm:$0xc0] %vm159, %v158
  %s168 = scalar_lea.vmem %s0, 16
  %v169 = vld [vmem:[%s168] sm:$0xff]
  %170 = vrot.lane.b32.xlu0 %v169, 125
  %v171 = vpop.permute.xlu0 %170
  %vm172 = vcmask 7168
  %s173 = scalar_lea.vmem %s1, 259
  %174 = vst.msk [vmem:[%s173] ss:$16 sm:$0x3] %vm172, %v171
  %s175 = scalar_lea.vmem %s1, 259
  %176 = vst.msk [vmem:[%s175] ss:$16 sm:$0xc] %vm172, %v171
  %s177 = scalar_lea.vmem %s1, 259
  %178 = vst.msk [vmem:[%s177] ss:$16 sm:$0x30] %vm172, %v171
  %s179 = scalar_lea.vmem %s1, 259
  %180 = vst.msk [vmem:[%s179] ss:$16 sm:$0xc0] %vm172, %v171
  %s181 = scalar_lea.vmem %s0, 24
  %v182 = vld [vmem:[%s181] sm:$0xff]
  %183 = vrot.lane.b32.xlu0 %v182, 125
  %v184 = vpop.permute.xlu0 %183
  %vm185 = vcmask 7168
  %s186 = scalar_lea.vmem %s1, 387
  %187 = vst.msk [vmem:[%s186] ss:$16 sm:$0x3] %vm185, %v184
  %s188 = scalar_lea.vmem %s1, 387
  %189 = vst.msk [vmem:[%s188] ss:$16 sm:$0xc] %vm185, %v184
  %s190 = scalar_lea.vmem %s1, 387
  %191 = vst.msk [vmem:[%s190] ss:$16 sm:$0x30] %vm185, %v184
  %s192 = scalar_lea.vmem %s1, 387
  %193 = vst.msk [vmem:[%s192] ss:$16 sm:$0xc0] %vm185, %v184
  %v194 = vld [vmem:[%s0] sm:$0xff]
  %195 = vrot.lane.b32.xlu0 %v194, 124
  %v196 = vpop.permute.xlu0 %195
  %vm197 = vcmask 7168
  %s198 = scalar_lea.vmem %s1, 4
  %199 = vst.msk [vmem:[%s198] ss:$16 sm:$0x3] %vm197, %v196
  %s200 = scalar_lea.vmem %s1, 4
  %201 = vst.msk [vmem:[%s200] ss:$16 sm:$0xc] %vm197, %v196
  %s202 = scalar_lea.vmem %s1, 4
  %203 = vst.msk [vmem:[%s202] ss:$16 sm:$0x30] %vm197, %v196
  %s204 = scalar_lea.vmem %s1, 4
  %205 = vst.msk [vmem:[%s204] ss:$16 sm:$0xc0] %vm197, %v196
  %s206 = scalar_lea.vmem %s0, 8
  %v207 = vld [vmem:[%s206] sm:$0xff]
  %208 = vrot.lane.b32.xlu0 %v207, 124
  %v209 = vpop.permute.xlu0 %208
  %vm210 = vcmask 7168
  %s211 = scalar_lea.vmem %s1, 132
  %212 = vst.msk [vmem:[%s211] ss:$16 sm:$0x3] %vm210, %v209
  %s213 = scalar_lea.vmem %s1, 132
  %214 = vst.msk [vmem:[%s213] ss:$16 sm:$0xc] %vm210, %v209
  %s215 = scalar_lea.vmem %s1, 132
  %216 = vst.msk [vmem:[%s215] ss:$16 sm:$0x30] %vm210, %v209
  %s217 = scalar_lea.vmem %s1, 132
  %218 = vst.msk [vmem:[%s217] ss:$16 sm:$0xc0] %vm210, %v209
  %s219 = scalar_lea.vmem %s0, 16
  %v220 = vld [vmem:[%s219] sm:$0xff]
  %221 = vrot.lane.b32.xlu0 %v220, 124
  %v222 = vpop.permute.xlu0 %221
  %vm223 = vcmask 7168
  %s224 = scalar_lea.vmem %s1, 260
  %225 = vst.msk [vmem:[%s224] ss:$16 sm:$0x3] %vm223, %v222
  %s226 = scalar_lea.vmem %s1, 260
  %227 = vst.msk [vmem:[%s226] ss:$16 sm:$0xc] %vm223, %v222
  %s228 = scalar_lea.vmem %s1, 260
  %229 = vst.msk [vmem:[%s228] ss:$16 sm:$0x30] %vm223, %v222
  %s230 = scalar_lea.vmem %s1, 260
  %231 = vst.msk [vmem:[%s230] ss:$16 sm:$0xc0] %vm223, %v222
  %s232 = scalar_lea.vmem %s0, 24
  %v233 = vld [vmem:[%s232] sm:$0xff]
  %234 = vrot.lane.b32.xlu0 %v233, 124
  %v235 = vpop.permute.xlu0 %234
  %vm236 = vcmask 7168
  %s237 = scalar_lea.vmem %s1, 388
  %238 = vst.msk [vmem:[%s237] ss:$16 sm:$0x3] %vm236, %v235
  %s239 = scalar_lea.vmem %s1, 388
  %240 = vst.msk [vmem:[%s239] ss:$16 sm:$0xc] %vm236, %v235
  %s241 = scalar_lea.vmem %s1, 388
  %242 = vst.msk [vmem:[%s241] ss:$16 sm:$0x30] %vm236, %v235
  %s243 = scalar_lea.vmem %s1, 388
  %244 = vst.msk [vmem:[%s243] ss:$16 sm:$0xc0] %vm236, %v235
  %v245 = vld [vmem:[%s0] sm:$0xff]
  %246 = vrot.lane.b32.xlu0 %v245, 123
  %v247 = vpop.permute.xlu0 %246
  %vm248 = vcmask 7168
  %s249 = scalar_lea.vmem %s1, 5
  %250 = vst.msk [vmem:[%s249] ss:$16 sm:$0x3] %vm248, %v247
  %s251 = scalar_lea.vmem %s1, 5
  %252 = vst.msk [vmem:[%s251] ss:$16 sm:$0xc] %vm248, %v247
  %s253 = scalar_lea.vmem %s1, 5
  %254 = vst.msk [vmem:[%s253] ss:$16 sm:$0x30] %vm248, %v247
  %s255 = scalar_lea.vmem %s1, 5
  %256 = vst.msk [vmem:[%s255] ss:$16 sm:$0xc0] %vm248, %v247
  %s257 = scalar_lea.vmem %s0, 8
  %v258 = vld [vmem:[%s257] sm:$0xff]
  %259 = vrot.lane.b32.xlu0 %v258, 123
  %v260 = vpop.permute.xlu0 %259
  %vm261 = vcmask 7168
  %s262 = scalar_lea.vmem %s1, 133
  %263 = vst.msk [vmem:[%s262] ss:$16 sm:$0x3] %vm261, %v260
  %s264 = scalar_lea.vmem %s1, 133
  %265 = vst.msk [vmem:[%s264] ss:$16 sm:$0xc] %vm261, %v260
  %s266 = scalar_lea.vmem %s1, 133
  %267 = vst.msk [vmem:[%s266] ss:$16 sm:$0x30] %vm261, %v260
  %s268 = scalar_lea.vmem %s1, 133
  %269 = vst.msk [vmem:[%s268] ss:$16 sm:$0xc0] %vm261, %v260
  %s270 = scalar_lea.vmem %s0, 16
  %v271 = vld [vmem:[%s270] sm:$0xff]
  %272 = vrot.lane.b32.xlu0 %v271, 123
  %v273 = vpop.permute.xlu0 %272
  %vm274 = vcmask 7168
  %s275 = scalar_lea.vmem %s1, 261
  %276 = vst.msk [vmem:[%s275] ss:$16 sm:$0x3] %vm274, %v273
  %s277 = scalar_lea.vmem %s1, 261
  %278 = vst.msk [vmem:[%s277] ss:$16 sm:$0xc] %vm274, %v273
  %s279 = scalar_lea.vmem %s1, 261
  %280 = vst.msk [vmem:[%s279] ss:$16 sm:$0x30] %vm274, %v273
  %s281 = scalar_lea.vmem %s1, 261
  %282 = vst.msk [vmem:[%s281] ss:$16 sm:$0xc0] %vm274, %v273
  %s283 = scalar_lea.vmem %s0, 24
  %v284 = vld [vmem:[%s283] sm:$0xff]
  %285 = vrot.lane.b32.xlu0 %v284, 123
  %v286 = vpop.permute.xlu0 %285
  %vm287 = vcmask 7168
  %s288 = scalar_lea.vmem %s1, 389
  %289 = vst.msk [vmem:[%s288] ss:$16 sm:$0x3] %vm287, %v286
  %s290 = scalar_lea.vmem %s1, 389
  %291 = vst.msk [vmem:[%s290] ss:$16 sm:$0xc] %vm287, %v286
  %s292 = scalar_lea.vmem %s1, 389
  %293 = vst.msk [vmem:[%s292] ss:$16 sm:$0x30] %vm287, %v286
  %s294 = scalar_lea.vmem %s1, 389
  %295 = vst.msk [vmem:[%s294] ss:$16 sm:$0xc0] %vm287, %v286
  %v296 = vld [vmem:[%s0] sm:$0xff]
  %297 = vrot.lane.b32.xlu0 %v296, 122
  %v298 = vpop.permute.xlu0 %297
  %vm299 = vcmask 7168
  %s300 = scalar_lea.vmem %s1, 6
  %301 = vst.msk [vmem:[%s300] ss:$16 sm:$0x3] %vm299, %v298
  %s302 = scalar_lea.vmem %s1, 6
  %303 = vst.msk [vmem:[%s302] ss:$16 sm:$0xc] %vm299, %v298
  %s304 = scalar_lea.vmem %s1, 6
  %305 = vst.msk [vmem:[%s304] ss:$16 sm:$0x30] %vm299, %v298
  %s306 = scalar_lea.vmem %s1, 6
  %307 = vst.msk [vmem:[%s306] ss:$16 sm:$0xc0] %vm299, %v298
  %s308 = scalar_lea.vmem %s0, 8
  %v309 = vld [vmem:[%s308] sm:$0xff]
  %310 = vrot.lane.b32.xlu0 %v309, 122
  %v311 = vpop.permute.xlu0 %310
  %vm312 = vcmask 7168
  %s313 = scalar_lea.vmem %s1, 134
  %314 = vst.msk [vmem:[%s313] ss:$16 sm:$0x3] %vm312, %v311
  %s315 = scalar_lea.vmem %s1, 134
  %316 = vst.msk [vmem:[%s315] ss:$16 sm:$0xc] %vm312, %v311
  %s317 = scalar_lea.vmem %s1, 134
  %318 = vst.msk [vmem:[%s317] ss:$16 sm:$0x30] %vm312, %v311
  %s319 = scalar_lea.vmem %s1, 134
  %320 = vst.msk [vmem:[%s319] ss:$16 sm:$0xc0] %vm312, %v311
  %s321 = scalar_lea.vmem %s0, 16
  %v322 = vld [vmem:[%s321] sm:$0xff]
  %323 = vrot.lane.b32.xlu0 %v322, 122
  %v324 = vpop.permute.xlu0 %323
  %vm325 = vcmask 7168
  %s326 = scalar_lea.vmem %s1, 262
  %327 = vst.msk [vmem:[%s326] ss:$16 sm:$0x3] %vm325, %v324
  %s328 = scalar_lea.vmem %s1, 262
  %329 = vst.msk [vmem:[%s328] ss:$16 sm:$0xc] %vm325, %v324
  %s330 = scalar_lea.vmem %s1, 262
  %331 = vst.msk [vmem:[%s330] ss:$16 sm:$0x30] %vm325, %v324
  %s332 = scalar_lea.vmem %s1, 262
  %333 = vst.msk [vmem:[%s332] ss:$16 sm:$0xc0] %vm325, %v324
  %s334 = scalar_lea.vmem %s0, 24
  %v335 = vld [vmem:[%s334] sm:$0xff]
  %336 = vrot.lane.b32.xlu0 %v335, 122
  %v337 = vpop.permute.xlu0 %336
  %vm338 = vcmask 7168
  %s339 = scalar_lea.vmem %s1, 390
  %340 = vst.msk [vmem:[%s339] ss:$16 sm:$0x3] %vm338, %v337
  %s341 = scalar_lea.vmem %s1, 390
  %342 = vst.msk [vmem:[%s341] ss:$16 sm:$0xc] %vm338, %v337
  %s343 = scalar_lea.vmem %s1, 390
  %344 = vst.msk [vmem:[%s343] ss:$16 sm:$0x30] %vm338, %v337
  %s345 = scalar_lea.vmem %s1, 390
  %346 = vst.msk [vmem:[%s345] ss:$16 sm:$0xc0] %vm338, %v337
  %v347 = vld [vmem:[%s0] sm:$0xff]
  %348 = vrot.lane.b32.xlu0 %v347, 121
  %v349 = vpop.permute.xlu0 %348
  %vm350 = vcmask 7168
  %s351 = scalar_lea.vmem %s1, 7
  %352 = vst.msk [vmem:[%s351] ss:$16 sm:$0x3] %vm350, %v349
  %s353 = scalar_lea.vmem %s1, 7
  %354 = vst.msk [vmem:[%s353] ss:$16 sm:$0xc] %vm350, %v349
  %s355 = scalar_lea.vmem %s1, 7
  %356 = vst.msk [vmem:[%s355] ss:$16 sm:$0x30] %vm350, %v349
  %s357 = scalar_lea.vmem %s1, 7
  %358 = vst.msk [vmem:[%s357] ss:$16 sm:$0xc0] %vm350, %v349
  %s359 = scalar_lea.vmem %s0, 8
  %v360 = vld [vmem:[%s359] sm:$0xff]
  %361 = vrot.lane.b32.xlu0 %v360, 121
  %v362 = vpop.permute.xlu0 %361
  %vm363 = vcmask 7168
  %s364 = scalar_lea.vmem %s1, 135
  %365 = vst.msk [vmem:[%s364] ss:$16 sm:$0x3] %vm363, %v362
  %s366 = scalar_lea.vmem %s1, 135
  %367 = vst.msk [vmem:[%s366] ss:$16 sm:$0xc] %vm363, %v362
  %s368 = scalar_lea.vmem %s1, 135
  %369 = vst.msk [vmem:[%s368] ss:$16 sm:$0x30] %vm363, %v362
  %s370 = scalar_lea.vmem %s1, 135
  %371 = vst.msk [vmem:[%s370] ss:$16 sm:$0xc0] %vm363, %v362
  %s372 = scalar_lea.vmem %s0, 16
  %v373 = vld [vmem:[%s372] sm:$0xff]
  %374 = vrot.lane.b32.xlu0 %v373, 121
  %v375 = vpop.permute.xlu0 %374
  %vm376 = vcmask 7168
  %s377 = scalar_lea.vmem %s1, 263
  %378 = vst.msk [vmem:[%s377] ss:$16 sm:$0x3] %vm376, %v375
  %s379 = scalar_lea.vmem %s1, 263
  %380 = vst.msk [vmem:[%s379] ss:$16 sm:$0xc] %vm376, %v375
  %s381 = scalar_lea.vmem %s1, 263
  %382 = vst.msk [vmem:[%s381] ss:$16 sm:$0x30] %vm376, %v375
  %s383 = scalar_lea.vmem %s1, 263
  %384 = vst.msk [vmem:[%s383] ss:$16 sm:$0xc0] %vm376, %v375
  %s385 = scalar_lea.vmem %s0, 24
  %v386 = vld [vmem:[%s385] sm:$0xff]
  %387 = vrot.lane.b32.xlu0 %v386, 121
  %v388 = vpop.permute.xlu0 %387
  %vm389 = vcmask 7168
  %s390 = scalar_lea.vmem %s1, 391
  %391 = vst.msk [vmem:[%s390] ss:$16 sm:$0x3] %vm389, %v388
  %s392 = scalar_lea.vmem %s1, 391
  %393 = vst.msk [vmem:[%s392] ss:$16 sm:$0xc] %vm389, %v388
  %s394 = scalar_lea.vmem %s1, 391
  %395 = vst.msk [vmem:[%s394] ss:$16 sm:$0x30] %vm389, %v388
  %s396 = scalar_lea.vmem %s1, 391
  %397 = vst.msk [vmem:[%s396] ss:$16 sm:$0xc0] %vm389, %v388
  %v398 = vld [vmem:[%s0] sm:$0xff]
  %399 = vrot.lane.b32.xlu0 %v398, 120
  %v400 = vpop.permute.xlu0 %399
  %vm401 = vcmask 7168
  %s402 = scalar_lea.vmem %s1, 8
  %403 = vst.msk [vmem:[%s402] ss:$16 sm:$0x3] %vm401, %v400
  %s404 = scalar_lea.vmem %s1, 8
  %405 = vst.msk [vmem:[%s404] ss:$16 sm:$0xc] %vm401, %v400
  %s406 = scalar_lea.vmem %s1, 8
  %407 = vst.msk [vmem:[%s406] ss:$16 sm:$0x30] %vm401, %v400
  %s408 = scalar_lea.vmem %s1, 8
  %409 = vst.msk [vmem:[%s408] ss:$16 sm:$0xc0] %vm401, %v400
  %s410 = scalar_lea.vmem %s0, 8
  %v411 = vld [vmem:[%s410] sm:$0xff]
  %412 = vrot.lane.b32.xlu0 %v411, 120
  %v413 = vpop.permute.xlu0 %412
  %vm414 = vcmask 7168
  %s415 = scalar_lea.vmem %s1, 136
  %416 = vst.msk [vmem:[%s415] ss:$16 sm:$0x3] %vm414, %v413
  %s417 = scalar_lea.vmem %s1, 136
  %418 = vst.msk [vmem:[%s417] ss:$16 sm:$0xc] %vm414, %v413
  %s419 = scalar_lea.vmem %s1, 136
  %420 = vst.msk [vmem:[%s419] ss:$16 sm:$0x30] %vm414, %v413
  %s421 = scalar_lea.vmem %s1, 136
  %422 = vst.msk [vmem:[%s421] ss:$16 sm:$0xc0] %vm414, %v413
  %s423 = scalar_lea.vmem %s0, 16
  %v424 = vld [vmem:[%s423] sm:$0xff]
  %425 = vrot.lane.b32.xlu0 %v424, 120
  %v426 = vpop.permute.xlu0 %425
  %vm427 = vcmask 7168
  %s428 = scalar_lea.vmem %s1, 264
  %429 = vst.msk [vmem:[%s428] ss:$16 sm:$0x3] %vm427, %v426
  %s430 = scalar_lea.vmem %s1, 264
  %431 = vst.msk [vmem:[%s430] ss:$16 sm:$0xc] %vm427, %v426
  %s432 = scalar_lea.vmem %s1, 264
  %433 = vst.msk [vmem:[%s432] ss:$16 sm:$0x30] %vm427, %v426
  %s434 = scalar_lea.vmem %s1, 264
  %435 = vst.msk [vmem:[%s434] ss:$16 sm:$0xc0] %vm427, %v426
  %s436 = scalar_lea.vmem %s0, 24
  %v437 = vld [vmem:[%s436] sm:$0xff]
  %438 = vrot.lane.b32.xlu0 %v437, 120
  %v439 = vpop.permute.xlu0 %438
  %vm440 = vcmask 7168
  %s441 = scalar_lea.vmem %s1, 392
  %442 = vst.msk [vmem:[%s441] ss:$16 sm:$0x3] %vm440, %v439
  %s443 = scalar_lea.vmem %s1, 392
  %444 = vst.msk [vmem:[%s443] ss:$16 sm:$0xc] %vm440, %v439
  %s445 = scalar_lea.vmem %s1, 392
  %446 = vst.msk [vmem:[%s445] ss:$16 sm:$0x30] %vm440, %v439
  %s447 = scalar_lea.vmem %s1, 392
  %448 = vst.msk [vmem:[%s447] ss:$16 sm:$0xc0] %vm440, %v439
  %v449 = vld [vmem:[%s0] sm:$0xff]
  %450 = vrot.lane.b32.xlu0 %v449, 119
  %v451 = vpop.permute.xlu0 %450
  %vm452 = vcmask 7168
  %s453 = scalar_lea.vmem %s1, 9
  %454 = vst.msk [vmem:[%s453] ss:$16 sm:$0x3] %vm452, %v451
  %s455 = scalar_lea.vmem %s1, 9
  %456 = vst.msk [vmem:[%s455] ss:$16 sm:$0xc] %vm452, %v451
  %s457 = scalar_lea.vmem %s1, 9
  %458 = vst.msk [vmem:[%s457] ss:$16 sm:$0x30] %vm452, %v451
  %s459 = scalar_lea.vmem %s1, 9
  %460 = vst.msk [vmem:[%s459] ss:$16 sm:$0xc0] %vm452, %v451
  %s461 = scalar_lea.vmem %s0, 8
  %v462 = vld [vmem:[%s461] sm:$0xff]
  %463 = vrot.lane.b32.xlu0 %v462, 119
  %v464 = vpop.permute.xlu0 %463
  %vm465 = vcmask 7168
  %s466 = scalar_lea.vmem %s1, 137
  %467 = vst.msk [vmem:[%s466] ss:$16 sm:$0x3] %vm465, %v464
  %s468 = scalar_lea.vmem %s1, 137
  %469 = vst.msk [vmem:[%s468] ss:$16 sm:$0xc] %vm465, %v464
  %s470 = scalar_lea.vmem %s1, 137
  %471 = vst.msk [vmem:[%s470] ss:$16 sm:$0x30] %vm465, %v464
  %s472 = scalar_lea.vmem %s1, 137
  %473 = vst.msk [vmem:[%s472] ss:$16 sm:$0xc0] %vm465, %v464
  %s474 = scalar_lea.vmem %s0, 16
  %v475 = vld [vmem:[%s474] sm:$0xff]
  %476 = vrot.lane.b32.xlu0 %v475, 119
  %v477 = vpop.permute.xlu0 %476
  %vm478 = vcmask 7168
  %s479 = scalar_lea.vmem %s1, 265
  %480 = vst.msk [vmem:[%s479] ss:$16 sm:$0x3] %vm478, %v477
  %s481 = scalar_lea.vmem %s1, 265
  %482 = vst.msk [vmem:[%s481] ss:$16 sm:$0xc] %vm478, %v477
  %s483 = scalar_lea.vmem %s1, 265
  %484 = vst.msk [vmem:[%s483] ss:$16 sm:$0x30] %vm478, %v477
  %s485 = scalar_lea.vmem %s1, 265
  %486 = vst.msk [vmem:[%s485] ss:$16 sm:$0xc0] %vm478, %v477
  %s487 = scalar_lea.vmem %s0, 24
  %v488 = vld [vmem:[%s487] sm:$0xff]
  %489 = vrot.lane.b32.xlu0 %v488, 119
  %v490 = vpop.permute.xlu0 %489
  %vm491 = vcmask 7168
  %s492 = scalar_lea.vmem %s1, 393
  %493 = vst.msk [vmem:[%s492] ss:$16 sm:$0x3] %vm491, %v490
  %s494 = scalar_lea.vmem %s1, 393
  %495 = vst.msk [vmem:[%s494] ss:$16 sm:$0xc] %vm491, %v490
  %s496 = scalar_lea.vmem %s1, 393
  %497 = vst.msk [vmem:[%s496] ss:$16 sm:$0x30] %vm491, %v490
  %s498 = scalar_lea.vmem %s1, 393
  %499 = vst.msk [vmem:[%s498] ss:$16 sm:$0xc0] %vm491, %v490
  %v500 = vld [vmem:[%s0] sm:$0xff]
  %501 = vrot.lane.b32.xlu0 %v500, 118
  %v502 = vpop.permute.xlu0 %501
  %vm503 = vcmask 7168
  %s504 = scalar_lea.vmem %s1, 10
  %505 = vst.msk [vmem:[%s504] ss:$16 sm:$0x3] %vm503, %v502
  %s506 = scalar_lea.vmem %s1, 10
  %507 = vst.msk [vmem:[%s506] ss:$16 sm:$0xc] %vm503, %v502
  %s508 = scalar_lea.vmem %s1, 10
  %509 = vst.msk [vmem:[%s508] ss:$16 sm:$0x30] %vm503, %v502
  %s510 = scalar_lea.vmem %s1, 10
  %511 = vst.msk [vmem:[%s510] ss:$16 sm:$0xc0] %vm503, %v502
  %s512 = scalar_lea.vmem %s0, 8
  %v513 = vld [vmem:[%s512] sm:$0xff]
  %514 = vrot.lane.b32.xlu0 %v513, 118
  %v515 = vpop.permute.xlu0 %514
  %vm516 = vcmask 7168
  %s517 = scalar_lea.vmem %s1, 138
  %518 = vst.msk [vmem:[%s517] ss:$16 sm:$0x3] %vm516, %v515
  %s519 = scalar_lea.vmem %s1, 138
  %520 = vst.msk [vmem:[%s519] ss:$16 sm:$0xc] %vm516, %v515
  %s521 = scalar_lea.vmem %s1, 138
  %522 = vst.msk [vmem:[%s521] ss:$16 sm:$0x30] %vm516, %v515
  %s523 = scalar_lea.vmem %s1, 138
  %524 = vst.msk [vmem:[%s523] ss:$16 sm:$0xc0] %vm516, %v515
  %s525 = scalar_lea.vmem %s0, 16
  %v526 = vld [vmem:[%s525] sm:$0xff]
  %527 = vrot.lane.b32.xlu0 %v526, 118
  %v528 = vpop.permute.xlu0 %527
  %vm529 = vcmask 7168
  %s530 = scalar_lea.vmem %s1, 266
  %531 = vst.msk [vmem:[%s530] ss:$16 sm:$0x3] %vm529, %v528
  %s532 = scalar_lea.vmem %s1, 266
  %533 = vst.msk [vmem:[%s532] ss:$16 sm:$0xc] %vm529, %v528
  %s534 = scalar_lea.vmem %s1, 266
  %535 = vst.msk [vmem:[%s534] ss:$16 sm:$0x30] %vm529, %v528
  %s536 = scalar_lea.vmem %s1, 266
  %537 = vst.msk [vmem:[%s536] ss:$16 sm:$0xc0] %vm529, %v528
  %s538 = scalar_lea.vmem %s0, 24
  %v539 = vld [vmem:[%s538] sm:$0xff]
  %540 = vrot.lane.b32.xlu0 %v539, 118
  %v541 = vpop.permute.xlu0 %540
  %vm542 = vcmask 7168
  %s543 = scalar_lea.vmem %s1, 394
  %544 = vst.msk [vmem:[%s543] ss:$16 sm:$0x3] %vm542, %v541
  %s545 = scalar_lea.vmem %s1, 394
  %546 = vst.msk [vmem:[%s545] ss:$16 sm:$0xc] %vm542, %v541
  %s547 = scalar_lea.vmem %s1, 394
  %548 = vst.msk [vmem:[%s547] ss:$16 sm:$0x30] %vm542, %v541
  %s549 = scalar_lea.vmem %s1, 394
  %550 = vst.msk [vmem:[%s549] ss:$16 sm:$0xc0] %vm542, %v541
  %v551 = vld [vmem:[%s0] sm:$0xff]
  %552 = vrot.lane.b32.xlu0 %v551, 117
  %v553 = vpop.permute.xlu0 %552
  %vm554 = vcmask 7168
  %s555 = scalar_lea.vmem %s1, 11
  %556 = vst.msk [vmem:[%s555] ss:$16 sm:$0x3] %vm554, %v553
  %s557 = scalar_lea.vmem %s1, 11
  %558 = vst.msk [vmem:[%s557] ss:$16 sm:$0xc] %vm554, %v553
  %s559 = scalar_lea.vmem %s1, 11
  %560 = vst.msk [vmem:[%s559] ss:$16 sm:$0x30] %vm554, %v553
  %s561 = scalar_lea.vmem %s1, 11
  %562 = vst.msk [vmem:[%s561] ss:$16 sm:$0xc0] %vm554, %v553
  %s563 = scalar_lea.vmem %s0, 8
  %v564 = vld [vmem:[%s563] sm:$0xff]
  %565 = vrot.lane.b32.xlu0 %v564, 117
  %v566 = vpop.permute.xlu0 %565
  %vm567 = vcmask 7168
  %s568 = scalar_lea.vmem %s1, 139
  %569 = vst.msk [vmem:[%s568] ss:$16 sm:$0x3] %vm567, %v566
  %s570 = scalar_lea.vmem %s1, 139
  %571 = vst.msk [vmem:[%s570] ss:$16 sm:$0xc] %vm567, %v566
  %s572 = scalar_lea.vmem %s1, 139
  %573 = vst.msk [vmem:[%s572] ss:$16 sm:$0x30] %vm567, %v566
  %s574 = scalar_lea.vmem %s1, 139
  %575 = vst.msk [vmem:[%s574] ss:$16 sm:$0xc0] %vm567, %v566
  %s576 = scalar_lea.vmem %s0, 16
  %v577 = vld [vmem:[%s576] sm:$0xff]
  %578 = vrot.lane.b32.xlu0 %v577, 117
  %v579 = vpop.permute.xlu0 %578
  %vm580 = vcmask 7168
  %s581 = scalar_lea.vmem %s1, 267
  %582 = vst.msk [vmem:[%s581] ss:$16 sm:$0x3] %vm580, %v579
  %s583 = scalar_lea.vmem %s1, 267
  %584 = vst.msk [vmem:[%s583] ss:$16 sm:$0xc] %vm580, %v579
  %s585 = scalar_lea.vmem %s1, 267
  %586 = vst.msk [vmem:[%s585] ss:$16 sm:$0x30] %vm580, %v579
  %s587 = scalar_lea.vmem %s1, 267
  %588 = vst.msk [vmem:[%s587] ss:$16 sm:$0xc0] %vm580, %v579
  %s589 = scalar_lea.vmem %s0, 24
  %v590 = vld [vmem:[%s589] sm:$0xff]
  %591 = vrot.lane.b32.xlu0 %v590, 117
  %v592 = vpop.permute.xlu0 %591
  %vm593 = vcmask 7168
  %s594 = scalar_lea.vmem %s1, 395
  %595 = vst.msk [vmem:[%s594] ss:$16 sm:$0x3] %vm593, %v592
  %s596 = scalar_lea.vmem %s1, 395
  %597 = vst.msk [vmem:[%s596] ss:$16 sm:$0xc] %vm593, %v592
  %s598 = scalar_lea.vmem %s1, 395
  %599 = vst.msk [vmem:[%s598] ss:$16 sm:$0x30] %vm593, %v592
  %s600 = scalar_lea.vmem %s1, 395
  %601 = vst.msk [vmem:[%s600] ss:$16 sm:$0xc0] %vm593, %v592
  %v602 = vld [vmem:[%s0] sm:$0xff]
  %603 = vrot.lane.b32.xlu0 %v602, 116
  %v604 = vpop.permute.xlu0 %603
  %vm605 = vcmask 7168
  %s606 = scalar_lea.vmem %s1, 12
  %607 = vst.msk [vmem:[%s606] ss:$16 sm:$0x3] %vm605, %v604
  %s608 = scalar_lea.vmem %s1, 12
  %609 = vst.msk [vmem:[%s608] ss:$16 sm:$0xc] %vm605, %v604
  %s610 = scalar_lea.vmem %s1, 12
  %611 = vst.msk [vmem:[%s610] ss:$16 sm:$0x30] %vm605, %v604
  %s612 = scalar_lea.vmem %s1, 12
  %613 = vst.msk [vmem:[%s612] ss:$16 sm:$0xc0] %vm605, %v604
  %s614 = scalar_lea.vmem %s0, 8
  %v615 = vld [vmem:[%s614] sm:$0xff]
  %616 = vrot.lane.b32.xlu0 %v615, 116
  %v617 = vpop.permute.xlu0 %616
  %vm618 = vcmask 7168
  %s619 = scalar_lea.vmem %s1, 140
  %620 = vst.msk [vmem:[%s619] ss:$16 sm:$0x3] %vm618, %v617
  %s621 = scalar_lea.vmem %s1, 140
  %622 = vst.msk [vmem:[%s621] ss:$16 sm:$0xc] %vm618, %v617
  %s623 = scalar_lea.vmem %s1, 140
  %624 = vst.msk [vmem:[%s623] ss:$16 sm:$0x30] %vm618, %v617
  %s625 = scalar_lea.vmem %s1, 140
  %626 = vst.msk [vmem:[%s625] ss:$16 sm:$0xc0] %vm618, %v617
  %s627 = scalar_lea.vmem %s0, 16
  %v628 = vld [vmem:[%s627] sm:$0xff]
  %629 = vrot.lane.b32.xlu0 %v628, 116
  %v630 = vpop.permute.xlu0 %629
  %vm631 = vcmask 7168
  %s632 = scalar_lea.vmem %s1, 268
  %633 = vst.msk [vmem:[%s632] ss:$16 sm:$0x3] %vm631, %v630
  %s634 = scalar_lea.vmem %s1, 268
  %635 = vst.msk [vmem:[%s634] ss:$16 sm:$0xc] %vm631, %v630
  %s636 = scalar_lea.vmem %s1, 268
  %637 = vst.msk [vmem:[%s636] ss:$16 sm:$0x30] %vm631, %v630
  %s638 = scalar_lea.vmem %s1, 268
  %639 = vst.msk [vmem:[%s638] ss:$16 sm:$0xc0] %vm631, %v630
  %s640 = scalar_lea.vmem %s0, 24
  %v641 = vld [vmem:[%s640] sm:$0xff]
  %642 = vrot.lane.b32.xlu0 %v641, 116
  %v643 = vpop.permute.xlu0 %642
  %vm644 = vcmask 7168
  %s645 = scalar_lea.vmem %s1, 396
  %646 = vst.msk [vmem:[%s645] ss:$16 sm:$0x3] %vm644, %v643
  %s647 = scalar_lea.vmem %s1, 396
  %648 = vst.msk [vmem:[%s647] ss:$16 sm:$0xc] %vm644, %v643
  %s649 = scalar_lea.vmem %s1, 396
  %650 = vst.msk [vmem:[%s649] ss:$16 sm:$0x30] %vm644, %v643
  %s651 = scalar_lea.vmem %s1, 396
  %652 = vst.msk [vmem:[%s651] ss:$16 sm:$0xc0] %vm644, %v643
  %v653 = vld [vmem:[%s0] sm:$0xff]
  %654 = vrot.lane.b32.xlu0 %v653, 115
  %v655 = vpop.permute.xlu0 %654
  %vm656 = vcmask 7168
  %s657 = scalar_lea.vmem %s1, 13
  %658 = vst.msk [vmem:[%s657] ss:$16 sm:$0x3] %vm656, %v655
  %s659 = scalar_lea.vmem %s1, 13
  %660 = vst.msk [vmem:[%s659] ss:$16 sm:$0xc] %vm656, %v655
  %s661 = scalar_lea.vmem %s1, 13
  %662 = vst.msk [vmem:[%s661] ss:$16 sm:$0x30] %vm656, %v655
  %s663 = scalar_lea.vmem %s1, 13
  %664 = vst.msk [vmem:[%s663] ss:$16 sm:$0xc0] %vm656, %v655
  %s665 = scalar_lea.vmem %s0, 8
  %v666 = vld [vmem:[%s665] sm:$0xff]
  %667 = vrot.lane.b32.xlu0 %v666, 115
  %v668 = vpop.permute.xlu0 %667
  %vm669 = vcmask 7168
  %s670 = scalar_lea.vmem %s1, 141
  %671 = vst.msk [vmem:[%s670] ss:$16 sm:$0x3] %vm669, %v668
  %s672 = scalar_lea.vmem %s1, 141
  %673 = vst.msk [vmem:[%s672] ss:$16 sm:$0xc] %vm669, %v668
  %s674 = scalar_lea.vmem %s1, 141
  %675 = vst.msk [vmem:[%s674] ss:$16 sm:$0x30] %vm669, %v668
  %s676 = scalar_lea.vmem %s1, 141
  %677 = vst.msk [vmem:[%s676] ss:$16 sm:$0xc0] %vm669, %v668
  %s678 = scalar_lea.vmem %s0, 16
  %v679 = vld [vmem:[%s678] sm:$0xff]
  %680 = vrot.lane.b32.xlu0 %v679, 115
  %v681 = vpop.permute.xlu0 %680
  %vm682 = vcmask 7168
  %s683 = scalar_lea.vmem %s1, 269
  %684 = vst.msk [vmem:[%s683] ss:$16 sm:$0x3] %vm682, %v681
  %s685 = scalar_lea.vmem %s1, 269
  %686 = vst.msk [vmem:[%s685] ss:$16 sm:$0xc] %vm682, %v681
  %s687 = scalar_lea.vmem %s1, 269
  %688 = vst.msk [vmem:[%s687] ss:$16 sm:$0x30] %vm682, %v681
  %s689 = scalar_lea.vmem %s1, 269
  %690 = vst.msk [vmem:[%s689] ss:$16 sm:$0xc0] %vm682, %v681
  %s691 = scalar_lea.vmem %s0, 24
  %v692 = vld [vmem:[%s691] sm:$0xff]
  %693 = vrot.lane.b32.xlu0 %v692, 115
  %v694 = vpop.permute.xlu0 %693
  %vm695 = vcmask 7168
  %s696 = scalar_lea.vmem %s1, 397
  %697 = vst.msk [vmem:[%s696] ss:$16 sm:$0x3] %vm695, %v694
  %s698 = scalar_lea.vmem %s1, 397
  %699 = vst.msk [vmem:[%s698] ss:$16 sm:$0xc] %vm695, %v694
  %s700 = scalar_lea.vmem %s1, 397
  %701 = vst.msk [vmem:[%s700] ss:$16 sm:$0x30] %vm695, %v694
  %s702 = scalar_lea.vmem %s1, 397
  %703 = vst.msk [vmem:[%s702] ss:$16 sm:$0xc0] %vm695, %v694
  %v704 = vld [vmem:[%s0] sm:$0xff]
  %705 = vrot.lane.b32.xlu0 %v704, 114
  %v706 = vpop.permute.xlu0 %705
  %vm707 = vcmask 7168
  %s708 = scalar_lea.vmem %s1, 14
  %709 = vst.msk [vmem:[%s708] ss:$16 sm:$0x3] %vm707, %v706
  %s710 = scalar_lea.vmem %s1, 14
  %711 = vst.msk [vmem:[%s710] ss:$16 sm:$0xc] %vm707, %v706
  %s712 = scalar_lea.vmem %s1, 14
  %713 = vst.msk [vmem:[%s712] ss:$16 sm:$0x30] %vm707, %v706
  %s714 = scalar_lea.vmem %s1, 14
  %715 = vst.msk [vmem:[%s714] ss:$16 sm:$0xc0] %vm707, %v706
  %s716 = scalar_lea.vmem %s0, 8
  %v717 = vld [vmem:[%s716] sm:$0xff]
  %718 = vrot.lane.b32.xlu0 %v717, 114
  %v719 = vpop.permute.xlu0 %718
  %vm720 = vcmask 7168
  %s721 = scalar_lea.vmem %s1, 142
  %722 = vst.msk [vmem:[%s721] ss:$16 sm:$0x3] %vm720, %v719
  %s723 = scalar_lea.vmem %s1, 142
  %724 = vst.msk [vmem:[%s723] ss:$16 sm:$0xc] %vm720, %v719
  %s725 = scalar_lea.vmem %s1, 142
  %726 = vst.msk [vmem:[%s725] ss:$16 sm:$0x30] %vm720, %v719
  %s727 = scalar_lea.vmem %s1, 142
  %728 = vst.msk [vmem:[%s727] ss:$16 sm:$0xc0] %vm720, %v719
  %s729 = scalar_lea.vmem %s0, 16
  %v730 = vld [vmem:[%s729] sm:$0xff]
  %731 = vrot.lane.b32.xlu0 %v730, 114
  %v732 = vpop.permute.xlu0 %731
  %vm733 = vcmask 7168
  %s734 = scalar_lea.vmem %s1, 270
  %735 = vst.msk [vmem:[%s734] ss:$16 sm:$0x3] %vm733, %v732
  %s736 = scalar_lea.vmem %s1, 270
  %737 = vst.msk [vmem:[%s736] ss:$16 sm:$0xc] %vm733, %v732
  %s738 = scalar_lea.vmem %s1, 270
  %739 = vst.msk [vmem:[%s738] ss:$16 sm:$0x30] %vm733, %v732
  %s740 = scalar_lea.vmem %s1, 270
  %741 = vst.msk [vmem:[%s740] ss:$16 sm:$0xc0] %vm733, %v732
  %s742 = scalar_lea.vmem %s0, 24
  %v743 = vld [vmem:[%s742] sm:$0xff]
  %744 = vrot.lane.b32.xlu0 %v743, 114
  %v745 = vpop.permute.xlu0 %744
  %vm746 = vcmask 7168
  %s747 = scalar_lea.vmem %s1, 398
  %748 = vst.msk [vmem:[%s747] ss:$16 sm:$0x3] %vm746, %v745
  %s749 = scalar_lea.vmem %s1, 398
  %750 = vst.msk [vmem:[%s749] ss:$16 sm:$0xc] %vm746, %v745
  %s751 = scalar_lea.vmem %s1, 398
  %752 = vst.msk [vmem:[%s751] ss:$16 sm:$0x30] %vm746, %v745
  %s753 = scalar_lea.vmem %s1, 398
  %754 = vst.msk [vmem:[%s753] ss:$16 sm:$0xc0] %vm746, %v745
  %v755 = vld [vmem:[%s0] sm:$0xff]
  %756 = vrot.lane.b32.xlu0 %v755, 113
  %v757 = vpop.permute.xlu0 %756
  %vm758 = vcmask 7168
  %s759 = scalar_lea.vmem %s1, 15
  %760 = vst.msk [vmem:[%s759] ss:$16 sm:$0x3] %vm758, %v757
  %s761 = scalar_lea.vmem %s1, 15
  %762 = vst.msk [vmem:[%s761] ss:$16 sm:$0xc] %vm758, %v757
  %s763 = scalar_lea.vmem %s1, 15
  %764 = vst.msk [vmem:[%s763] ss:$16 sm:$0x30] %vm758, %v757
  %s765 = scalar_lea.vmem %s1, 15
  %766 = vst.msk [vmem:[%s765] ss:$16 sm:$0xc0] %vm758, %v757
  %s767 = scalar_lea.vmem %s0, 8
  %v768 = vld [vmem:[%s767] sm:$0xff]
  %769 = vrot.lane.b32.xlu0 %v768, 113
  %v770 = vpop.permute.xlu0 %769
  %vm771 = vcmask 7168
  %s772 = scalar_lea.vmem %s1, 143
  %773 = vst.msk [vmem:[%s772] ss:$16 sm:$0x3] %vm771, %v770
  %s774 = scalar_lea.vmem %s1, 143
  %775 = vst.msk [vmem:[%s774] ss:$16 sm:$0xc] %vm771, %v770
  %s776 = scalar_lea.vmem %s1, 143
  %777 = vst.msk [vmem:[%s776] ss:$16 sm:$0x30] %vm771, %v770
  %s778 = scalar_lea.vmem %s1, 143
  %779 = vst.msk [vmem:[%s778] ss:$16 sm:$0xc0] %vm771, %v770
  %s780 = scalar_lea.vmem %s0, 16
  %v781 = vld [vmem:[%s780] sm:$0xff]
  %782 = vrot.lane.b32.xlu0 %v781, 113
  %v783 = vpop.permute.xlu0 %782
  %vm784 = vcmask 7168
  %s785 = scalar_lea.vmem %s1, 271
  %786 = vst.msk [vmem:[%s785] ss:$16 sm:$0x3] %vm784, %v783
  %s787 = scalar_lea.vmem %s1, 271
  %788 = vst.msk [vmem:[%s787] ss:$16 sm:$0xc] %vm784, %v783
  %s789 = scalar_lea.vmem %s1, 271
  %790 = vst.msk [vmem:[%s789] ss:$16 sm:$0x30] %vm784, %v783
  %s791 = scalar_lea.vmem %s1, 271
  %792 = vst.msk [vmem:[%s791] ss:$16 sm:$0xc0] %vm784, %v783
  %s793 = scalar_lea.vmem %s0, 24
  %v794 = vld [vmem:[%s793] sm:$0xff]
  %795 = vrot.lane.b32.xlu0 %v794, 113
  %v796 = vpop.permute.xlu0 %795
  %vm797 = vcmask 7168
  %s798 = scalar_lea.vmem %s1, 399
  %799 = vst.msk [vmem:[%s798] ss:$16 sm:$0x3] %vm797, %v796
  %s800 = scalar_lea.vmem %s1, 399
  %801 = vst.msk [vmem:[%s800] ss:$16 sm:$0xc] %vm797, %v796
  %s802 = scalar_lea.vmem %s1, 399
  %803 = vst.msk [vmem:[%s802] ss:$16 sm:$0x30] %vm797, %v796
  %s804 = scalar_lea.vmem %s1, 399
  %805 = vst.msk [vmem:[%s804] ss:$16 sm:$0xc0] %vm797, %v796

// kernel: generator_forward.3
$region0: #{generator_forward.3}
  #allocation0 [shape = 'u32[]', space=smem, size = 0x4, offset = 0x4, fixed_abs, tag = 'smem constant byte address 0x4 - core index']
  #allocation1 [shape = 'u32[72,128]{1,0:T(1,128)}', space=vmem, size = 0x9000, scoped, tag = 'internal scratch']
  %s0 = inlined_call_operand.vmem [shape: f32[2,512,3], index: 0, kind: input, shape index: {}]
  %s1 = inlined_call_operand.vmem [shape: f32[3,16], index: 1, kind: input, shape index: {}]
  %s2 = inlined_call_operand.vmem [shape: f32[1,16], index: 2, kind: input, shape index: {}]
  %s3 = inlined_call_operand.vmem [shape: f32[2,16,32], index: 3, kind: input, shape index: {}]
  %s4 = inlined_call_operand.vmem [shape: f32[2,1,32], index: 4, kind: input, shape index: {}]
  %s5 = inlined_call_operand.vmem [shape: bf16[2,512,32], index: 5, kind: output, shape index: {}]
  %s6 = sld [smem:[#allocation0]]
  $region53: #{generator_forward.3} parent=0
    _
  %s8 = ssub.s32 1, %s6
  %s9 = scalar_select 0, %s8, %s6
  loop: start=0, step=1, limit=4
  $region2: #{generator_forward.3} parent=0 // loop_pre_header
    _
  $region3: #{generator_forward.3} parent=0 // loop_header
    %s11 = sphi 0, %s15
    %p12 = scmp.ge.s32.totalorder %s11, 4
    %s18 = sphi 0, %s30
    %s19 = sphi 0, %s26
    %s20 = sphi 0, %s18
    %s21 = sphi 0, %s19
    %s22 = sphi 0, %s20
    %s23 = sphi 0, %s21
    %s35 = sphi 0, %s37
    %s38 = sphi 0, %s35
    %s39 = sphi 0, %s38
    %s55 = sphi 0, %s39
    %s59 = sphi 0, %s59
    %s61 = sphi 0, %s59
    %s62 = sphi 0, %s61
    %s76 = sphi 0, %s62
    %s80 = sphi 0, %s80
    %s82 = sphi 0, %s80
    %s83 = sphi 0, %s82
    %s97 = sphi 0, %s83
    %s103 = sphi 0, %s105
    %s106 = sphi 0, %s103
    %s107 = sphi 0, %s106
    %s123 = sphi 0, %s107
    %s129 = sphi 0, %s131
    %s132 = sphi 0, %s129
    %s133 = sphi 0, %s132
    %s149 = sphi 0, %s133
    %s157 = sphi 0, %s159
    %s160 = sphi 0, %s157
    %s161 = sphi 0, %s160
    %s177 = sphi 0, %s161
  $region4: #{generator_forward.3} parent=0 // loop_header_branch
    %14 = sbr.rel (%p12) target = $region8
  $region5: #{generator_forward.3} parent=0 // loop_body
    %s16 = ssub.s32 %s11, 1
    %s17 = ssub.s32 %s11, 2
    %s24 = sadd.s32 1, %s19
    %p25 = scmp.ge.s32.totalorder %s24, 1
    %s26 = scalar_select %p25, 0, %s24
    %s27 = sadd.s32 1, %s18
    %s28 = scalar_select %p25, %s27, %s18
    %p29 = scmp.ge.s32.totalorder %s28, 2
    %s30 = scalar_select %p29, 0, %s28
    %s31 = ssub.s32 %s18, %s30
    %s32 = ssub.s32 %s19, %s26
    %s33 = sor.u32 %s31, %s32
    %p34 = scmp.eq.s32.totalorder %s33, 0
    %s36 = sadd.s32 %s35, 1
    %s37 = scalar_select %p34, %s35, %s36
    %p40 = pneg %p34
    %p41 = scmp.eq.s32.totalorder %s11, 1
    %p42 = por %p40, %p41
    %p43 = scmp.ne.s32.totalorder %s35, %s38
    %p44 = scmp.eq.s32.totalorder %s11, 0
    %p45 = por %p43, %p44
    %p46 = scmp.ne.s32.totalorder %s35, %s38
    %p47 = scmp.eq.s32.totalorder %s16, 1
    %p48 = por %p46, %p47
    %p49 = scmp.ne.s32.totalorder %s38, %s39
    %p50 = scmp.eq.s32.totalorder %s16, 0
    %p51 = por %p49, %p50
    %p52 = scmp.ne.s32.totalorder %s38, %s39
    %p53 = scmp.eq.s32.totalorder %s17, 1
    %p54 = por %p52, %p53
    %p56 = scmp.ne.s32.totalorder %s39, %s55
    %p57 = scmp.eq.s32.totalorder %s17, 0
    %p58 = por %p56, %p57
    %s60 = sadd.s32 %s59, 1
    %p63 = scmp.eq.s32.totalorder %s11, 1
    %p64 = scmp.ne.s32.totalorder %s59, %s61
    %p65 = scmp.eq.s32.totalorder %s11, 0
    %p66 = por %p64, %p65
    %p67 = scmp.ne.s32.totalorder %s59, %s61
    %p68 = scmp.eq.s32.totalorder %s16, 1
    %p69 = por %p67, %p68
    %p70 = scmp.ne.s32.totalorder %s61, %s62
    %p71 = scmp.eq.s32.totalorder %s16, 0
    %p72 = por %p70, %p71
    %p73 = scmp.ne.s32.totalorder %s61, %s62
    %p74 = scmp.eq.s32.totalorder %s17, 1
    %p75 = por %p73, %p74
    %p77 = scmp.ne.s32.totalorder %s62, %s76
    %p78 = scmp.eq.s32.totalorder %s17, 0
    %p79 = por %p77, %p78
    %s81 = sadd.s32 %s80, 1
    %p84 = scmp.eq.s32.totalorder %s11, 1
    %p85 = scmp.ne.s32.totalorder %s80, %s82
    %p86 = scmp.eq.s32.totalorder %s11, 0
    %p87 = por %p85, %p86
    %p88 = scmp.ne.s32.totalorder %s80, %s82
    %p89 = scmp.eq.s32.totalorder %s16, 1
    %p90 = por %p88, %p89
    %p91 = scmp.ne.s32.totalorder %s82, %s83
    %p92 = scmp.eq.s32.totalorder %s16, 0
    %p93 = por %p91, %p92
    %p94 = scmp.ne.s32.totalorder %s82, %s83
    %p95 = scmp.eq.s32.totalorder %s17, 1
    %p96 = por %p94, %p95
    %p98 = scmp.ne.s32.totalorder %s83, %s97
    %p99 = scmp.eq.s32.totalorder %s17, 0
    %p100 = por %p98, %p99
    %s101 = ssub.s32 %s18, %s30
    %p102 = scmp.eq.s32.totalorder %s101, 0
    %s104 = sadd.s32 %s103, 1
    %s105 = scalar_select %p102, %s103, %s104
    %p108 = pneg %p102
    %p109 = scmp.eq.s32.totalorder %s11, 1
    %p110 = por %p108, %p109
    %p111 = scmp.ne.s32.totalorder %s103, %s106
    %p112 = scmp.eq.s32.totalorder %s11, 0
    %p113 = por %p111, %p112
    %p114 = scmp.ne.s32.totalorder %s103, %s106
    %p115 = scmp.eq.s32.totalorder %s16, 1
    %p116 = por %p114, %p115
    %p117 = scmp.ne.s32.totalorder %s106, %s107
    %p118 = scmp.eq.s32.totalorder %s16, 0
    %p119 = por %p117, %p118
    %p120 = scmp.ne.s32.totalorder %s106, %s107
    %p121 = scmp.eq.s32.totalorder %s17, 1
    %p122 = por %p120, %p121
    %p124 = scmp.ne.s32.totalorder %s107, %s123
    %p125 = scmp.eq.s32.totalorder %s17, 0
    %p126 = por %p124, %p125
    %s127 = ssub.s32 %s18, %s30
    %p128 = scmp.eq.s32.totalorder %s127, 0
    %s130 = sadd.s32 %s129, 1
    %s131 = scalar_select %p128, %s129, %s130
    %p134 = pneg %p128
    %p135 = scmp.eq.s32.totalorder %s11, 1
    %p136 = por %p134, %p135
    %p137 = scmp.ne.s32.totalorder %s129, %s132
    %p138 = scmp.eq.s32.totalorder %s11, 0
    %p139 = por %p137, %p138
    %p140 = scmp.ne.s32.totalorder %s129, %s132
    %p141 = scmp.eq.s32.totalorder %s16, 1
    %p142 = por %p140, %p141
    %p143 = scmp.ne.s32.totalorder %s132, %s133
    %p144 = scmp.eq.s32.totalorder %s16, 0
    %p145 = por %p143, %p144
    %p146 = scmp.ne.s32.totalorder %s132, %s133
    %p147 = scmp.eq.s32.totalorder %s17, 1
    %p148 = por %p146, %p147
    %p150 = scmp.ne.s32.totalorder %s133, %s149
    %p151 = scmp.eq.s32.totalorder %s17, 0
    %p152 = por %p150, %p151
    %s153 = ssub.s32 %s18, %s30
    %s154 = ssub.s32 %s19, %s26
    %s155 = sor.u32 %s153, %s154
    %p156 = scmp.eq.s32.totalorder %s155, 0
    %s158 = sadd.s32 %s157, 1
    %s159 = scalar_select %p156, %s157, %s158
    %p162 = pneg %p156
    %p163 = scmp.eq.s32.totalorder %s11, 1
    %p164 = por %p162, %p163
    %p165 = scmp.ne.s32.totalorder %s157, %s160
    %p166 = scmp.eq.s32.totalorder %s11, 0
    %p167 = por %p165, %p166
    %p168 = scmp.ne.s32.totalorder %s157, %s160
    %p169 = scmp.eq.s32.totalorder %s16, 1
    %p170 = por %p168, %p169
    %p171 = scmp.ne.s32.totalorder %s160, %s161
    %p172 = scmp.eq.s32.totalorder %s16, 0
    %p173 = por %p171, %p172
    %p174 = scmp.ne.s32.totalorder %s160, %s161
    %p175 = scmp.eq.s32.totalorder %s17, 1
    %p176 = por %p174, %p175
    %p178 = scmp.ne.s32.totalorder %s161, %s177
    %p179 = scmp.eq.s32.totalorder %s17, 0
    %p180 = por %p178, %p179
    %p181 = scmp.le.s32.totalorder 1, %s11
    %p182 = scmp.lt.s32.totalorder %s11, 3
    %p183 = pnand %p181, %p182
    %p184 = pneg %p183
    // Predicated region
    $region9: #{generator_forward.3} parent=5 // pred_check
      _
    $region10: #{generator_forward.3} parent=5 // pred_check_branch
      %186 = sbr.rel (%p183) target = $region12
    $region11: #{generator_forward.3} parent=5 // pred_region
      %s187 = ssub.s32 %s11, 1
      // Predicated region
      $region13: #{generator_forward.3} parent=11 // pred_check
        %p188 = pneg %p72
      $region14: #{generator_forward.3} parent=11 // pred_check_branch
        %190 = sbr.rel (%p188) target = $region16
      $region15: #{generator_forward.3} parent=11 // pred_region
        _
      $region16: #{generator_forward.3} parent=11 // pred_fallthru
        _
      // Predicated region
      $region17: #{generator_forward.3} parent=11 // pred_check
        %p191 = pneg %p93
      $region18: #{generator_forward.3} parent=11 // pred_check_branch
        %193 = sbr.rel (%p191) target = $region20
      $region19: #{generator_forward.3} parent=11 // pred_region
        _
      $region20: #{generator_forward.3} parent=11 // pred_fallthru
        _
    $region12: #{generator_forward.3} parent=5 // pred_fallthru
      _
    %p194 = scmp.lt.s32.totalorder %s11, 2
    // Predicated region
    $region21: #{generator_forward.3} parent=5 // pred_check
      %p195 = pneg %p194
    $region22: #{generator_forward.3} parent=5 // pred_check_branch
      %197 = sbr.rel (%p195) target = $region24
    $region23: #{generator_forward.3} parent=5 // pred_region
      // Predicated region
      $region25: #{generator_forward.3} parent=23 // pred_check
        %p198 = pneg %p45
      $region26: #{generator_forward.3} parent=23 // pred_check_branch
        %200 = sbr.rel (%p198) target = $region28
      $region27: #{generator_forward.3} parent=23 // pred_region
        %s201 = smul.u32 64, %s19
        %p202 = scmp.lt.s32.totalorder %s18, 1
        %s203 = scalar_select %p202, %s18, 1
        %p204 = scmp.lt.s32.totalorder %s201, 63
        %s205 = scalar_select %p204, %s201, 63
        %s206 = smul.addr %s203, 64
        %s207 = sadd.s32 %s205, %s206
        %s208 = smul.addr %s207, 8
        %s209 = scalar_lea.vmem %s0, %s208
        %s210 = smul.u32 64, %s19
      $region28: #{generator_forward.3} parent=23 // pred_fallthru
        _
      // Predicated region
      $region29: #{generator_forward.3} parent=23 // pred_check
        %p211 = pneg %p113
      $region30: #{generator_forward.3} parent=23 // pred_check_branch
        %213 = sbr.rel (%p211) target = $region32
      $region31: #{generator_forward.3} parent=23 // pred_region
        %p214 = scmp.lt.s32.totalorder %s18, 1
        %s215 = scalar_select %p214, %s18, 1
        %s216 = smul.addr %s215, 2
        %s217 = smul.addr %s216, 8
        %s218 = scalar_lea.vmem %s3, %s217
      $region32: #{generator_forward.3} parent=23 // pred_fallthru
        _
      // Predicated region
      $region33: #{generator_forward.3} parent=23 // pred_check
        %p219 = pneg %p139
      $region34: #{generator_forward.3} parent=23 // pred_check_branch
        %221 = sbr.rel (%p219) target = $region36
      $region35: #{generator_forward.3} parent=23 // pred_region
        %p222 = scmp.lt.s32.totalorder %s18, 1
        %s223 = scalar_select %p222, %s18, 1
        %s224 = scalar_lea.vmem %s4, %s223
      $region36: #{generator_forward.3} parent=23 // pred_fallthru
        _
    $region24: #{generator_forward.3} parent=5 // pred_fallthru
      _
    %p225 = scmp.le.s32.totalorder 1, %s11
    %p226 = scmp.lt.s32.totalorder %s11, 3
    %p227 = pnand %p225, %p226
    %p228 = pneg %p227
    // Predicated region
    $region37: #{generator_forward.3} parent=5 // pred_check
      _
    $region38: #{generator_forward.3} parent=5 // pred_check_branch
      %230 = sbr.rel (%p227) target = $region40
    $region39: #{generator_forward.3} parent=5 // pred_region
      %s231 = ssub.s32 %s11, 1
      %s232 = smul.u32 64, %s21
      %p233 = scmp.lt.s32.totalorder %s20, 1
      %s234 = scalar_select %p233, %s20, 1
      %p235 = scmp.lt.s32.totalorder %s232, 63
      %s236 = scalar_select %p235, %s232, 63
      %s237 = smul.addr %s234, 64
      %s238 = sadd.s32 %s236, %s237
      %s239 = smul.addr %s238, 8
      %s240 = scalar_lea.vmem %s0, %s239
      %p241 = pneg %p51
      %p242 = pneg %p48
      %p243 = pneg %p72
      %p244 = pneg %p69
      %p245 = pneg %p93
      %p246 = pneg %p90
      %p247 = scmp.lt.s32.totalorder %s20, 1
      %s248 = scalar_select %p247, %s20, 1
      %s249 = smul.addr %s248, 2
      %s250 = smul.addr %s249, 8
      %s251 = scalar_lea.vmem %s3, %s250
      %p252 = pneg %p119
      %p253 = pneg %p116
      %p254 = scmp.lt.s32.totalorder %s20, 1
      %s255 = scalar_select %p254, %s20, 1
      %s256 = scalar_lea.vmem %s4, %s255
      %p257 = pneg %p145
      %p258 = pneg %p142
      %p259 = pneg %p173
      %p260 = pneg %p170
      %s261 = smul.u32 64, %s21
      %p262 = scmp.lt.s32.totalorder %s20, 1
      %s263 = scalar_select %p262, %s20, 1
      %p264 = scmp.lt.s32.totalorder %s261, 63
      %s265 = scalar_select %p264, %s261, 63
      %s266 = smul.addr %s263, 64
      %s267 = sadd.s32 %s265, %s266
      %s268 = smul.addr %s267, 4
      %s269 = scalar_lea.vmem %s5, %s268
      %s270 = smul.u32 64, %s21
      %p271 = scmp.lt.s32.totalorder %s20, 1
      %s272 = scalar_select %p271, %s20, 1
      %p273 = scmp.lt.s32.totalorder %s270, 63
      %s274 = scalar_select %p273, %s270, 63
      %s275 = smul.addr %s272, 64
      %s276 = sadd.s32 %s274, %s275
      %s277 = smul.addr %s276, 8
      %s278 = scalar_lea.vmem %s0, %s277
      %s279 = smul.u32 64, %s21
      %p280 = scmp.lt.s32.totalorder %s20, 1
      %s281 = scalar_select %p280, %s20, 1
      %s282 = smul.addr %s281, 2
      %s283 = smul.addr %s282, 8
      %s284 = scalar_lea.vmem %s3, %s283
      %p285 = scmp.lt.s32.totalorder %s20, 1
      %s286 = scalar_select %p285, %s20, 1
      %s287 = scalar_lea.vmem %s4, %s286
      %s288 = smul.u32 64, %s21
      %p289 = scmp.lt.s32.totalorder %s20, 1
      %s290 = scalar_select %p289, %s20, 1
      %p291 = scmp.lt.s32.totalorder %s288, 63
      %s292 = scalar_select %p291, %s288, 63
      %s293 = smul.addr %s290, 64
      %s294 = sadd.s32 %s292, %s293
      %s295 = smul.addr %s294, 4
      %s296 = scalar_lea.vmem %s5, %s295
      %s297 = smul.u32 64, %s21
      %v298 = vld [vmem:[%s278] sm:$0xff]
      %v299 = vld [vmem:[%s278 + $0x8] sm:$0xff]
      %v300 = vld [vmem:[%s278 + $0x10] sm:$0xff]
      %v301 = vld [vmem:[%s278 + $0x18] sm:$0xff]
      %v302 = vld [vmem:[%s278 + $0x20] sm:$0xff]
      %v303 = vld [vmem:[%s278 + $0x28] sm:$0xff]
      %v304 = vld [vmem:[%s278 + $0x30] sm:$0xff]
      %v305 = vld [vmem:[%s278 + $0x38] sm:$0xff]
      %v306 = vld [vmem:[%s278 + $0x40] sm:$0xff]
      %v307 = vld [vmem:[%s278 + $0x48] sm:$0xff]
      %v308 = vld [vmem:[%s278 + $0x50] sm:$0xff]
      %v309 = vld [vmem:[%s278 + $0x58] sm:$0xff]
      %v310 = vld [vmem:[%s278 + $0x60] sm:$0xff]
      %v311 = vld [vmem:[%s278 + $0x68] sm:$0xff]
      %v312 = vld [vmem:[%s278 + $0x70] sm:$0xff]
      %v313 = vld [vmem:[%s278 + $0x78] sm:$0xff]
      %v314 = vld [vmem:[%s278 + $0x80] sm:$0xff]
      %v315 = vld [vmem:[%s278 + $0x88] sm:$0xff]
      %v316 = vld [vmem:[%s278 + $0x90] sm:$0xff]
      %v317 = vld [vmem:[%s278 + $0x98] sm:$0xff]
      %v318 = vld [vmem:[%s278 + $0xa0] sm:$0xff]
      %v319 = vld [vmem:[%s278 + $0xa8] sm:$0xff]
      %v320 = vld [vmem:[%s278 + $0xb0] sm:$0xff]
      %v321 = vld [vmem:[%s278 + $0xb8] sm:$0xff]
      %v322 = vld [vmem:[%s278 + $0xc0] sm:$0xff]
      %v323 = vld [vmem:[%s278 + $0xc8] sm:$0xff]
      %v324 = vld [vmem:[%s278 + $0xd0] sm:$0xff]
      %v325 = vld [vmem:[%s278 + $0xd8] sm:$0xff]
      %v326 = vld [vmem:[%s278 + $0xe0] sm:$0xff]
      %v327 = vld [vmem:[%s278 + $0xe8] sm:$0xff]
      %v328 = vld [vmem:[%s278 + $0xf0] sm:$0xff]
      %v329 = vld [vmem:[%s278 + $0xf8] sm:$0xff]
      %v330 = vld [vmem:[%s278 + $0x100] sm:$0xff]
      %v331 = vld [vmem:[%s278 + $0x108] sm:$0xff]
      %v332 = vld [vmem:[%s278 + $0x110] sm:$0xff]
      %v333 = vld [vmem:[%s278 + $0x118] sm:$0xff]
      %v334 = vld [vmem:[%s278 + $0x120] sm:$0xff]
      %v335 = vld [vmem:[%s278 + $0x128] sm:$0xff]
      %v336 = vld [vmem:[%s278 + $0x130] sm:$0xff]
      %v337 = vld [vmem:[%s278 + $0x138] sm:$0xff]
      %v338 = vld [vmem:[%s278 + $0x140] sm:$0xff]
      %v339 = vld [vmem:[%s278 + $0x148] sm:$0xff]
      %v340 = vld [vmem:[%s278 + $0x150] sm:$0xff]
      %v341 = vld [vmem:[%s278 + $0x158] sm:$0xff]
      %v342 = vld [vmem:[%s278 + $0x160] sm:$0xff]
      %v343 = vld [vmem:[%s278 + $0x168] sm:$0xff]
      %v344 = vld [vmem:[%s278 + $0x170] sm:$0xff]
      %v345 = vld [vmem:[%s278 + $0x178] sm:$0xff]
      %v346 = vld [vmem:[%s278 + $0x180] sm:$0xff]
      %v347 = vld [vmem:[%s278 + $0x188] sm:$0xff]
      %v348 = vld [vmem:[%s278 + $0x190] sm:$0xff]
      %v349 = vld [vmem:[%s278 + $0x198] sm:$0xff]
      %v350 = vld [vmem:[%s278 + $0x1a0] sm:$0xff]
      %v351 = vld [vmem:[%s278 + $0x1a8] sm:$0xff]
      %v352 = vld [vmem:[%s278 + $0x1b0] sm:$0xff]
      %v353 = vld [vmem:[%s278 + $0x1b8] sm:$0xff]
      %v354 = vld [vmem:[%s278 + $0x1c0] sm:$0xff]
      %v355 = vld [vmem:[%s278 + $0x1c8] sm:$0xff]
      %v356 = vld [vmem:[%s278 + $0x1d0] sm:$0xff]
      %v357 = vld [vmem:[%s278 + $0x1d8] sm:$0xff]
      %v358 = vld [vmem:[%s278 + $0x1e0] sm:$0xff]
      %v359 = vld [vmem:[%s278 + $0x1e8] sm:$0xff]
      %v360 = vld [vmem:[%s278 + $0x1f0] sm:$0xff]
      %v361 = vld [vmem:[%s278 + $0x1f8] sm:$0xff]
      %v362 = vld [vmem:[%s1] sm:$0x7]
      %v363 = vld [vmem:[%s2] sm:$0x1]
      %v365 = vperm.slane %v363, 0
      %vm367 = vcmask 23552
      %v369 = vsel %vm367, %v298, 0
      %v372 = vsel %vm367, %v299, 0
      %v375 = vsel %vm367, %v300, 0
      %v378 = vsel %vm367, %v301, 0
      %v381 = vsel %vm367, %v302, 0
      %v384 = vsel %vm367, %v303, 0
      %v387 = vsel %vm367, %v304, 0
      %v390 = vsel %vm367, %v305, 0
      %v393 = vsel %vm367, %v306, 0
      %v396 = vsel %vm367, %v307, 0
      %v399 = vsel %vm367, %v308, 0
      %v402 = vsel %vm367, %v309, 0
      %v405 = vsel %vm367, %v310, 0
      %v408 = vsel %vm367, %v311, 0
      %v411 = vsel %vm367, %v312, 0
      %v414 = vsel %vm367, %v313, 0
      %v417 = vsel %vm367, %v314, 0
      %v420 = vsel %vm367, %v315, 0
      %v423 = vsel %vm367, %v316, 0
      %v426 = vsel %vm367, %v317, 0
      %v429 = vsel %vm367, %v318, 0
      %v432 = vsel %vm367, %v319, 0
      %v435 = vsel %vm367, %v320, 0
      %v438 = vsel %vm367, %v321, 0
      %v441 = vsel %vm367, %v322, 0
      %v444 = vsel %vm367, %v323, 0
      %v447 = vsel %vm367, %v324, 0
      %v450 = vsel %vm367, %v325, 0
      %v453 = vsel %vm367, %v326, 0
      %v456 = vsel %vm367, %v327, 0
      %v459 = vsel %vm367, %v328, 0
      %v462 = vsel %vm367, %v329, 0
      %v465 = vsel %vm367, %v330, 0
      %v468 = vsel %vm367, %v331, 0
      %v471 = vsel %vm367, %v332, 0
      %v474 = vsel %vm367, %v333, 0
      %v477 = vsel %vm367, %v334, 0
      %v480 = vsel %vm367, %v335, 0
      %v483 = vsel %vm367, %v336, 0
      %v486 = vsel %vm367, %v337, 0
      %v489 = vsel %vm367, %v338, 0
      %v492 = vsel %vm367, %v339, 0
      %v495 = vsel %vm367, %v340, 0
      %v498 = vsel %vm367, %v341, 0
      %v501 = vsel %vm367, %v342, 0
      %v504 = vsel %vm367, %v343, 0
      %v507 = vsel %vm367, %v344, 0
      %v510 = vsel %vm367, %v345, 0
      %v513 = vsel %vm367, %v346, 0
      %v516 = vsel %vm367, %v347, 0
      %v519 = vsel %vm367, %v348, 0
      %v522 = vsel %vm367, %v349, 0
      %v525 = vsel %vm367, %v350, 0
      %v528 = vsel %vm367, %v351, 0
      %v531 = vsel %vm367, %v352, 0
      %v534 = vsel %vm367, %v353, 0
      %v537 = vsel %vm367, %v354, 0
      %v540 = vsel %vm367, %v355, 0
      %v543 = vsel %vm367, %v356, 0
      %v546 = vsel %vm367, %v357, 0
      %v549 = vsel %vm367, %v358, 0
      %v552 = vsel %vm367, %v359, 0
      %v555 = vsel %vm367, %v360, 0
      %v558 = vsel %vm367, %v361, 0
      %vm560 = vcmask 1042432
      %v562 = vsel %vm560, %v362, 0
      %564 = vmatpush.msra.mxu0 0.0
      %565 = vmatpush.msra.mxu0 0.0
      %566 = vmatpush.msra.mxu0 0.0
      %567 = vmatpush.msra.mxu0 0.0
      %568 = vmatpush.msra.mxu0 0.0
      %569 = vmatpush.msra.mxu0 0.0
      %570 = vmatpush.msra.mxu0 0.0
      %571 = vmatpush.msra.mxu0 0.0
      %572 = vmatpush.msra.mxu0 0.0
      %573 = vmatpush.msra.mxu0 0.0
      %574 = vmatpush.msra.mxu0 0.0
      %575 = vmatpush.msra.mxu0 0.0
      %576 = vmatpush.msra.mxu0 0.0
      %577 = vmatpush.msra.mxu0 0.0
      %578 = vmatpush.msra.mxu0 0.0
      %579 = vmatpush.msra.mxu0 %v562
      %580 = vmatmul.f32.gmra.mxu0 %v369
      %v581 = vpop.f32.mrf.mxu0
      %v582 = vadd.f32 %v365, %v581
      %583 = vmatmul.f32.gmra.mxu0 %v372
      %v584 = vpop.f32.mrf.mxu0
      %v585 = vadd.f32 %v365, %v584
      %586 = vmatmul.f32.gmra.mxu0 %v375
      %v587 = vpop.f32.mrf.mxu0
      %v588 = vadd.f32 %v365, %v587
      %589 = vmatmul.f32.gmra.mxu0 %v378
      %v590 = vpop.f32.mrf.mxu0
      %v591 = vadd.f32 %v365, %v590
      %592 = vmatmul.f32.gmra.mxu0 %v381
      %v593 = vpop.f32.mrf.mxu0
      %v594 = vadd.f32 %v365, %v593
      %595 = vmatmul.f32.gmra.mxu0 %v384
      %v596 = vpop.f32.mrf.mxu0
      %v597 = vadd.f32 %v365, %v596
      %598 = vmatmul.f32.gmra.mxu0 %v387
      %v599 = vpop.f32.mrf.mxu0
      %v600 = vadd.f32 %v365, %v599
      %601 = vmatmul.f32.gmra.mxu0 %v390
      %v602 = vpop.f32.mrf.mxu0
      %v603 = vadd.f32 %v365, %v602
      %604 = vmatmul.f32.gmra.mxu0 %v393
      %v605 = vpop.f32.mrf.mxu0
      %v606 = vadd.f32 %v365, %v605
      %607 = vmatmul.f32.gmra.mxu0 %v396
      %v608 = vpop.f32.mrf.mxu0
      %v609 = vadd.f32 %v365, %v608
      %610 = vmatmul.f32.gmra.mxu0 %v399
      %v611 = vpop.f32.mrf.mxu0
      %v612 = vadd.f32 %v365, %v611
      %613 = vmatmul.f32.gmra.mxu0 %v402
      %v614 = vpop.f32.mrf.mxu0
      %v615 = vadd.f32 %v365, %v614
      %616 = vmatmul.f32.gmra.mxu0 %v405
      %v617 = vpop.f32.mrf.mxu0
      %v618 = vadd.f32 %v365, %v617
      %619 = vmatmul.f32.gmra.mxu0 %v408
      %v620 = vpop.f32.mrf.mxu0
      %v621 = vadd.f32 %v365, %v620
      %622 = vmatmul.f32.gmra.mxu0 %v411
      %v623 = vpop.f32.mrf.mxu0
      %v624 = vadd.f32 %v365, %v623
      %625 = vmatmul.f32.gmra.mxu0 %v414
      %v626 = vpop.f32.mrf.mxu0
      %v627 = vadd.f32 %v365, %v626
      %628 = vmatmul.f32.gmra.mxu0 %v417
      %v629 = vpop.f32.mrf.mxu0
      %v630 = vadd.f32 %v365, %v629
      %631 = vmatmul.f32.gmra.mxu0 %v420
      %v632 = vpop.f32.mrf.mxu0
      %v633 = vadd.f32 %v365, %v632
      %634 = vmatmul.f32.gmra.mxu0 %v423
      %v635 = vpop.f32.mrf.mxu0
      %v636 = vadd.f32 %v365, %v635
      %637 = vmatmul.f32.gmra.mxu0 %v426
      %v638 = vpop.f32.mrf.mxu0
      %v639 = vadd.f32 %v365, %v638
      %640 = vmatmul.f32.gmra.mxu0 %v429
      %v641 = vpop.f32.mrf.mxu0
      %v642 = vadd.f32 %v365, %v641
      %643 = vmatmul.f32.gmra.mxu0 %v432
      %v644 = vpop.f32.mrf.mxu0
      %v645 = vadd.f32 %v365, %v644
      %646 = vmatmul.f32.gmra.mxu0 %v435
      %v647 = vpop.f32.mrf.mxu0
      %v648 = vadd.f32 %v365, %v647
      %649 = vmatmul.f32.gmra.mxu0 %v438
      %v650 = vpop.f32.mrf.mxu0
      %v651 = vadd.f32 %v365, %v650
      %652 = vmatmul.f32.gmra.mxu0 %v441
      %v653 = vpop.f32.mrf.mxu0
      %v654 = vadd.f32 %v365, %v653
      %655 = vmatmul.f32.gmra.mxu0 %v444
      %v656 = vpop.f32.mrf.mxu0
      %v657 = vadd.f32 %v365, %v656
      %658 = vmatmul.f32.gmra.mxu0 %v447
      %v659 = vpop.f32.mrf.mxu0
      %v660 = vadd.f32 %v365, %v659
      %661 = vmatmul.f32.gmra.mxu0 %v450
      %v662 = vpop.f32.mrf.mxu0
      %v663 = vadd.f32 %v365, %v662
      %664 = vmatmul.f32.gmra.mxu0 %v453
      %v665 = vpop.f32.mrf.mxu0
      %v666 = vadd.f32 %v365, %v665
      %667 = vmatmul.f32.gmra.mxu0 %v456
      %v668 = vpop.f32.mrf.mxu0
      %v669 = vadd.f32 %v365, %v668
      %670 = vmatmul.f32.gmra.mxu0 %v459
      %v671 = vpop.f32.mrf.mxu0
      %v672 = vadd.f32 %v365, %v671
      %673 = vmatmul.f32.gmra.mxu0 %v462
      %v674 = vpop.f32.mrf.mxu0
      %v675 = vadd.f32 %v365, %v674
      %676 = vmatmul.f32.gmra.mxu0 %v465
      %v677 = vpop.f32.mrf.mxu0
      %v678 = vadd.f32 %v365, %v677
      %679 = vmatmul.f32.gmra.mxu0 %v468
      %v680 = vpop.f32.mrf.mxu0
      %v681 = vadd.f32 %v365, %v680
      %682 = vmatmul.f32.gmra.mxu0 %v471
      %v683 = vpop.f32.mrf.mxu0
      %v684 = vadd.f32 %v365, %v683
      %685 = vmatmul.f32.gmra.mxu0 %v474
      %v686 = vpop.f32.mrf.mxu0
      %v687 = vadd.f32 %v365, %v686
      %688 = vmatmul.f32.gmra.mxu0 %v477
      %v689 = vpop.f32.mrf.mxu0
      %v690 = vadd.f32 %v365, %v689
      %691 = vmatmul.f32.gmra.mxu0 %v480
      %v692 = vpop.f32.mrf.mxu0
      %v693 = vadd.f32 %v365, %v692
      %694 = vmatmul.f32.gmra.mxu0 %v483
      %v695 = vpop.f32.mrf.mxu0
      %v696 = vadd.f32 %v365, %v695
      %697 = vmatmul.f32.gmra.mxu0 %v486
      %v698 = vpop.f32.mrf.mxu0
      %v699 = vadd.f32 %v365, %v698
      %700 = vmatmul.f32.gmra.mxu0 %v489
      %v701 = vpop.f32.mrf.mxu0
      %v702 = vadd.f32 %v365, %v701
      %703 = vmatmul.f32.gmra.mxu0 %v492
      %v704 = vpop.f32.mrf.mxu0
      %v705 = vadd.f32 %v365, %v704
      %706 = vmatmul.f32.gmra.mxu0 %v495
      %v707 = vpop.f32.mrf.mxu0
      %v708 = vadd.f32 %v365, %v707
      %709 = vmatmul.f32.gmra.mxu0 %v498
      %v710 = vpop.f32.mrf.mxu0
      %v711 = vadd.f32 %v365, %v710
      %712 = vmatmul.f32.gmra.mxu0 %v501
      %v713 = vpop.f32.mrf.mxu0
      %v714 = vadd.f32 %v365, %v713
      %715 = vmatmul.f32.gmra.mxu0 %v504
      %v716 = vpop.f32.mrf.mxu0
      %v717 = vadd.f32 %v365, %v716
      %718 = vmatmul.f32.gmra.mxu0 %v507
      %v719 = vpop.f32.mrf.mxu0
      %v720 = vadd.f32 %v365, %v719
      %721 = vmatmul.f32.gmra.mxu0 %v510
      %v722 = vpop.f32.mrf.mxu0
      %v723 = vadd.f32 %v365, %v722
      %724 = vmatmul.f32.gmra.mxu0 %v513
      %v725 = vpop.f32.mrf.mxu0
      %v726 = vadd.f32 %v365, %v725
      %727 = vmatmul.f32.gmra.mxu0 %v516
      %v728 = vpop.f32.mrf.mxu0
      %v729 = vadd.f32 %v365, %v728
      %730 = vmatmul.f32.gmra.mxu0 %v519
      %v731 = vpop.f32.mrf.mxu0
      %v732 = vadd.f32 %v365, %v731
      %733 = vmatmul.f32.gmra.mxu0 %v522
      %v734 = vpop.f32.mrf.mxu0
      %v735 = vadd.f32 %v365, %v734
      %736 = vmatmul.f32.gmra.mxu0 %v525
      %v737 = vpop.f32.mrf.mxu0
      %v738 = vadd.f32 %v365, %v737
      %739 = vmatmul.f32.gmra.mxu0 %v528
      %v740 = vpop.f32.mrf.mxu0
      %v741 = vadd.f32 %v365, %v740
      %742 = vmatmul.f32.gmra.mxu0 %v531
      %v743 = vpop.f32.mrf.mxu0
      %v744 = vadd.f32 %v365, %v743
      %745 = vmatmul.f32.gmra.mxu0 %v534
      %v746 = vpop.f32.mrf.mxu0
      %v747 = vadd.f32 %v365, %v746
      %748 = vmatmul.f32.gmra.mxu0 %v537
      %v749 = vpop.f32.mrf.mxu0
      %v750 = vadd.f32 %v365, %v749
      %751 = vmatmul.f32.gmra.mxu0 %v540
      %v752 = vpop.f32.mrf.mxu0
      %v753 = vadd.f32 %v365, %v752
      %754 = vmatmul.f32.gmra.mxu0 %v543
      %v755 = vpop.f32.mrf.mxu0
      %v756 = vadd.f32 %v365, %v755
      %757 = vmatmul.f32.gmra.mxu0 %v546
      %v758 = vpop.f32.mrf.mxu0
      %v759 = vadd.f32 %v365, %v758
      %760 = vmatmul.f32.gmra.mxu0 %v549
      %v761 = vpop.f32.mrf.mxu0
      %v762 = vadd.f32 %v365, %v761
      %763 = vmatmul.f32.gmra.mxu0 %v552
      %v764 = vpop.f32.mrf.mxu0
      %v765 = vadd.f32 %v365, %v764
      %766 = vmatmul.f32.gmra.mxu0 %v555
      %v767 = vpop.f32.mrf.mxu0
      %v768 = vadd.f32 %v365, %v767
      %769 = vmatmul.f32.gmra.mxu0 %v558
      %v770 = vpop.f32.mrf.mxu0
      %v771 = vadd.f32 %v365, %v770
      %772 = vdwg.mxu0
      %v773 = vmax.f32 %v582, 0.0
      %v774 = vmax.f32 %v585, 0.0
      %v775 = vmax.f32 %v588, 0.0
      %v776 = vmax.f32 %v591, 0.0
      %v777 = vmax.f32 %v594, 0.0
      %v778 = vmax.f32 %v597, 0.0
      %v779 = vmax.f32 %v600, 0.0
      %v780 = vmax.f32 %v603, 0.0
      %v781 = vmax.f32 %v606, 0.0
      %v782 = vmax.f32 %v609, 0.0
      %v783 = vmax.f32 %v612, 0.0
      %v784 = vmax.f32 %v615, 0.0
      %v785 = vmax.f32 %v618, 0.0
      %v786 = vmax.f32 %v621, 0.0
      %v787 = vmax.f32 %v624, 0.0
      %v788 = vmax.f32 %v627, 0.0
      %v789 = vmax.f32 %v630, 0.0
      %v790 = vmax.f32 %v633, 0.0
      %v791 = vmax.f32 %v636, 0.0
      %v792 = vmax.f32 %v639, 0.0
      %v793 = vmax.f32 %v642, 0.0
      %v794 = vmax.f32 %v645, 0.0
      %v795 = vmax.f32 %v648, 0.0
      %v796 = vmax.f32 %v651, 0.0
      %v797 = vmax.f32 %v654, 0.0
      %v798 = vmax.f32 %v657, 0.0
      %v799 = vmax.f32 %v660, 0.0
      %v800 = vmax.f32 %v663, 0.0
      %v801 = vmax.f32 %v666, 0.0
      %v802 = vmax.f32 %v669, 0.0
      %v803 = vmax.f32 %v672, 0.0
      %v804 = vmax.f32 %v675, 0.0
      %v805 = vmax.f32 %v678, 0.0
      %v806 = vmax.f32 %v681, 0.0
      %v807 = vmax.f32 %v684, 0.0
      %v808 = vmax.f32 %v687, 0.0
      %v809 = vmax.f32 %v690, 0.0
      %v810 = vmax.f32 %v693, 0.0
      %v811 = vmax.f32 %v696, 0.0
      %v812 = vmax.f32 %v699, 0.0
      %v813 = vmax.f32 %v702, 0.0
      %v814 = vmax.f32 %v705, 0.0
      %v815 = vmax.f32 %v708, 0.0
      %v816 = vmax.f32 %v711, 0.0
      %v817 = vmax.f32 %v714, 0.0
      %v818 = vmax.f32 %v717, 0.0
      %v819 = vmax.f32 %v720, 0.0
      %v820 = vmax.f32 %v723, 0.0
      %v821 = vmax.f32 %v726, 0.0
      %v822 = vmax.f32 %v729, 0.0
      %v823 = vmax.f32 %v732, 0.0
      %v824 = vmax.f32 %v735, 0.0
      %v825 = vmax.f32 %v738, 0.0
      %v826 = vmax.f32 %v741, 0.0
      %v827 = vmax.f32 %v744, 0.0
      %v828 = vmax.f32 %v747, 0.0
      %v829 = vmax.f32 %v750, 0.0
      %v830 = vmax.f32 %v753, 0.0
      %v831 = vmax.f32 %v756, 0.0
      %v832 = vmax.f32 %v759, 0.0
      %v833 = vmax.f32 %v762, 0.0
      %v834 = vmax.f32 %v765, 0.0
      %v835 = vmax.f32 %v768, 0.0
      %v836 = vmax.f32 %v771, 0.0
      %v837 = vld [vmem:[%s284] sm:$0xff]
      %v838 = vld [vmem:[%s284 + $0x8] sm:$0xff]
      %v839 = vld [vmem:[%s287] sm:$0x1]
      %v841 = vperm.slane %v839, 0
      %vm843 = vcmask 130048
      %v845 = vsel %vm843, %v773, 0
      %v848 = vsel %vm843, %v774, 0
      %v851 = vsel %vm843, %v775, 0
      %v854 = vsel %vm843, %v776, 0
      %v857 = vsel %vm843, %v777, 0
      %v860 = vsel %vm843, %v778, 0
      %v863 = vsel %vm843, %v779, 0
      %v866 = vsel %vm843, %v780, 0
      %v869 = vsel %vm843, %v781, 0
      %v872 = vsel %vm843, %v782, 0
      %v875 = vsel %vm843, %v783, 0
      %v878 = vsel %vm843, %v784, 0
      %v881 = vsel %vm843, %v785, 0
      %v884 = vsel %vm843, %v786, 0
      %v887 = vsel %vm843, %v787, 0
      %v890 = vsel %vm843, %v788, 0
      %v893 = vsel %vm843, %v789, 0
      %v896 = vsel %vm843, %v790, 0
      %v899 = vsel %vm843, %v791, 0
      %v902 = vsel %vm843, %v792, 0
      %v905 = vsel %vm843, %v793, 0
      %v908 = vsel %vm843, %v794, 0
      %v911 = vsel %vm843, %v795, 0
      %v914 = vsel %vm843, %v796, 0
      %v917 = vsel %vm843, %v797, 0
      %v920 = vsel %vm843, %v798, 0
      %v923 = vsel %vm843, %v799, 0
      %v926 = vsel %vm843, %v800, 0
      %v929 = vsel %vm843, %v801, 0
      %v932 = vsel %vm843, %v802, 0
      %v935 = vsel %vm843, %v803, 0
      %v938 = vsel %vm843, %v804, 0
      %v941 = vsel %vm843, %v805, 0
      %v944 = vsel %vm843, %v806, 0
      %v947 = vsel %vm843, %v807, 0
      %v950 = vsel %vm843, %v808, 0
      %v953 = vsel %vm843, %v809, 0
      %v956 = vsel %vm843, %v810, 0
      %v959 = vsel %vm843, %v811, 0
      %v962 = vsel %vm843, %v812, 0
      %v965 = vsel %vm843, %v813, 0
      %v968 = vsel %vm843, %v814, 0
      %v971 = vsel %vm843, %v815, 0
      %v974 = vsel %vm843, %v816, 0
      %v977 = vsel %vm843, %v817, 0
      %v980 = vsel %vm843, %v818, 0
      %v983 = vsel %vm843, %v819, 0
      %v986 = vsel %vm843, %v820, 0
      %v989 = vsel %vm843, %v821, 0
      %v992 = vsel %vm843, %v822, 0
      %v995 = vsel %vm843, %v823, 0
      %v998 = vsel %vm843, %v824, 0
      %v1001 = vsel %vm843, %v825, 0
      %v1004 = vsel %vm843, %v826, 0
      %v1007 = vsel %vm843, %v827, 0
      %v1010 = vsel %vm843, %v828, 0
      %v1013 = vsel %vm843, %v829, 0
      %v1016 = vsel %vm843, %v830, 0
      %v1019 = vsel %vm843, %v831, 0
      %v1022 = vsel %vm843, %v832, 0
      %v1025 = vsel %vm843, %v833, 0
      %v1028 = vsel %vm843, %v834, 0
      %v1031 = vsel %vm843, %v835, 0
      %v1034 = vsel %vm843, %v836, 0
      %1036 = vmatpush.msra.mxu0 0.0
      %1037 = vmatpush.msra.mxu0 0.0
      %1038 = vmatpush.msra.mxu0 0.0
      %1039 = vmatpush.msra.mxu0 0.0
      %1040 = vmatpush.msra.mxu0 0.0
      %1041 = vmatpush.msra.mxu0 0.0
      %1042 = vmatpush.msra.mxu0 0.0
      %1043 = vmatpush.msra.mxu0 0.0
      %1044 = vmatpush.msra.mxu0 0.0
      %1045 = vmatpush.msra.mxu0 0.0
      %1046 = vmatpush.msra.mxu0 0.0
      %1047 = vmatpush.msra.mxu0 0.0
      %1048 = vmatpush.msra.mxu0 0.0
      %1049 = vmatpush.msra.mxu0 0.0
      %1050 = vmatpush.msra.mxu0 %v838
      %1051 = vmatpush.msra.mxu0 %v837
      %1052 = vmatmul.f32.gmra.mxu0 %v845
      %v1053 = vpop.f32.mrf.mxu0
      %v1054 = vadd.f32 %v841, %v1053
      %1055 = vmatmul.f32.gmra.mxu0 %v848
      %v1056 = vpop.f32.mrf.mxu0
      %v1057 = vadd.f32 %v841, %v1056
      %1058 = vmatmul.f32.gmra.mxu0 %v851
      %v1059 = vpop.f32.mrf.mxu0
      %v1060 = vadd.f32 %v841, %v1059
      %1061 = vmatmul.f32.gmra.mxu0 %v854
      %v1062 = vpop.f32.mrf.mxu0
      %v1063 = vadd.f32 %v841, %v1062
      %1064 = vmatmul.f32.gmra.mxu0 %v857
      %v1065 = vpop.f32.mrf.mxu0
      %v1066 = vadd.f32 %v841, %v1065
      %1067 = vmatmul.f32.gmra.mxu0 %v860
      %v1068 = vpop.f32.mrf.mxu0
      %v1069 = vadd.f32 %v841, %v1068
      %1070 = vmatmul.f32.gmra.mxu0 %v863
      %v1071 = vpop.f32.mrf.mxu0
      %v1072 = vadd.f32 %v841, %v1071
      %1073 = vmatmul.f32.gmra.mxu0 %v866
      %v1074 = vpop.f32.mrf.mxu0
      %v1075 = vadd.f32 %v841, %v1074
      %1076 = vmatmul.f32.gmra.mxu0 %v869
      %v1077 = vpop.f32.mrf.mxu0
      %v1078 = vadd.f32 %v841, %v1077
      %1079 = vmatmul.f32.gmra.mxu0 %v872
      %v1080 = vpop.f32.mrf.mxu0
      %v1081 = vadd.f32 %v841, %v1080
      %1082 = vmatmul.f32.gmra.mxu0 %v875
      %v1083 = vpop.f32.mrf.mxu0
      %v1084 = vadd.f32 %v841, %v1083
      %1085 = vmatmul.f32.gmra.mxu0 %v878
      %v1086 = vpop.f32.mrf.mxu0
      %v1087 = vadd.f32 %v841, %v1086
      %1088 = vmatmul.f32.gmra.mxu0 %v881
      %v1089 = vpop.f32.mrf.mxu0
      %v1090 = vadd.f32 %v841, %v1089
      %1091 = vmatmul.f32.gmra.mxu0 %v884
      %v1092 = vpop.f32.mrf.mxu0
      %v1093 = vadd.f32 %v841, %v1092
      %1094 = vmatmul.f32.gmra.mxu0 %v887
      %v1095 = vpop.f32.mrf.mxu0
      %v1096 = vadd.f32 %v841, %v1095
      %1097 = vmatmul.f32.gmra.mxu0 %v890
      %v1098 = vpop.f32.mrf.mxu0
      %v1099 = vadd.f32 %v841, %v1098
      %1100 = vmatmul.f32.gmra.mxu0 %v893
      %v1101 = vpop.f32.mrf.mxu0
      %v1102 = vadd.f32 %v841, %v1101
      %1103 = vmatmul.f32.gmra.mxu0 %v896
      %v1104 = vpop.f32.mrf.mxu0
      %v1105 = vadd.f32 %v841, %v1104
      %1106 = vmatmul.f32.gmra.mxu0 %v899
      %v1107 = vpop.f32.mrf.mxu0
      %v1108 = vadd.f32 %v841, %v1107
      %1109 = vmatmul.f32.gmra.mxu0 %v902
      %v1110 = vpop.f32.mrf.mxu0
      %v1111 = vadd.f32 %v841, %v1110
      %1112 = vmatmul.f32.gmra.mxu0 %v905
      %v1113 = vpop.f32.mrf.mxu0
      %v1114 = vadd.f32 %v841, %v1113
      %1115 = vmatmul.f32.gmra.mxu0 %v908
      %v1116 = vpop.f32.mrf.mxu0
      %v1117 = vadd.f32 %v841, %v1116
      %1118 = vmatmul.f32.gmra.mxu0 %v911
      %v1119 = vpop.f32.mrf.mxu0
      %v1120 = vadd.f32 %v841, %v1119
      %1121 = vmatmul.f32.gmra.mxu0 %v914
      %v1122 = vpop.f32.mrf.mxu0
      %v1123 = vadd.f32 %v841, %v1122
      %1124 = vmatmul.f32.gmra.mxu0 %v917
      %v1125 = vpop.f32.mrf.mxu0
      %v1126 = vadd.f32 %v841, %v1125
      %1127 = vmatmul.f32.gmra.mxu0 %v920
      %v1128 = vpop.f32.mrf.mxu0
      %v1129 = vadd.f32 %v841, %v1128
      %1130 = vmatmul.f32.gmra.mxu0 %v923
      %v1131 = vpop.f32.mrf.mxu0
      %v1132 = vadd.f32 %v841, %v1131
      %1133 = vmatmul.f32.gmra.mxu0 %v926
      %v1134 = vpop.f32.mrf.mxu0
      %v1135 = vadd.f32 %v841, %v1134
      %1136 = vmatmul.f32.gmra.mxu0 %v929
      %v1137 = vpop.f32.mrf.mxu0
      %v1138 = vadd.f32 %v841, %v1137
      %1139 = vmatmul.f32.gmra.mxu0 %v932
      %v1140 = vpop.f32.mrf.mxu0
      %v1141 = vadd.f32 %v841, %v1140
      %1142 = vmatmul.f32.gmra.mxu0 %v935
      %v1143 = vpop.f32.mrf.mxu0
      %v1144 = vadd.f32 %v841, %v1143
      %1145 = vmatmul.f32.gmra.mxu0 %v938
      %v1146 = vpop.f32.mrf.mxu0
      %v1147 = vadd.f32 %v841, %v1146
      %1148 = vmatmul.f32.gmra.mxu0 %v941
      %v1149 = vpop.f32.mrf.mxu0
      %v1150 = vadd.f32 %v841, %v1149
      %1151 = vmatmul.f32.gmra.mxu0 %v944
      %v1152 = vpop.f32.mrf.mxu0
      %v1153 = vadd.f32 %v841, %v1152
      %1154 = vmatmul.f32.gmra.mxu0 %v947
      %v1155 = vpop.f32.mrf.mxu0
      %v1156 = vadd.f32 %v841, %v1155
      %1157 = vmatmul.f32.gmra.mxu0 %v950
      %v1158 = vpop.f32.mrf.mxu0
      %v1159 = vadd.f32 %v841, %v1158
      %1160 = vmatmul.f32.gmra.mxu0 %v953
      %v1161 = vpop.f32.mrf.mxu0
      %v1162 = vadd.f32 %v841, %v1161
      %1163 = vmatmul.f32.gmra.mxu0 %v956
      %v1164 = vpop.f32.mrf.mxu0
      %v1165 = vadd.f32 %v841, %v1164
      %1166 = vmatmul.f32.gmra.mxu0 %v959
      %v1167 = vpop.f32.mrf.mxu0
      %v1168 = vadd.f32 %v841, %v1167
      %1169 = vmatmul.f32.gmra.mxu0 %v962
      %v1170 = vpop.f32.mrf.mxu0
      %v1171 = vadd.f32 %v841, %v1170
      %1172 = vmatmul.f32.gmra.mxu0 %v965
      %v1173 = vpop.f32.mrf.mxu0
      %v1174 = vadd.f32 %v841, %v1173
      %1175 = vmatmul.f32.gmra.mxu0 %v968
      %v1176 = vpop.f32.mrf.mxu0
      %v1177 = vadd.f32 %v841, %v1176
      %1178 = vmatmul.f32.gmra.mxu0 %v971
      %v1179 = vpop.f32.mrf.mxu0
      %v1180 = vadd.f32 %v841, %v1179
      %1181 = vmatmul.f32.gmra.mxu0 %v974
      %v1182 = vpop.f32.mrf.mxu0
      %v1183 = vadd.f32 %v841, %v1182
      %1184 = vmatmul.f32.gmra.mxu0 %v977
      %v1185 = vpop.f32.mrf.mxu0
      %v1186 = vadd.f32 %v841, %v1185
      %1187 = vmatmul.f32.gmra.mxu0 %v980
      %v1188 = vpop.f32.mrf.mxu0
      %v1189 = vadd.f32 %v841, %v1188
      %1190 = vmatmul.f32.gmra.mxu0 %v983
      %v1191 = vpop.f32.mrf.mxu0
      %v1192 = vadd.f32 %v841, %v1191
      %1193 = vmatmul.f32.gmra.mxu0 %v986
      %v1194 = vpop.f32.mrf.mxu0
      %v1195 = vadd.f32 %v841, %v1194
      %1196 = vmatmul.f32.gmra.mxu0 %v989
      %v1197 = vpop.f32.mrf.mxu0
      %v1198 = vadd.f32 %v841, %v1197
      %1199 = vmatmul.f32.gmra.mxu0 %v992
      %v1200 = vpop.f32.mrf.mxu0
      %v1201 = vadd.f32 %v841, %v1200
      %1202 = vmatmul.f32.gmra.mxu0 %v995
      %v1203 = vpop.f32.mrf.mxu0
      %v1204 = vadd.f32 %v841, %v1203
      %1205 = vmatmul.f32.gmra.mxu0 %v998
      %v1206 = vpop.f32.mrf.mxu0
      %v1207 = vadd.f32 %v841, %v1206
      %1208 = vmatmul.f32.gmra.mxu0 %v1001
      %v1209 = vpop.f32.mrf.mxu0
      %v1210 = vadd.f32 %v841, %v1209
      %1211 = vmatmul.f32.gmra.mxu0 %v1004
      %v1212 = vpop.f32.mrf.mxu0
      %v1213 = vadd.f32 %v841, %v1212
      %1214 = vmatmul.f32.gmra.mxu0 %v1007
      %v1215 = vpop.f32.mrf.mxu0
      %v1216 = vadd.f32 %v841, %v1215
      %1217 = vmatmul.f32.gmra.mxu0 %v1010
      %v1218 = vpop.f32.mrf.mxu0
      %v1219 = vadd.f32 %v841, %v1218
      %1220 = vmatmul.f32.gmra.mxu0 %v1013
      %v1221 = vpop.f32.mrf.mxu0
      %v1222 = vadd.f32 %v841, %v1221
      %1223 = vmatmul.f32.gmra.mxu0 %v1016
      %v1224 = vpop.f32.mrf.mxu0
      %v1225 = vadd.f32 %v841, %v1224
      %1226 = vmatmul.f32.gmra.mxu0 %v1019
      %v1227 = vpop.f32.mrf.mxu0
      %v1228 = vadd.f32 %v841, %v1227
      %1229 = vmatmul.f32.gmra.mxu0 %v1022
      %v1230 = vpop.f32.mrf.mxu0
      %v1231 = vadd.f32 %v841, %v1230
      %1232 = vmatmul.f32.gmra.mxu0 %v1025
      %v1233 = vpop.f32.mrf.mxu0
      %v1234 = vadd.f32 %v841, %v1233
      %1235 = vmatmul.f32.gmra.mxu0 %v1028
      %v1236 = vpop.f32.mrf.mxu0
      %v1237 = vadd.f32 %v841, %v1236
      %1238 = vmatmul.f32.gmra.mxu0 %v1031
      %v1239 = vpop.f32.mrf.mxu0
      %v1240 = vadd.f32 %v841, %v1239
      %1241 = vmatmul.f32.gmra.mxu0 %v1034
      %v1242 = vpop.f32.mrf.mxu0
      %v1243 = vadd.f32 %v841, %v1242
      %1244 = vdwg.mxu0
      %vm1245 = vcmask 261120
      %v1246 = vsel %vm1245, %v1054, 0.0
      %1247 = vadd.xlane.f32.xlu0 %v1246
      %v1248 = vpop.xlane.xlu0 %1247
      %v1249 = vsel %vm1245, %v1057, 0.0
      %1250 = vadd.xlane.f32.xlu0 %v1249
      %v1251 = vpop.xlane.xlu0 %1250
      %v1252 = vsel %vm1245, %v1060, 0.0
      %1253 = vadd.xlane.f32.xlu0 %v1252
      %v1254 = vpop.xlane.xlu0 %1253
      %v1255 = vsel %vm1245, %v1063, 0.0
      %1256 = vadd.xlane.f32.xlu0 %v1255
      %v1257 = vpop.xlane.xlu0 %1256
      %v1258 = vsel %vm1245, %v1066, 0.0
      %1259 = vadd.xlane.f32.xlu0 %v1258
      %v1260 = vpop.xlane.xlu0 %1259
      %v1261 = vsel %vm1245, %v1069, 0.0
      %1262 = vadd.xlane.f32.xlu0 %v1261
      %v1263 = vpop.xlane.xlu0 %1262
      %v1264 = vsel %vm1245, %v1072, 0.0
      %1265 = vadd.xlane.f32.xlu0 %v1264
      %v1266 = vpop.xlane.xlu0 %1265
      %v1267 = vsel %vm1245, %v1075, 0.0
      %1268 = vadd.xlane.f32.xlu0 %v1267
      %v1269 = vpop.xlane.xlu0 %1268
      %v1270 = vsel %vm1245, %v1078, 0.0
      %1271 = vadd.xlane.f32.xlu0 %v1270
      %v1272 = vpop.xlane.xlu0 %1271
      %v1273 = vsel %vm1245, %v1081, 0.0
      %1274 = vadd.xlane.f32.xlu0 %v1273
      %v1275 = vpop.xlane.xlu0 %1274
      %v1276 = vsel %vm1245, %v1084, 0.0
      %1277 = vadd.xlane.f32.xlu0 %v1276
      %v1278 = vpop.xlane.xlu0 %1277
      %v1279 = vsel %vm1245, %v1087, 0.0
      %1280 = vadd.xlane.f32.xlu0 %v1279
      %v1281 = vpop.xlane.xlu0 %1280
      %v1282 = vsel %vm1245, %v1090, 0.0
      %1283 = vadd.xlane.f32.xlu0 %v1282
      %v1284 = vpop.xlane.xlu0 %1283
      %v1285 = vsel %vm1245, %v1093, 0.0
      %1286 = vadd.xlane.f32.xlu0 %v1285
      %v1287 = vpop.xlane.xlu0 %1286
      %v1288 = vsel %vm1245, %v1096, 0.0
      %1289 = vadd.xlane.f32.xlu0 %v1288
      %v1290 = vpop.xlane.xlu0 %1289
      %v1291 = vsel %vm1245, %v1099, 0.0
      %1292 = vadd.xlane.f32.xlu0 %v1291
      %v1293 = vpop.xlane.xlu0 %1292
      %v1294 = vsel %vm1245, %v1102, 0.0
      %1295 = vadd.xlane.f32.xlu0 %v1294
      %v1296 = vpop.xlane.xlu0 %1295
      %v1297 = vsel %vm1245, %v1105, 0.0
      %1298 = vadd.xlane.f32.xlu0 %v1297
      %v1299 = vpop.xlane.xlu0 %1298
      %v1300 = vsel %vm1245, %v1108, 0.0
      %1301 = vadd.xlane.f32.xlu0 %v1300
      %v1302 = vpop.xlane.xlu0 %1301
      %v1303 = vsel %vm1245, %v1111, 0.0
      %1304 = vadd.xlane.f32.xlu0 %v1303
      %v1305 = vpop.xlane.xlu0 %1304
      %v1306 = vsel %vm1245, %v1114, 0.0
      %1307 = vadd.xlane.f32.xlu0 %v1306
      %v1308 = vpop.xlane.xlu0 %1307
      %v1309 = vsel %vm1245, %v1117, 0.0
      %1310 = vadd.xlane.f32.xlu0 %v1309
      %v1311 = vpop.xlane.xlu0 %1310
      %v1312 = vsel %vm1245, %v1120, 0.0
      %1313 = vadd.xlane.f32.xlu0 %v1312
      %v1314 = vpop.xlane.xlu0 %1313
      %v1315 = vsel %vm1245, %v1123, 0.0
      %1316 = vadd.xlane.f32.xlu0 %v1315
      %v1317 = vpop.xlane.xlu0 %1316
      %v1318 = vsel %vm1245, %v1126, 0.0
      %1319 = vadd.xlane.f32.xlu0 %v1318
      %v1320 = vpop.xlane.xlu0 %1319
      %v1321 = vsel %vm1245, %v1129, 0.0
      %1322 = vadd.xlane.f32.xlu0 %v1321
      %v1323 = vpop.xlane.xlu0 %1322
      %v1324 = vsel %vm1245, %v1132, 0.0
      %1325 = vadd.xlane.f32.xlu0 %v1324
      %v1326 = vpop.xlane.xlu0 %1325
      %v1327 = vsel %vm1245, %v1135, 0.0
      %1328 = vadd.xlane.f32.xlu0 %v1327
      %v1329 = vpop.xlane.xlu0 %1328
      %v1330 = vsel %vm1245, %v1138, 0.0
      %1331 = vadd.xlane.f32.xlu0 %v1330
      %v1332 = vpop.xlane.xlu0 %1331
      %v1333 = vsel %vm1245, %v1141, 0.0
      %1334 = vadd.xlane.f32.xlu0 %v1333
      %v1335 = vpop.xlane.xlu0 %1334
      %v1336 = vsel %vm1245, %v1144, 0.0
      %1337 = vadd.xlane.f32.xlu0 %v1336
      %v1338 = vpop.xlane.xlu0 %1337
      %v1339 = vsel %vm1245, %v1147, 0.0
      %1340 = vadd.xlane.f32.xlu0 %v1339
      %v1341 = vpop.xlane.xlu0 %1340
      %v1342 = vsel %vm1245, %v1150, 0.0
      %1343 = vadd.xlane.f32.xlu0 %v1342
      %v1344 = vpop.xlane.xlu0 %1343
      %v1345 = vsel %vm1245, %v1153, 0.0
      %1346 = vadd.xlane.f32.xlu0 %v1345
      %v1347 = vpop.xlane.xlu0 %1346
      %v1348 = vsel %vm1245, %v1156, 0.0
      %1349 = vadd.xlane.f32.xlu0 %v1348
      %v1350 = vpop.xlane.xlu0 %1349
      %v1351 = vsel %vm1245, %v1159, 0.0
      %1352 = vadd.xlane.f32.xlu0 %v1351
      %v1353 = vpop.xlane.xlu0 %1352
      %v1354 = vsel %vm1245, %v1162, 0.0
      %1355 = vadd.xlane.f32.xlu0 %v1354
      %v1356 = vpop.xlane.xlu0 %1355
      %v1357 = vsel %vm1245, %v1165, 0.0
      %1358 = vadd.xlane.f32.xlu0 %v1357
      %v1359 = vpop.xlane.xlu0 %1358
      %v1360 = vsel %vm1245, %v1168, 0.0
      %1361 = vadd.xlane.f32.xlu0 %v1360
      %v1362 = vpop.xlane.xlu0 %1361
      %v1363 = vsel %vm1245, %v1171, 0.0
      %1364 = vadd.xlane.f32.xlu0 %v1363
      %v1365 = vpop.xlane.xlu0 %1364
      %v1366 = vsel %vm1245, %v1174, 0.0
      %1367 = vadd.xlane.f32.xlu0 %v1366
      %v1368 = vpop.xlane.xlu0 %1367
      %v1369 = vsel %vm1245, %v1177, 0.0
      %1370 = vadd.xlane.f32.xlu0 %v1369
      %v1371 = vpop.xlane.xlu0 %1370
      %v1372 = vsel %vm1245, %v1180, 0.0
      %1373 = vadd.xlane.f32.xlu0 %v1372
      %v1374 = vpop.xlane.xlu0 %1373
      %v1375 = vsel %vm1245, %v1183, 0.0
      %1376 = vadd.xlane.f32.xlu0 %v1375
      %v1377 = vpop.xlane.xlu0 %1376
      %v1378 = vsel %vm1245, %v1186, 0.0
      %1379 = vadd.xlane.f32.xlu0 %v1378
      %v1380 = vpop.xlane.xlu0 %1379
      %v1381 = vsel %vm1245, %v1189, 0.0
      %1382 = vadd.xlane.f32.xlu0 %v1381
      %v1383 = vpop.xlane.xlu0 %1382
      %v1384 = vsel %vm1245, %v1192, 0.0
      %1385 = vadd.xlane.f32.xlu0 %v1384
      %v1386 = vpop.xlane.xlu0 %1385
      %v1387 = vsel %vm1245, %v1195, 0.0
      %1388 = vadd.xlane.f32.xlu0 %v1387
      %v1389 = vpop.xlane.xlu0 %1388
      %v1390 = vsel %vm1245, %v1198, 0.0
      %1391 = vadd.xlane.f32.xlu0 %v1390
      %v1392 = vpop.xlane.xlu0 %1391
      %v1393 = vsel %vm1245, %v1201, 0.0
      %1394 = vadd.xlane.f32.xlu0 %v1393
      %v1395 = vpop.xlane.xlu0 %1394
      %v1396 = vsel %vm1245, %v1204, 0.0
      %1397 = vadd.xlane.f32.xlu0 %v1396
      %v1398 = vpop.xlane.xlu0 %1397
      %v1399 = vsel %vm1245, %v1207, 0.0
      %1400 = vadd.xlane.f32.xlu0 %v1399
      %v1401 = vpop.xlane.xlu0 %1400
      %v1402 = vsel %vm1245, %v1210, 0.0
      %1403 = vadd.xlane.f32.xlu0 %v1402
      %v1404 = vpop.xlane.xlu0 %1403
      %v1405 = vsel %vm1245, %v1213, 0.0
      %1406 = vadd.xlane.f32.xlu0 %v1405
      %v1407 = vpop.xlane.xlu0 %1406
      %v1408 = vsel %vm1245, %v1216, 0.0
      %1409 = vadd.xlane.f32.xlu0 %v1408
      %v1410 = vpop.xlane.xlu0 %1409
      %v1411 = vsel %vm1245, %v1219, 0.0
      %1412 = vadd.xlane.f32.xlu0 %v1411
      %v1413 = vpop.xlane.xlu0 %1412
      %v1414 = vsel %vm1245, %v1222, 0.0
      %1415 = vadd.xlane.f32.xlu0 %v1414
      %v1416 = vpop.xlane.xlu0 %1415
      %v1417 = vsel %vm1245, %v1225, 0.0
      %1418 = vadd.xlane.f32.xlu0 %v1417
      %v1419 = vpop.xlane.xlu0 %1418
      %v1420 = vsel %vm1245, %v1228, 0.0
      %1421 = vadd.xlane.f32.xlu0 %v1420
      %v1422 = vpop.xlane.xlu0 %1421
      %v1423 = vsel %vm1245, %v1231, 0.0
      %1424 = vadd.xlane.f32.xlu0 %v1423
      %v1425 = vpop.xlane.xlu0 %1424
      %v1426 = vsel %vm1245, %v1234, 0.0
      %1427 = vadd.xlane.f32.xlu0 %v1426
      %v1428 = vpop.xlane.xlu0 %1427
      %v1429 = vsel %vm1245, %v1237, 0.0
      %1430 = vadd.xlane.f32.xlu0 %v1429
      %v1431 = vpop.xlane.xlu0 %1430
      %v1432 = vsel %vm1245, %v1240, 0.0
      %1433 = vadd.xlane.f32.xlu0 %v1432
      %v1434 = vpop.xlane.xlu0 %1433
      %v1435 = vsel %vm1245, %v1243, 0.0
      %1436 = vadd.xlane.f32.xlu0 %v1435
      %v1437 = vpop.xlane.xlu0 %1436
      %v1438 = vrcp.pop 32.0
      %v1439 = vmul.f32 32.0, %v1438
      %v1440 = vsub.f32 1.0, %v1439
      %v1441 = vmul.f32 %v1438, %v1440
      %v1442 = vadd.f32 %v1438, %v1441
      %vm1443 = vweird.f32 %v1438
      %v1444 = vsel %vm1443, %v1438, %v1442
      %v1445 = vmul.f32 %v1248, %v1444
      %v1446 = vmul.f32 %v1251, %v1444
      %v1447 = vmul.f32 %v1254, %v1444
      %v1448 = vmul.f32 %v1257, %v1444
      %v1449 = vmul.f32 %v1260, %v1444
      %v1450 = vmul.f32 %v1263, %v1444
      %v1451 = vmul.f32 %v1266, %v1444
      %v1452 = vmul.f32 %v1269, %v1444
      %v1453 = vmul.f32 %v1272, %v1444
      %v1454 = vmul.f32 %v1275, %v1444
      %v1455 = vmul.f32 %v1278, %v1444
      %v1456 = vmul.f32 %v1281, %v1444
      %v1457 = vmul.f32 %v1284, %v1444
      %v1458 = vmul.f32 %v1287, %v1444
      %v1459 = vmul.f32 %v1290, %v1444
      %v1460 = vmul.f32 %v1293, %v1444
      %v1461 = vmul.f32 %v1296, %v1444
      %v1462 = vmul.f32 %v1299, %v1444
      %v1463 = vmul.f32 %v1302, %v1444
      %v1464 = vmul.f32 %v1305, %v1444
      %v1465 = vmul.f32 %v1308, %v1444
      %v1466 = vmul.f32 %v1311, %v1444
      %v1467 = vmul.f32 %v1314, %v1444
      %v1468 = vmul.f32 %v1317, %v1444
      %v1469 = vmul.f32 %v1320, %v1444
      %v1470 = vmul.f32 %v1323, %v1444
      %v1471 = vmul.f32 %v1326, %v1444
      %v1472 = vmul.f32 %v1329, %v1444
      %v1473 = vmul.f32 %v1332, %v1444
      %v1474 = vmul.f32 %v1335, %v1444
      %v1475 = vmul.f32 %v1338, %v1444
      %v1476 = vmul.f32 %v1341, %v1444
      %v1477 = vmul.f32 %v1344, %v1444
      %v1478 = vmul.f32 %v1347, %v1444
      %v1479 = vmul.f32 %v1350, %v1444
      %v1480 = vmul.f32 %v1353, %v1444
      %v1481 = vmul.f32 %v1356, %v1444
      %v1482 = vmul.f32 %v1359, %v1444
      %v1483 = vmul.f32 %v1362, %v1444
      %v1484 = vmul.f32 %v1365, %v1444
      %v1485 = vmul.f32 %v1368, %v1444
      %v1486 = vmul.f32 %v1371, %v1444
      %v1487 = vmul.f32 %v1374, %v1444
      %v1488 = vmul.f32 %v1377, %v1444
      %v1489 = vmul.f32 %v1380, %v1444
      %v1490 = vmul.f32 %v1383, %v1444
      %v1491 = vmul.f32 %v1386, %v1444
      %v1492 = vmul.f32 %v1389, %v1444
      %v1493 = vmul.f32 %v1392, %v1444
      %v1494 = vmul.f32 %v1395, %v1444
      %v1495 = vmul.f32 %v1398, %v1444
      %v1496 = vmul.f32 %v1401, %v1444
      %v1497 = vmul.f32 %v1404, %v1444
      %v1498 = vmul.f32 %v1407, %v1444
      %v1499 = vmul.f32 %v1410, %v1444
      %v1500 = vmul.f32 %v1413, %v1444
      %v1501 = vmul.f32 %v1416, %v1444
      %v1502 = vmul.f32 %v1419, %v1444
      %v1503 = vmul.f32 %v1422, %v1444
      %v1504 = vmul.f32 %v1425, %v1444
      %v1505 = vmul.f32 %v1428, %v1444
      %v1506 = vmul.f32 %v1431, %v1444
      %v1507 = vmul.f32 %v1434, %v1444
      %v1508 = vmul.f32 %v1437, %v1444
      %v1509 = vsub.f32 %v1054, %v1445
      %v1510 = vsub.f32 %v1057, %v1446
      %v1511 = vsub.f32 %v1060, %v1447
      %v1512 = vsub.f32 %v1063, %v1448
      %v1513 = vsub.f32 %v1066, %v1449
      %v1514 = vsub.f32 %v1069, %v1450
      %v1515 = vsub.f32 %v1072, %v1451
      %v1516 = vsub.f32 %v1075, %v1452
      %v1517 = vsub.f32 %v1078, %v1453
      %v1518 = vsub.f32 %v1081, %v1454
      %v1519 = vsub.f32 %v1084, %v1455
      %v1520 = vsub.f32 %v1087, %v1456
      %v1521 = vsub.f32 %v1090, %v1457
      %v1522 = vsub.f32 %v1093, %v1458
      %v1523 = vsub.f32 %v1096, %v1459
      %v1524 = vsub.f32 %v1099, %v1460
      %v1525 = vsub.f32 %v1102, %v1461
      %v1526 = vsub.f32 %v1105, %v1462
      %v1527 = vsub.f32 %v1108, %v1463
      %v1528 = vsub.f32 %v1111, %v1464
      %v1529 = vsub.f32 %v1114, %v1465
      %v1530 = vsub.f32 %v1117, %v1466
      %v1531 = vsub.f32 %v1120, %v1467
      %v1532 = vsub.f32 %v1123, %v1468
      %v1533 = vsub.f32 %v1126, %v1469
      %v1534 = vsub.f32 %v1129, %v1470
      %v1535 = vsub.f32 %v1132, %v1471
      %v1536 = vsub.f32 %v1135, %v1472
      %v1537 = vsub.f32 %v1138, %v1473
      %v1538 = vsub.f32 %v1141, %v1474
      %v1539 = vsub.f32 %v1144, %v1475
      %v1540 = vsub.f32 %v1147, %v1476
      %v1541 = vsub.f32 %v1150, %v1477
      %v1542 = vsub.f32 %v1153, %v1478
      %v1543 = vsub.f32 %v1156, %v1479
      %v1544 = vsub.f32 %v1159, %v1480
      %v1545 = vsub.f32 %v1162, %v1481
      %v1546 = vsub.f32 %v1165, %v1482
      %v1547 = vsub.f32 %v1168, %v1483
      %v1548 = vsub.f32 %v1171, %v1484
      %v1549 = vsub.f32 %v1174, %v1485
      %v1550 = vsub.f32 %v1177, %v1486
      %v1551 = vsub.f32 %v1180, %v1487
      %v1552 = vsub.f32 %v1183, %v1488
      %v1553 = vsub.f32 %v1186, %v1489
      %v1554 = vsub.f32 %v1189, %v1490
      %v1555 = vsub.f32 %v1192, %v1491
      %v1556 = vsub.f32 %v1195, %v1492
      %v1557 = vsub.f32 %v1198, %v1493
      %v1558 = vsub.f32 %v1201, %v1494
      %v1559 = vsub.f32 %v1204, %v1495
      %v1560 = vsub.f32 %v1207, %v1496
      %v1561 = vsub.f32 %v1210, %v1497
      %v1562 = vsub.f32 %v1213, %v1498
      %v1563 = vsub.f32 %v1216, %v1499
      %v1564 = vsub.f32 %v1219, %v1500
      %v1565 = vsub.f32 %v1222, %v1501
      %v1566 = vsub.f32 %v1225, %v1502
      %v1567 = vsub.f32 %v1228, %v1503
      %v1568 = vsub.f32 %v1231, %v1504
      %v1569 = vsub.f32 %v1234, %v1505
      %v1570 = vsub.f32 %v1237, %v1506
      %v1571 = vsub.f32 %v1240, %v1507
      %v1572 = vsub.f32 %v1243, %v1508
      %v1573 = vmul.f32 %v1509, %v1509
      %v1574 = vmul.f32 %v1510, %v1510
      %v1575 = vmul.f32 %v1511, %v1511
      %v1576 = vmul.f32 %v1512, %v1512
      %v1577 = vmul.f32 %v1513, %v1513
      %v1578 = vmul.f32 %v1514, %v1514
      %v1579 = vmul.f32 %v1515, %v1515
      %v1580 = vmul.f32 %v1516, %v1516
      %v1581 = vmul.f32 %v1517, %v1517
      %v1582 = vmul.f32 %v1518, %v1518
      %v1583 = vmul.f32 %v1519, %v1519
      %v1584 = vmul.f32 %v1520, %v1520
      %v1585 = vmul.f32 %v1521, %v1521
      %v1586 = vmul.f32 %v1522, %v1522
      %v1587 = vmul.f32 %v1523, %v1523
      %v1588 = vmul.f32 %v1524, %v1524
      %v1589 = vmul.f32 %v1525, %v1525
      %v1590 = vmul.f32 %v1526, %v1526
      %v1591 = vmul.f32 %v1527, %v1527
      %v1592 = vmul.f32 %v1528, %v1528
      %v1593 = vmul.f32 %v1529, %v1529
      %v1594 = vmul.f32 %v1530, %v1530
      %v1595 = vmul.f32 %v1531, %v1531
      %v1596 = vmul.f32 %v1532, %v1532
      %v1597 = vmul.f32 %v1533, %v1533
      %v1598 = vmul.f32 %v1534, %v1534
      %v1599 = vmul.f32 %v1535, %v1535
      %v1600 = vmul.f32 %v1536, %v1536
      %v1601 = vmul.f32 %v1537, %v1537
      %v1602 = vmul.f32 %v1538, %v1538
      %v1603 = vmul.f32 %v1539, %v1539
      %v1604 = vmul.f32 %v1540, %v1540
      %v1605 = vmul.f32 %v1541, %v1541
      %v1606 = vmul.f32 %v1542, %v1542
      %v1607 = vmul.f32 %v1543, %v1543
      %v1608 = vmul.f32 %v1544, %v1544
      %v1609 = vmul.f32 %v1545, %v1545
      %v1610 = vmul.f32 %v1546, %v1546
      %v1611 = vmul.f32 %v1547, %v1547
      %v1612 = vmul.f32 %v1548, %v1548
      %v1613 = vmul.f32 %v1549, %v1549
      %v1614 = vmul.f32 %v1550, %v1550
      %v1615 = vmul.f32 %v1551, %v1551
      %v1616 = vmul.f32 %v1552, %v1552
      %v1617 = vmul.f32 %v1553, %v1553
      %v1618 = vmul.f32 %v1554, %v1554
      %v1619 = vmul.f32 %v1555, %v1555
      %v1620 = vmul.f32 %v1556, %v1556
      %v1621 = vmul.f32 %v1557, %v1557
      %v1622 = vmul.f32 %v1558, %v1558
      %v1623 = vmul.f32 %v1559, %v1559
      %v1624 = vmul.f32 %v1560, %v1560
      %v1625 = vmul.f32 %v1561, %v1561
      %v1626 = vmul.f32 %v1562, %v1562
      %v1627 = vmul.f32 %v1563, %v1563
      %v1628 = vmul.f32 %v1564, %v1564
      %v1629 = vmul.f32 %v1565, %v1565
      %v1630 = vmul.f32 %v1566, %v1566
      %v1631 = vmul.f32 %v1567, %v1567
      %v1632 = vmul.f32 %v1568, %v1568
      %v1633 = vmul.f32 %v1569, %v1569
      %v1634 = vmul.f32 %v1570, %v1570
      %v1635 = vmul.f32 %v1571, %v1571
      %v1636 = vmul.f32 %v1572, %v1572
      %v1637 = vsel %vm1245, %v1573, 0.0
      %1638 = vadd.xlane.f32.xlu0 %v1637
      %v1639 = vpop.xlane.xlu0 %1638
      %v1640 = vsel %vm1245, %v1574, 0.0
      %1641 = vadd.xlane.f32.xlu0 %v1640
      %v1642 = vpop.xlane.xlu0 %1641
      %v1643 = vsel %vm1245, %v1575, 0.0
      %1644 = vadd.xlane.f32.xlu0 %v1643
      %v1645 = vpop.xlane.xlu0 %1644
      %v1646 = vsel %vm1245, %v1576, 0.0
      %1647 = vadd.xlane.f32.xlu0 %v1646
      %v1648 = vpop.xlane.xlu0 %1647
      %v1649 = vsel %vm1245, %v1577, 0.0
      %1650 = vadd.xlane.f32.xlu0 %v1649
      %v1651 = vpop.xlane.xlu0 %1650
      %v1652 = vsel %vm1245, %v1578, 0.0
      %1653 = vadd.xlane.f32.xlu0 %v1652
      %v1654 = vpop.xlane.xlu0 %1653
      %v1655 = vsel %vm1245, %v1579, 0.0
      %1656 = vadd.xlane.f32.xlu0 %v1655
      %v1657 = vpop.xlane.xlu0 %1656
      %v1658 = vsel %vm1245, %v1580, 0.0
      %1659 = vadd.xlane.f32.xlu0 %v1658
      %v1660 = vpop.xlane.xlu0 %1659
      %v1661 = vsel %vm1245, %v1581, 0.0
      %1662 = vadd.xlane.f32.xlu0 %v1661
      %v1663 = vpop.xlane.xlu0 %1662
      %v1664 = vsel %vm1245, %v1582, 0.0
      %1665 = vadd.xlane.f32.xlu0 %v1664
      %v1666 = vpop.xlane.xlu0 %1665
      %v1667 = vsel %vm1245, %v1583, 0.0
      %1668 = vadd.xlane.f32.xlu0 %v1667
      %v1669 = vpop.xlane.xlu0 %1668
      %v1670 = vsel %vm1245, %v1584, 0.0
      %1671 = vadd.xlane.f32.xlu0 %v1670
      %v1672 = vpop.xlane.xlu0 %1671
      %v1673 = vsel %vm1245, %v1585, 0.0
      %1674 = vadd.xlane.f32.xlu0 %v1673
      %v1675 = vpop.xlane.xlu0 %1674
      %v1676 = vsel %vm1245, %v1586, 0.0
      %1677 = vadd.xlane.f32.xlu0 %v1676
      %v1678 = vpop.xlane.xlu0 %1677
      %v1679 = vsel %vm1245, %v1587, 0.0
      %1680 = vadd.xlane.f32.xlu0 %v1679
      %v1681 = vpop.xlane.xlu0 %1680
      %v1682 = vsel %vm1245, %v1588, 0.0
      %1683 = vadd.xlane.f32.xlu0 %v1682
      %v1684 = vpop.xlane.xlu0 %1683
      %v1685 = vsel %vm1245, %v1589, 0.0
      %1686 = vadd.xlane.f32.xlu0 %v1685
      %v1687 = vpop.xlane.xlu0 %1686
      %v1688 = vsel %vm1245, %v1590, 0.0
      %1689 = vadd.xlane.f32.xlu0 %v1688
      %v1690 = vpop.xlane.xlu0 %1689
      %v1691 = vsel %vm1245, %v1591, 0.0
      %1692 = vadd.xlane.f32.xlu0 %v1691
      %v1693 = vpop.xlane.xlu0 %1692
      %v1694 = vsel %vm1245, %v1592, 0.0
      %1695 = vadd.xlane.f32.xlu0 %v1694
      %v1696 = vpop.xlane.xlu0 %1695
      %v1697 = vsel %vm1245, %v1593, 0.0
      %1698 = vadd.xlane.f32.xlu0 %v1697
      %v1699 = vpop.xlane.xlu0 %1698
      %v1700 = vsel %vm1245, %v1594, 0.0
      %1701 = vadd.xlane.f32.xlu0 %v1700
      %v1702 = vpop.xlane.xlu0 %1701
      %v1703 = vsel %vm1245, %v1595, 0.0
      %1704 = vadd.xlane.f32.xlu0 %v1703
      %v1705 = vpop.xlane.xlu0 %1704
      %v1706 = vsel %vm1245, %v1596, 0.0
      %1707 = vadd.xlane.f32.xlu0 %v1706
      %v1708 = vpop.xlane.xlu0 %1707
      %v1709 = vsel %vm1245, %v1597, 0.0
      %1710 = vadd.xlane.f32.xlu0 %v1709
      %v1711 = vpop.xlane.xlu0 %1710
      %v1712 = vsel %vm1245, %v1598, 0.0
      %1713 = vadd.xlane.f32.xlu0 %v1712
      %v1714 = vpop.xlane.xlu0 %1713
      %v1715 = vsel %vm1245, %v1599, 0.0
      %1716 = vadd.xlane.f32.xlu0 %v1715
      %v1717 = vpop.xlane.xlu0 %1716
      %v1718 = vsel %vm1245, %v1600, 0.0
      %1719 = vadd.xlane.f32.xlu0 %v1718
      %v1720 = vpop.xlane.xlu0 %1719
      %v1721 = vsel %vm1245, %v1601, 0.0
      %1722 = vadd.xlane.f32.xlu0 %v1721
      %v1723 = vpop.xlane.xlu0 %1722
      %v1724 = vsel %vm1245, %v1602, 0.0
      %1725 = vadd.xlane.f32.xlu0 %v1724
      %v1726 = vpop.xlane.xlu0 %1725
      %v1727 = vsel %vm1245, %v1603, 0.0
      %1728 = vadd.xlane.f32.xlu0 %v1727
      %v1729 = vpop.xlane.xlu0 %1728
      %v1730 = vsel %vm1245, %v1604, 0.0
      %1731 = vadd.xlane.f32.xlu0 %v1730
      %v1732 = vpop.xlane.xlu0 %1731
      %v1733 = vsel %vm1245, %v1605, 0.0
      %1734 = vadd.xlane.f32.xlu0 %v1733
      %v1735 = vpop.xlane.xlu0 %1734
      %v1736 = vsel %vm1245, %v1606, 0.0
      %1737 = vadd.xlane.f32.xlu0 %v1736
      %v1738 = vpop.xlane.xlu0 %1737
      %v1739 = vsel %vm1245, %v1607, 0.0
      %1740 = vadd.xlane.f32.xlu0 %v1739
      %v1741 = vpop.xlane.xlu0 %1740
      %v1742 = vsel %vm1245, %v1608, 0.0
      %1743 = vadd.xlane.f32.xlu0 %v1742
      %v1744 = vpop.xlane.xlu0 %1743
      %v1745 = vsel %vm1245, %v1609, 0.0
      %1746 = vadd.xlane.f32.xlu0 %v1745
      %v1747 = vpop.xlane.xlu0 %1746
      %v1748 = vsel %vm1245, %v1610, 0.0
      %1749 = vadd.xlane.f32.xlu0 %v1748
      %v1750 = vpop.xlane.xlu0 %1749
      %v1751 = vsel %vm1245, %v1611, 0.0
      %1752 = vadd.xlane.f32.xlu0 %v1751
      %v1753 = vpop.xlane.xlu0 %1752
      %v1754 = vsel %vm1245, %v1612, 0.0
      %1755 = vadd.xlane.f32.xlu0 %v1754
      %v1756 = vpop.xlane.xlu0 %1755
      %v1757 = vsel %vm1245, %v1613, 0.0
      %1758 = vadd.xlane.f32.xlu0 %v1757
      %v1759 = vpop.xlane.xlu0 %1758
      %v1760 = vsel %vm1245, %v1614, 0.0
      %1761 = vadd.xlane.f32.xlu0 %v1760
      %v1762 = vpop.xlane.xlu0 %1761
      %v1763 = vsel %vm1245, %v1615, 0.0
      %1764 = vadd.xlane.f32.xlu0 %v1763
      %v1765 = vpop.xlane.xlu0 %1764
      %v1766 = vsel %vm1245, %v1616, 0.0
      %1767 = vadd.xlane.f32.xlu0 %v1766
      %v1768 = vpop.xlane.xlu0 %1767
      %v1769 = vsel %vm1245, %v1617, 0.0
      %1770 = vadd.xlane.f32.xlu0 %v1769
      %v1771 = vpop.xlane.xlu0 %1770
      %v1772 = vsel %vm1245, %v1618, 0.0
      %1773 = vadd.xlane.f32.xlu0 %v1772
      %v1774 = vpop.xlane.xlu0 %1773
      %v1775 = vsel %vm1245, %v1619, 0.0
      %1776 = vadd.xlane.f32.xlu0 %v1775
      %v1777 = vpop.xlane.xlu0 %1776
      %v1778 = vsel %vm1245, %v1620, 0.0
      %1779 = vadd.xlane.f32.xlu0 %v1778
      %v1780 = vpop.xlane.xlu0 %1779
      %v1781 = vsel %vm1245, %v1621, 0.0
      %1782 = vadd.xlane.f32.xlu0 %v1781
      %v1783 = vpop.xlane.xlu0 %1782
      %v1784 = vsel %vm1245, %v1622, 0.0
      %1785 = vadd.xlane.f32.xlu0 %v1784
      %v1786 = vpop.xlane.xlu0 %1785
      %v1787 = vsel %vm1245, %v1623, 0.0
      %1788 = vadd.xlane.f32.xlu0 %v1787
      %v1789 = vpop.xlane.xlu0 %1788
      %v1790 = vsel %vm1245, %v1624, 0.0
      %1791 = vadd.xlane.f32.xlu0 %v1790
      %v1792 = vpop.xlane.xlu0 %1791
      %v1793 = vsel %vm1245, %v1625, 0.0
      %1794 = vadd.xlane.f32.xlu0 %v1793
      %v1795 = vpop.xlane.xlu0 %1794
      %v1796 = vsel %vm1245, %v1626, 0.0
      %1797 = vadd.xlane.f32.xlu0 %v1796
      %v1798 = vpop.xlane.xlu0 %1797
      %v1799 = vsel %vm1245, %v1627, 0.0
      %1800 = vadd.xlane.f32.xlu0 %v1799
      %v1801 = vpop.xlane.xlu0 %1800
      %v1802 = vsel %vm1245, %v1628, 0.0
      %1803 = vadd.xlane.f32.xlu0 %v1802
      %v1804 = vpop.xlane.xlu0 %1803
      %v1805 = vsel %vm1245, %v1629, 0.0
      %1806 = vadd.xlane.f32.xlu0 %v1805
      %v1807 = vpop.xlane.xlu0 %1806
      %v1808 = vsel %vm1245, %v1630, 0.0
      %1809 = vadd.xlane.f32.xlu0 %v1808
      %v1810 = vpop.xlane.xlu0 %1809
      %v1811 = vsel %vm1245, %v1631, 0.0
      %1812 = vadd.xlane.f32.xlu0 %v1811
      %v1813 = vpop.xlane.xlu0 %1812
      %v1814 = vsel %vm1245, %v1632, 0.0
      %1815 = vadd.xlane.f32.xlu0 %v1814
      %v1816 = vpop.xlane.xlu0 %1815
      %v1817 = vsel %vm1245, %v1633, 0.0
      %1818 = vadd.xlane.f32.xlu0 %v1817
      %v1819 = vpop.xlane.xlu0 %1818
      %v1820 = vsel %vm1245, %v1634, 0.0
      %1821 = vadd.xlane.f32.xlu0 %v1820
      %v1822 = vpop.xlane.xlu0 %1821
      %v1823 = vsel %vm1245, %v1635, 0.0
      %1824 = vadd.xlane.f32.xlu0 %v1823
      %v1825 = vpop.xlane.xlu0 %1824
      %v1826 = vsel %vm1245, %v1636, 0.0
      %1827 = vadd.xlane.f32.xlu0 %v1826
      %v1828 = vpop.xlane.xlu0 %1827
      %v1829 = vrsqrt.pop %v1639
      %v1830 = vmul.f32 %v1829, %v1639
      %v1831 = vmul.f32 %v1830, %v1829
      %v1832 = vmul.f32 0.5, %v1831
      %v1833 = vsub.f32 1.5, %v1832
      %v1834 = vmul.f32 %v1829, %v1833
      %v1835 = vmul.f32 %v1639, %v1834
      %vm1836 = vcmp.eq.f32.partialorder %v1639, inf
      %v1837 = vsel %vm1836, %v1639, %v1835
      %vm1838 = vcmp.eq.f32.partialorder %v1639, 0.0
      %v1839 = vand.u32 %v1639, 2147483648
      %v1840 = vsel %vm1838, %v1839, %v1837
      %v1841 = vrsqrt.pop %v1642
      %v1842 = vmul.f32 %v1841, %v1642
      %v1843 = vmul.f32 %v1842, %v1841
      %v1844 = vmul.f32 0.5, %v1843
      %v1845 = vsub.f32 1.5, %v1844
      %v1846 = vmul.f32 %v1841, %v1845
      %v1847 = vmul.f32 %v1642, %v1846
      %vm1848 = vcmp.eq.f32.partialorder %v1642, inf
      %v1849 = vsel %vm1848, %v1642, %v1847
      %vm1850 = vcmp.eq.f32.partialorder %v1642, 0.0
      %v1851 = vand.u32 %v1642, 2147483648
      %v1852 = vsel %vm1850, %v1851, %v1849
      %v1853 = vrsqrt.pop %v1645
      %v1854 = vmul.f32 %v1853, %v1645
      %v1855 = vmul.f32 %v1854, %v1853
      %v1856 = vmul.f32 0.5, %v1855
      %v1857 = vsub.f32 1.5, %v1856
      %v1858 = vmul.f32 %v1853, %v1857
      %v1859 = vmul.f32 %v1645, %v1858
      %vm1860 = vcmp.eq.f32.partialorder %v1645, inf
      %v1861 = vsel %vm1860, %v1645, %v1859
      %vm1862 = vcmp.eq.f32.partialorder %v1645, 0.0
      %v1863 = vand.u32 %v1645, 2147483648
      %v1864 = vsel %vm1862, %v1863, %v1861
      %v1865 = vrsqrt.pop %v1648
      %v1866 = vmul.f32 %v1865, %v1648
      %v1867 = vmul.f32 %v1866, %v1865
      %v1868 = vmul.f32 0.5, %v1867
      %v1869 = vsub.f32 1.5, %v1868
      %v1870 = vmul.f32 %v1865, %v1869
      %v1871 = vmul.f32 %v1648, %v1870
      %vm1872 = vcmp.eq.f32.partialorder %v1648, inf
      %v1873 = vsel %vm1872, %v1648, %v1871
      %vm1874 = vcmp.eq.f32.partialorder %v1648, 0.0
      %v1875 = vand.u32 %v1648, 2147483648
      %v1876 = vsel %vm1874, %v1875, %v1873
      %v1877 = vrsqrt.pop %v1651
      %v1878 = vmul.f32 %v1877, %v1651
      %v1879 = vmul.f32 %v1878, %v1877
      %v1880 = vmul.f32 0.5, %v1879
      %v1881 = vsub.f32 1.5, %v1880
      %v1882 = vmul.f32 %v1877, %v1881
      %v1883 = vmul.f32 %v1651, %v1882
      %vm1884 = vcmp.eq.f32.partialorder %v1651, inf
      %v1885 = vsel %vm1884, %v1651, %v1883
      %vm1886 = vcmp.eq.f32.partialorder %v1651, 0.0
      %v1887 = vand.u32 %v1651, 2147483648
      %v1888 = vsel %vm1886, %v1887, %v1885
      %v1889 = vrsqrt.pop %v1654
      %v1890 = vmul.f32 %v1889, %v1654
      %v1891 = vmul.f32 %v1890, %v1889
      %v1892 = vmul.f32 0.5, %v1891
      %v1893 = vsub.f32 1.5, %v1892
      %v1894 = vmul.f32 %v1889, %v1893
      %v1895 = vmul.f32 %v1654, %v1894
      %vm1896 = vcmp.eq.f32.partialorder %v1654, inf
      %v1897 = vsel %vm1896, %v1654, %v1895
      %vm1898 = vcmp.eq.f32.partialorder %v1654, 0.0
      %v1899 = vand.u32 %v1654, 2147483648
      %v1900 = vsel %vm1898, %v1899, %v1897
      %v1901 = vrsqrt.pop %v1657
      %v1902 = vmul.f32 %v1901, %v1657
      %v1903 = vmul.f32 %v1902, %v1901
      %v1904 = vmul.f32 0.5, %v1903
      %v1905 = vsub.f32 1.5, %v1904
      %v1906 = vmul.f32 %v1901, %v1905
      %v1907 = vmul.f32 %v1657, %v1906
      %vm1908 = vcmp.eq.f32.partialorder %v1657, inf
      %v1909 = vsel %vm1908, %v1657, %v1907
      %vm1910 = vcmp.eq.f32.partialorder %v1657, 0.0
      %v1911 = vand.u32 %v1657, 2147483648
      %v1912 = vsel %vm1910, %v1911, %v1909
      %v1913 = vrsqrt.pop %v1660
      %v1914 = vmul.f32 %v1913, %v1660
      %v1915 = vmul.f32 %v1914, %v1913
      %v1916 = vmul.f32 0.5, %v1915
      %v1917 = vsub.f32 1.5, %v1916
      %v1918 = vmul.f32 %v1913, %v1917
      %v1919 = vmul.f32 %v1660, %v1918
      %vm1920 = vcmp.eq.f32.partialorder %v1660, inf
      %v1921 = vsel %vm1920, %v1660, %v1919
      %vm1922 = vcmp.eq.f32.partialorder %v1660, 0.0
      %v1923 = vand.u32 %v1660, 2147483648
      %v1924 = vsel %vm1922, %v1923, %v1921
      %v1925 = vrsqrt.pop %v1663
      %v1926 = vmul.f32 %v1925, %v1663
      %v1927 = vmul.f32 %v1926, %v1925
      %v1928 = vmul.f32 0.5, %v1927
      %v1929 = vsub.f32 1.5, %v1928
      %v1930 = vmul.f32 %v1925, %v1929
      %v1931 = vmul.f32 %v1663, %v1930
      %vm1932 = vcmp.eq.f32.partialorder %v1663, inf
      %v1933 = vsel %vm1932, %v1663, %v1931
      %vm1934 = vcmp.eq.f32.partialorder %v1663, 0.0
      %v1935 = vand.u32 %v1663, 2147483648
      %v1936 = vsel %vm1934, %v1935, %v1933
      %v1937 = vrsqrt.pop %v1666
      %v1938 = vmul.f32 %v1937, %v1666
      %v1939 = vmul.f32 %v1938, %v1937
      %v1940 = vmul.f32 0.5, %v1939
      %v1941 = vsub.f32 1.5, %v1940
      %v1942 = vmul.f32 %v1937, %v1941
      %v1943 = vmul.f32 %v1666, %v1942
      %vm1944 = vcmp.eq.f32.partialorder %v1666, inf
      %v1945 = vsel %vm1944, %v1666, %v1943
      %vm1946 = vcmp.eq.f32.partialorder %v1666, 0.0
      %v1947 = vand.u32 %v1666, 2147483648
      %v1948 = vsel %vm1946, %v1947, %v1945
      %v1949 = vrsqrt.pop %v1669
      %v1950 = vmul.f32 %v1949, %v1669
      %v1951 = vmul.f32 %v1950, %v1949
      %v1952 = vmul.f32 0.5, %v1951
      %v1953 = vsub.f32 1.5, %v1952
      %v1954 = vmul.f32 %v1949, %v1953
      %v1955 = vmul.f32 %v1669, %v1954
      %vm1956 = vcmp.eq.f32.partialorder %v1669, inf
      %v1957 = vsel %vm1956, %v1669, %v1955
      %vm1958 = vcmp.eq.f32.partialorder %v1669, 0.0
      %v1959 = vand.u32 %v1669, 2147483648
      %v1960 = vsel %vm1958, %v1959, %v1957
      %v1961 = vrsqrt.pop %v1672
      %v1962 = vmul.f32 %v1961, %v1672
      %v1963 = vmul.f32 %v1962, %v1961
      %v1964 = vmul.f32 0.5, %v1963
      %v1965 = vsub.f32 1.5, %v1964
      %v1966 = vmul.f32 %v1961, %v1965
      %v1967 = vmul.f32 %v1672, %v1966
      %vm1968 = vcmp.eq.f32.partialorder %v1672, inf
      %v1969 = vsel %vm1968, %v1672, %v1967
      %vm1970 = vcmp.eq.f32.partialorder %v1672, 0.0
      %v1971 = vand.u32 %v1672, 2147483648
      %v1972 = vsel %vm1970, %v1971, %v1969
      %v1973 = vrsqrt.pop %v1675
      %v1974 = vmul.f32 %v1973, %v1675
      %v1975 = vmul.f32 %v1974, %v1973
      %v1976 = vmul.f32 0.5, %v1975
      %v1977 = vsub.f32 1.5, %v1976
      %v1978 = vmul.f32 %v1973, %v1977
      %v1979 = vmul.f32 %v1675, %v1978
      %vm1980 = vcmp.eq.f32.partialorder %v1675, inf
      %v1981 = vsel %vm1980, %v1675, %v1979
      %vm1982 = vcmp.eq.f32.partialorder %v1675, 0.0
      %v1983 = vand.u32 %v1675, 2147483648
      %v1984 = vsel %vm1982, %v1983, %v1981
      %v1985 = vrsqrt.pop %v1678
      %v1986 = vmul.f32 %v1985, %v1678
      %v1987 = vmul.f32 %v1986, %v1985
      %v1988 = vmul.f32 0.5, %v1987
      %v1989 = vsub.f32 1.5, %v1988
      %v1990 = vmul.f32 %v1985, %v1989
      %v1991 = vmul.f32 %v1678, %v1990
      %vm1992 = vcmp.eq.f32.partialorder %v1678, inf
      %v1993 = vsel %vm1992, %v1678, %v1991
      %vm1994 = vcmp.eq.f32.partialorder %v1678, 0.0
      %v1995 = vand.u32 %v1678, 2147483648
      %v1996 = vsel %vm1994, %v1995, %v1993
      %v1997 = vrsqrt.pop %v1681
      %v1998 = vmul.f32 %v1997, %v1681
      %v1999 = vmul.f32 %v1998, %v1997
      %v2000 = vmul.f32 0.5, %v1999
      %v2001 = vsub.f32 1.5, %v2000
      %v2002 = vmul.f32 %v1997, %v2001
      %v2003 = vmul.f32 %v1681, %v2002
      %vm2004 = vcmp.eq.f32.partialorder %v1681, inf
      %v2005 = vsel %vm2004, %v1681, %v2003
      %vm2006 = vcmp.eq.f32.partialorder %v1681, 0.0
      %v2007 = vand.u32 %v1681, 2147483648
      %v2008 = vsel %vm2006, %v2007, %v2005
      %v2009 = vrsqrt.pop %v1684
      %v2010 = vmul.f32 %v2009, %v1684
      %v2011 = vmul.f32 %v2010, %v2009
      %v2012 = vmul.f32 0.5, %v2011
      %v2013 = vsub.f32 1.5, %v2012
      %v2014 = vmul.f32 %v2009, %v2013
      %v2015 = vmul.f32 %v1684, %v2014
      %vm2016 = vcmp.eq.f32.partialorder %v1684, inf
      %v2017 = vsel %vm2016, %v1684, %v2015
      %vm2018 = vcmp.eq.f32.partialorder %v1684, 0.0
      %v2019 = vand.u32 %v1684, 2147483648
      %v2020 = vsel %vm2018, %v2019, %v2017
      %v2021 = vrsqrt.pop %v1687
      %v2022 = vmul.f32 %v2021, %v1687
      %v2023 = vmul.f32 %v2022, %v2021
      %v2024 = vmul.f32 0.5, %v2023
      %v2025 = vsub.f32 1.5, %v2024
      %v2026 = vmul.f32 %v2021, %v2025
      %v2027 = vmul.f32 %v1687, %v2026
      %vm2028 = vcmp.eq.f32.partialorder %v1687, inf
      %v2029 = vsel %vm2028, %v1687, %v2027
      %vm2030 = vcmp.eq.f32.partialorder %v1687, 0.0
      %v2031 = vand.u32 %v1687, 2147483648
      %v2032 = vsel %vm2030, %v2031, %v2029
      %v2033 = vrsqrt.pop %v1690
      %v2034 = vmul.f32 %v2033, %v1690
      %v2035 = vmul.f32 %v2034, %v2033
      %v2036 = vmul.f32 0.5, %v2035
      %v2037 = vsub.f32 1.5, %v2036
      %v2038 = vmul.f32 %v2033, %v2037
      %v2039 = vmul.f32 %v1690, %v2038
      %vm2040 = vcmp.eq.f32.partialorder %v1690, inf
      %v2041 = vsel %vm2040, %v1690, %v2039
      %vm2042 = vcmp.eq.f32.partialorder %v1690, 0.0
      %v2043 = vand.u32 %v1690, 2147483648
      %v2044 = vsel %vm2042, %v2043, %v2041
      %v2045 = vrsqrt.pop %v1693
      %v2046 = vmul.f32 %v2045, %v1693
      %v2047 = vmul.f32 %v2046, %v2045
      %v2048 = vmul.f32 0.5, %v2047
      %v2049 = vsub.f32 1.5, %v2048
      %v2050 = vmul.f32 %v2045, %v2049
      %v2051 = vmul.f32 %v1693, %v2050
      %vm2052 = vcmp.eq.f32.partialorder %v1693, inf
      %v2053 = vsel %vm2052, %v1693, %v2051
      %vm2054 = vcmp.eq.f32.partialorder %v1693, 0.0
      %v2055 = vand.u32 %v1693, 2147483648
      %v2056 = vsel %vm2054, %v2055, %v2053
      %v2057 = vrsqrt.pop %v1696
      %v2058 = vmul.f32 %v2057, %v1696
      %v2059 = vmul.f32 %v2058, %v2057
      %v2060 = vmul.f32 0.5, %v2059
      %v2061 = vsub.f32 1.5, %v2060
      %v2062 = vmul.f32 %v2057, %v2061
      %v2063 = vmul.f32 %v1696, %v2062
      %vm2064 = vcmp.eq.f32.partialorder %v1696, inf
      %v2065 = vsel %vm2064, %v1696, %v2063
      %vm2066 = vcmp.eq.f32.partialorder %v1696, 0.0
      %v2067 = vand.u32 %v1696, 2147483648
      %v2068 = vsel %vm2066, %v2067, %v2065
      %v2069 = vrsqrt.pop %v1699
      %v2070 = vmul.f32 %v2069, %v1699
      %v2071 = vmul.f32 %v2070, %v2069
      %v2072 = vmul.f32 0.5, %v2071
      %v2073 = vsub.f32 1.5, %v2072
      %v2074 = vmul.f32 %v2069, %v2073
      %v2075 = vmul.f32 %v1699, %v2074
      %vm2076 = vcmp.eq.f32.partialorder %v1699, inf
      %v2077 = vsel %vm2076, %v1699, %v2075
      %vm2078 = vcmp.eq.f32.partialorder %v1699, 0.0
      %v2079 = vand.u32 %v1699, 2147483648
      %v2080 = vsel %vm2078, %v2079, %v2077
      %v2081 = vrsqrt.pop %v1702
      %v2082 = vmul.f32 %v2081, %v1702
      %v2083 = vmul.f32 %v2082, %v2081
      %v2084 = vmul.f32 0.5, %v2083
      %v2085 = vsub.f32 1.5, %v2084
      %v2086 = vmul.f32 %v2081, %v2085
      %v2087 = vmul.f32 %v1702, %v2086
      %vm2088 = vcmp.eq.f32.partialorder %v1702, inf
      %v2089 = vsel %vm2088, %v1702, %v2087
      %vm2090 = vcmp.eq.f32.partialorder %v1702, 0.0
      %v2091 = vand.u32 %v1702, 2147483648
      %v2092 = vsel %vm2090, %v2091, %v2089
      %v2093 = vrsqrt.pop %v1705
      %v2094 = vmul.f32 %v2093, %v1705
      %v2095 = vmul.f32 %v2094, %v2093
      %v2096 = vmul.f32 0.5, %v2095
      %v2097 = vsub.f32 1.5, %v2096
      %v2098 = vmul.f32 %v2093, %v2097
      %v2099 = vmul.f32 %v1705, %v2098
      %vm2100 = vcmp.eq.f32.partialorder %v1705, inf
      %v2101 = vsel %vm2100, %v1705, %v2099
      %vm2102 = vcmp.eq.f32.partialorder %v1705, 0.0
      %v2103 = vand.u32 %v1705, 2147483648
      %v2104 = vsel %vm2102, %v2103, %v2101
      %v2105 = vrsqrt.pop %v1708
      %v2106 = vmul.f32 %v2105, %v1708
      %v2107 = vmul.f32 %v2106, %v2105
      %v2108 = vmul.f32 0.5, %v2107
      %v2109 = vsub.f32 1.5, %v2108
      %v2110 = vmul.f32 %v2105, %v2109
      %v2111 = vmul.f32 %v1708, %v2110
      %vm2112 = vcmp.eq.f32.partialorder %v1708, inf
      %v2113 = vsel %vm2112, %v1708, %v2111
      %vm2114 = vcmp.eq.f32.partialorder %v1708, 0.0
      %v2115 = vand.u32 %v1708, 2147483648
      %v2116 = vsel %vm2114, %v2115, %v2113
      %v2117 = vrsqrt.pop %v1711
      %v2118 = vmul.f32 %v2117, %v1711
      %v2119 = vmul.f32 %v2118, %v2117
      %v2120 = vmul.f32 0.5, %v2119
      %v2121 = vsub.f32 1.5, %v2120
      %v2122 = vmul.f32 %v2117, %v2121
      %v2123 = vmul.f32 %v1711, %v2122
      %vm2124 = vcmp.eq.f32.partialorder %v1711, inf
      %v2125 = vsel %vm2124, %v1711, %v2123
      %vm2126 = vcmp.eq.f32.partialorder %v1711, 0.0
      %v2127 = vand.u32 %v1711, 2147483648
      %v2128 = vsel %vm2126, %v2127, %v2125
      %v2129 = vrsqrt.pop %v1714
      %v2130 = vmul.f32 %v2129, %v1714
      %v2131 = vmul.f32 %v2130, %v2129
      %v2132 = vmul.f32 0.5, %v2131
      %v2133 = vsub.f32 1.5, %v2132
      %v2134 = vmul.f32 %v2129, %v2133
      %v2135 = vmul.f32 %v1714, %v2134
      %vm2136 = vcmp.eq.f32.partialorder %v1714, inf
      %v2137 = vsel %vm2136, %v1714, %v2135
      %vm2138 = vcmp.eq.f32.partialorder %v1714, 0.0
      %v2139 = vand.u32 %v1714, 2147483648
      %v2140 = vsel %vm2138, %v2139, %v2137
      %v2141 = vrsqrt.pop %v1717
      %v2142 = vmul.f32 %v2141, %v1717
      %v2143 = vmul.f32 %v2142, %v2141
      %v2144 = vmul.f32 0.5, %v2143
      %v2145 = vsub.f32 1.5, %v2144
      %v2146 = vmul.f32 %v2141, %v2145
      %v2147 = vmul.f32 %v1717, %v2146
      %vm2148 = vcmp.eq.f32.partialorder %v1717, inf
      %v2149 = vsel %vm2148, %v1717, %v2147
      %vm2150 = vcmp.eq.f32.partialorder %v1717, 0.0
      %v2151 = vand.u32 %v1717, 2147483648
      %v2152 = vsel %vm2150, %v2151, %v2149
      %v2153 = vrsqrt.pop %v1720
      %v2154 = vmul.f32 %v2153, %v1720
      %v2155 = vmul.f32 %v2154, %v2153
      %v2156 = vmul.f32 0.5, %v2155
      %v2157 = vsub.f32 1.5, %v2156
      %v2158 = vmul.f32 %v2153, %v2157
      %v2159 = vmul.f32 %v1720, %v2158
      %vm2160 = vcmp.eq.f32.partialorder %v1720, inf
      %v2161 = vsel %vm2160, %v1720, %v2159
      %vm2162 = vcmp.eq.f32.partialorder %v1720, 0.0
      %v2163 = vand.u32 %v1720, 2147483648
      %v2164 = vsel %vm2162, %v2163, %v2161
      %v2165 = vrsqrt.pop %v1723
      %v2166 = vmul.f32 %v2165, %v1723
      %v2167 = vmul.f32 %v2166, %v2165
      %v2168 = vmul.f32 0.5, %v2167
      %v2169 = vsub.f32 1.5, %v2168
      %v2170 = vmul.f32 %v2165, %v2169
      %v2171 = vmul.f32 %v1723, %v2170
      %vm2172 = vcmp.eq.f32.partialorder %v1723, inf
      %v2173 = vsel %vm2172, %v1723, %v2171
      %vm2174 = vcmp.eq.f32.partialorder %v1723, 0.0
      %v2175 = vand.u32 %v1723, 2147483648
      %v2176 = vsel %vm2174, %v2175, %v2173
      %v2177 = vrsqrt.pop %v1726
      %v2178 = vmul.f32 %v2177, %v1726
      %v2179 = vmul.f32 %v2178, %v2177
      %v2180 = vmul.f32 0.5, %v2179
      %v2181 = vsub.f32 1.5, %v2180
      %v2182 = vmul.f32 %v2177, %v2181
      %v2183 = vmul.f32 %v1726, %v2182
      %vm2184 = vcmp.eq.f32.partialorder %v1726, inf
      %v2185 = vsel %vm2184, %v1726, %v2183
      %vm2186 = vcmp.eq.f32.partialorder %v1726, 0.0
      %v2187 = vand.u32 %v1726, 2147483648
      %v2188 = vsel %vm2186, %v2187, %v2185
      %v2189 = vrsqrt.pop %v1729
      %v2190 = vmul.f32 %v2189, %v1729
      %v2191 = vmul.f32 %v2190, %v2189
      %v2192 = vmul.f32 0.5, %v2191
      %v2193 = vsub.f32 1.5, %v2192
      %v2194 = vmul.f32 %v2189, %v2193
      %v2195 = vmul.f32 %v1729, %v2194
      %vm2196 = vcmp.eq.f32.partialorder %v1729, inf
      %v2197 = vsel %vm2196, %v1729, %v2195
      %vm2198 = vcmp.eq.f32.partialorder %v1729, 0.0
      %v2199 = vand.u32 %v1729, 2147483648
      %v2200 = vsel %vm2198, %v2199, %v2197
      %v2201 = vrsqrt.pop %v1732
      %v2202 = vmul.f32 %v2201, %v1732
      %v2203 = vmul.f32 %v2202, %v2201
      %v2204 = vmul.f32 0.5, %v2203
      %v2205 = vsub.f32 1.5, %v2204
      %v2206 = vmul.f32 %v2201, %v2205
      %v2207 = vmul.f32 %v1732, %v2206
      %vm2208 = vcmp.eq.f32.partialorder %v1732, inf
      %v2209 = vsel %vm2208, %v1732, %v2207
      %vm2210 = vcmp.eq.f32.partialorder %v1732, 0.0
      %v2211 = vand.u32 %v1732, 2147483648
      %v2212 = vsel %vm2210, %v2211, %v2209
      %v2213 = vrsqrt.pop %v1735
      %v2214 = vmul.f32 %v2213, %v1735
      %v2215 = vmul.f32 %v2214, %v2213
      %v2216 = vmul.f32 0.5, %v2215
      %v2217 = vsub.f32 1.5, %v2216
      %v2218 = vmul.f32 %v2213, %v2217
      %v2219 = vmul.f32 %v1735, %v2218
      %vm2220 = vcmp.eq.f32.partialorder %v1735, inf
      %v2221 = vsel %vm2220, %v1735, %v2219
      %vm2222 = vcmp.eq.f32.partialorder %v1735, 0.0
      %v2223 = vand.u32 %v1735, 2147483648
      %v2224 = vsel %vm2222, %v2223, %v2221
      %v2225 = vrsqrt.pop %v1738
      %v2226 = vmul.f32 %v2225, %v1738
      %v2227 = vmul.f32 %v2226, %v2225
      %v2228 = vmul.f32 0.5, %v2227
      %v2229 = vsub.f32 1.5, %v2228
      %v2230 = vmul.f32 %v2225, %v2229
      %v2231 = vmul.f32 %v1738, %v2230
      %vm2232 = vcmp.eq.f32.partialorder %v1738, inf
      %v2233 = vsel %vm2232, %v1738, %v2231
      %vm2234 = vcmp.eq.f32.partialorder %v1738, 0.0
      %v2235 = vand.u32 %v1738, 2147483648
      %v2236 = vsel %vm2234, %v2235, %v2233
      %v2237 = vrsqrt.pop %v1741
      %v2238 = vmul.f32 %v2237, %v1741
      %v2239 = vmul.f32 %v2238, %v2237
      %v2240 = vmul.f32 0.5, %v2239
      %v2241 = vsub.f32 1.5, %v2240
      %v2242 = vmul.f32 %v2237, %v2241
      %v2243 = vmul.f32 %v1741, %v2242
      %vm2244 = vcmp.eq.f32.partialorder %v1741, inf
      %v2245 = vsel %vm2244, %v1741, %v2243
      %vm2246 = vcmp.eq.f32.partialorder %v1741, 0.0
      %v2247 = vand.u32 %v1741, 2147483648
      %v2248 = vsel %vm2246, %v2247, %v2245
      %v2249 = vrsqrt.pop %v1744
      %v2250 = vmul.f32 %v2249, %v1744
      %v2251 = vmul.f32 %v2250, %v2249
      %v2252 = vmul.f32 0.5, %v2251
      %v2253 = vsub.f32 1.5, %v2252
      %v2254 = vmul.f32 %v2249, %v2253
      %v2255 = vmul.f32 %v1744, %v2254
      %vm2256 = vcmp.eq.f32.partialorder %v1744, inf
      %v2257 = vsel %vm2256, %v1744, %v2255
      %vm2258 = vcmp.eq.f32.partialorder %v1744, 0.0
      %v2259 = vand.u32 %v1744, 2147483648
      %v2260 = vsel %vm2258, %v2259, %v2257
      %v2261 = vrsqrt.pop %v1747
      %v2262 = vmul.f32 %v2261, %v1747
      %v2263 = vmul.f32 %v2262, %v2261
      %v2264 = vmul.f32 0.5, %v2263
      %v2265 = vsub.f32 1.5, %v2264
      %v2266 = vmul.f32 %v2261, %v2265
      %v2267 = vmul.f32 %v1747, %v2266
      %vm2268 = vcmp.eq.f32.partialorder %v1747, inf
      %v2269 = vsel %vm2268, %v1747, %v2267
      %vm2270 = vcmp.eq.f32.partialorder %v1747, 0.0
      %v2271 = vand.u32 %v1747, 2147483648
      %v2272 = vsel %vm2270, %v2271, %v2269
      %v2273 = vrsqrt.pop %v1750
      %v2274 = vmul.f32 %v2273, %v1750
      %v2275 = vmul.f32 %v2274, %v2273
      %v2276 = vmul.f32 0.5, %v2275
      %v2277 = vsub.f32 1.5, %v2276
      %v2278 = vmul.f32 %v2273, %v2277
      %v2279 = vmul.f32 %v1750, %v2278
      %vm2280 = vcmp.eq.f32.partialorder %v1750, inf
      %v2281 = vsel %vm2280, %v1750, %v2279
      %vm2282 = vcmp.eq.f32.partialorder %v1750, 0.0
      %v2283 = vand.u32 %v1750, 2147483648
      %v2284 = vsel %vm2282, %v2283, %v2281
      %v2285 = vrsqrt.pop %v1753
      %v2286 = vmul.f32 %v2285, %v1753
      %v2287 = vmul.f32 %v2286, %v2285
      %v2288 = vmul.f32 0.5, %v2287
      %v2289 = vsub.f32 1.5, %v2288
      %v2290 = vmul.f32 %v2285, %v2289
      %v2291 = vmul.f32 %v1753, %v2290
      %vm2292 = vcmp.eq.f32.partialorder %v1753, inf
      %v2293 = vsel %vm2292, %v1753, %v2291
      %vm2294 = vcmp.eq.f32.partialorder %v1753, 0.0
      %v2295 = vand.u32 %v1753, 2147483648
      %v2296 = vsel %vm2294, %v2295, %v2293
      %v2297 = vrsqrt.pop %v1756
      %v2298 = vmul.f32 %v2297, %v1756
      %v2299 = vmul.f32 %v2298, %v2297
      %v2300 = vmul.f32 0.5, %v2299
      %v2301 = vsub.f32 1.5, %v2300
      %v2302 = vmul.f32 %v2297, %v2301
      %v2303 = vmul.f32 %v1756, %v2302
      %vm2304 = vcmp.eq.f32.partialorder %v1756, inf
      %v2305 = vsel %vm2304, %v1756, %v2303
      %vm2306 = vcmp.eq.f32.partialorder %v1756, 0.0
      %v2307 = vand.u32 %v1756, 2147483648
      %v2308 = vsel %vm2306, %v2307, %v2305
      %v2309 = vrsqrt.pop %v1759
      %v2310 = vmul.f32 %v2309, %v1759
      %v2311 = vmul.f32 %v2310, %v2309
      %v2312 = vmul.f32 0.5, %v2311
      %v2313 = vsub.f32 1.5, %v2312
      %v2314 = vmul.f32 %v2309, %v2313
      %v2315 = vmul.f32 %v1759, %v2314
      %vm2316 = vcmp.eq.f32.partialorder %v1759, inf
      %v2317 = vsel %vm2316, %v1759, %v2315
      %vm2318 = vcmp.eq.f32.partialorder %v1759, 0.0
      %v2319 = vand.u32 %v1759, 2147483648
      %v2320 = vsel %vm2318, %v2319, %v2317
      %v2321 = vrsqrt.pop %v1762
      %v2322 = vmul.f32 %v2321, %v1762
      %v2323 = vmul.f32 %v2322, %v2321
      %v2324 = vmul.f32 0.5, %v2323
      %v2325 = vsub.f32 1.5, %v2324
      %v2326 = vmul.f32 %v2321, %v2325
      %v2327 = vmul.f32 %v1762, %v2326
      %vm2328 = vcmp.eq.f32.partialorder %v1762, inf
      %v2329 = vsel %vm2328, %v1762, %v2327
      %vm2330 = vcmp.eq.f32.partialorder %v1762, 0.0
      %v2331 = vand.u32 %v1762, 2147483648
      %v2332 = vsel %vm2330, %v2331, %v2329
      %v2333 = vrsqrt.pop %v1765
      %v2334 = vmul.f32 %v2333, %v1765
      %v2335 = vmul.f32 %v2334, %v2333
      %v2336 = vmul.f32 0.5, %v2335
      %v2337 = vsub.f32 1.5, %v2336
      %v2338 = vmul.f32 %v2333, %v2337
      %v2339 = vmul.f32 %v1765, %v2338
      %vm2340 = vcmp.eq.f32.partialorder %v1765, inf
      %v2341 = vsel %vm2340, %v1765, %v2339
      %vm2342 = vcmp.eq.f32.partialorder %v1765, 0.0
      %v2343 = vand.u32 %v1765, 2147483648
      %v2344 = vsel %vm2342, %v2343, %v2341
      %v2345 = vrsqrt.pop %v1768
      %v2346 = vmul.f32 %v2345, %v1768
      %v2347 = vmul.f32 %v2346, %v2345
      %v2348 = vmul.f32 0.5, %v2347
      %v2349 = vsub.f32 1.5, %v2348
      %v2350 = vmul.f32 %v2345, %v2349
      %v2351 = vmul.f32 %v1768, %v2350
      %vm2352 = vcmp.eq.f32.partialorder %v1768, inf
      %v2353 = vsel %vm2352, %v1768, %v2351
      %vm2354 = vcmp.eq.f32.partialorder %v1768, 0.0
      %v2355 = vand.u32 %v1768, 2147483648
      %v2356 = vsel %vm2354, %v2355, %v2353
      %v2357 = vrsqrt.pop %v1771
      %v2358 = vmul.f32 %v2357, %v1771
      %v2359 = vmul.f32 %v2358, %v2357
      %v2360 = vmul.f32 0.5, %v2359
      %v2361 = vsub.f32 1.5, %v2360
      %v2362 = vmul.f32 %v2357, %v2361
      %v2363 = vmul.f32 %v1771, %v2362
      %vm2364 = vcmp.eq.f32.partialorder %v1771, inf
      %v2365 = vsel %vm2364, %v1771, %v2363
      %vm2366 = vcmp.eq.f32.partialorder %v1771, 0.0
      %v2367 = vand.u32 %v1771, 2147483648
      %v2368 = vsel %vm2366, %v2367, %v2365
      %v2369 = vrsqrt.pop %v1774
      %v2370 = vmul.f32 %v2369, %v1774
      %v2371 = vmul.f32 %v2370, %v2369
      %v2372 = vmul.f32 0.5, %v2371
      %v2373 = vsub.f32 1.5, %v2372
      %v2374 = vmul.f32 %v2369, %v2373
      %v2375 = vmul.f32 %v1774, %v2374
      %vm2376 = vcmp.eq.f32.partialorder %v1774, inf
      %v2377 = vsel %vm2376, %v1774, %v2375
      %vm2378 = vcmp.eq.f32.partialorder %v1774, 0.0
      %v2379 = vand.u32 %v1774, 2147483648
      %v2380 = vsel %vm2378, %v2379, %v2377
      %v2381 = vrsqrt.pop %v1777
      %v2382 = vmul.f32 %v2381, %v1777
      %v2383 = vmul.f32 %v2382, %v2381
      %v2384 = vmul.f32 0.5, %v2383
      %v2385 = vsub.f32 1.5, %v2384
      %v2386 = vmul.f32 %v2381, %v2385
      %v2387 = vmul.f32 %v1777, %v2386
      %vm2388 = vcmp.eq.f32.partialorder %v1777, inf
      %v2389 = vsel %vm2388, %v1777, %v2387
      %vm2390 = vcmp.eq.f32.partialorder %v1777, 0.0
      %v2391 = vand.u32 %v1777, 2147483648
      %v2392 = vsel %vm2390, %v2391, %v2389
      %v2393 = vrsqrt.pop %v1780
      %v2394 = vmul.f32 %v2393, %v1780
      %v2395 = vmul.f32 %v2394, %v2393
      %v2396 = vmul.f32 0.5, %v2395
      %v2397 = vsub.f32 1.5, %v2396
      %v2398 = vmul.f32 %v2393, %v2397
      %v2399 = vmul.f32 %v1780, %v2398
      %vm2400 = vcmp.eq.f32.partialorder %v1780, inf
      %v2401 = vsel %vm2400, %v1780, %v2399
      %vm2402 = vcmp.eq.f32.partialorder %v1780, 0.0
      %v2403 = vand.u32 %v1780, 2147483648
      %v2404 = vsel %vm2402, %v2403, %v2401
      %v2405 = vrsqrt.pop %v1783
      %v2406 = vmul.f32 %v2405, %v1783
      %v2407 = vmul.f32 %v2406, %v2405
      %v2408 = vmul.f32 0.5, %v2407
      %v2409 = vsub.f32 1.5, %v2408
      %v2410 = vmul.f32 %v2405, %v2409
      %v2411 = vmul.f32 %v1783, %v2410
      %vm2412 = vcmp.eq.f32.partialorder %v1783, inf
      %v2413 = vsel %vm2412, %v1783, %v2411
      %vm2414 = vcmp.eq.f32.partialorder %v1783, 0.0
      %v2415 = vand.u32 %v1783, 2147483648
      %v2416 = vsel %vm2414, %v2415, %v2413
      %v2417 = vrsqrt.pop %v1786
      %v2418 = vmul.f32 %v2417, %v1786
      %v2419 = vmul.f32 %v2418, %v2417
      %v2420 = vmul.f32 0.5, %v2419
      %v2421 = vsub.f32 1.5, %v2420
      %v2422 = vmul.f32 %v2417, %v2421
      %v2423 = vmul.f32 %v1786, %v2422
      %vm2424 = vcmp.eq.f32.partialorder %v1786, inf
      %v2425 = vsel %vm2424, %v1786, %v2423
      %vm2426 = vcmp.eq.f32.partialorder %v1786, 0.0
      %v2427 = vand.u32 %v1786, 2147483648
      %v2428 = vsel %vm2426, %v2427, %v2425
      %v2429 = vrsqrt.pop %v1789
      %v2430 = vmul.f32 %v2429, %v1789
      %v2431 = vmul.f32 %v2430, %v2429
      %v2432 = vmul.f32 0.5, %v2431
      %v2433 = vsub.f32 1.5, %v2432
      %v2434 = vmul.f32 %v2429, %v2433
      %v2435 = vmul.f32 %v1789, %v2434
      %vm2436 = vcmp.eq.f32.partialorder %v1789, inf
      %v2437 = vsel %vm2436, %v1789, %v2435
      %vm2438 = vcmp.eq.f32.partialorder %v1789, 0.0
      %v2439 = vand.u32 %v1789, 2147483648
      %v2440 = vsel %vm2438, %v2439, %v2437
      %v2441 = vrsqrt.pop %v1792
      %v2442 = vmul.f32 %v2441, %v1792
      %v2443 = vmul.f32 %v2442, %v2441
      %v2444 = vmul.f32 0.5, %v2443
      %v2445 = vsub.f32 1.5, %v2444
      %v2446 = vmul.f32 %v2441, %v2445
      %v2447 = vmul.f32 %v1792, %v2446
      %vm2448 = vcmp.eq.f32.partialorder %v1792, inf
      %v2449 = vsel %vm2448, %v1792, %v2447
      %vm2450 = vcmp.eq.f32.partialorder %v1792, 0.0
      %v2451 = vand.u32 %v1792, 2147483648
      %v2452 = vsel %vm2450, %v2451, %v2449
      %v2453 = vrsqrt.pop %v1795
      %v2454 = vmul.f32 %v2453, %v1795
      %v2455 = vmul.f32 %v2454, %v2453
      %v2456 = vmul.f32 0.5, %v2455
      %v2457 = vsub.f32 1.5, %v2456
      %v2458 = vmul.f32 %v2453, %v2457
      %v2459 = vmul.f32 %v1795, %v2458
      %vm2460 = vcmp.eq.f32.partialorder %v1795, inf
      %v2461 = vsel %vm2460, %v1795, %v2459
      %vm2462 = vcmp.eq.f32.partialorder %v1795, 0.0
      %v2463 = vand.u32 %v1795, 2147483648
      %v2464 = vsel %vm2462, %v2463, %v2461
      %v2465 = vrsqrt.pop %v1798
      %v2466 = vmul.f32 %v2465, %v1798
      %v2467 = vmul.f32 %v2466, %v2465
      %v2468 = vmul.f32 0.5, %v2467
      %v2469 = vsub.f32 1.5, %v2468
      %v2470 = vmul.f32 %v2465, %v2469
      %v2471 = vmul.f32 %v1798, %v2470
      %vm2472 = vcmp.eq.f32.partialorder %v1798, inf
      %v2473 = vsel %vm2472, %v1798, %v2471
      %vm2474 = vcmp.eq.f32.partialorder %v1798, 0.0
      %v2475 = vand.u32 %v1798, 2147483648
      %v2476 = vsel %vm2474, %v2475, %v2473
      %v2477 = vrsqrt.pop %v1801
      %v2478 = vmul.f32 %v2477, %v1801
      %v2479 = vmul.f32 %v2478, %v2477
      %v2480 = vmul.f32 0.5, %v2479
      %v2481 = vsub.f32 1.5, %v2480
      %v2482 = vmul.f32 %v2477, %v2481
      %v2483 = vmul.f32 %v1801, %v2482
      %vm2484 = vcmp.eq.f32.partialorder %v1801, inf
      %v2485 = vsel %vm2484, %v1801, %v2483
      %vm2486 = vcmp.eq.f32.partialorder %v1801, 0.0
      %v2487 = vand.u32 %v1801, 2147483648
      %v2488 = vsel %vm2486, %v2487, %v2485
      %v2489 = vrsqrt.pop %v1804
      %v2490 = vmul.f32 %v2489, %v1804
      %v2491 = vmul.f32 %v2490, %v2489
      %v2492 = vmul.f32 0.5, %v2491
      %v2493 = vsub.f32 1.5, %v2492
      %v2494 = vmul.f32 %v2489, %v2493
      %v2495 = vmul.f32 %v1804, %v2494
      %vm2496 = vcmp.eq.f32.partialorder %v1804, inf
      %v2497 = vsel %vm2496, %v1804, %v2495
      %vm2498 = vcmp.eq.f32.partialorder %v1804, 0.0
      %v2499 = vand.u32 %v1804, 2147483648
      %v2500 = vsel %vm2498, %v2499, %v2497
      %v2501 = vrsqrt.pop %v1807
      %v2502 = vmul.f32 %v2501, %v1807
      %v2503 = vmul.f32 %v2502, %v2501
      %v2504 = vmul.f32 0.5, %v2503
      %v2505 = vsub.f32 1.5, %v2504
      %v2506 = vmul.f32 %v2501, %v2505
      %v2507 = vmul.f32 %v1807, %v2506
      %vm2508 = vcmp.eq.f32.partialorder %v1807, inf
      %v2509 = vsel %vm2508, %v1807, %v2507
      %vm2510 = vcmp.eq.f32.partialorder %v1807, 0.0
      %v2511 = vand.u32 %v1807, 2147483648
      %v2512 = vsel %vm2510, %v2511, %v2509
      %v2513 = vrsqrt.pop %v1810
      %v2514 = vmul.f32 %v2513, %v1810
      %v2515 = vmul.f32 %v2514, %v2513
      %v2516 = vmul.f32 0.5, %v2515
      %v2517 = vsub.f32 1.5, %v2516
      %v2518 = vmul.f32 %v2513, %v2517
      %v2519 = vmul.f32 %v1810, %v2518
      %vm2520 = vcmp.eq.f32.partialorder %v1810, inf
      %v2521 = vsel %vm2520, %v1810, %v2519
      %vm2522 = vcmp.eq.f32.partialorder %v1810, 0.0
      %v2523 = vand.u32 %v1810, 2147483648
      %v2524 = vsel %vm2522, %v2523, %v2521
      %v2525 = vrsqrt.pop %v1813
      %v2526 = vmul.f32 %v2525, %v1813
      %v2527 = vmul.f32 %v2526, %v2525
      %v2528 = vmul.f32 0.5, %v2527
      %v2529 = vsub.f32 1.5, %v2528
      %v2530 = vmul.f32 %v2525, %v2529
      %v2531 = vmul.f32 %v1813, %v2530
      %vm2532 = vcmp.eq.f32.partialorder %v1813, inf
      %v2533 = vsel %vm2532, %v1813, %v2531
      %vm2534 = vcmp.eq.f32.partialorder %v1813, 0.0
      %v2535 = vand.u32 %v1813, 2147483648
      %v2536 = vsel %vm2534, %v2535, %v2533
      %v2537 = vrsqrt.pop %v1816
      %v2538 = vmul.f32 %v2537, %v1816
      %v2539 = vmul.f32 %v2538, %v2537
      %v2540 = vmul.f32 0.5, %v2539
      %v2541 = vsub.f32 1.5, %v2540
      %v2542 = vmul.f32 %v2537, %v2541
      %v2543 = vmul.f32 %v1816, %v2542
      %vm2544 = vcmp.eq.f32.partialorder %v1816, inf
      %v2545 = vsel %vm2544, %v1816, %v2543
      %vm2546 = vcmp.eq.f32.partialorder %v1816, 0.0
      %v2547 = vand.u32 %v1816, 2147483648
      %v2548 = vsel %vm2546, %v2547, %v2545
      %v2549 = vrsqrt.pop %v1819
      %v2550 = vmul.f32 %v2549, %v1819
      %v2551 = vmul.f32 %v2550, %v2549
      %v2552 = vmul.f32 0.5, %v2551
      %v2553 = vsub.f32 1.5, %v2552
      %v2554 = vmul.f32 %v2549, %v2553
      %v2555 = vmul.f32 %v1819, %v2554
      %vm2556 = vcmp.eq.f32.partialorder %v1819, inf
      %v2557 = vsel %vm2556, %v1819, %v2555
      %vm2558 = vcmp.eq.f32.partialorder %v1819, 0.0
      %v2559 = vand.u32 %v1819, 2147483648
      %v2560 = vsel %vm2558, %v2559, %v2557
      %v2561 = vrsqrt.pop %v1822
      %v2562 = vmul.f32 %v2561, %v1822
      %v2563 = vmul.f32 %v2562, %v2561
      %v2564 = vmul.f32 0.5, %v2563
      %v2565 = vsub.f32 1.5, %v2564
      %v2566 = vmul.f32 %v2561, %v2565
      %v2567 = vmul.f32 %v1822, %v2566
      %vm2568 = vcmp.eq.f32.partialorder %v1822, inf
      %v2569 = vsel %vm2568, %v1822, %v2567
      %vm2570 = vcmp.eq.f32.partialorder %v1822, 0.0
      %v2571 = vand.u32 %v1822, 2147483648
      %v2572 = vsel %vm2570, %v2571, %v2569
      %v2573 = vrsqrt.pop %v1825
      %v2574 = vmul.f32 %v2573, %v1825
      %v2575 = vmul.f32 %v2574, %v2573
      %v2576 = vmul.f32 0.5, %v2575
      %v2577 = vsub.f32 1.5, %v2576
      %v2578 = vmul.f32 %v2573, %v2577
      %v2579 = vmul.f32 %v1825, %v2578
      %vm2580 = vcmp.eq.f32.partialorder %v1825, inf
      %v2581 = vsel %vm2580, %v1825, %v2579
      %vm2582 = vcmp.eq.f32.partialorder %v1825, 0.0
      %v2583 = vand.u32 %v1825, 2147483648
      %v2584 = vsel %vm2582, %v2583, %v2581
      %v2585 = vrsqrt.pop %v1828
      %v2586 = vmul.f32 %v2585, %v1828
      %v2587 = vmul.f32 %v2586, %v2585
      %v2588 = vmul.f32 0.5, %v2587
      %v2589 = vsub.f32 1.5, %v2588
      %v2590 = vmul.f32 %v2585, %v2589
      %v2591 = vmul.f32 %v1828, %v2590
      %vm2592 = vcmp.eq.f32.partialorder %v1828, inf
      %v2593 = vsel %vm2592, %v1828, %v2591
      %vm2594 = vcmp.eq.f32.partialorder %v1828, 0.0
      %v2595 = vand.u32 %v1828, 2147483648
      %v2596 = vsel %vm2594, %v2595, %v2593
      %v2597 = vadd.f32 %v1840, 1e-08
      %v2598 = vadd.f32 %v1852, 1e-08
      %v2599 = vadd.f32 %v1864, 1e-08
      %v2600 = vadd.f32 %v1876, 1e-08
      %v2601 = vadd.f32 %v1888, 1e-08
      %v2602 = vadd.f32 %v1900, 1e-08
      %v2603 = vadd.f32 %v1912, 1e-08
      %v2604 = vadd.f32 %v1924, 1e-08
      %v2605 = vadd.f32 %v1936, 1e-08
      %v2606 = vadd.f32 %v1948, 1e-08
      %v2607 = vadd.f32 %v1960, 1e-08
      %v2608 = vadd.f32 %v1972, 1e-08
      %v2609 = vadd.f32 %v1984, 1e-08
      %v2610 = vadd.f32 %v1996, 1e-08
      %v2611 = vadd.f32 %v2008, 1e-08
      %v2612 = vadd.f32 %v2020, 1e-08
      %v2613 = vadd.f32 %v2032, 1e-08
      %v2614 = vadd.f32 %v2044, 1e-08
      %v2615 = vadd.f32 %v2056, 1e-08
      %v2616 = vadd.f32 %v2068, 1e-08
      %v2617 = vadd.f32 %v2080, 1e-08
      %v2618 = vadd.f32 %v2092, 1e-08
      %v2619 = vadd.f32 %v2104, 1e-08
      %v2620 = vadd.f32 %v2116, 1e-08
      %v2621 = vadd.f32 %v2128, 1e-08
      %v2622 = vadd.f32 %v2140, 1e-08
      %v2623 = vadd.f32 %v2152, 1e-08
      %v2624 = vadd.f32 %v2164, 1e-08
      %v2625 = vadd.f32 %v2176, 1e-08
      %v2626 = vadd.f32 %v2188, 1e-08
      %v2627 = vadd.f32 %v2200, 1e-08
      %v2628 = vadd.f32 %v2212, 1e-08
      %v2629 = vadd.f32 %v2224, 1e-08
      %v2630 = vadd.f32 %v2236, 1e-08
      %v2631 = vadd.f32 %v2248, 1e-08
      %v2632 = vadd.f32 %v2260, 1e-08
      %v2633 = vadd.f32 %v2272, 1e-08
      %v2634 = vadd.f32 %v2284, 1e-08
      %v2635 = vadd.f32 %v2296, 1e-08
      %v2636 = vadd.f32 %v2308, 1e-08
      %v2637 = vadd.f32 %v2320, 1e-08
      %v2638 = vadd.f32 %v2332, 1e-08
      %v2639 = vadd.f32 %v2344, 1e-08
      %v2640 = vadd.f32 %v2356, 1e-08
      %v2641 = vadd.f32 %v2368, 1e-08
      %v2642 = vadd.f32 %v2380, 1e-08
      %v2643 = vadd.f32 %v2392, 1e-08
      %v2644 = vadd.f32 %v2404, 1e-08
      %v2645 = vadd.f32 %v2416, 1e-08
      %v2646 = vadd.f32 %v2428, 1e-08
      %v2647 = vadd.f32 %v2440, 1e-08
      %v2648 = vadd.f32 %v2452, 1e-08
      %v2649 = vadd.f32 %v2464, 1e-08
      %v2650 = vadd.f32 %v2476, 1e-08
      %v2651 = vadd.f32 %v2488, 1e-08
      %v2652 = vadd.f32 %v2500, 1e-08
      %v2653 = vadd.f32 %v2512, 1e-08
      %v2654 = vadd.f32 %v2524, 1e-08
      %v2655 = vadd.f32 %v2536, 1e-08
      %v2656 = vadd.f32 %v2548, 1e-08
      %v2657 = vadd.f32 %v2560, 1e-08
      %v2658 = vadd.f32 %v2572, 1e-08
      %v2659 = vadd.f32 %v2584, 1e-08
      %v2660 = vadd.f32 %v2596, 1e-08
      %v2661 = vrcp.pop %v2597
      %v2662 = vmul.f32 %v2597, %v2661
      %v2663 = vsub.f32 1.0, %v2662
      %v2664 = vmul.f32 %v2661, %v2663
      %v2665 = vadd.f32 %v2661, %v2664
      %vm2666 = vweird.f32 %v2597
      %vm2667 = vweird.f32 %v2661
      %vm2668 = vmor %vm2666, %vm2667
      %v2669 = vsel %vm2668, %v2661, %v2665
      %v2670 = vand.u32 2147483647, %v2597
      %vm2671 = vcmp.eq.f32.partialorder %v2670, 8.507059e+37
      %v2672 = vand.u32 %v2597, 2147483648
      %v2673 = vor.u32 1.1754944e-38, %v2672
      %v2674 = vsel %vm2671, %v2673, %v2669
      %v2675 = vmul.f32 %v1509, %v2674
      %v2676 = vrcp.pop %v2598
      %v2677 = vmul.f32 %v2598, %v2676
      %v2678 = vsub.f32 1.0, %v2677
      %v2679 = vmul.f32 %v2676, %v2678
      %v2680 = vadd.f32 %v2676, %v2679
      %vm2681 = vweird.f32 %v2598
      %vm2682 = vweird.f32 %v2676
      %vm2683 = vmor %vm2681, %vm2682
      %v2684 = vsel %vm2683, %v2676, %v2680
      %v2685 = vand.u32 2147483647, %v2598
      %vm2686 = vcmp.eq.f32.partialorder %v2685, 8.507059e+37
      %v2687 = vand.u32 %v2598, 2147483648
      %v2688 = vor.u32 1.1754944e-38, %v2687
      %v2689 = vsel %vm2686, %v2688, %v2684
      %v2690 = vmul.f32 %v1510, %v2689
      %v2691 = vrcp.pop %v2599
      %v2692 = vmul.f32 %v2599, %v2691
      %v2693 = vsub.f32 1.0, %v2692
      %v2694 = vmul.f32 %v2691, %v2693
      %v2695 = vadd.f32 %v2691, %v2694
      %vm2696 = vweird.f32 %v2599
      %vm2697 = vweird.f32 %v2691
      %vm2698 = vmor %vm2696, %vm2697
      %v2699 = vsel %vm2698, %v2691, %v2695
      %v2700 = vand.u32 2147483647, %v2599
      %vm2701 = vcmp.eq.f32.partialorder %v2700, 8.507059e+37
      %v2702 = vand.u32 %v2599, 2147483648
      %v2703 = vor.u32 1.1754944e-38, %v2702
      %v2704 = vsel %vm2701, %v2703, %v2699
      %v2705 = vmul.f32 %v1511, %v2704
      %v2706 = vrcp.pop %v2600
      %v2707 = vmul.f32 %v2600, %v2706
      %v2708 = vsub.f32 1.0, %v2707
      %v2709 = vmul.f32 %v2706, %v2708
      %v2710 = vadd.f32 %v2706, %v2709
      %vm2711 = vweird.f32 %v2600
      %vm2712 = vweird.f32 %v2706
      %vm2713 = vmor %vm2711, %vm2712
      %v2714 = vsel %vm2713, %v2706, %v2710
      %v2715 = vand.u32 2147483647, %v2600
      %vm2716 = vcmp.eq.f32.partialorder %v2715, 8.507059e+37
      %v2717 = vand.u32 %v2600, 2147483648
      %v2718 = vor.u32 1.1754944e-38, %v2717
      %v2719 = vsel %vm2716, %v2718, %v2714
      %v2720 = vmul.f32 %v1512, %v2719
      %v2721 = vrcp.pop %v2601
      %v2722 = vmul.f32 %v2601, %v2721
      %v2723 = vsub.f32 1.0, %v2722
      %v2724 = vmul.f32 %v2721, %v2723
      %v2725 = vadd.f32 %v2721, %v2724
      %vm2726 = vweird.f32 %v2601
      %vm2727 = vweird.f32 %v2721
      %vm2728 = vmor %vm2726, %vm2727
      %v2729 = vsel %vm2728, %v2721, %v2725
      %v2730 = vand.u32 2147483647, %v2601
      %vm2731 = vcmp.eq.f32.partialorder %v2730, 8.507059e+37
      %v2732 = vand.u32 %v2601, 2147483648
      %v2733 = vor.u32 1.1754944e-38, %v2732
      %v2734 = vsel %vm2731, %v2733, %v2729
      %v2735 = vmul.f32 %v1513, %v2734
      %v2736 = vrcp.pop %v2602
      %v2737 = vmul.f32 %v2602, %v2736
      %v2738 = vsub.f32 1.0, %v2737
      %v2739 = vmul.f32 %v2736, %v2738
      %v2740 = vadd.f32 %v2736, %v2739
      %vm2741 = vweird.f32 %v2602
      %vm2742 = vweird.f32 %v2736
      %vm2743 = vmor %vm2741, %vm2742
      %v2744 = vsel %vm2743, %v2736, %v2740
      %v2745 = vand.u32 2147483647, %v2602
      %vm2746 = vcmp.eq.f32.partialorder %v2745, 8.507059e+37
      %v2747 = vand.u32 %v2602, 2147483648
      %v2748 = vor.u32 1.1754944e-38, %v2747
      %v2749 = vsel %vm2746, %v2748, %v2744
      %v2750 = vmul.f32 %v1514, %v2749
      %v2751 = vrcp.pop %v2603
      %v2752 = vmul.f32 %v2603, %v2751
      %v2753 = vsub.f32 1.0, %v2752
      %v2754 = vmul.f32 %v2751, %v2753
      %v2755 = vadd.f32 %v2751, %v2754
      %vm2756 = vweird.f32 %v2603
      %vm2757 = vweird.f32 %v2751
      %vm2758 = vmor %vm2756, %vm2757
      %v2759 = vsel %vm2758, %v2751, %v2755
      %v2760 = vand.u32 2147483647, %v2603
      %vm2761 = vcmp.eq.f32.partialorder %v2760, 8.507059e+37
      %v2762 = vand.u32 %v2603, 2147483648
      %v2763 = vor.u32 1.1754944e-38, %v2762
      %v2764 = vsel %vm2761, %v2763, %v2759
      %v2765 = vmul.f32 %v1515, %v2764
      %v2766 = vrcp.pop %v2604
      %v2767 = vmul.f32 %v2604, %v2766
      %v2768 = vsub.f32 1.0, %v2767
      %v2769 = vmul.f32 %v2766, %v2768
      %v2770 = vadd.f32 %v2766, %v2769
      %vm2771 = vweird.f32 %v2604
      %vm2772 = vweird.f32 %v2766
      %vm2773 = vmor %vm2771, %vm2772
      %v2774 = vsel %vm2773, %v2766, %v2770
      %v2775 = vand.u32 2147483647, %v2604
      %vm2776 = vcmp.eq.f32.partialorder %v2775, 8.507059e+37
      %v2777 = vand.u32 %v2604, 2147483648
      %v2778 = vor.u32 1.1754944e-38, %v2777
      %v2779 = vsel %vm2776, %v2778, %v2774
      %v2780 = vmul.f32 %v1516, %v2779
      %v2781 = vrcp.pop %v2605
      %v2782 = vmul.f32 %v2605, %v2781
      %v2783 = vsub.f32 1.0, %v2782
      %v2784 = vmul.f32 %v2781, %v2783
      %v2785 = vadd.f32 %v2781, %v2784
      %vm2786 = vweird.f32 %v2605
      %vm2787 = vweird.f32 %v2781
      %vm2788 = vmor %vm2786, %vm2787
      %v2789 = vsel %vm2788, %v2781, %v2785
      %v2790 = vand.u32 2147483647, %v2605
      %vm2791 = vcmp.eq.f32.partialorder %v2790, 8.507059e+37
      %v2792 = vand.u32 %v2605, 2147483648
      %v2793 = vor.u32 1.1754944e-38, %v2792
      %v2794 = vsel %vm2791, %v2793, %v2789
      %v2795 = vmul.f32 %v1517, %v2794
      %v2796 = vrcp.pop %v2606
      %v2797 = vmul.f32 %v2606, %v2796
      %v2798 = vsub.f32 1.0, %v2797
      %v2799 = vmul.f32 %v2796, %v2798
      %v2800 = vadd.f32 %v2796, %v2799
      %vm2801 = vweird.f32 %v2606
      %vm2802 = vweird.f32 %v2796
      %vm2803 = vmor %vm2801, %vm2802
      %v2804 = vsel %vm2803, %v2796, %v2800
      %v2805 = vand.u32 2147483647, %v2606
      %vm2806 = vcmp.eq.f32.partialorder %v2805, 8.507059e+37
      %v2807 = vand.u32 %v2606, 2147483648
      %v2808 = vor.u32 1.1754944e-38, %v2807
      %v2809 = vsel %vm2806, %v2808, %v2804
      %v2810 = vmul.f32 %v1518, %v2809
      %v2811 = vrcp.pop %v2607
      %v2812 = vmul.f32 %v2607, %v2811
      %v2813 = vsub.f32 1.0, %v2812
      %v2814 = vmul.f32 %v2811, %v2813
      %v2815 = vadd.f32 %v2811, %v2814
      %vm2816 = vweird.f32 %v2607
      %vm2817 = vweird.f32 %v2811
      %vm2818 = vmor %vm2816, %vm2817
      %v2819 = vsel %vm2818, %v2811, %v2815
      %v2820 = vand.u32 2147483647, %v2607
      %vm2821 = vcmp.eq.f32.partialorder %v2820, 8.507059e+37
      %v2822 = vand.u32 %v2607, 2147483648
      %v2823 = vor.u32 1.1754944e-38, %v2822
      %v2824 = vsel %vm2821, %v2823, %v2819
      %v2825 = vmul.f32 %v1519, %v2824
      %v2826 = vrcp.pop %v2608
      %v2827 = vmul.f32 %v2608, %v2826
      %v2828 = vsub.f32 1.0, %v2827
      %v2829 = vmul.f32 %v2826, %v2828
      %v2830 = vadd.f32 %v2826, %v2829
      %vm2831 = vweird.f32 %v2608
      %vm2832 = vweird.f32 %v2826
      %vm2833 = vmor %vm2831, %vm2832
      %v2834 = vsel %vm2833, %v2826, %v2830
      %v2835 = vand.u32 2147483647, %v2608
      %vm2836 = vcmp.eq.f32.partialorder %v2835, 8.507059e+37
      %v2837 = vand.u32 %v2608, 2147483648
      %v2838 = vor.u32 1.1754944e-38, %v2837
      %v2839 = vsel %vm2836, %v2838, %v2834
      %v2840 = vmul.f32 %v1520, %v2839
      %v2841 = vrcp.pop %v2609
      %v2842 = vmul.f32 %v2609, %v2841
      %v2843 = vsub.f32 1.0, %v2842
      %v2844 = vmul.f32 %v2841, %v2843
      %v2845 = vadd.f32 %v2841, %v2844
      %vm2846 = vweird.f32 %v2609
      %vm2847 = vweird.f32 %v2841
      %vm2848 = vmor %vm2846, %vm2847
      %v2849 = vsel %vm2848, %v2841, %v2845
      %v2850 = vand.u32 2147483647, %v2609
      %vm2851 = vcmp.eq.f32.partialorder %v2850, 8.507059e+37
      %v2852 = vand.u32 %v2609, 2147483648
      %v2853 = vor.u32 1.1754944e-38, %v2852
      %v2854 = vsel %vm2851, %v2853, %v2849
      %v2855 = vmul.f32 %v1521, %v2854
      %v2856 = vrcp.pop %v2610
      %v2857 = vmul.f32 %v2610, %v2856
      %v2858 = vsub.f32 1.0, %v2857
      %v2859 = vmul.f32 %v2856, %v2858
      %v2860 = vadd.f32 %v2856, %v2859
      %vm2861 = vweird.f32 %v2610
      %vm2862 = vweird.f32 %v2856
      %vm2863 = vmor %vm2861, %vm2862
      %v2864 = vsel %vm2863, %v2856, %v2860
      %v2865 = vand.u32 2147483647, %v2610
      %vm2866 = vcmp.eq.f32.partialorder %v2865, 8.507059e+37
      %v2867 = vand.u32 %v2610, 2147483648
      %v2868 = vor.u32 1.1754944e-38, %v2867
      %v2869 = vsel %vm2866, %v2868, %v2864
      %v2870 = vmul.f32 %v1522, %v2869
      %v2871 = vrcp.pop %v2611
      %v2872 = vmul.f32 %v2611, %v2871
      %v2873 = vsub.f32 1.0, %v2872
      %v2874 = vmul.f32 %v2871, %v2873
      %v2875 = vadd.f32 %v2871, %v2874
      %vm2876 = vweird.f32 %v2611
      %vm2877 = vweird.f32 %v2871
      %vm2878 = vmor %vm2876, %vm2877
      %v2879 = vsel %vm2878, %v2871, %v2875
      %v2880 = vand.u32 2147483647, %v2611
      %vm2881 = vcmp.eq.f32.partialorder %v2880, 8.507059e+37
      %v2882 = vand.u32 %v2611, 2147483648
      %v2883 = vor.u32 1.1754944e-38, %v2882
      %v2884 = vsel %vm2881, %v2883, %v2879
      %v2885 = vmul.f32 %v1523, %v2884
      %v2886 = vrcp.pop %v2612
      %v2887 = vmul.f32 %v2612, %v2886
      %v2888 = vsub.f32 1.0, %v2887
      %v2889 = vmul.f32 %v2886, %v2888
      %v2890 = vadd.f32 %v2886, %v2889
      %vm2891 = vweird.f32 %v2612
      %vm2892 = vweird.f32 %v2886
      %vm2893 = vmor %vm2891, %vm2892
      %v2894 = vsel %vm2893, %v2886, %v2890
      %v2895 = vand.u32 2147483647, %v2612
      %vm2896 = vcmp.eq.f32.partialorder %v2895, 8.507059e+37
      %v2897 = vand.u32 %v2612, 2147483648
      %v2898 = vor.u32 1.1754944e-38, %v2897
      %v2899 = vsel %vm2896, %v2898, %v2894
      %v2900 = vmul.f32 %v1524, %v2899
      %v2901 = vrcp.pop %v2613
      %v2902 = vmul.f32 %v2613, %v2901
      %v2903 = vsub.f32 1.0, %v2902
      %v2904 = vmul.f32 %v2901, %v2903
      %v2905 = vadd.f32 %v2901, %v2904
      %vm2906 = vweird.f32 %v2613
      %vm2907 = vweird.f32 %v2901
      %vm2908 = vmor %vm2906, %vm2907
      %v2909 = vsel %vm2908, %v2901, %v2905
      %v2910 = vand.u32 2147483647, %v2613
      %vm2911 = vcmp.eq.f32.partialorder %v2910, 8.507059e+37
      %v2912 = vand.u32 %v2613, 2147483648
      %v2913 = vor.u32 1.1754944e-38, %v2912
      %v2914 = vsel %vm2911, %v2913, %v2909
      %v2915 = vmul.f32 %v1525, %v2914
      %v2916 = vrcp.pop %v2614
      %v2917 = vmul.f32 %v2614, %v2916
      %v2918 = vsub.f32 1.0, %v2917
      %v2919 = vmul.f32 %v2916, %v2918
      %v2920 = vadd.f32 %v2916, %v2919
      %vm2921 = vweird.f32 %v2614
      %vm2922 = vweird.f32 %v2916
      %vm2923 = vmor %vm2921, %vm2922
      %v2924 = vsel %vm2923, %v2916, %v2920
      %v2925 = vand.u32 2147483647, %v2614
      %vm2926 = vcmp.eq.f32.partialorder %v2925, 8.507059e+37
      %v2927 = vand.u32 %v2614, 2147483648
      %v2928 = vor.u32 1.1754944e-38, %v2927
      %v2929 = vsel %vm2926, %v2928, %v2924
      %v2930 = vmul.f32 %v1526, %v2929
      %v2931 = vrcp.pop %v2615
      %v2932 = vmul.f32 %v2615, %v2931
      %v2933 = vsub.f32 1.0, %v2932
      %v2934 = vmul.f32 %v2931, %v2933
      %v2935 = vadd.f32 %v2931, %v2934
      %vm2936 = vweird.f32 %v2615
      %vm2937 = vweird.f32 %v2931
      %vm2938 = vmor %vm2936, %vm2937
      %v2939 = vsel %vm2938, %v2931, %v2935
      %v2940 = vand.u32 2147483647, %v2615
      %vm2941 = vcmp.eq.f32.partialorder %v2940, 8.507059e+37
      %v2942 = vand.u32 %v2615, 2147483648
      %v2943 = vor.u32 1.1754944e-38, %v2942
      %v2944 = vsel %vm2941, %v2943, %v2939
      %v2945 = vmul.f32 %v1527, %v2944
      %v2946 = vrcp.pop %v2616
      %v2947 = vmul.f32 %v2616, %v2946
      %v2948 = vsub.f32 1.0, %v2947
      %v2949 = vmul.f32 %v2946, %v2948
      %v2950 = vadd.f32 %v2946, %v2949
      %vm2951 = vweird.f32 %v2616
      %vm2952 = vweird.f32 %v2946
      %vm2953 = vmor %vm2951, %vm2952
      %v2954 = vsel %vm2953, %v2946, %v2950
      %v2955 = vand.u32 2147483647, %v2616
      %vm2956 = vcmp.eq.f32.partialorder %v2955, 8.507059e+37
      %v2957 = vand.u32 %v2616, 2147483648
      %v2958 = vor.u32 1.1754944e-38, %v2957
      %v2959 = vsel %vm2956, %v2958, %v2954
      %v2960 = vmul.f32 %v1528, %v2959
      %v2961 = vrcp.pop %v2617
      %v2962 = vmul.f32 %v2617, %v2961
      %v2963 = vsub.f32 1.0, %v2962
      %v2964 = vmul.f32 %v2961, %v2963
      %v2965 = vadd.f32 %v2961, %v2964
      %vm2966 = vweird.f32 %v2617
      %vm2967 = vweird.f32 %v2961
      %vm2968 = vmor %vm2966, %vm2967
      %v2969 = vsel %vm2968, %v2961, %v2965
      %v2970 = vand.u32 2147483647, %v2617
      %vm2971 = vcmp.eq.f32.partialorder %v2970, 8.507059e+37
      %v2972 = vand.u32 %v2617, 2147483648
      %v2973 = vor.u32 1.1754944e-38, %v2972
      %v2974 = vsel %vm2971, %v2973, %v2969
      %v2975 = vmul.f32 %v1529, %v2974
      %v2976 = vrcp.pop %v2618
      %v2977 = vmul.f32 %v2618, %v2976
      %v2978 = vsub.f32 1.0, %v2977
      %v2979 = vmul.f32 %v2976, %v2978
      %v2980 = vadd.f32 %v2976, %v2979
      %vm2981 = vweird.f32 %v2618
      %vm2982 = vweird.f32 %v2976
      %vm2983 = vmor %vm2981, %vm2982
      %v2984 = vsel %vm2983, %v2976, %v2980
      %v2985 = vand.u32 2147483647, %v2618
      %vm2986 = vcmp.eq.f32.partialorder %v2985, 8.507059e+37
      %v2987 = vand.u32 %v2618, 2147483648
      %v2988 = vor.u32 1.1754944e-38, %v2987
      %v2989 = vsel %vm2986, %v2988, %v2984
      %v2990 = vmul.f32 %v1530, %v2989
      %v2991 = vrcp.pop %v2619
      %v2992 = vmul.f32 %v2619, %v2991
      %v2993 = vsub.f32 1.0, %v2992
      %v2994 = vmul.f32 %v2991, %v2993
      %v2995 = vadd.f32 %v2991, %v2994
      %vm2996 = vweird.f32 %v2619
      %vm2997 = vweird.f32 %v2991
      %vm2998 = vmor %vm2996, %vm2997
      %v2999 = vsel %vm2998, %v2991, %v2995
      %v3000 = vand.u32 2147483647, %v2619
      %vm3001 = vcmp.eq.f32.partialorder %v3000, 8.507059e+37
      %v3002 = vand.u32 %v2619, 2147483648
      %v3003 = vor.u32 1.1754944e-38, %v3002
      %v3004 = vsel %vm3001, %v3003, %v2999
      %v3005 = vmul.f32 %v1531, %v3004
      %v3006 = vrcp.pop %v2620
      %v3007 = vmul.f32 %v2620, %v3006
      %v3008 = vsub.f32 1.0, %v3007
      %v3009 = vmul.f32 %v3006, %v3008
      %v3010 = vadd.f32 %v3006, %v3009
      %vm3011 = vweird.f32 %v2620
      %vm3012 = vweird.f32 %v3006
      %vm3013 = vmor %vm3011, %vm3012
      %v3014 = vsel %vm3013, %v3006, %v3010
      %v3015 = vand.u32 2147483647, %v2620
      %vm3016 = vcmp.eq.f32.partialorder %v3015, 8.507059e+37
      %v3017 = vand.u32 %v2620, 2147483648
      %v3018 = vor.u32 1.1754944e-38, %v3017
      %v3019 = vsel %vm3016, %v3018, %v3014
      %v3020 = vmul.f32 %v1532, %v3019
      %v3021 = vrcp.pop %v2621
      %v3022 = vmul.f32 %v2621, %v3021
      %v3023 = vsub.f32 1.0, %v3022
      %v3024 = vmul.f32 %v3021, %v3023
      %v3025 = vadd.f32 %v3021, %v3024
      %vm3026 = vweird.f32 %v2621
      %vm3027 = vweird.f32 %v3021
      %vm3028 = vmor %vm3026, %vm3027
      %v3029 = vsel %vm3028, %v3021, %v3025
      %v3030 = vand.u32 2147483647, %v2621
      %vm3031 = vcmp.eq.f32.partialorder %v3030, 8.507059e+37
      %v3032 = vand.u32 %v2621, 2147483648
      %v3033 = vor.u32 1.1754944e-38, %v3032
      %v3034 = vsel %vm3031, %v3033, %v3029
      %v3035 = vmul.f32 %v1533, %v3034
      %v3036 = vrcp.pop %v2622
      %v3037 = vmul.f32 %v2622, %v3036
      %v3038 = vsub.f32 1.0, %v3037
      %v3039 = vmul.f32 %v3036, %v3038
      %v3040 = vadd.f32 %v3036, %v3039
      %vm3041 = vweird.f32 %v2622
      %vm3042 = vweird.f32 %v3036
      %vm3043 = vmor %vm3041, %vm3042
      %v3044 = vsel %vm3043, %v3036, %v3040
      %v3045 = vand.u32 2147483647, %v2622
      %vm3046 = vcmp.eq.f32.partialorder %v3045, 8.507059e+37
      %v3047 = vand.u32 %v2622, 2147483648
      %v3048 = vor.u32 1.1754944e-38, %v3047
      %v3049 = vsel %vm3046, %v3048, %v3044
      %v3050 = vmul.f32 %v1534, %v3049
      %v3051 = vrcp.pop %v2623
      %v3052 = vmul.f32 %v2623, %v3051
      %v3053 = vsub.f32 1.0, %v3052
      %v3054 = vmul.f32 %v3051, %v3053
      %v3055 = vadd.f32 %v3051, %v3054
      %vm3056 = vweird.f32 %v2623
      %vm3057 = vweird.f32 %v3051
      %vm3058 = vmor %vm3056, %vm3057
      %v3059 = vsel %vm3058, %v3051, %v3055
      %v3060 = vand.u32 2147483647, %v2623
      %vm3061 = vcmp.eq.f32.partialorder %v3060, 8.507059e+37
      %v3062 = vand.u32 %v2623, 2147483648
      %v3063 = vor.u32 1.1754944e-38, %v3062
      %v3064 = vsel %vm3061, %v3063, %v3059
      %v3065 = vmul.f32 %v1535, %v3064
      %v3066 = vrcp.pop %v2624
      %v3067 = vmul.f32 %v2624, %v3066
      %v3068 = vsub.f32 1.0, %v3067
      %v3069 = vmul.f32 %v3066, %v3068
      %v3070 = vadd.f32 %v3066, %v3069
      %vm3071 = vweird.f32 %v2624
      %vm3072 = vweird.f32 %v3066
      %vm3073 = vmor %vm3071, %vm3072
      %v3074 = vsel %vm3073, %v3066, %v3070
      %v3075 = vand.u32 2147483647, %v2624
      %vm3076 = vcmp.eq.f32.partialorder %v3075, 8.507059e+37
      %v3077 = vand.u32 %v2624, 2147483648
      %v3078 = vor.u32 1.1754944e-38, %v3077
      %v3079 = vsel %vm3076, %v3078, %v3074
      %v3080 = vmul.f32 %v1536, %v3079
      %v3081 = vrcp.pop %v2625
      %v3082 = vmul.f32 %v2625, %v3081
      %v3083 = vsub.f32 1.0, %v3082
      %v3084 = vmul.f32 %v3081, %v3083
      %v3085 = vadd.f32 %v3081, %v3084
      %vm3086 = vweird.f32 %v2625
      %vm3087 = vweird.f32 %v3081
      %vm3088 = vmor %vm3086, %vm3087
      %v3089 = vsel %vm3088, %v3081, %v3085
      %v3090 = vand.u32 2147483647, %v2625
      %vm3091 = vcmp.eq.f32.partialorder %v3090, 8.507059e+37
      %v3092 = vand.u32 %v2625, 2147483648
      %v3093 = vor.u32 1.1754944e-38, %v3092
      %v3094 = vsel %vm3091, %v3093, %v3089
      %v3095 = vmul.f32 %v1537, %v3094
      %v3096 = vrcp.pop %v2626
      %v3097 = vmul.f32 %v2626, %v3096
      %v3098 = vsub.f32 1.0, %v3097
      %v3099 = vmul.f32 %v3096, %v3098
      %v3100 = vadd.f32 %v3096, %v3099
      %vm3101 = vweird.f32 %v2626
      %vm3102 = vweird.f32 %v3096
      %vm3103 = vmor %vm3101, %vm3102
      %v3104 = vsel %vm3103, %v3096, %v3100
      %v3105 = vand.u32 2147483647, %v2626
      %vm3106 = vcmp.eq.f32.partialorder %v3105, 8.507059e+37
      %v3107 = vand.u32 %v2626, 2147483648
      %v3108 = vor.u32 1.1754944e-38, %v3107
      %v3109 = vsel %vm3106, %v3108, %v3104
      %v3110 = vmul.f32 %v1538, %v3109
      %v3111 = vrcp.pop %v2627
      %v3112 = vmul.f32 %v2627, %v3111
      %v3113 = vsub.f32 1.0, %v3112
      %v3114 = vmul.f32 %v3111, %v3113
      %v3115 = vadd.f32 %v3111, %v3114
      %vm3116 = vweird.f32 %v2627
      %vm3117 = vweird.f32 %v3111
      %vm3118 = vmor %vm3116, %vm3117
      %v3119 = vsel %vm3118, %v3111, %v3115
      %v3120 = vand.u32 2147483647, %v2627
      %vm3121 = vcmp.eq.f32.partialorder %v3120, 8.507059e+37
      %v3122 = vand.u32 %v2627, 2147483648
      %v3123 = vor.u32 1.1754944e-38, %v3122
      %v3124 = vsel %vm3121, %v3123, %v3119
      %v3125 = vmul.f32 %v1539, %v3124
      %v3126 = vrcp.pop %v2628
      %v3127 = vmul.f32 %v2628, %v3126
      %v3128 = vsub.f32 1.0, %v3127
      %v3129 = vmul.f32 %v3126, %v3128
      %v3130 = vadd.f32 %v3126, %v3129
      %vm3131 = vweird.f32 %v2628
      %vm3132 = vweird.f32 %v3126
      %vm3133 = vmor %vm3131, %vm3132
      %v3134 = vsel %vm3133, %v3126, %v3130
      %v3135 = vand.u32 2147483647, %v2628
      %vm3136 = vcmp.eq.f32.partialorder %v3135, 8.507059e+37
      %v3137 = vand.u32 %v2628, 2147483648
      %v3138 = vor.u32 1.1754944e-38, %v3137
      %v3139 = vsel %vm3136, %v3138, %v3134
      %v3140 = vmul.f32 %v1540, %v3139
      %v3141 = vrcp.pop %v2629
      %v3142 = vmul.f32 %v2629, %v3141
      %v3143 = vsub.f32 1.0, %v3142
      %v3144 = vmul.f32 %v3141, %v3143
      %v3145 = vadd.f32 %v3141, %v3144
      %vm3146 = vweird.f32 %v2629
      %vm3147 = vweird.f32 %v3141
      %vm3148 = vmor %vm3146, %vm3147
      %v3149 = vsel %vm3148, %v3141, %v3145
      %v3150 = vand.u32 2147483647, %v2629
      %vm3151 = vcmp.eq.f32.partialorder %v3150, 8.507059e+37
      %v3152 = vand.u32 %v2629, 2147483648
      %v3153 = vor.u32 1.1754944e-38, %v3152
      %v3154 = vsel %vm3151, %v3153, %v3149
      %v3155 = vmul.f32 %v1541, %v3154
      %v3156 = vrcp.pop %v2630
      %v3157 = vmul.f32 %v2630, %v3156
      %v3158 = vsub.f32 1.0, %v3157
      %v3159 = vmul.f32 %v3156, %v3158
      %v3160 = vadd.f32 %v3156, %v3159
      %vm3161 = vweird.f32 %v2630
      %vm3162 = vweird.f32 %v3156
      %vm3163 = vmor %vm3161, %vm3162
      %v3164 = vsel %vm3163, %v3156, %v3160
      %v3165 = vand.u32 2147483647, %v2630
      %vm3166 = vcmp.eq.f32.partialorder %v3165, 8.507059e+37
      %v3167 = vand.u32 %v2630, 2147483648
      %v3168 = vor.u32 1.1754944e-38, %v3167
      %v3169 = vsel %vm3166, %v3168, %v3164
      %v3170 = vmul.f32 %v1542, %v3169
      %v3171 = vrcp.pop %v2631
      %v3172 = vmul.f32 %v2631, %v3171
      %v3173 = vsub.f32 1.0, %v3172
      %v3174 = vmul.f32 %v3171, %v3173
      %v3175 = vadd.f32 %v3171, %v3174
      %vm3176 = vweird.f32 %v2631
      %vm3177 = vweird.f32 %v3171
      %vm3178 = vmor %vm3176, %vm3177
      %v3179 = vsel %vm3178, %v3171, %v3175
      %v3180 = vand.u32 2147483647, %v2631
      %vm3181 = vcmp.eq.f32.partialorder %v3180, 8.507059e+37
      %v3182 = vand.u32 %v2631, 2147483648
      %v3183 = vor.u32 1.1754944e-38, %v3182
      %v3184 = vsel %vm3181, %v3183, %v3179
      %v3185 = vmul.f32 %v1543, %v3184
      %v3186 = vrcp.pop %v2632
      %v3187 = vmul.f32 %v2632, %v3186
      %v3188 = vsub.f32 1.0, %v3187
      %v3189 = vmul.f32 %v3186, %v3188
      %v3190 = vadd.f32 %v3186, %v3189
      %vm3191 = vweird.f32 %v2632
      %vm3192 = vweird.f32 %v3186
      %vm3193 = vmor %vm3191, %vm3192
      %v3194 = vsel %vm3193, %v3186, %v3190
      %v3195 = vand.u32 2147483647, %v2632
      %vm3196 = vcmp.eq.f32.partialorder %v3195, 8.507059e+37
      %v3197 = vand.u32 %v2632, 2147483648
      %v3198 = vor.u32 1.1754944e-38, %v3197
      %v3199 = vsel %vm3196, %v3198, %v3194
      %v3200 = vmul.f32 %v1544, %v3199
      %v3201 = vrcp.pop %v2633
      %v3202 = vmul.f32 %v2633, %v3201
      %v3203 = vsub.f32 1.0, %v3202
      %v3204 = vmul.f32 %v3201, %v3203
      %v3205 = vadd.f32 %v3201, %v3204
      %vm3206 = vweird.f32 %v2633
      %vm3207 = vweird.f32 %v3201
      %vm3208 = vmor %vm3206, %vm3207
      %v3209 = vsel %vm3208, %v3201, %v3205
      %v3210 = vand.u32 2147483647, %v2633
      %vm3211 = vcmp.eq.f32.partialorder %v3210, 8.507059e+37
      %v3212 = vand.u32 %v2633, 2147483648
      %v3213 = vor.u32 1.1754944e-38, %v3212
      %v3214 = vsel %vm3211, %v3213, %v3209
      %v3215 = vmul.f32 %v1545, %v3214
      %v3216 = vrcp.pop %v2634
      %v3217 = vmul.f32 %v2634, %v3216
      %v3218 = vsub.f32 1.0, %v3217
      %v3219 = vmul.f32 %v3216, %v3218
      %v3220 = vadd.f32 %v3216, %v3219
      %vm3221 = vweird.f32 %v2634
      %vm3222 = vweird.f32 %v3216
      %vm3223 = vmor %vm3221, %vm3222
      %v3224 = vsel %vm3223, %v3216, %v3220
      %v3225 = vand.u32 2147483647, %v2634
      %vm3226 = vcmp.eq.f32.partialorder %v3225, 8.507059e+37
      %v3227 = vand.u32 %v2634, 2147483648
      %v3228 = vor.u32 1.1754944e-38, %v3227
      %v3229 = vsel %vm3226, %v3228, %v3224
      %v3230 = vmul.f32 %v1546, %v3229
      %v3231 = vrcp.pop %v2635
      %v3232 = vmul.f32 %v2635, %v3231
      %v3233 = vsub.f32 1.0, %v3232
      %v3234 = vmul.f32 %v3231, %v3233
      %v3235 = vadd.f32 %v3231, %v3234
      %vm3236 = vweird.f32 %v2635
      %vm3237 = vweird.f32 %v3231
      %vm3238 = vmor %vm3236, %vm3237
      %v3239 = vsel %vm3238, %v3231, %v3235
      %v3240 = vand.u32 2147483647, %v2635
      %vm3241 = vcmp.eq.f32.partialorder %v3240, 8.507059e+37
      %v3242 = vand.u32 %v2635, 2147483648
      %v3243 = vor.u32 1.1754944e-38, %v3242
      %v3244 = vsel %vm3241, %v3243, %v3239
      %v3245 = vmul.f32 %v1547, %v3244
      %v3246 = vrcp.pop %v2636
      %v3247 = vmul.f32 %v2636, %v3246
      %v3248 = vsub.f32 1.0, %v3247
      %v3249 = vmul.f32 %v3246, %v3248
      %v3250 = vadd.f32 %v3246, %v3249
      %vm3251 = vweird.f32 %v2636
      %vm3252 = vweird.f32 %v3246
      %vm3253 = vmor %vm3251, %vm3252
      %v3254 = vsel %vm3253, %v3246, %v3250
      %v3255 = vand.u32 2147483647, %v2636
      %vm3256 = vcmp.eq.f32.partialorder %v3255, 8.507059e+37
      %v3257 = vand.u32 %v2636, 2147483648
      %v3258 = vor.u32 1.1754944e-38, %v3257
      %v3259 = vsel %vm3256, %v3258, %v3254
      %v3260 = vmul.f32 %v1548, %v3259
      %v3261 = vrcp.pop %v2637
      %v3262 = vmul.f32 %v2637, %v3261
      %v3263 = vsub.f32 1.0, %v3262
      %v3264 = vmul.f32 %v3261, %v3263
      %v3265 = vadd.f32 %v3261, %v3264
      %vm3266 = vweird.f32 %v2637
      %vm3267 = vweird.f32 %v3261
      %vm3268 = vmor %vm3266, %vm3267
      %v3269 = vsel %vm3268, %v3261, %v3265
      %v3270 = vand.u32 2147483647, %v2637
      %vm3271 = vcmp.eq.f32.partialorder %v3270, 8.507059e+37
      %v3272 = vand.u32 %v2637, 2147483648
      %v3273 = vor.u32 1.1754944e-38, %v3272
      %v3274 = vsel %vm3271, %v3273, %v3269
      %v3275 = vmul.f32 %v1549, %v3274
      %v3276 = vrcp.pop %v2638
      %v3277 = vmul.f32 %v2638, %v3276
      %v3278 = vsub.f32 1.0, %v3277
      %v3279 = vmul.f32 %v3276, %v3278
      %v3280 = vadd.f32 %v3276, %v3279
      %vm3281 = vweird.f32 %v2638
      %vm3282 = vweird.f32 %v3276
      %vm3283 = vmor %vm3281, %vm3282
      %v3284 = vsel %vm3283, %v3276, %v3280
      %v3285 = vand.u32 2147483647, %v2638
      %vm3286 = vcmp.eq.f32.partialorder %v3285, 8.507059e+37
      %v3287 = vand.u32 %v2638, 2147483648
      %v3288 = vor.u32 1.1754944e-38, %v3287
      %v3289 = vsel %vm3286, %v3288, %v3284
      %v3290 = vmul.f32 %v1550, %v3289
      %v3291 = vrcp.pop %v2639
      %v3292 = vmul.f32 %v2639, %v3291
      %v3293 = vsub.f32 1.0, %v3292
      %v3294 = vmul.f32 %v3291, %v3293
      %v3295 = vadd.f32 %v3291, %v3294
      %vm3296 = vweird.f32 %v2639
      %vm3297 = vweird.f32 %v3291
      %vm3298 = vmor %vm3296, %vm3297
      %v3299 = vsel %vm3298, %v3291, %v3295
      %v3300 = vand.u32 2147483647, %v2639
      %vm3301 = vcmp.eq.f32.partialorder %v3300, 8.507059e+37
      %v3302 = vand.u32 %v2639, 2147483648
      %v3303 = vor.u32 1.1754944e-38, %v3302
      %v3304 = vsel %vm3301, %v3303, %v3299
      %v3305 = vmul.f32 %v1551, %v3304
      %v3306 = vrcp.pop %v2640
      %v3307 = vmul.f32 %v2640, %v3306
      %v3308 = vsub.f32 1.0, %v3307
      %v3309 = vmul.f32 %v3306, %v3308
      %v3310 = vadd.f32 %v3306, %v3309
      %vm3311 = vweird.f32 %v2640
      %vm3312 = vweird.f32 %v3306
      %vm3313 = vmor %vm3311, %vm3312
      %v3314 = vsel %vm3313, %v3306, %v3310
      %v3315 = vand.u32 2147483647, %v2640
      %vm3316 = vcmp.eq.f32.partialorder %v3315, 8.507059e+37
      %v3317 = vand.u32 %v2640, 2147483648
      %v3318 = vor.u32 1.1754944e-38, %v3317
      %v3319 = vsel %vm3316, %v3318, %v3314
      %v3320 = vmul.f32 %v1552, %v3319
      %v3321 = vrcp.pop %v2641
      %v3322 = vmul.f32 %v2641, %v3321
      %v3323 = vsub.f32 1.0, %v3322
      %v3324 = vmul.f32 %v3321, %v3323
      %v3325 = vadd.f32 %v3321, %v3324
      %vm3326 = vweird.f32 %v2641
      %vm3327 = vweird.f32 %v3321
      %vm3328 = vmor %vm3326, %vm3327
      %v3329 = vsel %vm3328, %v3321, %v3325
      %v3330 = vand.u32 2147483647, %v2641
      %vm3331 = vcmp.eq.f32.partialorder %v3330, 8.507059e+37
      %v3332 = vand.u32 %v2641, 2147483648
      %v3333 = vor.u32 1.1754944e-38, %v3332
      %v3334 = vsel %vm3331, %v3333, %v3329
      %v3335 = vmul.f32 %v1553, %v3334
      %v3336 = vrcp.pop %v2642
      %v3337 = vmul.f32 %v2642, %v3336
      %v3338 = vsub.f32 1.0, %v3337
      %v3339 = vmul.f32 %v3336, %v3338
      %v3340 = vadd.f32 %v3336, %v3339
      %vm3341 = vweird.f32 %v2642
      %vm3342 = vweird.f32 %v3336
      %vm3343 = vmor %vm3341, %vm3342
      %v3344 = vsel %vm3343, %v3336, %v3340
      %v3345 = vand.u32 2147483647, %v2642
      %vm3346 = vcmp.eq.f32.partialorder %v3345, 8.507059e+37
      %v3347 = vand.u32 %v2642, 2147483648
      %v3348 = vor.u32 1.1754944e-38, %v3347
      %v3349 = vsel %vm3346, %v3348, %v3344
      %v3350 = vmul.f32 %v1554, %v3349
      %v3351 = vrcp.pop %v2643
      %v3352 = vmul.f32 %v2643, %v3351
      %v3353 = vsub.f32 1.0, %v3352
      %v3354 = vmul.f32 %v3351, %v3353
      %v3355 = vadd.f32 %v3351, %v3354
      %vm3356 = vweird.f32 %v2643
      %vm3357 = vweird.f32 %v3351
      %vm3358 = vmor %vm3356, %vm3357
      %v3359 = vsel %vm3358, %v3351, %v3355
      %v3360 = vand.u32 2147483647, %v2643
      %vm3361 = vcmp.eq.f32.partialorder %v3360, 8.507059e+37
      %v3362 = vand.u32 %v2643, 2147483648
      %v3363 = vor.u32 1.1754944e-38, %v3362
      %v3364 = vsel %vm3361, %v3363, %v3359
      %v3365 = vmul.f32 %v1555, %v3364
      %v3366 = vrcp.pop %v2644
      %v3367 = vmul.f32 %v2644, %v3366
      %v3368 = vsub.f32 1.0, %v3367
      %v3369 = vmul.f32 %v3366, %v3368
      %v3370 = vadd.f32 %v3366, %v3369
      %vm3371 = vweird.f32 %v2644
      %vm3372 = vweird.f32 %v3366
      %vm3373 = vmor %vm3371, %vm3372
      %v3374 = vsel %vm3373, %v3366, %v3370
      %v3375 = vand.u32 2147483647, %v2644
      %vm3376 = vcmp.eq.f32.partialorder %v3375, 8.507059e+37
      %v3377 = vand.u32 %v2644, 2147483648
      %v3378 = vor.u32 1.1754944e-38, %v3377
      %v3379 = vsel %vm3376, %v3378, %v3374
      %v3380 = vmul.f32 %v1556, %v3379
      %v3381 = vrcp.pop %v2645
      %v3382 = vmul.f32 %v2645, %v3381
      %v3383 = vsub.f32 1.0, %v3382
      %v3384 = vmul.f32 %v3381, %v3383
      %v3385 = vadd.f32 %v3381, %v3384
      %vm3386 = vweird.f32 %v2645
      %vm3387 = vweird.f32 %v3381
      %vm3388 = vmor %vm3386, %vm3387
      %v3389 = vsel %vm3388, %v3381, %v3385
      %v3390 = vand.u32 2147483647, %v2645
      %vm3391 = vcmp.eq.f32.partialorder %v3390, 8.507059e+37
      %v3392 = vand.u32 %v2645, 2147483648
      %v3393 = vor.u32 1.1754944e-38, %v3392
      %v3394 = vsel %vm3391, %v3393, %v3389
      %v3395 = vmul.f32 %v1557, %v3394
      %v3396 = vrcp.pop %v2646
      %v3397 = vmul.f32 %v2646, %v3396
      %v3398 = vsub.f32 1.0, %v3397
      %v3399 = vmul.f32 %v3396, %v3398
      %v3400 = vadd.f32 %v3396, %v3399
      %vm3401 = vweird.f32 %v2646
      %vm3402 = vweird.f32 %v3396
      %vm3403 = vmor %vm3401, %vm3402
      %v3404 = vsel %vm3403, %v3396, %v3400
      %v3405 = vand.u32 2147483647, %v2646
      %vm3406 = vcmp.eq.f32.partialorder %v3405, 8.507059e+37
      %v3407 = vand.u32 %v2646, 2147483648
      %v3408 = vor.u32 1.1754944e-38, %v3407
      %v3409 = vsel %vm3406, %v3408, %v3404
      %v3410 = vmul.f32 %v1558, %v3409
      %v3411 = vrcp.pop %v2647
      %v3412 = vmul.f32 %v2647, %v3411
      %v3413 = vsub.f32 1.0, %v3412
      %v3414 = vmul.f32 %v3411, %v3413
      %v3415 = vadd.f32 %v3411, %v3414
      %vm3416 = vweird.f32 %v2647
      %vm3417 = vweird.f32 %v3411
      %vm3418 = vmor %vm3416, %vm3417
      %v3419 = vsel %vm3418, %v3411, %v3415
      %v3420 = vand.u32 2147483647, %v2647
      %vm3421 = vcmp.eq.f32.partialorder %v3420, 8.507059e+37
      %v3422 = vand.u32 %v2647, 2147483648
      %v3423 = vor.u32 1.1754944e-38, %v3422
      %v3424 = vsel %vm3421, %v3423, %v3419
      %v3425 = vmul.f32 %v1559, %v3424
      %v3426 = vrcp.pop %v2648
      %v3427 = vmul.f32 %v2648, %v3426
      %v3428 = vsub.f32 1.0, %v3427
      %v3429 = vmul.f32 %v3426, %v3428
      %v3430 = vadd.f32 %v3426, %v3429
      %vm3431 = vweird.f32 %v2648
      %vm3432 = vweird.f32 %v3426
      %vm3433 = vmor %vm3431, %vm3432
      %v3434 = vsel %vm3433, %v3426, %v3430
      %v3435 = vand.u32 2147483647, %v2648
      %vm3436 = vcmp.eq.f32.partialorder %v3435, 8.507059e+37
      %v3437 = vand.u32 %v2648, 2147483648
      %v3438 = vor.u32 1.1754944e-38, %v3437
      %v3439 = vsel %vm3436, %v3438, %v3434
      %v3440 = vmul.f32 %v1560, %v3439
      %v3441 = vrcp.pop %v2649
      %v3442 = vmul.f32 %v2649, %v3441
      %v3443 = vsub.f32 1.0, %v3442
      %v3444 = vmul.f32 %v3441, %v3443
      %v3445 = vadd.f32 %v3441, %v3444
      %vm3446 = vweird.f32 %v2649
      %vm3447 = vweird.f32 %v3441
      %vm3448 = vmor %vm3446, %vm3447
      %v3449 = vsel %vm3448, %v3441, %v3445
      %v3450 = vand.u32 2147483647, %v2649
      %vm3451 = vcmp.eq.f32.partialorder %v3450, 8.507059e+37
      %v3452 = vand.u32 %v2649, 2147483648
      %v3453 = vor.u32 1.1754944e-38, %v3452
      %v3454 = vsel %vm3451, %v3453, %v3449
      %v3455 = vmul.f32 %v1561, %v3454
      %v3456 = vrcp.pop %v2650
      %v3457 = vmul.f32 %v2650, %v3456
      %v3458 = vsub.f32 1.0, %v3457
      %v3459 = vmul.f32 %v3456, %v3458
      %v3460 = vadd.f32 %v3456, %v3459
      %vm3461 = vweird.f32 %v2650
      %vm3462 = vweird.f32 %v3456
      %vm3463 = vmor %vm3461, %vm3462
      %v3464 = vsel %vm3463, %v3456, %v3460
      %v3465 = vand.u32 2147483647, %v2650
      %vm3466 = vcmp.eq.f32.partialorder %v3465, 8.507059e+37
      %v3467 = vand.u32 %v2650, 2147483648
      %v3468 = vor.u32 1.1754944e-38, %v3467
      %v3469 = vsel %vm3466, %v3468, %v3464
      %v3470 = vmul.f32 %v1562, %v3469
      %v3471 = vrcp.pop %v2651
      %v3472 = vmul.f32 %v2651, %v3471
      %v3473 = vsub.f32 1.0, %v3472
      %v3474 = vmul.f32 %v3471, %v3473
      %v3475 = vadd.f32 %v3471, %v3474
      %vm3476 = vweird.f32 %v2651
      %vm3477 = vweird.f32 %v3471
      %vm3478 = vmor %vm3476, %vm3477
      %v3479 = vsel %vm3478, %v3471, %v3475
      %v3480 = vand.u32 2147483647, %v2651
      %vm3481 = vcmp.eq.f32.partialorder %v3480, 8.507059e+37
      %v3482 = vand.u32 %v2651, 2147483648
      %v3483 = vor.u32 1.1754944e-38, %v3482
      %v3484 = vsel %vm3481, %v3483, %v3479
      %v3485 = vmul.f32 %v1563, %v3484
      %v3486 = vrcp.pop %v2652
      %v3487 = vmul.f32 %v2652, %v3486
      %v3488 = vsub.f32 1.0, %v3487
      %v3489 = vmul.f32 %v3486, %v3488
      %v3490 = vadd.f32 %v3486, %v3489
      %vm3491 = vweird.f32 %v2652
      %vm3492 = vweird.f32 %v3486
      %vm3493 = vmor %vm3491, %vm3492
      %v3494 = vsel %vm3493, %v3486, %v3490
      %v3495 = vand.u32 2147483647, %v2652
      %vm3496 = vcmp.eq.f32.partialorder %v3495, 8.507059e+37
      %v3497 = vand.u32 %v2652, 2147483648
      %v3498 = vor.u32 1.1754944e-38, %v3497
      %v3499 = vsel %vm3496, %v3498, %v3494
      %v3500 = vmul.f32 %v1564, %v3499
      %v3501 = vrcp.pop %v2653
      %v3502 = vmul.f32 %v2653, %v3501
      %v3503 = vsub.f32 1.0, %v3502
      %v3504 = vmul.f32 %v3501, %v3503
      %v3505 = vadd.f32 %v3501, %v3504
      %vm3506 = vweird.f32 %v2653
      %vm3507 = vweird.f32 %v3501
      %vm3508 = vmor %vm3506, %vm3507
      %v3509 = vsel %vm3508, %v3501, %v3505
      %v3510 = vand.u32 2147483647, %v2653
      %vm3511 = vcmp.eq.f32.partialorder %v3510, 8.507059e+37
      %v3512 = vand.u32 %v2653, 2147483648
      %v3513 = vor.u32 1.1754944e-38, %v3512
      %v3514 = vsel %vm3511, %v3513, %v3509
      %v3515 = vmul.f32 %v1565, %v3514
      %v3516 = vrcp.pop %v2654
      %v3517 = vmul.f32 %v2654, %v3516
      %v3518 = vsub.f32 1.0, %v3517
      %v3519 = vmul.f32 %v3516, %v3518
      %v3520 = vadd.f32 %v3516, %v3519
      %vm3521 = vweird.f32 %v2654
      %vm3522 = vweird.f32 %v3516
      %vm3523 = vmor %vm3521, %vm3522
      %v3524 = vsel %vm3523, %v3516, %v3520
      %v3525 = vand.u32 2147483647, %v2654
      %vm3526 = vcmp.eq.f32.partialorder %v3525, 8.507059e+37
      %v3527 = vand.u32 %v2654, 2147483648
      %v3528 = vor.u32 1.1754944e-38, %v3527
      %v3529 = vsel %vm3526, %v3528, %v3524
      %v3530 = vmul.f32 %v1566, %v3529
      %v3531 = vrcp.pop %v2655
      %v3532 = vmul.f32 %v2655, %v3531
      %v3533 = vsub.f32 1.0, %v3532
      %v3534 = vmul.f32 %v3531, %v3533
      %v3535 = vadd.f32 %v3531, %v3534
      %vm3536 = vweird.f32 %v2655
      %vm3537 = vweird.f32 %v3531
      %vm3538 = vmor %vm3536, %vm3537
      %v3539 = vsel %vm3538, %v3531, %v3535
      %v3540 = vand.u32 2147483647, %v2655
      %vm3541 = vcmp.eq.f32.partialorder %v3540, 8.507059e+37
      %v3542 = vand.u32 %v2655, 2147483648
      %v3543 = vor.u32 1.1754944e-38, %v3542
      %v3544 = vsel %vm3541, %v3543, %v3539
      %v3545 = vmul.f32 %v1567, %v3544
      %v3546 = vrcp.pop %v2656
      %v3547 = vmul.f32 %v2656, %v3546
      %v3548 = vsub.f32 1.0, %v3547
      %v3549 = vmul.f32 %v3546, %v3548
      %v3550 = vadd.f32 %v3546, %v3549
      %vm3551 = vweird.f32 %v2656
      %vm3552 = vweird.f32 %v3546
      %vm3553 = vmor %vm3551, %vm3552
      %v3554 = vsel %vm3553, %v3546, %v3550
      %v3555 = vand.u32 2147483647, %v2656
      %vm3556 = vcmp.eq.f32.partialorder %v3555, 8.507059e+37
      %v3557 = vand.u32 %v2656, 2147483648
      %v3558 = vor.u32 1.1754944e-38, %v3557
      %v3559 = vsel %vm3556, %v3558, %v3554
      %v3560 = vmul.f32 %v1568, %v3559
      %v3561 = vrcp.pop %v2657
      %v3562 = vmul.f32 %v2657, %v3561
      %v3563 = vsub.f32 1.0, %v3562
      %v3564 = vmul.f32 %v3561, %v3563
      %v3565 = vadd.f32 %v3561, %v3564
      %vm3566 = vweird.f32 %v2657
      %vm3567 = vweird.f32 %v3561
      %vm3568 = vmor %vm3566, %vm3567
      %v3569 = vsel %vm3568, %v3561, %v3565
      %v3570 = vand.u32 2147483647, %v2657
      %vm3571 = vcmp.eq.f32.partialorder %v3570, 8.507059e+37
      %v3572 = vand.u32 %v2657, 2147483648
      %v3573 = vor.u32 1.1754944e-38, %v3572
      %v3574 = vsel %vm3571, %v3573, %v3569
      %v3575 = vmul.f32 %v1569, %v3574
      %v3576 = vrcp.pop %v2658
      %v3577 = vmul.f32 %v2658, %v3576
      %v3578 = vsub.f32 1.0, %v3577
      %v3579 = vmul.f32 %v3576, %v3578
      %v3580 = vadd.f32 %v3576, %v3579
      %vm3581 = vweird.f32 %v2658
      %vm3582 = vweird.f32 %v3576
      %vm3583 = vmor %vm3581, %vm3582
      %v3584 = vsel %vm3583, %v3576, %v3580
      %v3585 = vand.u32 2147483647, %v2658
      %vm3586 = vcmp.eq.f32.partialorder %v3585, 8.507059e+37
      %v3587 = vand.u32 %v2658, 2147483648
      %v3588 = vor.u32 1.1754944e-38, %v3587
      %v3589 = vsel %vm3586, %v3588, %v3584
      %v3590 = vmul.f32 %v1570, %v3589
      %v3591 = vrcp.pop %v2659
      %v3592 = vmul.f32 %v2659, %v3591
      %v3593 = vsub.f32 1.0, %v3592
      %v3594 = vmul.f32 %v3591, %v3593
      %v3595 = vadd.f32 %v3591, %v3594
      %vm3596 = vweird.f32 %v2659
      %vm3597 = vweird.f32 %v3591
      %vm3598 = vmor %vm3596, %vm3597
      %v3599 = vsel %vm3598, %v3591, %v3595
      %v3600 = vand.u32 2147483647, %v2659
      %vm3601 = vcmp.eq.f32.partialorder %v3600, 8.507059e+37
      %v3602 = vand.u32 %v2659, 2147483648
      %v3603 = vor.u32 1.1754944e-38, %v3602
      %v3604 = vsel %vm3601, %v3603, %v3599
      %v3605 = vmul.f32 %v1571, %v3604
      %v3606 = vrcp.pop %v2660
      %v3607 = vmul.f32 %v2660, %v3606
      %v3608 = vsub.f32 1.0, %v3607
      %v3609 = vmul.f32 %v3606, %v3608
      %v3610 = vadd.f32 %v3606, %v3609
      %vm3611 = vweird.f32 %v2660
      %vm3612 = vweird.f32 %v3606
      %vm3613 = vmor %vm3611, %vm3612
      %v3614 = vsel %vm3613, %v3606, %v3610
      %v3615 = vand.u32 2147483647, %v2660
      %vm3616 = vcmp.eq.f32.partialorder %v3615, 8.507059e+37
      %v3617 = vand.u32 %v2660, 2147483648
      %v3618 = vor.u32 1.1754944e-38, %v3617
      %v3619 = vsel %vm3616, %v3618, %v3614
      %v3620 = vmul.f32 %v1572, %v3619
      %v3621 = vpack.c.bf16 %v2675, %v2675
      %v3622 = vpack.c.bf16 %v2690, %v2690
      %v3623 = vpack.c.bf16 %v2705, %v2705
      %v3624 = vpack.c.bf16 %v2720, %v2720
      %v3625 = vpack.c.bf16 %v2735, %v2735
      %v3626 = vpack.c.bf16 %v2750, %v2750
      %v3627 = vpack.c.bf16 %v2765, %v2765
      %v3628 = vpack.c.bf16 %v2780, %v2780
      %v3629 = vpack.c.bf16 %v2795, %v2795
      %v3630 = vpack.c.bf16 %v2810, %v2810
      %v3631 = vpack.c.bf16 %v2825, %v2825
      %v3632 = vpack.c.bf16 %v2840, %v2840
      %v3633 = vpack.c.bf16 %v2855, %v2855
      %v3634 = vpack.c.bf16 %v2870, %v2870
      %v3635 = vpack.c.bf16 %v2885, %v2885
      %v3636 = vpack.c.bf16 %v2900, %v2900
      %v3637 = vpack.c.bf16 %v2915, %v2915
      %v3638 = vpack.c.bf16 %v2930, %v2930
      %v3639 = vpack.c.bf16 %v2945, %v2945
      %v3640 = vpack.c.bf16 %v2960, %v2960
      %v3641 = vpack.c.bf16 %v2975, %v2975
      %v3642 = vpack.c.bf16 %v2990, %v2990
      %v3643 = vpack.c.bf16 %v3005, %v3005
      %v3644 = vpack.c.bf16 %v3020, %v3020
      %v3645 = vpack.c.bf16 %v3035, %v3035
      %v3646 = vpack.c.bf16 %v3050, %v3050
      %v3647 = vpack.c.bf16 %v3065, %v3065
      %v3648 = vpack.c.bf16 %v3080, %v3080
      %v3649 = vpack.c.bf16 %v3095, %v3095
      %v3650 = vpack.c.bf16 %v3110, %v3110
      %v3651 = vpack.c.bf16 %v3125, %v3125
      %v3652 = vpack.c.bf16 %v3140, %v3140
      %v3653 = vpack.c.bf16 %v3155, %v3155
      %v3654 = vpack.c.bf16 %v3170, %v3170
      %v3655 = vpack.c.bf16 %v3185, %v3185
      %v3656 = vpack.c.bf16 %v3200, %v3200
      %v3657 = vpack.c.bf16 %v3215, %v3215
      %v3658 = vpack.c.bf16 %v3230, %v3230
      %v3659 = vpack.c.bf16 %v3245, %v3245
      %v3660 = vpack.c.bf16 %v3260, %v3260
      %v3661 = vpack.c.bf16 %v3275, %v3275
      %v3662 = vpack.c.bf16 %v3290, %v3290
      %v3663 = vpack.c.bf16 %v3305, %v3305
      %v3664 = vpack.c.bf16 %v3320, %v3320
      %v3665 = vpack.c.bf16 %v3335, %v3335
      %v3666 = vpack.c.bf16 %v3350, %v3350
      %v3667 = vpack.c.bf16 %v3365, %v3365
      %v3668 = vpack.c.bf16 %v3380, %v3380
      %v3669 = vpack.c.bf16 %v3395, %v3395
      %v3670 = vpack.c.bf16 %v3410, %v3410
      %v3671 = vpack.c.bf16 %v3425, %v3425
      %v3672 = vpack.c.bf16 %v3440, %v3440
      %v3673 = vpack.c.bf16 %v3455, %v3455
      %v3674 = vpack.c.bf16 %v3470, %v3470
      %v3675 = vpack.c.bf16 %v3485, %v3485
      %v3676 = vpack.c.bf16 %v3500, %v3500
      %v3677 = vpack.c.bf16 %v3515, %v3515
      %v3678 = vpack.c.bf16 %v3530, %v3530
      %v3679 = vpack.c.bf16 %v3545, %v3545
      %v3680 = vpack.c.bf16 %v3560, %v3560
      %v3681 = vpack.c.bf16 %v3575, %v3575
      %v3682 = vpack.c.bf16 %v3590, %v3590
      %v3683 = vpack.c.bf16 %v3605, %v3605
      %v3684 = vpack.c.bf16 %v3620, %v3620
      %vm3685 = vcmask 257024
      %3686 = vst.msk [vmem:[%s296] sm:$0xf] %vm3685, %v3621
      %3687 = vst.msk [vmem:[%s296 + $0x4] sm:$0xf] %vm3685, %v3622
      %3688 = vst.msk [vmem:[%s296 + $0x8] sm:$0xf] %vm3685, %v3623
      %3689 = vst.msk [vmem:[%s296 + $0xc] sm:$0xf] %vm3685, %v3624
      %3690 = vst.msk [vmem:[%s296 + $0x10] sm:$0xf] %vm3685, %v3625
      %3691 = vst.msk [vmem:[%s296 + $0x14] sm:$0xf] %vm3685, %v3626
      %3692 = vst.msk [vmem:[%s296 + $0x18] sm:$0xf] %vm3685, %v3627
      %3693 = vst.msk [vmem:[%s296 + $0x1c] sm:$0xf] %vm3685, %v3628
      %3694 = vst.msk [vmem:[%s296 + $0x20] sm:$0xf] %vm3685, %v3629
      %3695 = vst.msk [vmem:[%s296 + $0x24] sm:$0xf] %vm3685, %v3630
      %3696 = vst.msk [vmem:[%s296 + $0x28] sm:$0xf] %vm3685, %v3631
      %3697 = vst.msk [vmem:[%s296 + $0x2c] sm:$0xf] %vm3685, %v3632
      %3698 = vst.msk [vmem:[%s296 + $0x30] sm:$0xf] %vm3685, %v3633
      %3699 = vst.msk [vmem:[%s296 + $0x34] sm:$0xf] %vm3685, %v3634
      %3700 = vst.msk [vmem:[%s296 + $0x38] sm:$0xf] %vm3685, %v3635
      %3701 = vst.msk [vmem:[%s296 + $0x3c] sm:$0xf] %vm3685, %v3636
      %3702 = vst.msk [vmem:[%s296 + $0x40] sm:$0xf] %vm3685, %v3637
      %3703 = vst.msk [vmem:[%s296 + $0x44] sm:$0xf] %vm3685, %v3638
      %3704 = vst.msk [vmem:[%s296 + $0x48] sm:$0xf] %vm3685, %v3639
      %3705 = vst.msk [vmem:[%s296 + $0x4c] sm:$0xf] %vm3685, %v3640
      %3706 = vst.msk [vmem:[%s296 + $0x50] sm:$0xf] %vm3685, %v3641
      %3707 = vst.msk [vmem:[%s296 + $0x54] sm:$0xf] %vm3685, %v3642
      %3708 = vst.msk [vmem:[%s296 + $0x58] sm:$0xf] %vm3685, %v3643
      %3709 = vst.msk [vmem:[%s296 + $0x5c] sm:$0xf] %vm3685, %v3644
      %3710 = vst.msk [vmem:[%s296 + $0x60] sm:$0xf] %vm3685, %v3645
      %3711 = vst.msk [vmem:[%s296 + $0x64] sm:$0xf] %vm3685, %v3646
      %3712 = vst.msk [vmem:[%s296 + $0x68] sm:$0xf] %vm3685, %v3647
      %3713 = vst.msk [vmem:[%s296 + $0x6c] sm:$0xf] %vm3685, %v3648
      %3714 = vst.msk [vmem:[%s296 + $0x70] sm:$0xf] %vm3685, %v3649
      %3715 = vst.msk [vmem:[%s296 + $0x74] sm:$0xf] %vm3685, %v3650
      %3716 = vst.msk [vmem:[%s296 + $0x78] sm:$0xf] %vm3685, %v3651
      %3717 = vst.msk [vmem:[%s296 + $0x7c] sm:$0xf] %vm3685, %v3652
      %3718 = vst.msk [vmem:[%s296 + $0x80] sm:$0xf] %vm3685, %v3653
      %3719 = vst.msk [vmem:[%s296 + $0x84] sm:$0xf] %vm3685, %v3654
      %3720 = vst.msk [vmem:[%s296 + $0x88] sm:$0xf] %vm3685, %v3655
      %3721 = vst.msk [vmem:[%s296 + $0x8c] sm:$0xf] %vm3685, %v3656
      %3722 = vst.msk [vmem:[%s296 + $0x90] sm:$0xf] %vm3685, %v3657
      %3723 = vst.msk [vmem:[%s296 + $0x94] sm:$0xf] %vm3685, %v3658
      %3724 = vst.msk [vmem:[%s296 + $0x98] sm:$0xf] %vm3685, %v3659
      %3725 = vst.msk [vmem:[%s296 + $0x9c] sm:$0xf] %vm3685, %v3660
      %3726 = vst.msk [vmem:[%s296 + $0xa0] sm:$0xf] %vm3685, %v3661
      %3727 = vst.msk [vmem:[%s296 + $0xa4] sm:$0xf] %vm3685, %v3662
      %3728 = vst.msk [vmem:[%s296 + $0xa8] sm:$0xf] %vm3685, %v3663
      %3729 = vst.msk [vmem:[%s296 + $0xac] sm:$0xf] %vm3685, %v3664
      %3730 = vst.msk [vmem:[%s296 + $0xb0] sm:$0xf] %vm3685, %v3665
      %3731 = vst.msk [vmem:[%s296 + $0xb4] sm:$0xf] %vm3685, %v3666
      %3732 = vst.msk [vmem:[%s296 + $0xb8] sm:$0xf] %vm3685, %v3667
      %3733 = vst.msk [vmem:[%s296 + $0xbc] sm:$0xf] %vm3685, %v3668
      %3734 = vst.msk [vmem:[%s296 + $0xc0] sm:$0xf] %vm3685, %v3669
      %3735 = vst.msk [vmem:[%s296 + $0xc4] sm:$0xf] %vm3685, %v3670
      %3736 = vst.msk [vmem:[%s296 + $0xc8] sm:$0xf] %vm3685, %v3671
      %3737 = vst.msk [vmem:[%s296 + $0xcc] sm:$0xf] %vm3685, %v3672
      %3738 = vst.msk [vmem:[%s296 + $0xd0] sm:$0xf] %vm3685, %v3673
      %3739 = vst.msk [vmem:[%s296 + $0xd4] sm:$0xf] %vm3685, %v3674
      %3740 = vst.msk [vmem:[%s296 + $0xd8] sm:$0xf] %vm3685, %v3675
      %3741 = vst.msk [vmem:[%s296 + $0xdc] sm:$0xf] %vm3685, %v3676
      %3742 = vst.msk [vmem:[%s296 + $0xe0] sm:$0xf] %vm3685, %v3677
      %3743 = vst.msk [vmem:[%s296 + $0xe4] sm:$0xf] %vm3685, %v3678
      %3744 = vst.msk [vmem:[%s296 + $0xe8] sm:$0xf] %vm3685, %v3679
      %3745 = vst.msk [vmem:[%s296 + $0xec] sm:$0xf] %vm3685, %v3680
      %3746 = vst.msk [vmem:[%s296 + $0xf0] sm:$0xf] %vm3685, %v3681
      %3747 = vst.msk [vmem:[%s296 + $0xf4] sm:$0xf] %vm3685, %v3682
      %3748 = vst.msk [vmem:[%s296 + $0xf8] sm:$0xf] %vm3685, %v3683
      %3749 = vst.msk [vmem:[%s296 + $0xfc] sm:$0xf] %vm3685, %v3684
      %s3750 = smul.u32 64, %s21
      %p3751 = scmp.lt.s32.totalorder %s20, 1
      %s3752 = scalar_select %p3751, %s20, 1
      %p3753 = scmp.lt.s32.totalorder %s3750, 63
      %s3754 = scalar_select %p3753, %s3750, 63
      %s3755 = smul.addr %s3752, 64
      %s3756 = sadd.s32 %s3754, %s3755
      %s3757 = smul.addr %s3756, 4
      %s3758 = scalar_lea.vmem %s5, %s3757
      // Predicated region
      $region41: #{generator_forward.3} parent=39 // pred_check
        %p3759 = pneg %p170
      $region42: #{generator_forward.3} parent=39 // pred_check_branch
        %3761 = sbr.rel (%p3759) target = $region44
      $region43: #{generator_forward.3} parent=39 // pred_region
        %s3762 = smul.u32 64, %s21
      $region44: #{generator_forward.3} parent=39 // pred_fallthru
        _
    $region40: #{generator_forward.3} parent=5 // pred_fallthru
      _
    %p3763 = scmp.le.s32.totalorder 2, %s11
    // Predicated region
    $region45: #{generator_forward.3} parent=5 // pred_check
      %p3764 = pneg %p3763
    $region46: #{generator_forward.3} parent=5 // pred_check_branch
      %3766 = sbr.rel (%p3764) target = $region48
    $region47: #{generator_forward.3} parent=5 // pred_region
      %s3767 = ssub.s32 %s11, 2
      // Predicated region
      $region49: #{generator_forward.3} parent=47 // pred_check
        %p3768 = pneg %p176
      $region50: #{generator_forward.3} parent=47 // pred_check_branch
        %3770 = sbr.rel (%p3768) target = $region52
      $region51: #{generator_forward.3} parent=47 // pred_region
        %s3771 = smul.u32 64, %s23
        %p3772 = scmp.lt.s32.totalorder %s22, 1
        %s3773 = scalar_select %p3772, %s22, 1
        %p3774 = scmp.lt.s32.totalorder %s3771, 63
        %s3775 = scalar_select %p3774, %s3771, 63
        %s3776 = smul.addr %s3773, 64
        %s3777 = sadd.s32 %s3775, %s3776
        %s3778 = smul.addr %s3777, 4
        %s3779 = scalar_lea.vmem %s5, %s3778
      $region52: #{generator_forward.3} parent=47 // pred_fallthru
        _
    $region48: #{generator_forward.3} parent=5 // pred_fallthru
      _
  $region6: #{generator_forward.3} parent=0 // loop_footer
    %s15 = sadd.s32 1, %s11
  $region7: #{generator_forward.3} parent=0 // loop_footer_branch
    %10 = sbr.rel target = $region3
  $region8: #{generator_forward.3} parent=0 // loop_exit
    _

// kernel: generator_forward.4
$region0: #{generator_forward.4}
  #allocation0 [shape = 'u32[]', space=smem, size = 0x4, offset = 0x4, fixed_abs, tag = 'smem constant byte address 0x4 - core index']
  #allocation1 [shape = 'u32[72,128]{1,0:T(1,128)}', space=vmem, size = 0x9000, scoped, tag = 'internal scratch']
  #allocation2 [shape = 'f32[128,256]{1,0:T(8,128)}', space=vmem, size = 0x20000, scoped, tag = 'scratch operand']
  %s0 = inlined_call_operand.vmem [shape: bf16[2,256,32], index: 0, kind: input, shape index: {}]
  %s1 = inlined_call_operand.vmem [shape: bf16[2,256,32], index: 1, kind: input, shape index: {}]
  %s2 = inlined_call_operand.vmem [shape: f32[9,2,256,1], index: 2, kind: input, shape index: {}]
  %s3 = inlined_call_operand.vmem [shape: f32[9,2,1,256], index: 3, kind: input, shape index: {}]
  %s4 = inlined_call_operand.vmem [shape: f32[2,256,3], index: 4, kind: input, shape index: {}]
  %s5 = inlined_call_operand.vmem [shape: f32[2,256,3], index: 5, kind: output, shape index: {0}]
  %s6 = inlined_call_operand.vmem [shape: f32[2,256,3], index: 6, kind: output, shape index: {1}]
  %7 = xla_tuple %s5, %s6
  %s8 = sld [smem:[#allocation0]]
  $region73: #{generator_forward.4} parent=0
    _
  %s10 = ssub.s32 1, %s8
  %s11 = scalar_select 0, %s10, %s8
  loop: start=0, step=1, limit=38
  $region2: #{generator_forward.4} parent=0 // loop_pre_header
    _
  $region3: #{generator_forward.4} parent=0 // loop_header
    %s13 = sphi 0, %s17
    %p14 = scmp.ge.s32.totalorder %s13, 38
    %s20 = sphi 0, %s39
    %s21 = sphi 0, %s35
    %s22 = sphi 0, %s31
    %s23 = sphi 0, %s20
    %s24 = sphi 0, %s21
    %s25 = sphi 0, %s22
    %s26 = sphi 0, %s23
    %s27 = sphi 0, %s24
    %s28 = sphi 0, %s25
    %s44 = sphi 0, %s46
    %s47 = sphi 0, %s44
    %s48 = sphi 0, %s47
    %s64 = sphi 0, %s48
    %s70 = sphi 0, %s72
    %s73 = sphi 0, %s70
    %s74 = sphi 0, %s73
    %s90 = sphi 0, %s74
    %s100 = sphi 0, %s102
    %s103 = sphi 0, %s100
    %s104 = sphi 0, %s103
    %s120 = sphi 0, %s104
    %s128 = sphi 0, %s130
    %s131 = sphi 0, %s128
    %s132 = sphi 0, %s131
    %s148 = sphi 0, %s132
    %s154 = sphi 0, %s156
    %s157 = sphi 0, %s154
    %s158 = sphi 0, %s157
    %s174 = sphi 0, %s158
    %s182 = sphi 0, %s184
    %s185 = sphi 0, %s182
    %s186 = sphi 0, %s185
    %s202 = sphi 0, %s186
    %s210 = sphi 0, %s212
    %s213 = sphi 0, %s210
    %s214 = sphi 0, %s213
    %s230 = sphi 0, %s214
  $region4: #{generator_forward.4} parent=0 // loop_header_branch
    %16 = sbr.rel (%p14) target = $region8
  $region5: #{generator_forward.4} parent=0 // loop_body
    %s18 = ssub.s32 %s13, 1
    %s19 = ssub.s32 %s13, 2
    %s29 = sadd.s32 1, %s22
    %p30 = scmp.ge.s32.totalorder %s29, 9
    %s31 = scalar_select %p30, 0, %s29
    %s32 = sadd.s32 1, %s21
    %s33 = scalar_select %p30, %s32, %s21
    %p34 = scmp.ge.s32.totalorder %s33, 2
    %s35 = scalar_select %p34, 0, %s33
    %s36 = sadd.s32 1, %s20
    %s37 = scalar_select %p34, %s36, %s20
    %p38 = scmp.ge.s32.totalorder %s37, 2
    %s39 = scalar_select %p38, 0, %s37
    %s40 = ssub.s32 %s20, %s39
    %s41 = ssub.s32 %s21, %s35
    %s42 = sor.u32 %s40, %s41
    %p43 = scmp.eq.s32.totalorder %s42, 0
    %s45 = sadd.s32 %s44, 1
    %s46 = scalar_select %p43, %s44, %s45
    %p49 = pneg %p43
    %p50 = scmp.eq.s32.totalorder %s13, 35
    %p51 = por %p49, %p50
    %p52 = scmp.ne.s32.totalorder %s44, %s47
    %p53 = scmp.eq.s32.totalorder %s13, 0
    %p54 = por %p52, %p53
    %p55 = scmp.ne.s32.totalorder %s44, %s47
    %p56 = scmp.eq.s32.totalorder %s18, 35
    %p57 = por %p55, %p56
    %p58 = scmp.ne.s32.totalorder %s47, %s48
    %p59 = scmp.eq.s32.totalorder %s18, 0
    %p60 = por %p58, %p59
    %p61 = scmp.ne.s32.totalorder %s47, %s48
    %p62 = scmp.eq.s32.totalorder %s19, 35
    %p63 = por %p61, %p62
    %p65 = scmp.ne.s32.totalorder %s48, %s64
    %p66 = scmp.eq.s32.totalorder %s19, 0
    %p67 = por %p65, %p66
    %s68 = ssub.s32 %s20, %s39
    %p69 = scmp.eq.s32.totalorder %s68, 0
    %s71 = sadd.s32 %s70, 1
    %s72 = scalar_select %p69, %s70, %s71
    %p75 = pneg %p69
    %p76 = scmp.eq.s32.totalorder %s13, 35
    %p77 = por %p75, %p76
    %p78 = scmp.ne.s32.totalorder %s70, %s73
    %p79 = scmp.eq.s32.totalorder %s13, 0
    %p80 = por %p78, %p79
    %p81 = scmp.ne.s32.totalorder %s70, %s73
    %p82 = scmp.eq.s32.totalorder %s18, 35
    %p83 = por %p81, %p82
    %p84 = scmp.ne.s32.totalorder %s73, %s74
    %p85 = scmp.eq.s32.totalorder %s18, 0
    %p86 = por %p84, %p85
    %p87 = scmp.ne.s32.totalorder %s73, %s74
    %p88 = scmp.eq.s32.totalorder %s19, 35
    %p89 = por %p87, %p88
    %p91 = scmp.ne.s32.totalorder %s74, %s90
    %p92 = scmp.eq.s32.totalorder %s19, 0
    %p93 = por %p91, %p92
    %s94 = ssub.s32 %s22, %s31
    %s95 = ssub.s32 %s20, %s39
    %s96 = sor.u32 %s94, %s95
    %s97 = ssub.s32 %s21, %s35
    %s98 = sor.u32 %s96, %s97
    %p99 = scmp.eq.s32.totalorder %s98, 0
    %s101 = sadd.s32 %s100, 1
    %s102 = scalar_select %p99, %s100, %s101
    %p105 = pneg %p99
    %p106 = scmp.eq.s32.totalorder %s13, 35
    %p107 = por %p105, %p106
    %p108 = scmp.ne.s32.totalorder %s100, %s103
    %p109 = scmp.eq.s32.totalorder %s13, 0
    %p110 = por %p108, %p109
    %p111 = scmp.ne.s32.totalorder %s100, %s103
    %p112 = scmp.eq.s32.totalorder %s18, 35
    %p113 = por %p111, %p112
    %p114 = scmp.ne.s32.totalorder %s103, %s104
    %p115 = scmp.eq.s32.totalorder %s18, 0
    %p116 = por %p114, %p115
    %p117 = scmp.ne.s32.totalorder %s103, %s104
    %p118 = scmp.eq.s32.totalorder %s19, 35
    %p119 = por %p117, %p118
    %p121 = scmp.ne.s32.totalorder %s104, %s120
    %p122 = scmp.eq.s32.totalorder %s19, 0
    %p123 = por %p121, %p122
    %s124 = ssub.s32 %s22, %s31
    %s125 = ssub.s32 %s20, %s39
    %s126 = sor.u32 %s124, %s125
    %p127 = scmp.eq.s32.totalorder %s126, 0
    %s129 = sadd.s32 %s128, 1
    %s130 = scalar_select %p127, %s128, %s129
    %p133 = pneg %p127
    %p134 = scmp.eq.s32.totalorder %s13, 35
    %p135 = por %p133, %p134
    %p136 = scmp.ne.s32.totalorder %s128, %s131
    %p137 = scmp.eq.s32.totalorder %s13, 0
    %p138 = por %p136, %p137
    %p139 = scmp.ne.s32.totalorder %s128, %s131
    %p140 = scmp.eq.s32.totalorder %s18, 35
    %p141 = por %p139, %p140
    %p142 = scmp.ne.s32.totalorder %s131, %s132
    %p143 = scmp.eq.s32.totalorder %s18, 0
    %p144 = por %p142, %p143
    %p145 = scmp.ne.s32.totalorder %s131, %s132
    %p146 = scmp.eq.s32.totalorder %s19, 35
    %p147 = por %p145, %p146
    %p149 = scmp.ne.s32.totalorder %s132, %s148
    %p150 = scmp.eq.s32.totalorder %s19, 0
    %p151 = por %p149, %p150
    %s152 = ssub.s32 %s20, %s39
    %p153 = scmp.eq.s32.totalorder %s152, 0
    %s155 = sadd.s32 %s154, 1
    %s156 = scalar_select %p153, %s154, %s155
    %p159 = pneg %p153
    %p160 = scmp.eq.s32.totalorder %s13, 35
    %p161 = por %p159, %p160
    %p162 = scmp.ne.s32.totalorder %s154, %s157
    %p163 = scmp.eq.s32.totalorder %s13, 0
    %p164 = por %p162, %p163
    %p165 = scmp.ne.s32.totalorder %s154, %s157
    %p166 = scmp.eq.s32.totalorder %s18, 35
    %p167 = por %p165, %p166
    %p168 = scmp.ne.s32.totalorder %s157, %s158
    %p169 = scmp.eq.s32.totalorder %s18, 0
    %p170 = por %p168, %p169
    %p171 = scmp.ne.s32.totalorder %s157, %s158
    %p172 = scmp.eq.s32.totalorder %s19, 35
    %p173 = por %p171, %p172
    %p175 = scmp.ne.s32.totalorder %s158, %s174
    %p176 = scmp.eq.s32.totalorder %s19, 0
    %p177 = por %p175, %p176
    %s178 = ssub.s32 %s20, %s39
    %s179 = ssub.s32 %s21, %s35
    %s180 = sor.u32 %s178, %s179
    %p181 = scmp.eq.s32.totalorder %s180, 0
    %s183 = sadd.s32 %s182, 1
    %s184 = scalar_select %p181, %s182, %s183
    %p187 = pneg %p181
    %p188 = scmp.eq.s32.totalorder %s13, 35
    %p189 = por %p187, %p188
    %p190 = scmp.ne.s32.totalorder %s182, %s185
    %p191 = scmp.eq.s32.totalorder %s13, 0
    %p192 = por %p190, %p191
    %p193 = scmp.ne.s32.totalorder %s182, %s185
    %p194 = scmp.eq.s32.totalorder %s18, 35
    %p195 = por %p193, %p194
    %p196 = scmp.ne.s32.totalorder %s185, %s186
    %p197 = scmp.eq.s32.totalorder %s18, 0
    %p198 = por %p196, %p197
    %p199 = scmp.ne.s32.totalorder %s185, %s186
    %p200 = scmp.eq.s32.totalorder %s19, 35
    %p201 = por %p199, %p200
    %p203 = scmp.ne.s32.totalorder %s186, %s202
    %p204 = scmp.eq.s32.totalorder %s19, 0
    %p205 = por %p203, %p204
    %s206 = ssub.s32 %s20, %s39
    %s207 = ssub.s32 %s21, %s35
    %s208 = sor.u32 %s206, %s207
    %p209 = scmp.eq.s32.totalorder %s208, 0
    %s211 = sadd.s32 %s210, 1
    %s212 = scalar_select %p209, %s210, %s211
    %p215 = pneg %p209
    %p216 = scmp.eq.s32.totalorder %s13, 35
    %p217 = por %p215, %p216
    %p218 = scmp.ne.s32.totalorder %s210, %s213
    %p219 = scmp.eq.s32.totalorder %s13, 0
    %p220 = por %p218, %p219
    %p221 = scmp.ne.s32.totalorder %s210, %s213
    %p222 = scmp.eq.s32.totalorder %s18, 35
    %p223 = por %p221, %p222
    %p224 = scmp.ne.s32.totalorder %s213, %s214
    %p225 = scmp.eq.s32.totalorder %s18, 0
    %p226 = por %p224, %p225
    %p227 = scmp.ne.s32.totalorder %s213, %s214
    %p228 = scmp.eq.s32.totalorder %s19, 35
    %p229 = por %p227, %p228
    %p231 = scmp.ne.s32.totalorder %s214, %s230
    %p232 = scmp.eq.s32.totalorder %s19, 0
    %p233 = por %p231, %p232
    %p234 = scmp.le.s32.totalorder 1, %s13
    %p235 = scmp.lt.s32.totalorder %s13, 37
    %p236 = pnand %p234, %p235
    %p237 = pneg %p236
    // Predicated region
    $region9: #{generator_forward.4} parent=5 // pred_check
      _
    $region10: #{generator_forward.4} parent=5 // pred_check_branch
      %239 = sbr.rel (%p236) target = $region12
    $region11: #{generator_forward.4} parent=5 // pred_region
      %s240 = ssub.s32 %s13, 1
    $region12: #{generator_forward.4} parent=5 // pred_fallthru
      _
    %p241 = scmp.lt.s32.totalorder %s13, 36
    // Predicated region
    $region13: #{generator_forward.4} parent=5 // pred_check
      %p242 = pneg %p241
    $region14: #{generator_forward.4} parent=5 // pred_check_branch
      %244 = sbr.rel (%p242) target = $region16
    $region15: #{generator_forward.4} parent=5 // pred_region
      // Predicated region
      $region17: #{generator_forward.4} parent=15 // pred_check
        %p245 = pneg %p54
      $region18: #{generator_forward.4} parent=15 // pred_check_branch
        %247 = sbr.rel (%p245) target = $region20
      $region19: #{generator_forward.4} parent=15 // pred_region
        %s248 = smul.u32 16, %s21
        %p249 = scmp.lt.s32.totalorder %s20, 1
        %s250 = scalar_select %p249, %s20, 1
        %p251 = scmp.lt.s32.totalorder %s248, 31
        %s252 = scalar_select %p251, %s248, 31
        %s253 = smul.addr %s250, 32
        %s254 = sadd.s32 %s252, %s253
        %s255 = smul.addr %s254, 4
        %s256 = scalar_lea.vmem %s0, %s255
        %s257 = smul.u32 16, %s21
      $region20: #{generator_forward.4} parent=15 // pred_fallthru
        _
      // Predicated region
      $region21: #{generator_forward.4} parent=15 // pred_check
        %p258 = pneg %p80
      $region22: #{generator_forward.4} parent=15 // pred_check_branch
        %260 = sbr.rel (%p258) target = $region24
      $region23: #{generator_forward.4} parent=15 // pred_region
        %p261 = scmp.lt.s32.totalorder %s20, 1
        %s262 = scalar_select %p261, %s20, 1
        %s263 = smul.addr %s262, 32
        %s264 = smul.addr %s263, 4
        %s265 = scalar_lea.vmem %s1, %s264
      $region24: #{generator_forward.4} parent=15 // pred_fallthru
        _
      // Predicated region
      $region25: #{generator_forward.4} parent=15 // pred_check
        %p266 = pneg %p110
      $region26: #{generator_forward.4} parent=15 // pred_check_branch
        %268 = sbr.rel (%p266) target = $region28
      $region27: #{generator_forward.4} parent=15 // pred_region
        %s269 = smul.u32 16, %s21
        %p270 = scmp.lt.s32.totalorder %s22, 8
        %s271 = scalar_select %p270, %s22, 8
        %p272 = scmp.lt.s32.totalorder %s20, 1
        %s273 = scalar_select %p272, %s20, 1
        %p274 = scmp.lt.s32.totalorder %s269, 31
        %s275 = scalar_select %p274, %s269, 31
        %s276 = smul.addr %s273, 32
        %s277 = sadd.s32 %s275, %s276
        %s278 = smul.addr %s271, 64
        %s279 = sadd.s32 %s277, %s278
        %s280 = smul.addr %s279, 8
        %s281 = scalar_lea.vmem %s2, %s280
        %s282 = smul.u32 16, %s21
      $region28: #{generator_forward.4} parent=15 // pred_fallthru
        _
      // Predicated region
      $region29: #{generator_forward.4} parent=15 // pred_check
        %p283 = pneg %p138
      $region30: #{generator_forward.4} parent=15 // pred_check_branch
        %285 = sbr.rel (%p283) target = $region32
      $region31: #{generator_forward.4} parent=15 // pred_region
        %p286 = scmp.lt.s32.totalorder %s22, 8
        %s287 = scalar_select %p286, %s22, 8
        %p288 = scmp.lt.s32.totalorder %s20, 1
        %s289 = scalar_select %p288, %s20, 1
        %s290 = smul.addr %s289, 2
        %s291 = smul.addr %s287, 4
        %s292 = sadd.s32 %s290, %s291
        %s293 = scalar_lea.vmem %s3, %s292
      $region32: #{generator_forward.4} parent=15 // pred_fallthru
        _
      // Predicated region
      $region33: #{generator_forward.4} parent=15 // pred_check
        %p294 = pneg %p164
      $region34: #{generator_forward.4} parent=15 // pred_check_branch
        %296 = sbr.rel (%p294) target = $region36
      $region35: #{generator_forward.4} parent=15 // pred_region
        %p297 = scmp.lt.s32.totalorder %s20, 1
        %s298 = scalar_select %p297, %s20, 1
        %s299 = smul.addr %s298, 32
        %s300 = smul.addr %s299, 8
        %s301 = scalar_lea.vmem %s4, %s300
      $region36: #{generator_forward.4} parent=15 // pred_fallthru
        _
    $region16: #{generator_forward.4} parent=5 // pred_fallthru
      _
    %p302 = scmp.le.s32.totalorder 1, %s13
    %p303 = scmp.lt.s32.totalorder %s13, 37
    %p304 = pnand %p302, %p303
    %p305 = pneg %p304
    // Predicated region
    $region37: #{generator_forward.4} parent=5 // pred_check
      _
    $region38: #{generator_forward.4} parent=5 // pred_check_branch
      %307 = sbr.rel (%p304) target = $region40
    $region39: #{generator_forward.4} parent=5 // pred_region
      %s308 = ssub.s32 %s13, 1
      %s309 = smul.u32 16, %s24
      %p310 = scmp.lt.s32.totalorder %s23, 1
      %s311 = scalar_select %p310, %s23, 1
      %p312 = scmp.lt.s32.totalorder %s309, 31
      %s313 = scalar_select %p312, %s309, 31
      %s314 = smul.addr %s311, 32
      %s315 = sadd.s32 %s313, %s314
      %s316 = smul.addr %s315, 4
      %s317 = scalar_lea.vmem %s0, %s316
      %p318 = pneg %p60
      %p319 = pneg %p57
      %p320 = scmp.lt.s32.totalorder %s23, 1
      %s321 = scalar_select %p320, %s23, 1
      %s322 = smul.addr %s321, 32
      %s323 = smul.addr %s322, 4
      %s324 = scalar_lea.vmem %s1, %s323
      %p325 = pneg %p86
      %p326 = pneg %p83
      %s327 = smul.u32 16, %s24
      %p328 = scmp.lt.s32.totalorder %s25, 8
      %s329 = scalar_select %p328, %s25, 8
      %p330 = scmp.lt.s32.totalorder %s23, 1
      %s331 = scalar_select %p330, %s23, 1
      %p332 = scmp.lt.s32.totalorder %s327, 31
      %s333 = scalar_select %p332, %s327, 31
      %s334 = smul.addr %s331, 32
      %s335 = sadd.s32 %s333, %s334
      %s336 = smul.addr %s329, 64
      %s337 = sadd.s32 %s335, %s336
      %s338 = smul.addr %s337, 8
      %s339 = scalar_lea.vmem %s2, %s338
      %p340 = pneg %p116
      %p341 = pneg %p113
      %p342 = scmp.lt.s32.totalorder %s25, 8
      %s343 = scalar_select %p342, %s25, 8
      %p344 = scmp.lt.s32.totalorder %s23, 1
      %s345 = scalar_select %p344, %s23, 1
      %s346 = smul.addr %s345, 2
      %s347 = smul.addr %s343, 4
      %s348 = sadd.s32 %s346, %s347
      %s349 = scalar_lea.vmem %s3, %s348
      %p350 = pneg %p144
      %p351 = pneg %p141
      %p352 = scmp.lt.s32.totalorder %s23, 1
      %s353 = scalar_select %p352, %s23, 1
      %s354 = smul.addr %s353, 32
      %s355 = smul.addr %s354, 8
      %s356 = scalar_lea.vmem %s4, %s355
      %p357 = pneg %p170
      %p358 = pneg %p167
      %p359 = pneg %p198
      %p360 = pneg %p195
      %s361 = smul.u32 16, %s24
      %p362 = scmp.lt.s32.totalorder %s23, 1
      %s363 = scalar_select %p362, %s23, 1
      %p364 = scmp.lt.s32.totalorder %s361, 31
      %s365 = scalar_select %p364, %s361, 31
      %s366 = smul.addr %s363, 32
      %s367 = sadd.s32 %s365, %s366
      %s368 = smul.addr %s367, 8
      %s369 = scalar_lea.vmem %s5, %s368
      %p370 = pneg %p226
      %p371 = pneg %p223
      %s372 = smul.u32 16, %s24
      %p373 = scmp.lt.s32.totalorder %s23, 1
      %s374 = scalar_select %p373, %s23, 1
      %p375 = scmp.lt.s32.totalorder %s372, 31
      %s376 = scalar_select %p375, %s372, 31
      %s377 = smul.addr %s374, 32
      %s378 = sadd.s32 %s376, %s377
      %s379 = smul.addr %s378, 8
      %s380 = scalar_lea.vmem %s6, %s379
      %s381 = smul.u32 16, %s24
      %p382 = scmp.lt.s32.totalorder %s23, 1
      %s383 = scalar_select %p382, %s23, 1
      %p384 = scmp.lt.s32.totalorder %s381, 31
      %s385 = scalar_select %p384, %s381, 31
      %s386 = smul.addr %s383, 32
      %s387 = sadd.s32 %s385, %s386
      %s388 = smul.addr %s387, 4
      %s389 = scalar_lea.vmem %s0, %s388
      %s390 = smul.u32 16, %s24
      %p391 = scmp.lt.s32.totalorder %s23, 1
      %s392 = scalar_select %p391, %s23, 1
      %s393 = smul.addr %s392, 32
      %s394 = smul.addr %s393, 4
      %s395 = scalar_lea.vmem %s1, %s394
      %s396 = smul.u32 16, %s24
      %p397 = scmp.lt.s32.totalorder %s25, 8
      %s398 = scalar_select %p397, %s25, 8
      %p399 = scmp.lt.s32.totalorder %s23, 1
      %s400 = scalar_select %p399, %s23, 1
      %p401 = scmp.lt.s32.totalorder %s396, 31
      %s402 = scalar_select %p401, %s396, 31
      %s403 = smul.addr %s400, 32
      %s404 = sadd.s32 %s402, %s403
      %s405 = smul.addr %s398, 64
      %s406 = sadd.s32 %s404, %s405
      %s407 = smul.addr %s406, 8
      %s408 = scalar_lea.vmem %s2, %s407
      %s409 = smul.u32 16, %s24
      %p410 = scmp.lt.s32.totalorder %s25, 8
      %s411 = scalar_select %p410, %s25, 8
      %p412 = scmp.lt.s32.totalorder %s23, 1
      %s413 = scalar_select %p412, %s23, 1
      %s414 = smul.addr %s413, 2
      %s415 = smul.addr %s411, 4
      %s416 = sadd.s32 %s414, %s415
      %s417 = scalar_lea.vmem %s3, %s416
      %p418 = scmp.lt.s32.totalorder %s23, 1
      %s419 = scalar_select %p418, %s23, 1
      %s420 = smul.addr %s419, 32
      %s421 = smul.addr %s420, 8
      %s422 = scalar_lea.vmem %s4, %s421
      %s423 = smul.u32 16, %s24
      %p424 = scmp.lt.s32.totalorder %s23, 1
      %s425 = scalar_select %p424, %s23, 1
      %p426 = scmp.lt.s32.totalorder %s423, 31
      %s427 = scalar_select %p426, %s423, 31
      %s428 = smul.addr %s425, 32
      %s429 = sadd.s32 %s427, %s428
      %s430 = smul.addr %s429, 8
      %s431 = scalar_lea.vmem %s5, %s430
      %s432 = smul.u32 16, %s24
      %s433 = smul.u32 16, %s24
      %p434 = scmp.lt.s32.totalorder %s23, 1
      %s435 = scalar_select %p434, %s23, 1
      %p436 = scmp.lt.s32.totalorder %s433, 31
      %s437 = scalar_select %p436, %s433, 31
      %s438 = smul.addr %s435, 32
      %s439 = sadd.s32 %s437, %s438
      %s440 = smul.addr %s439, 8
      %s441 = scalar_lea.vmem %s6, %s440
      %s442 = smul.u32 16, %s24
      %p443 = scmp.eq.s32.totalorder %s25, 0
      // Predicated region
      $region41: #{generator_forward.4} parent=39 // pred_check
        %p444 = pneg %p443
      $region42: #{generator_forward.4} parent=39 // pred_check_branch
        %446 = sbr.rel (%p444) target = $region44
      $region43: #{generator_forward.4} parent=39 // pred_region
        %vm447 = vcmask 23552
        %448 = vst.msk [vmem:[%s431] sm:$0xff] %vm447, 0.0
        %449 = vst.msk [vmem:[%s431 + $0x8] sm:$0xff] %vm447, 0.0
        %450 = vst.msk [vmem:[%s431 + $0x10] sm:$0xff] %vm447, 0.0
        %451 = vst.msk [vmem:[%s431 + $0x18] sm:$0xff] %vm447, 0.0
        %452 = vst.msk [vmem:[%s431 + $0x20] sm:$0xff] %vm447, 0.0
        %453 = vst.msk [vmem:[%s431 + $0x28] sm:$0xff] %vm447, 0.0
        %454 = vst.msk [vmem:[%s431 + $0x30] sm:$0xff] %vm447, 0.0
        %455 = vst.msk [vmem:[%s431 + $0x38] sm:$0xff] %vm447, 0.0
        %456 = vst.msk [vmem:[%s431 + $0x40] sm:$0xff] %vm447, 0.0
        %457 = vst.msk [vmem:[%s431 + $0x48] sm:$0xff] %vm447, 0.0
        %458 = vst.msk [vmem:[%s431 + $0x50] sm:$0xff] %vm447, 0.0
        %459 = vst.msk [vmem:[%s431 + $0x58] sm:$0xff] %vm447, 0.0
        %460 = vst.msk [vmem:[%s431 + $0x60] sm:$0xff] %vm447, 0.0
        %461 = vst.msk [vmem:[%s431 + $0x68] sm:$0xff] %vm447, 0.0
        %462 = vst.msk [vmem:[%s431 + $0x70] sm:$0xff] %vm447, 0.0
        %463 = vst.msk [vmem:[%s431 + $0x78] sm:$0xff] %vm447, 0.0
        %464 = vst.msk [vmem:[%s441] sm:$0xff] %vm447, 0.0
        %465 = vst.msk [vmem:[%s441 + $0x8] sm:$0xff] %vm447, 0.0
        %466 = vst.msk [vmem:[%s441 + $0x10] sm:$0xff] %vm447, 0.0
        %467 = vst.msk [vmem:[%s441 + $0x18] sm:$0xff] %vm447, 0.0
        %468 = vst.msk [vmem:[%s441 + $0x20] sm:$0xff] %vm447, 0.0
        %469 = vst.msk [vmem:[%s441 + $0x28] sm:$0xff] %vm447, 0.0
        %470 = vst.msk [vmem:[%s441 + $0x30] sm:$0xff] %vm447, 0.0
        %471 = vst.msk [vmem:[%s441 + $0x38] sm:$0xff] %vm447, 0.0
        %472 = vst.msk [vmem:[%s441 + $0x40] sm:$0xff] %vm447, 0.0
        %473 = vst.msk [vmem:[%s441 + $0x48] sm:$0xff] %vm447, 0.0
        %474 = vst.msk [vmem:[%s441 + $0x50] sm:$0xff] %vm447, 0.0
        %475 = vst.msk [vmem:[%s441 + $0x58] sm:$0xff] %vm447, 0.0
        %476 = vst.msk [vmem:[%s441 + $0x60] sm:$0xff] %vm447, 0.0
        %477 = vst.msk [vmem:[%s441 + $0x68] sm:$0xff] %vm447, 0.0
        %478 = vst.msk [vmem:[%s441 + $0x70] sm:$0xff] %vm447, 0.0
        %479 = vst.msk [vmem:[%s441 + $0x78] sm:$0xff] %vm447, 0.0
        %v480 = vld [vmem:[%s389] sm:$0xf]
        %v481 = vld [vmem:[%s389 + $0x4] sm:$0xf]
        %v482 = vld [vmem:[%s389 + $0x8] sm:$0xf]
        %v483 = vld [vmem:[%s389 + $0xc] sm:$0xf]
        %v484 = vld [vmem:[%s389 + $0x10] sm:$0xf]
        %v485 = vld [vmem:[%s389 + $0x14] sm:$0xf]
        %v486 = vld [vmem:[%s389 + $0x18] sm:$0xf]
        %v487 = vld [vmem:[%s389 + $0x1c] sm:$0xf]
        %v488 = vld [vmem:[%s389 + $0x20] sm:$0xf]
        %v489 = vld [vmem:[%s389 + $0x24] sm:$0xf]
        %v490 = vld [vmem:[%s389 + $0x28] sm:$0xf]
        %v491 = vld [vmem:[%s389 + $0x2c] sm:$0xf]
        %v492 = vld [vmem:[%s389 + $0x30] sm:$0xf]
        %v493 = vld [vmem:[%s389 + $0x34] sm:$0xf]
        %v494 = vld [vmem:[%s389 + $0x38] sm:$0xf]
        %v495 = vld [vmem:[%s389 + $0x3c] sm:$0xf]
        %v496 = vld [vmem:[%s395] sm:$0xf]
        %v497 = vld [vmem:[%s395 + $0x4] sm:$0xf]
        %v498 = vld [vmem:[%s395 + $0x8] sm:$0xf]
        %v499 = vld [vmem:[%s395 + $0xc] sm:$0xf]
        %v500 = vld [vmem:[%s395 + $0x10] sm:$0xf]
        %v501 = vld [vmem:[%s395 + $0x14] sm:$0xf]
        %v502 = vld [vmem:[%s395 + $0x18] sm:$0xf]
        %v503 = vld [vmem:[%s395 + $0x1c] sm:$0xf]
        %v504 = vld [vmem:[%s395 + $0x20] sm:$0xf]
        %v505 = vld [vmem:[%s395 + $0x24] sm:$0xf]
        %v506 = vld [vmem:[%s395 + $0x28] sm:$0xf]
        %v507 = vld [vmem:[%s395 + $0x2c] sm:$0xf]
        %v508 = vld [vmem:[%s395 + $0x30] sm:$0xf]
        %v509 = vld [vmem:[%s395 + $0x34] sm:$0xf]
        %v510 = vld [vmem:[%s395 + $0x38] sm:$0xf]
        %v511 = vld [vmem:[%s395 + $0x3c] sm:$0xf]
        %v512 = vld [vmem:[%s395 + $0x40] sm:$0xf]
        %v513 = vld [vmem:[%s395 + $0x44] sm:$0xf]
        %v514 = vld [vmem:[%s395 + $0x48] sm:$0xf]
        %v515 = vld [vmem:[%s395 + $0x4c] sm:$0xf]
        %v516 = vld [vmem:[%s395 + $0x50] sm:$0xf]
        %v517 = vld [vmem:[%s395 + $0x54] sm:$0xf]
        %v518 = vld [vmem:[%s395 + $0x58] sm:$0xf]
        %v519 = vld [vmem:[%s395 + $0x5c] sm:$0xf]
        %v520 = vld [vmem:[%s395 + $0x60] sm:$0xf]
        %v521 = vld [vmem:[%s395 + $0x64] sm:$0xf]
        %v522 = vld [vmem:[%s395 + $0x68] sm:$0xf]
        %v523 = vld [vmem:[%s395 + $0x6c] sm:$0xf]
        %v524 = vld [vmem:[%s395 + $0x70] sm:$0xf]
        %v525 = vld [vmem:[%s395 + $0x74] sm:$0xf]
        %v526 = vld [vmem:[%s395 + $0x78] sm:$0xf]
        %v527 = vld [vmem:[%s395 + $0x7c] sm:$0xf]
        %v544 = vunpack.c.l.b16 %v480
        %v545 = vunpack.c.l.b16 %v481
        %v546 = vunpack.c.l.b16 %v482
        %v547 = vunpack.c.l.b16 %v483
        %v548 = vunpack.c.l.b16 %v484
        %v549 = vunpack.c.l.b16 %v485
        %v550 = vunpack.c.l.b16 %v486
        %v551 = vunpack.c.l.b16 %v487
        %v552 = vunpack.c.l.b16 %v488
        %v553 = vunpack.c.l.b16 %v489
        %v554 = vunpack.c.l.b16 %v490
        %v555 = vunpack.c.l.b16 %v491
        %v556 = vunpack.c.l.b16 %v492
        %v557 = vunpack.c.l.b16 %v493
        %v558 = vunpack.c.l.b16 %v494
        %v559 = vunpack.c.l.b16 %v495
        %v560 = vpack.c.b16 %v545, %v544
        %v561 = vpack.c.b16 %v547, %v546
        %v562 = vpack.c.b16 %v549, %v548
        %v563 = vpack.c.b16 %v551, %v550
        %v564 = vpack.c.b16 %v553, %v552
        %v565 = vpack.c.b16 %v555, %v554
        %v566 = vpack.c.b16 %v557, %v556
        %v567 = vpack.c.b16 %v559, %v558
        %v600 = vunpack.c.l.b16 %v496
        %v601 = vunpack.c.l.b16 %v497
        %v602 = vunpack.c.l.b16 %v498
        %v603 = vunpack.c.l.b16 %v499
        %v604 = vunpack.c.l.b16 %v500
        %v605 = vunpack.c.l.b16 %v501
        %v606 = vunpack.c.l.b16 %v502
        %v607 = vunpack.c.l.b16 %v503
        %v608 = vunpack.c.l.b16 %v504
        %v609 = vunpack.c.l.b16 %v505
        %v610 = vunpack.c.l.b16 %v506
        %v611 = vunpack.c.l.b16 %v507
        %v612 = vunpack.c.l.b16 %v508
        %v613 = vunpack.c.l.b16 %v509
        %v614 = vunpack.c.l.b16 %v510
        %v615 = vunpack.c.l.b16 %v511
        %v616 = vunpack.c.l.b16 %v512
        %v617 = vunpack.c.l.b16 %v513
        %v618 = vunpack.c.l.b16 %v514
        %v619 = vunpack.c.l.b16 %v515
        %v620 = vunpack.c.l.b16 %v516
        %v621 = vunpack.c.l.b16 %v517
        %v622 = vunpack.c.l.b16 %v518
        %v623 = vunpack.c.l.b16 %v519
        %v624 = vunpack.c.l.b16 %v520
        %v625 = vunpack.c.l.b16 %v521
        %v626 = vunpack.c.l.b16 %v522
        %v627 = vunpack.c.l.b16 %v523
        %v628 = vunpack.c.l.b16 %v524
        %v629 = vunpack.c.l.b16 %v525
        %v630 = vunpack.c.l.b16 %v526
        %v631 = vunpack.c.l.b16 %v527
        %v632 = vpack.c.b16 %v601, %v600
        %v633 = vpack.c.b16 %v603, %v602
        %v634 = vpack.c.b16 %v605, %v604
        %v635 = vpack.c.b16 %v607, %v606
        %v636 = vpack.c.b16 %v609, %v608
        %v637 = vpack.c.b16 %v611, %v610
        %v638 = vpack.c.b16 %v613, %v612
        %v639 = vpack.c.b16 %v615, %v614
        %v640 = vpack.c.b16 %v617, %v616
        %v641 = vpack.c.b16 %v619, %v618
        %v642 = vpack.c.b16 %v621, %v620
        %v643 = vpack.c.b16 %v623, %v622
        %v644 = vpack.c.b16 %v625, %v624
        %v645 = vpack.c.b16 %v627, %v626
        %v646 = vpack.c.b16 %v629, %v628
        %v647 = vpack.c.b16 %v631, %v630
        %vm648 = vcmask 261120
        %v650 = vsel %vm648, %v560, 0
        %v653 = vsel %vm648, %v561, 0
        %v656 = vsel %vm648, %v562, 0
        %v659 = vsel %vm648, %v563, 0
        %v662 = vsel %vm648, %v564, 0
        %v665 = vsel %vm648, %v565, 0
        %v668 = vsel %vm648, %v566, 0
        %v671 = vsel %vm648, %v567, 0
        %v674 = vsel %vm648, %v632, 0
        %v677 = vsel %vm648, %v633, 0
        %v680 = vsel %vm648, %v634, 0
        %v683 = vsel %vm648, %v635, 0
        %v686 = vsel %vm648, %v636, 0
        %v689 = vsel %vm648, %v637, 0
        %v692 = vsel %vm648, %v638, 0
        %v695 = vsel %vm648, %v639, 0
        %v698 = vsel %vm648, %v640, 0
        %v701 = vsel %vm648, %v641, 0
        %v704 = vsel %vm648, %v642, 0
        %v707 = vsel %vm648, %v643, 0
        %v710 = vsel %vm648, %v644, 0
        %v713 = vsel %vm648, %v645, 0
        %v716 = vsel %vm648, %v646, 0
        %v719 = vsel %vm648, %v647, 0
        %721 = vmatpush.bf16.xpose.msra.mxu0 %v695
        %722 = vmatpush.bf16.xpose.msra.mxu0 %v692
        %723 = vmatpush.bf16.xpose.msra.mxu0 %v689
        %724 = vmatpush.bf16.xpose.msra.mxu0 %v686
        %725 = vmatpush.bf16.xpose.msra.mxu0 %v683
        %726 = vmatpush.bf16.xpose.msra.mxu0 %v680
        %727 = vmatpush.bf16.xpose.msra.mxu0 %v677
        %728 = vmatpush.bf16.xpose.msra.mxu0 %v674
        %729 = vmatmul.bf16.gmra.mxu0 %v650
        %v730 = vpop.f32.mrf.mxu0
        %v731 = vadd.f32 0.0, %v730
        %v732 = vpop.f32.mrf.mxu0
        %v733 = vadd.f32 0.0, %v732
        %734 = vmatmul.bf16.gmra.mxu0 %v653
        %v735 = vpop.f32.mrf.mxu0
        %v736 = vadd.f32 0.0, %v735
        %v737 = vpop.f32.mrf.mxu0
        %v738 = vadd.f32 0.0, %v737
        %739 = vmatmul.bf16.gmra.mxu0 %v656
        %v740 = vpop.f32.mrf.mxu0
        %v741 = vadd.f32 0.0, %v740
        %v742 = vpop.f32.mrf.mxu0
        %v743 = vadd.f32 0.0, %v742
        %744 = vmatmul.bf16.gmra.mxu0 %v659
        %v745 = vpop.f32.mrf.mxu0
        %v746 = vadd.f32 0.0, %v745
        %v747 = vpop.f32.mrf.mxu0
        %v748 = vadd.f32 0.0, %v747
        %749 = vmatmul.bf16.gmra.mxu0 %v662
        %v750 = vpop.f32.mrf.mxu0
        %v751 = vadd.f32 0.0, %v750
        %v752 = vpop.f32.mrf.mxu0
        %v753 = vadd.f32 0.0, %v752
        %754 = vmatmul.bf16.gmra.mxu0 %v665
        %v755 = vpop.f32.mrf.mxu0
        %v756 = vadd.f32 0.0, %v755
        %v757 = vpop.f32.mrf.mxu0
        %v758 = vadd.f32 0.0, %v757
        %759 = vmatmul.bf16.gmra.mxu0 %v668
        %v760 = vpop.f32.mrf.mxu0
        %v761 = vadd.f32 0.0, %v760
        %v762 = vpop.f32.mrf.mxu0
        %v763 = vadd.f32 0.0, %v762
        %764 = vmatmul.bf16.gmra.mxu0 %v671
        %v765 = vpop.f32.mrf.mxu0
        %v766 = vadd.f32 0.0, %v765
        %v767 = vpop.f32.mrf.mxu0
        %v768 = vadd.f32 0.0, %v767
        %769 = vdwg.mxu0
        %770 = vmatpush.bf16.xpose.msra.mxu0 %v719
        %771 = vmatpush.bf16.xpose.msra.mxu0 %v716
        %772 = vmatpush.bf16.xpose.msra.mxu0 %v713
        %773 = vmatpush.bf16.xpose.msra.mxu0 %v710
        %774 = vmatpush.bf16.xpose.msra.mxu0 %v707
        %775 = vmatpush.bf16.xpose.msra.mxu0 %v704
        %776 = vmatpush.bf16.xpose.msra.mxu0 %v701
        %777 = vmatpush.bf16.xpose.msra.mxu0 %v698
        %778 = vmatmul.bf16.gmra.mxu0 %v650
        %v779 = vpop.f32.mrf.mxu0
        %v780 = vadd.f32 0.0, %v779
        %v781 = vpop.f32.mrf.mxu0
        %v782 = vadd.f32 0.0, %v781
        %783 = vmatmul.bf16.gmra.mxu0 %v653
        %v784 = vpop.f32.mrf.mxu0
        %v785 = vadd.f32 0.0, %v784
        %v786 = vpop.f32.mrf.mxu0
        %v787 = vadd.f32 0.0, %v786
        %788 = vmatmul.bf16.gmra.mxu0 %v656
        %v789 = vpop.f32.mrf.mxu0
        %v790 = vadd.f32 0.0, %v789
        %v791 = vpop.f32.mrf.mxu0
        %v792 = vadd.f32 0.0, %v791
        %793 = vmatmul.bf16.gmra.mxu0 %v659
        %v794 = vpop.f32.mrf.mxu0
        %v795 = vadd.f32 0.0, %v794
        %v796 = vpop.f32.mrf.mxu0
        %v797 = vadd.f32 0.0, %v796
        %798 = vmatmul.bf16.gmra.mxu0 %v662
        %v799 = vpop.f32.mrf.mxu0
        %v800 = vadd.f32 0.0, %v799
        %v801 = vpop.f32.mrf.mxu0
        %v802 = vadd.f32 0.0, %v801
        %803 = vmatmul.bf16.gmra.mxu0 %v665
        %v804 = vpop.f32.mrf.mxu0
        %v805 = vadd.f32 0.0, %v804
        %v806 = vpop.f32.mrf.mxu0
        %v807 = vadd.f32 0.0, %v806
        %808 = vmatmul.bf16.gmra.mxu0 %v668
        %v809 = vpop.f32.mrf.mxu0
        %v810 = vadd.f32 0.0, %v809
        %v811 = vpop.f32.mrf.mxu0
        %v812 = vadd.f32 0.0, %v811
        %813 = vmatmul.bf16.gmra.mxu0 %v671
        %v814 = vpop.f32.mrf.mxu0
        %v815 = vadd.f32 0.0, %v814
        %v816 = vpop.f32.mrf.mxu0
        %v817 = vadd.f32 0.0, %v816
        %818 = vdwg.mxu0
        %819 = vst [vmem:[#allocation2] sm:$0xff] %v731
        %820 = vst [vmem:[#allocation2 + $0x8] sm:$0xff] %v780
        %821 = vst [vmem:[#allocation2 + $0x10] sm:$0xff] %v733
        %822 = vst [vmem:[#allocation2 + $0x18] sm:$0xff] %v782
        %823 = vst [vmem:[#allocation2 + $0x20] sm:$0xff] %v736
        %824 = vst [vmem:[#allocation2 + $0x28] sm:$0xff] %v785
        %825 = vst [vmem:[#allocation2 + $0x30] sm:$0xff] %v738
        %826 = vst [vmem:[#allocation2 + $0x38] sm:$0xff] %v787
        %827 = vst [vmem:[#allocation2 + $0x40] sm:$0xff] %v741
        %828 = vst [vmem:[#allocation2 + $0x48] sm:$0xff] %v790
        %829 = vst [vmem:[#allocation2 + $0x50] sm:$0xff] %v743
        %830 = vst [vmem:[#allocation2 + $0x58] sm:$0xff] %v792
        %831 = vst [vmem:[#allocation2 + $0x60] sm:$0xff] %v746
        %832 = vst [vmem:[#allocation2 + $0x68] sm:$0xff] %v795
        %833 = vst [vmem:[#allocation2 + $0x70] sm:$0xff] %v748
        %834 = vst [vmem:[#allocation2 + $0x78] sm:$0xff] %v797
        %835 = vst [vmem:[#allocation2 + $0x80] sm:$0xff] %v751
        %836 = vst [vmem:[#allocation2 + $0x88] sm:$0xff] %v800
        %837 = vst [vmem:[#allocation2 + $0x90] sm:$0xff] %v753
        %838 = vst [vmem:[#allocation2 + $0x98] sm:$0xff] %v802
        %839 = vst [vmem:[#allocation2 + $0xa0] sm:$0xff] %v756
        %840 = vst [vmem:[#allocation2 + $0xa8] sm:$0xff] %v805
        %841 = vst [vmem:[#allocation2 + $0xb0] sm:$0xff] %v758
        %842 = vst [vmem:[#allocation2 + $0xb8] sm:$0xff] %v807
        %843 = vst [vmem:[#allocation2 + $0xc0] sm:$0xff] %v761
        %844 = vst [vmem:[#allocation2 + $0xc8] sm:$0xff] %v810
        %845 = vst [vmem:[#allocation2 + $0xd0] sm:$0xff] %v763
        %846 = vst [vmem:[#allocation2 + $0xd8] sm:$0xff] %v812
        %847 = vst [vmem:[#allocation2 + $0xe0] sm:$0xff] %v766
        %848 = vst [vmem:[#allocation2 + $0xe8] sm:$0xff] %v815
        %849 = vst [vmem:[#allocation2 + $0xf0] sm:$0xff] %v768
        %850 = vst [vmem:[#allocation2 + $0xf8] sm:$0xff] %v817
      $region44: #{generator_forward.4} parent=39 // pred_fallthru
        _
      %v851 = vld [vmem:[%s408] sm:$0xff]
      %v852 = vld [vmem:[%s408 + $0x8] sm:$0xff]
      %v853 = vld [vmem:[%s408 + $0x10] sm:$0xff]
      %v854 = vld [vmem:[%s408 + $0x18] sm:$0xff]
      %v855 = vld [vmem:[%s408 + $0x20] sm:$0xff]
      %v856 = vld [vmem:[%s408 + $0x28] sm:$0xff]
      %v857 = vld [vmem:[%s408 + $0x30] sm:$0xff]
      %v858 = vld [vmem:[%s408 + $0x38] sm:$0xff]
      %v859 = vld [vmem:[%s408 + $0x40] sm:$0xff]
      %v860 = vld [vmem:[%s408 + $0x48] sm:$0xff]
      %v861 = vld [vmem:[%s408 + $0x50] sm:$0xff]
      %v862 = vld [vmem:[%s408 + $0x58] sm:$0xff]
      %v863 = vld [vmem:[%s408 + $0x60] sm:$0xff]
      %v864 = vld [vmem:[%s408 + $0x68] sm:$0xff]
      %v865 = vld [vmem:[%s408 + $0x70] sm:$0xff]
      %v866 = vld [vmem:[%s408 + $0x78] sm:$0xff]
      %v867 = vld [vmem:[%s417] sm:$0x3]
      %vm868 = vcmp.gt.f32.partialorder %v867, 0.5
      %vm869 = vcmp.gt.f32.partialorder %v851, 0.5
      %vm870 = vcmp.gt.f32.partialorder %v852, 0.5
      %vm871 = vcmp.gt.f32.partialorder %v853, 0.5
      %vm872 = vcmp.gt.f32.partialorder %v854, 0.5
      %vm873 = vcmp.gt.f32.partialorder %v855, 0.5
      %vm874 = vcmp.gt.f32.partialorder %v856, 0.5
      %vm875 = vcmp.gt.f32.partialorder %v857, 0.5
      %vm876 = vcmp.gt.f32.partialorder %v858, 0.5
      %vm877 = vcmp.gt.f32.partialorder %v859, 0.5
      %vm878 = vcmp.gt.f32.partialorder %v860, 0.5
      %vm879 = vcmp.gt.f32.partialorder %v861, 0.5
      %vm880 = vcmp.gt.f32.partialorder %v862, 0.5
      %vm881 = vcmp.gt.f32.partialorder %v863, 0.5
      %vm882 = vcmp.gt.f32.partialorder %v864, 0.5
      %vm883 = vcmp.gt.f32.partialorder %v865, 0.5
      %vm884 = vcmp.gt.f32.partialorder %v866, 0.5
      %v885 = vld [vmem:[#allocation2] sm:$0xff]
      %v886 = vld [vmem:[#allocation2 + $0x8] sm:$0xff]
      %v887 = vld [vmem:[#allocation2 + $0x10] sm:$0xff]
      %v888 = vld [vmem:[#allocation2 + $0x18] sm:$0xff]
      %v889 = vld [vmem:[#allocation2 + $0x20] sm:$0xff]
      %v890 = vld [vmem:[#allocation2 + $0x28] sm:$0xff]
      %v891 = vld [vmem:[#allocation2 + $0x30] sm:$0xff]
      %v892 = vld [vmem:[#allocation2 + $0x38] sm:$0xff]
      %v893 = vld [vmem:[#allocation2 + $0x40] sm:$0xff]
      %v894 = vld [vmem:[#allocation2 + $0x48] sm:$0xff]
      %v895 = vld [vmem:[#allocation2 + $0x50] sm:$0xff]
      %v896 = vld [vmem:[#allocation2 + $0x58] sm:$0xff]
      %v897 = vld [vmem:[#allocation2 + $0x60] sm:$0xff]
      %v898 = vld [vmem:[#allocation2 + $0x68] sm:$0xff]
      %v899 = vld [vmem:[#allocation2 + $0x70] sm:$0xff]
      %v900 = vld [vmem:[#allocation2 + $0x78] sm:$0xff]
      %v901 = vld [vmem:[#allocation2 + $0x80] sm:$0xff]
      %v902 = vld [vmem:[#allocation2 + $0x88] sm:$0xff]
      %v903 = vld [vmem:[#allocation2 + $0x90] sm:$0xff]
      %v904 = vld [vmem:[#allocation2 + $0x98] sm:$0xff]
      %v905 = vld [vmem:[#allocation2 + $0xa0] sm:$0xff]
      %v906 = vld [vmem:[#allocation2 + $0xa8] sm:$0xff]
      %v907 = vld [vmem:[#allocation2 + $0xb0] sm:$0xff]
      %v908 = vld [vmem:[#allocation2 + $0xb8] sm:$0xff]
      %v909 = vld [vmem:[#allocation2 + $0xc0] sm:$0xff]
      %v910 = vld [vmem:[#allocation2 + $0xc8] sm:$0xff]
      %v911 = vld [vmem:[#allocation2 + $0xd0] sm:$0xff]
      %v912 = vld [vmem:[#allocation2 + $0xd8] sm:$0xff]
      %v913 = vld [vmem:[#allocation2 + $0xe0] sm:$0xff]
      %v914 = vld [vmem:[#allocation2 + $0xe8] sm:$0xff]
      %v915 = vld [vmem:[#allocation2 + $0xf0] sm:$0xff]
      %v916 = vld [vmem:[#allocation2 + $0xf8] sm:$0xff]
      %v917 = vmul.f32 %v885, 100.0
      %v918 = vmul.f32 %v886, 100.0
      %v919 = vmul.f32 %v887, 100.0
      %v920 = vmul.f32 %v888, 100.0
      %v921 = vmul.f32 %v889, 100.0
      %v922 = vmul.f32 %v890, 100.0
      %v923 = vmul.f32 %v891, 100.0
      %v924 = vmul.f32 %v892, 100.0
      %v925 = vmul.f32 %v893, 100.0
      %v926 = vmul.f32 %v894, 100.0
      %v927 = vmul.f32 %v895, 100.0
      %v928 = vmul.f32 %v896, 100.0
      %v929 = vmul.f32 %v897, 100.0
      %v930 = vmul.f32 %v898, 100.0
      %v931 = vmul.f32 %v899, 100.0
      %v932 = vmul.f32 %v900, 100.0
      %v933 = vmul.f32 %v901, 100.0
      %v934 = vmul.f32 %v902, 100.0
      %v935 = vmul.f32 %v903, 100.0
      %v936 = vmul.f32 %v904, 100.0
      %v937 = vmul.f32 %v905, 100.0
      %v938 = vmul.f32 %v906, 100.0
      %v939 = vmul.f32 %v907, 100.0
      %v940 = vmul.f32 %v908, 100.0
      %v941 = vmul.f32 %v909, 100.0
      %v942 = vmul.f32 %v910, 100.0
      %v943 = vmul.f32 %v911, 100.0
      %v944 = vmul.f32 %v912, 100.0
      %v945 = vmul.f32 %v913, 100.0
      %v946 = vmul.f32 %v914, 100.0
      %v947 = vmul.f32 %v915, 100.0
      %v948 = vmul.f32 %v916, 100.0
      %v949 = vsel %vm868, 1, 0
      %v950 = vperm.slane %v949, 0
      %v951 = vperm.slane %v949, 1
      %vm952 = vcmp.eq.s32.totalorder %v950, 1
      %vm953 = vcmp.eq.s32.totalorder %v951, 1
      %v954 = vsel %vm952, %v917, -1e+30
      %v955 = vsel %vm953, %v918, -1e+30
      %v956 = vsel %vm952, %v919, -1e+30
      %v957 = vsel %vm953, %v920, -1e+30
      %v958 = vsel %vm952, %v921, -1e+30
      %v959 = vsel %vm953, %v922, -1e+30
      %v960 = vsel %vm952, %v923, -1e+30
      %v961 = vsel %vm953, %v924, -1e+30
      %v962 = vsel %vm952, %v925, -1e+30
      %v963 = vsel %vm953, %v926, -1e+30
      %v964 = vsel %vm952, %v927, -1e+30
      %v965 = vsel %vm953, %v928, -1e+30
      %v966 = vsel %vm952, %v929, -1e+30
      %v967 = vsel %vm953, %v930, -1e+30
      %v968 = vsel %vm952, %v931, -1e+30
      %v969 = vsel %vm953, %v932, -1e+30
      %v970 = vsel %vm952, %v933, -1e+30
      %v971 = vsel %vm953, %v934, -1e+30
      %v972 = vsel %vm952, %v935, -1e+30
      %v973 = vsel %vm953, %v936, -1e+30
      %v974 = vsel %vm952, %v937, -1e+30
      %v975 = vsel %vm953, %v938, -1e+30
      %v976 = vsel %vm952, %v939, -1e+30
      %v977 = vsel %vm953, %v940, -1e+30
      %v978 = vsel %vm952, %v941, -1e+30
      %v979 = vsel %vm953, %v942, -1e+30
      %v980 = vsel %vm952, %v943, -1e+30
      %v981 = vsel %vm953, %v944, -1e+30
      %v982 = vsel %vm952, %v945, -1e+30
      %v983 = vsel %vm953, %v946, -1e+30
      %v984 = vsel %vm952, %v947, -1e+30
      %v985 = vsel %vm953, %v948, -1e+30
      %v986 = vmax.f32 %v954, %v955
      %987 = vmax.xlane.f32.xlu0 %v986
      %v988 = vpop.xlane.xlu0 %987
      %v989 = vmax.f32 %v956, %v957
      %990 = vmax.xlane.f32.xlu0 %v989
      %v991 = vpop.xlane.xlu0 %990
      %v992 = vmax.f32 %v958, %v959
      %993 = vmax.xlane.f32.xlu0 %v992
      %v994 = vpop.xlane.xlu0 %993
      %v995 = vmax.f32 %v960, %v961
      %996 = vmax.xlane.f32.xlu0 %v995
      %v997 = vpop.xlane.xlu0 %996
      %v998 = vmax.f32 %v962, %v963
      %999 = vmax.xlane.f32.xlu0 %v998
      %v1000 = vpop.xlane.xlu0 %999
      %v1001 = vmax.f32 %v964, %v965
      %1002 = vmax.xlane.f32.xlu0 %v1001
      %v1003 = vpop.xlane.xlu0 %1002
      %v1004 = vmax.f32 %v966, %v967
      %1005 = vmax.xlane.f32.xlu0 %v1004
      %v1006 = vpop.xlane.xlu0 %1005
      %v1007 = vmax.f32 %v968, %v969
      %1008 = vmax.xlane.f32.xlu0 %v1007
      %v1009 = vpop.xlane.xlu0 %1008
      %v1010 = vmax.f32 %v970, %v971
      %1011 = vmax.xlane.f32.xlu0 %v1010
      %v1012 = vpop.xlane.xlu0 %1011
      %v1013 = vmax.f32 %v972, %v973
      %1014 = vmax.xlane.f32.xlu0 %v1013
      %v1015 = vpop.xlane.xlu0 %1014
      %v1016 = vmax.f32 %v974, %v975
      %1017 = vmax.xlane.f32.xlu0 %v1016
      %v1018 = vpop.xlane.xlu0 %1017
      %v1019 = vmax.f32 %v976, %v977
      %1020 = vmax.xlane.f32.xlu0 %v1019
      %v1021 = vpop.xlane.xlu0 %1020
      %v1022 = vmax.f32 %v978, %v979
      %1023 = vmax.xlane.f32.xlu0 %v1022
      %v1024 = vpop.xlane.xlu0 %1023
      %v1025 = vmax.f32 %v980, %v981
      %1026 = vmax.xlane.f32.xlu0 %v1025
      %v1027 = vpop.xlane.xlu0 %1026
      %v1028 = vmax.f32 %v982, %v983
      %1029 = vmax.xlane.f32.xlu0 %v1028
      %v1030 = vpop.xlane.xlu0 %1029
      %v1031 = vmax.f32 %v984, %v985
      %1032 = vmax.xlane.f32.xlu0 %v1031
      %v1033 = vpop.xlane.xlu0 %1032
      %v1034 = vsub.f32 %v954, %v988
      %v1035 = vsub.f32 %v955, %v988
      %v1036 = vsub.f32 %v956, %v991
      %v1037 = vsub.f32 %v957, %v991
      %v1038 = vsub.f32 %v958, %v994
      %v1039 = vsub.f32 %v959, %v994
      %v1040 = vsub.f32 %v960, %v997
      %v1041 = vsub.f32 %v961, %v997
      %v1042 = vsub.f32 %v962, %v1000
      %v1043 = vsub.f32 %v963, %v1000
      %v1044 = vsub.f32 %v964, %v1003
      %v1045 = vsub.f32 %v965, %v1003
      %v1046 = vsub.f32 %v966, %v1006
      %v1047 = vsub.f32 %v967, %v1006
      %v1048 = vsub.f32 %v968, %v1009
      %v1049 = vsub.f32 %v969, %v1009
      %v1050 = vsub.f32 %v970, %v1012
      %v1051 = vsub.f32 %v971, %v1012
      %v1052 = vsub.f32 %v972, %v1015
      %v1053 = vsub.f32 %v973, %v1015
      %v1054 = vsub.f32 %v974, %v1018
      %v1055 = vsub.f32 %v975, %v1018
      %v1056 = vsub.f32 %v976, %v1021
      %v1057 = vsub.f32 %v977, %v1021
      %v1058 = vsub.f32 %v978, %v1024
      %v1059 = vsub.f32 %v979, %v1024
      %v1060 = vsub.f32 %v980, %v1027
      %v1061 = vsub.f32 %v981, %v1027
      %v1062 = vsub.f32 %v982, %v1030
      %v1063 = vsub.f32 %v983, %v1030
      %v1064 = vsub.f32 %v984, %v1033
      %v1065 = vsub.f32 %v985, %v1033
      %v1066 = vmul.f32 %v1034, 1.442695
      %v1067 = vpow.pop %v1066
      %v1068 = vmul.f32 %v1035, 1.442695
      %v1069 = vpow.pop %v1068
      %v1070 = vmul.f32 %v1036, 1.442695
      %v1071 = vpow.pop %v1070
      %v1072 = vmul.f32 %v1037, 1.442695
      %v1073 = vpow.pop %v1072
      %v1074 = vmul.f32 %v1038, 1.442695
      %v1075 = vpow.pop %v1074
      %v1076 = vmul.f32 %v1039, 1.442695
      %v1077 = vpow.pop %v1076
      %v1078 = vmul.f32 %v1040, 1.442695
      %v1079 = vpow.pop %v1078
      %v1080 = vmul.f32 %v1041, 1.442695
      %v1081 = vpow.pop %v1080
      %v1082 = vmul.f32 %v1042, 1.442695
      %v1083 = vpow.pop %v1082
      %v1084 = vmul.f32 %v1043, 1.442695
      %v1085 = vpow.pop %v1084
      %v1086 = vmul.f32 %v1044, 1.442695
      %v1087 = vpow.pop %v1086
      %v1088 = vmul.f32 %v1045, 1.442695
      %v1089 = vpow.pop %v1088
      %v1090 = vmul.f32 %v1046, 1.442695
      %v1091 = vpow.pop %v1090
      %v1092 = vmul.f32 %v1047, 1.442695
      %v1093 = vpow.pop %v1092
      %v1094 = vmul.f32 %v1048, 1.442695
      %v1095 = vpow.pop %v1094
      %v1096 = vmul.f32 %v1049, 1.442695
      %v1097 = vpow.pop %v1096
      %v1098 = vmul.f32 %v1050, 1.442695
      %v1099 = vpow.pop %v1098
      %v1100 = vmul.f32 %v1051, 1.442695
      %v1101 = vpow.pop %v1100
      %v1102 = vmul.f32 %v1052, 1.442695
      %v1103 = vpow.pop %v1102
      %v1104 = vmul.f32 %v1053, 1.442695
      %v1105 = vpow.pop %v1104
      %v1106 = vmul.f32 %v1054, 1.442695
      %v1107 = vpow.pop %v1106
      %v1108 = vmul.f32 %v1055, 1.442695
      %v1109 = vpow.pop %v1108
      %v1110 = vmul.f32 %v1056, 1.442695
      %v1111 = vpow.pop %v1110
      %v1112 = vmul.f32 %v1057, 1.442695
      %v1113 = vpow.pop %v1112
      %v1114 = vmul.f32 %v1058, 1.442695
      %v1115 = vpow.pop %v1114
      %v1116 = vmul.f32 %v1059, 1.442695
      %v1117 = vpow.pop %v1116
      %v1118 = vmul.f32 %v1060, 1.442695
      %v1119 = vpow.pop %v1118
      %v1120 = vmul.f32 %v1061, 1.442695
      %v1121 = vpow.pop %v1120
      %v1122 = vmul.f32 %v1062, 1.442695
      %v1123 = vpow.pop %v1122
      %v1124 = vmul.f32 %v1063, 1.442695
      %v1125 = vpow.pop %v1124
      %v1126 = vmul.f32 %v1064, 1.442695
      %v1127 = vpow.pop %v1126
      %v1128 = vmul.f32 %v1065, 1.442695
      %v1129 = vpow.pop %v1128
      %v1130 = vsel %vm952, %v1067, 0.0
      %v1131 = vsel %vm953, %v1069, 0.0
      %v1132 = vsel %vm952, %v1071, 0.0
      %v1133 = vsel %vm953, %v1073, 0.0
      %v1134 = vsel %vm952, %v1075, 0.0
      %v1135 = vsel %vm953, %v1077, 0.0
      %v1136 = vsel %vm952, %v1079, 0.0
      %v1137 = vsel %vm953, %v1081, 0.0
      %v1138 = vsel %vm952, %v1083, 0.0
      %v1139 = vsel %vm953, %v1085, 0.0
      %v1140 = vsel %vm952, %v1087, 0.0
      %v1141 = vsel %vm953, %v1089, 0.0
      %v1142 = vsel %vm952, %v1091, 0.0
      %v1143 = vsel %vm953, %v1093, 0.0
      %v1144 = vsel %vm952, %v1095, 0.0
      %v1145 = vsel %vm953, %v1097, 0.0
      %v1146 = vsel %vm952, %v1099, 0.0
      %v1147 = vsel %vm953, %v1101, 0.0
      %v1148 = vsel %vm952, %v1103, 0.0
      %v1149 = vsel %vm953, %v1105, 0.0
      %v1150 = vsel %vm952, %v1107, 0.0
      %v1151 = vsel %vm953, %v1109, 0.0
      %v1152 = vsel %vm952, %v1111, 0.0
      %v1153 = vsel %vm953, %v1113, 0.0
      %v1154 = vsel %vm952, %v1115, 0.0
      %v1155 = vsel %vm953, %v1117, 0.0
      %v1156 = vsel %vm952, %v1119, 0.0
      %v1157 = vsel %vm953, %v1121, 0.0
      %v1158 = vsel %vm952, %v1123, 0.0
      %v1159 = vsel %vm953, %v1125, 0.0
      %v1160 = vsel %vm952, %v1127, 0.0
      %v1161 = vsel %vm953, %v1129, 0.0
      %v1162 = vadd.f32 %v1130, %v1131
      %1163 = vadd.xlane.f32.xlu0 %v1162
      %v1164 = vpop.xlane.xlu0 %1163
      %v1165 = vadd.f32 %v1132, %v1133
      %1166 = vadd.xlane.f32.xlu0 %v1165
      %v1167 = vpop.xlane.xlu0 %1166
      %v1168 = vadd.f32 %v1134, %v1135
      %1169 = vadd.xlane.f32.xlu0 %v1168
      %v1170 = vpop.xlane.xlu0 %1169
      %v1171 = vadd.f32 %v1136, %v1137
      %1172 = vadd.xlane.f32.xlu0 %v1171
      %v1173 = vpop.xlane.xlu0 %1172
      %v1174 = vadd.f32 %v1138, %v1139
      %1175 = vadd.xlane.f32.xlu0 %v1174
      %v1176 = vpop.xlane.xlu0 %1175
      %v1177 = vadd.f32 %v1140, %v1141
      %1178 = vadd.xlane.f32.xlu0 %v1177
      %v1179 = vpop.xlane.xlu0 %1178
      %v1180 = vadd.f32 %v1142, %v1143
      %1181 = vadd.xlane.f32.xlu0 %v1180
      %v1182 = vpop.xlane.xlu0 %1181
      %v1183 = vadd.f32 %v1144, %v1145
      %1184 = vadd.xlane.f32.xlu0 %v1183
      %v1185 = vpop.xlane.xlu0 %1184
      %v1186 = vadd.f32 %v1146, %v1147
      %1187 = vadd.xlane.f32.xlu0 %v1186
      %v1188 = vpop.xlane.xlu0 %1187
      %v1189 = vadd.f32 %v1148, %v1149
      %1190 = vadd.xlane.f32.xlu0 %v1189
      %v1191 = vpop.xlane.xlu0 %1190
      %v1192 = vadd.f32 %v1150, %v1151
      %1193 = vadd.xlane.f32.xlu0 %v1192
      %v1194 = vpop.xlane.xlu0 %1193
      %v1195 = vadd.f32 %v1152, %v1153
      %1196 = vadd.xlane.f32.xlu0 %v1195
      %v1197 = vpop.xlane.xlu0 %1196
      %v1198 = vadd.f32 %v1154, %v1155
      %1199 = vadd.xlane.f32.xlu0 %v1198
      %v1200 = vpop.xlane.xlu0 %1199
      %v1201 = vadd.f32 %v1156, %v1157
      %1202 = vadd.xlane.f32.xlu0 %v1201
      %v1203 = vpop.xlane.xlu0 %1202
      %v1204 = vadd.f32 %v1158, %v1159
      %1205 = vadd.xlane.f32.xlu0 %v1204
      %v1206 = vpop.xlane.xlu0 %1205
      %v1207 = vadd.f32 %v1160, %v1161
      %1208 = vadd.xlane.f32.xlu0 %v1207
      %v1209 = vpop.xlane.xlu0 %1208
      %v1210 = vadd.f32 %v1164, 1e-30
      %v1211 = vadd.f32 %v1167, 1e-30
      %v1212 = vadd.f32 %v1170, 1e-30
      %v1213 = vadd.f32 %v1173, 1e-30
      %v1214 = vadd.f32 %v1176, 1e-30
      %v1215 = vadd.f32 %v1179, 1e-30
      %v1216 = vadd.f32 %v1182, 1e-30
      %v1217 = vadd.f32 %v1185, 1e-30
      %v1218 = vadd.f32 %v1188, 1e-30
      %v1219 = vadd.f32 %v1191, 1e-30
      %v1220 = vadd.f32 %v1194, 1e-30
      %v1221 = vadd.f32 %v1197, 1e-30
      %v1222 = vadd.f32 %v1200, 1e-30
      %v1223 = vadd.f32 %v1203, 1e-30
      %v1224 = vadd.f32 %v1206, 1e-30
      %v1225 = vadd.f32 %v1209, 1e-30
      %v1226 = vrcp.pop %v1210
      %v1227 = vrcp.pop %v1211
      %v1228 = vrcp.pop %v1212
      %v1229 = vrcp.pop %v1213
      %v1230 = vrcp.pop %v1214
      %v1231 = vrcp.pop %v1215
      %v1232 = vrcp.pop %v1216
      %v1233 = vrcp.pop %v1217
      %v1234 = vrcp.pop %v1218
      %v1235 = vrcp.pop %v1219
      %v1236 = vrcp.pop %v1220
      %v1237 = vrcp.pop %v1221
      %v1238 = vrcp.pop %v1222
      %v1239 = vrcp.pop %v1223
      %v1240 = vrcp.pop %v1224
      %v1241 = vrcp.pop %v1225
      %v1242 = vmul.f32 %v1130, %v1226
      %v1243 = vmul.f32 %v1131, %v1226
      %v1244 = vmul.f32 %v1132, %v1227
      %v1245 = vmul.f32 %v1133, %v1227
      %v1246 = vmul.f32 %v1134, %v1228
      %v1247 = vmul.f32 %v1135, %v1228
      %v1248 = vmul.f32 %v1136, %v1229
      %v1249 = vmul.f32 %v1137, %v1229
      %v1250 = vmul.f32 %v1138, %v1230
      %v1251 = vmul.f32 %v1139, %v1230
      %v1252 = vmul.f32 %v1140, %v1231
      %v1253 = vmul.f32 %v1141, %v1231
      %v1254 = vmul.f32 %v1142, %v1232
      %v1255 = vmul.f32 %v1143, %v1232
      %v1256 = vmul.f32 %v1144, %v1233
      %v1257 = vmul.f32 %v1145, %v1233
      %v1258 = vmul.f32 %v1146, %v1234
      %v1259 = vmul.f32 %v1147, %v1234
      %v1260 = vmul.f32 %v1148, %v1235
      %v1261 = vmul.f32 %v1149, %v1235
      %v1262 = vmul.f32 %v1150, %v1236
      %v1263 = vmul.f32 %v1151, %v1236
      %v1264 = vmul.f32 %v1152, %v1237
      %v1265 = vmul.f32 %v1153, %v1237
      %v1266 = vmul.f32 %v1154, %v1238
      %v1267 = vmul.f32 %v1155, %v1238
      %v1268 = vmul.f32 %v1156, %v1239
      %v1269 = vmul.f32 %v1157, %v1239
      %v1270 = vmul.f32 %v1158, %v1240
      %v1271 = vmul.f32 %v1159, %v1240
      %v1272 = vmul.f32 %v1160, %v1241
      %v1273 = vmul.f32 %v1161, %v1241
      %v1274 = vld [vmem:[%s422] sm:$0xff]
      %v1275 = vld [vmem:[%s422 + $0x8] sm:$0xff]
      %v1276 = vld [vmem:[%s422 + $0x10] sm:$0xff]
      %v1277 = vld [vmem:[%s422 + $0x18] sm:$0xff]
      %v1278 = vld [vmem:[%s422 + $0x20] sm:$0xff]
      %v1279 = vld [vmem:[%s422 + $0x28] sm:$0xff]
      %v1280 = vld [vmem:[%s422 + $0x30] sm:$0xff]
      %v1281 = vld [vmem:[%s422 + $0x38] sm:$0xff]
      %v1282 = vld [vmem:[%s422 + $0x40] sm:$0xff]
      %v1283 = vld [vmem:[%s422 + $0x48] sm:$0xff]
      %v1284 = vld [vmem:[%s422 + $0x50] sm:$0xff]
      %v1285 = vld [vmem:[%s422 + $0x58] sm:$0xff]
      %v1286 = vld [vmem:[%s422 + $0x60] sm:$0xff]
      %v1287 = vld [vmem:[%s422 + $0x68] sm:$0xff]
      %v1288 = vld [vmem:[%s422 + $0x70] sm:$0xff]
      %v1289 = vld [vmem:[%s422 + $0x78] sm:$0xff]
      %v1290 = vld [vmem:[%s422 + $0x80] sm:$0xff]
      %v1291 = vld [vmem:[%s422 + $0x88] sm:$0xff]
      %v1292 = vld [vmem:[%s422 + $0x90] sm:$0xff]
      %v1293 = vld [vmem:[%s422 + $0x98] sm:$0xff]
      %v1294 = vld [vmem:[%s422 + $0xa0] sm:$0xff]
      %v1295 = vld [vmem:[%s422 + $0xa8] sm:$0xff]
      %v1296 = vld [vmem:[%s422 + $0xb0] sm:$0xff]
      %v1297 = vld [vmem:[%s422 + $0xb8] sm:$0xff]
      %v1298 = vld [vmem:[%s422 + $0xc0] sm:$0xff]
      %v1299 = vld [vmem:[%s422 + $0xc8] sm:$0xff]
      %v1300 = vld [vmem:[%s422 + $0xd0] sm:$0xff]
      %v1301 = vld [vmem:[%s422 + $0xd8] sm:$0xff]
      %v1302 = vld [vmem:[%s422 + $0xe0] sm:$0xff]
      %v1303 = vld [vmem:[%s422 + $0xe8] sm:$0xff]
      %v1304 = vld [vmem:[%s422 + $0xf0] sm:$0xff]
      %v1305 = vld [vmem:[%s422 + $0xf8] sm:$0xff]
      %1306 = vmatpush.msra.mxu0 %v1289
      %1307 = vmatpush.msra.mxu0 %v1288
      %1308 = vmatpush.msra.mxu0 %v1287
      %1309 = vmatpush.msra.mxu0 %v1286
      %1310 = vmatpush.msra.mxu0 %v1285
      %1311 = vmatpush.msra.mxu0 %v1284
      %1312 = vmatpush.msra.mxu0 %v1283
      %1313 = vmatpush.msra.mxu0 %v1282
      %1314 = vmatpush.msra.mxu0 %v1281
      %1315 = vmatpush.msra.mxu0 %v1280
      %1316 = vmatpush.msra.mxu0 %v1279
      %1317 = vmatpush.msra.mxu0 %v1278
      %1318 = vmatpush.msra.mxu0 %v1277
      %1319 = vmatpush.msra.mxu0 %v1276
      %1320 = vmatpush.msra.mxu0 %v1275
      %1321 = vmatpush.msra.mxu0 %v1274
      %1322 = vmatmul.f32.gmra.mxu0 %v1242
      %v1323 = vpop.f32.mrf.mxu0
      %v1324 = vadd.f32 0.0, %v1323
      %1325 = vmatmul.f32.gmra.mxu0 %v1244
      %v1326 = vpop.f32.mrf.mxu0
      %v1327 = vadd.f32 0.0, %v1326
      %1328 = vmatmul.f32.gmra.mxu0 %v1246
      %v1329 = vpop.f32.mrf.mxu0
      %v1330 = vadd.f32 0.0, %v1329
      %1331 = vmatmul.f32.gmra.mxu0 %v1248
      %v1332 = vpop.f32.mrf.mxu0
      %v1333 = vadd.f32 0.0, %v1332
      %1334 = vmatmul.f32.gmra.mxu0 %v1250
      %v1335 = vpop.f32.mrf.mxu0
      %v1336 = vadd.f32 0.0, %v1335
      %1337 = vmatmul.f32.gmra.mxu0 %v1252
      %v1338 = vpop.f32.mrf.mxu0
      %v1339 = vadd.f32 0.0, %v1338
      %1340 = vmatmul.f32.gmra.mxu0 %v1254
      %v1341 = vpop.f32.mrf.mxu0
      %v1342 = vadd.f32 0.0, %v1341
      %1343 = vmatmul.f32.gmra.mxu0 %v1256
      %v1344 = vpop.f32.mrf.mxu0
      %v1345 = vadd.f32 0.0, %v1344
      %1346 = vmatmul.f32.gmra.mxu0 %v1258
      %v1347 = vpop.f32.mrf.mxu0
      %v1348 = vadd.f32 0.0, %v1347
      %1349 = vmatmul.f32.gmra.mxu0 %v1260
      %v1350 = vpop.f32.mrf.mxu0
      %v1351 = vadd.f32 0.0, %v1350
      %1352 = vmatmul.f32.gmra.mxu0 %v1262
      %v1353 = vpop.f32.mrf.mxu0
      %v1354 = vadd.f32 0.0, %v1353
      %1355 = vmatmul.f32.gmra.mxu0 %v1264
      %v1356 = vpop.f32.mrf.mxu0
      %v1357 = vadd.f32 0.0, %v1356
      %1358 = vmatmul.f32.gmra.mxu0 %v1266
      %v1359 = vpop.f32.mrf.mxu0
      %v1360 = vadd.f32 0.0, %v1359
      %1361 = vmatmul.f32.gmra.mxu0 %v1268
      %v1362 = vpop.f32.mrf.mxu0
      %v1363 = vadd.f32 0.0, %v1362
      %1364 = vmatmul.f32.gmra.mxu0 %v1270
      %v1365 = vpop.f32.mrf.mxu0
      %v1366 = vadd.f32 0.0, %v1365
      %1367 = vmatmul.f32.gmra.mxu0 %v1272
      %v1368 = vpop.f32.mrf.mxu0
      %v1369 = vadd.f32 0.0, %v1368
      %1370 = vdwg.mxu0
      %1371 = vmatpush.msra.mxu0 %v1305
      %1372 = vmatpush.msra.mxu0 %v1304
      %1373 = vmatpush.msra.mxu0 %v1303
      %1374 = vmatpush.msra.mxu0 %v1302
      %1375 = vmatpush.msra.mxu0 %v1301
      %1376 = vmatpush.msra.mxu0 %v1300
      %1377 = vmatpush.msra.mxu0 %v1299
      %1378 = vmatpush.msra.mxu0 %v1298
      %1379 = vmatpush.msra.mxu0 %v1297
      %1380 = vmatpush.msra.mxu0 %v1296
      %1381 = vmatpush.msra.mxu0 %v1295
      %1382 = vmatpush.msra.mxu0 %v1294
      %1383 = vmatpush.msra.mxu0 %v1293
      %1384 = vmatpush.msra.mxu0 %v1292
      %1385 = vmatpush.msra.mxu0 %v1291
      %1386 = vmatpush.msra.mxu0 %v1290
      %1387 = vmatmul.f32.gmra.mxu0 %v1243
      %v1388 = vpop.f32.mrf.mxu0
      %v1389 = vadd.f32 %v1324, %v1388
      %1390 = vmatmul.f32.gmra.mxu0 %v1245
      %v1391 = vpop.f32.mrf.mxu0
      %v1392 = vadd.f32 %v1327, %v1391
      %1393 = vmatmul.f32.gmra.mxu0 %v1247
      %v1394 = vpop.f32.mrf.mxu0
      %v1395 = vadd.f32 %v1330, %v1394
      %1396 = vmatmul.f32.gmra.mxu0 %v1249
      %v1397 = vpop.f32.mrf.mxu0
      %v1398 = vadd.f32 %v1333, %v1397
      %1399 = vmatmul.f32.gmra.mxu0 %v1251
      %v1400 = vpop.f32.mrf.mxu0
      %v1401 = vadd.f32 %v1336, %v1400
      %1402 = vmatmul.f32.gmra.mxu0 %v1253
      %v1403 = vpop.f32.mrf.mxu0
      %v1404 = vadd.f32 %v1339, %v1403
      %1405 = vmatmul.f32.gmra.mxu0 %v1255
      %v1406 = vpop.f32.mrf.mxu0
      %v1407 = vadd.f32 %v1342, %v1406
      %1408 = vmatmul.f32.gmra.mxu0 %v1257
      %v1409 = vpop.f32.mrf.mxu0
      %v1410 = vadd.f32 %v1345, %v1409
      %1411 = vmatmul.f32.gmra.mxu0 %v1259
      %v1412 = vpop.f32.mrf.mxu0
      %v1413 = vadd.f32 %v1348, %v1412
      %1414 = vmatmul.f32.gmra.mxu0 %v1261
      %v1415 = vpop.f32.mrf.mxu0
      %v1416 = vadd.f32 %v1351, %v1415
      %1417 = vmatmul.f32.gmra.mxu0 %v1263
      %v1418 = vpop.f32.mrf.mxu0
      %v1419 = vadd.f32 %v1354, %v1418
      %1420 = vmatmul.f32.gmra.mxu0 %v1265
      %v1421 = vpop.f32.mrf.mxu0
      %v1422 = vadd.f32 %v1357, %v1421
      %1423 = vmatmul.f32.gmra.mxu0 %v1267
      %v1424 = vpop.f32.mrf.mxu0
      %v1425 = vadd.f32 %v1360, %v1424
      %1426 = vmatmul.f32.gmra.mxu0 %v1269
      %v1427 = vpop.f32.mrf.mxu0
      %v1428 = vadd.f32 %v1363, %v1427
      %1429 = vmatmul.f32.gmra.mxu0 %v1271
      %v1430 = vpop.f32.mrf.mxu0
      %v1431 = vadd.f32 %v1366, %v1430
      %1432 = vmatmul.f32.gmra.mxu0 %v1273
      %v1433 = vpop.f32.mrf.mxu0
      %v1434 = vadd.f32 %v1369, %v1433
      %1435 = vdwg.mxu0
      %p1436 = scmp.lt.s32.totalorder %s25, 8
      // Predicated region
      $region45: #{generator_forward.4} parent=39 // pred_check
        %p1437 = pneg %p1436
      $region46: #{generator_forward.4} parent=39 // pred_check_branch
        %1439 = sbr.rel (%p1437) target = $region48
      $region47: #{generator_forward.4} parent=39 // pred_region
        %v1440 = vld [vmem:[%s431] sm:$0xff]
        %v1441 = vld [vmem:[%s431 + $0x8] sm:$0xff]
        %v1442 = vld [vmem:[%s431 + $0x10] sm:$0xff]
        %v1443 = vld [vmem:[%s431 + $0x18] sm:$0xff]
        %v1444 = vld [vmem:[%s431 + $0x20] sm:$0xff]
        %v1445 = vld [vmem:[%s431 + $0x28] sm:$0xff]
        %v1446 = vld [vmem:[%s431 + $0x30] sm:$0xff]
        %v1447 = vld [vmem:[%s431 + $0x38] sm:$0xff]
        %v1448 = vld [vmem:[%s431 + $0x40] sm:$0xff]
        %v1449 = vld [vmem:[%s431 + $0x48] sm:$0xff]
        %v1450 = vld [vmem:[%s431 + $0x50] sm:$0xff]
        %v1451 = vld [vmem:[%s431 + $0x58] sm:$0xff]
        %v1452 = vld [vmem:[%s431 + $0x60] sm:$0xff]
        %v1453 = vld [vmem:[%s431 + $0x68] sm:$0xff]
        %v1454 = vld [vmem:[%s431 + $0x70] sm:$0xff]
        %v1455 = vld [vmem:[%s431 + $0x78] sm:$0xff]
        %v1456 = vsel %vm869, 1, 0
        %v1457 = vsel %vm870, 1, 0
        %v1458 = vsel %vm871, 1, 0
        %v1459 = vsel %vm872, 1, 0
        %v1460 = vsel %vm873, 1, 0
        %v1461 = vsel %vm874, 1, 0
        %v1462 = vsel %vm875, 1, 0
        %v1463 = vsel %vm876, 1, 0
        %v1464 = vsel %vm877, 1, 0
        %v1465 = vsel %vm878, 1, 0
        %v1466 = vsel %vm879, 1, 0
        %v1467 = vsel %vm880, 1, 0
        %v1468 = vsel %vm881, 1, 0
        %v1469 = vsel %vm882, 1, 0
        %v1470 = vsel %vm883, 1, 0
        %v1471 = vsel %vm884, 1, 0
        %1472 = vset.pattern.permute.xlu0 0
        %1473 = vperm.xlu0 %1472, %v1456
        %v1474 = vpop.permute.xlu0 %1473
        %1475 = vset.pattern.permute.xlu0 0
        %1476 = vperm.xlu0 %1475, %v1457
        %v1477 = vpop.permute.xlu0 %1476
        %1478 = vset.pattern.permute.xlu0 0
        %1479 = vperm.xlu0 %1478, %v1458
        %v1480 = vpop.permute.xlu0 %1479
        %1481 = vset.pattern.permute.xlu0 0
        %1482 = vperm.xlu0 %1481, %v1459
        %v1483 = vpop.permute.xlu0 %1482
        %1484 = vset.pattern.permute.xlu0 0
        %1485 = vperm.xlu0 %1484, %v1460
        %v1486 = vpop.permute.xlu0 %1485
        %1487 = vset.pattern.permute.xlu0 0
        %1488 = vperm.xlu0 %1487, %v1461
        %v1489 = vpop.permute.xlu0 %1488
        %1490 = vset.pattern.permute.xlu0 0
        %1491 = vperm.xlu0 %1490, %v1462
        %v1492 = vpop.permute.xlu0 %1491
        %1493 = vset.pattern.permute.xlu0 0
        %1494 = vperm.xlu0 %1493, %v1463
        %v1495 = vpop.permute.xlu0 %1494
        %1496 = vset.pattern.permute.xlu0 0
        %1497 = vperm.xlu0 %1496, %v1464
        %v1498 = vpop.permute.xlu0 %1497
        %1499 = vset.pattern.permute.xlu0 0
        %1500 = vperm.xlu0 %1499, %v1465
        %v1501 = vpop.permute.xlu0 %1500
        %1502 = vset.pattern.permute.xlu0 0
        %1503 = vperm.xlu0 %1502, %v1466
        %v1504 = vpop.permute.xlu0 %1503
        %1505 = vset.pattern.permute.xlu0 0
        %1506 = vperm.xlu0 %1505, %v1467
        %v1507 = vpop.permute.xlu0 %1506
        %1508 = vset.pattern.permute.xlu0 0
        %1509 = vperm.xlu0 %1508, %v1468
        %v1510 = vpop.permute.xlu0 %1509
        %1511 = vset.pattern.permute.xlu0 0
        %1512 = vperm.xlu0 %1511, %v1469
        %v1513 = vpop.permute.xlu0 %1512
        %1514 = vset.pattern.permute.xlu0 0
        %1515 = vperm.xlu0 %1514, %v1470
        %v1516 = vpop.permute.xlu0 %1515
        %1517 = vset.pattern.permute.xlu0 0
        %1518 = vperm.xlu0 %1517, %v1471
        %v1519 = vpop.permute.xlu0 %1518
        %vm1520 = vcmp.eq.s32.totalorder %v1474, 1
        %vm1521 = vcmp.eq.s32.totalorder %v1477, 1
        %vm1522 = vcmp.eq.s32.totalorder %v1480, 1
        %vm1523 = vcmp.eq.s32.totalorder %v1483, 1
        %vm1524 = vcmp.eq.s32.totalorder %v1486, 1
        %vm1525 = vcmp.eq.s32.totalorder %v1489, 1
        %vm1526 = vcmp.eq.s32.totalorder %v1492, 1
        %vm1527 = vcmp.eq.s32.totalorder %v1495, 1
        %vm1528 = vcmp.eq.s32.totalorder %v1498, 1
        %vm1529 = vcmp.eq.s32.totalorder %v1501, 1
        %vm1530 = vcmp.eq.s32.totalorder %v1504, 1
        %vm1531 = vcmp.eq.s32.totalorder %v1507, 1
        %vm1532 = vcmp.eq.s32.totalorder %v1510, 1
        %vm1533 = vcmp.eq.s32.totalorder %v1513, 1
        %vm1534 = vcmp.eq.s32.totalorder %v1516, 1
        %vm1535 = vcmp.eq.s32.totalorder %v1519, 1
        %v1536 = vsel %vm1520, %v1389, %v1440
        %v1537 = vsel %vm1521, %v1392, %v1441
        %v1538 = vsel %vm1522, %v1395, %v1442
        %v1539 = vsel %vm1523, %v1398, %v1443
        %v1540 = vsel %vm1524, %v1401, %v1444
        %v1541 = vsel %vm1525, %v1404, %v1445
        %v1542 = vsel %vm1526, %v1407, %v1446
        %v1543 = vsel %vm1527, %v1410, %v1447
        %v1544 = vsel %vm1528, %v1413, %v1448
        %v1545 = vsel %vm1529, %v1416, %v1449
        %v1546 = vsel %vm1530, %v1419, %v1450
        %v1547 = vsel %vm1531, %v1422, %v1451
        %v1548 = vsel %vm1532, %v1425, %v1452
        %v1549 = vsel %vm1533, %v1428, %v1453
        %v1550 = vsel %vm1534, %v1431, %v1454
        %v1551 = vsel %vm1535, %v1434, %v1455
        %vm1552 = vcmask 23552
        %1553 = vst.msk [vmem:[%s431] sm:$0xff] %vm1552, %v1536
        %1554 = vst.msk [vmem:[%s431 + $0x8] sm:$0xff] %vm1552, %v1537
        %1555 = vst.msk [vmem:[%s431 + $0x10] sm:$0xff] %vm1552, %v1538
        %1556 = vst.msk [vmem:[%s431 + $0x18] sm:$0xff] %vm1552, %v1539
        %1557 = vst.msk [vmem:[%s431 + $0x20] sm:$0xff] %vm1552, %v1540
        %1558 = vst.msk [vmem:[%s431 + $0x28] sm:$0xff] %vm1552, %v1541
        %1559 = vst.msk [vmem:[%s431 + $0x30] sm:$0xff] %vm1552, %v1542
        %1560 = vst.msk [vmem:[%s431 + $0x38] sm:$0xff] %vm1552, %v1543
        %1561 = vst.msk [vmem:[%s431 + $0x40] sm:$0xff] %vm1552, %v1544
        %1562 = vst.msk [vmem:[%s431 + $0x48] sm:$0xff] %vm1552, %v1545
        %1563 = vst.msk [vmem:[%s431 + $0x50] sm:$0xff] %vm1552, %v1546
        %1564 = vst.msk [vmem:[%s431 + $0x58] sm:$0xff] %vm1552, %v1547
        %1565 = vst.msk [vmem:[%s431 + $0x60] sm:$0xff] %vm1552, %v1548
        %1566 = vst.msk [vmem:[%s431 + $0x68] sm:$0xff] %vm1552, %v1549
        %1567 = vst.msk [vmem:[%s431 + $0x70] sm:$0xff] %vm1552, %v1550
        %1568 = vst.msk [vmem:[%s431 + $0x78] sm:$0xff] %vm1552, %v1551
      $region48: #{generator_forward.4} parent=39 // pred_fallthru
        _
      %p1569 = scmp.ge.s32.totalorder %s25, 8
      // Predicated region
      $region49: #{generator_forward.4} parent=39 // pred_check
        %p1570 = pneg %p1569
      $region50: #{generator_forward.4} parent=39 // pred_check_branch
        %1572 = sbr.rel (%p1570) target = $region52
      $region51: #{generator_forward.4} parent=39 // pred_region
        %v1573 = vld [vmem:[%s441] sm:$0xff]
        %v1574 = vld [vmem:[%s441 + $0x8] sm:$0xff]
        %v1575 = vld [vmem:[%s441 + $0x10] sm:$0xff]
        %v1576 = vld [vmem:[%s441 + $0x18] sm:$0xff]
        %v1577 = vld [vmem:[%s441 + $0x20] sm:$0xff]
        %v1578 = vld [vmem:[%s441 + $0x28] sm:$0xff]
        %v1579 = vld [vmem:[%s441 + $0x30] sm:$0xff]
        %v1580 = vld [vmem:[%s441 + $0x38] sm:$0xff]
        %v1581 = vld [vmem:[%s441 + $0x40] sm:$0xff]
        %v1582 = vld [vmem:[%s441 + $0x48] sm:$0xff]
        %v1583 = vld [vmem:[%s441 + $0x50] sm:$0xff]
        %v1584 = vld [vmem:[%s441 + $0x58] sm:$0xff]
        %v1585 = vld [vmem:[%s441 + $0x60] sm:$0xff]
        %v1586 = vld [vmem:[%s441 + $0x68] sm:$0xff]
        %v1587 = vld [vmem:[%s441 + $0x70] sm:$0xff]
        %v1588 = vld [vmem:[%s441 + $0x78] sm:$0xff]
        %v1589 = vsel %vm869, 1, 0
        %v1590 = vsel %vm870, 1, 0
        %v1591 = vsel %vm871, 1, 0
        %v1592 = vsel %vm872, 1, 0
        %v1593 = vsel %vm873, 1, 0
        %v1594 = vsel %vm874, 1, 0
        %v1595 = vsel %vm875, 1, 0
        %v1596 = vsel %vm876, 1, 0
        %v1597 = vsel %vm877, 1, 0
        %v1598 = vsel %vm878, 1, 0
        %v1599 = vsel %vm879, 1, 0
        %v1600 = vsel %vm880, 1, 0
        %v1601 = vsel %vm881, 1, 0
        %v1602 = vsel %vm882, 1, 0
        %v1603 = vsel %vm883, 1, 0
        %v1604 = vsel %vm884, 1, 0
        %1605 = vset.pattern.permute.xlu0 0
        %1606 = vperm.xlu0 %1605, %v1589
        %v1607 = vpop.permute.xlu0 %1606
        %1608 = vset.pattern.permute.xlu0 0
        %1609 = vperm.xlu0 %1608, %v1590
        %v1610 = vpop.permute.xlu0 %1609
        %1611 = vset.pattern.permute.xlu0 0
        %1612 = vperm.xlu0 %1611, %v1591
        %v1613 = vpop.permute.xlu0 %1612
        %1614 = vset.pattern.permute.xlu0 0
        %1615 = vperm.xlu0 %1614, %v1592
        %v1616 = vpop.permute.xlu0 %1615
        %1617 = vset.pattern.permute.xlu0 0
        %1618 = vperm.xlu0 %1617, %v1593
        %v1619 = vpop.permute.xlu0 %1618
        %1620 = vset.pattern.permute.xlu0 0
        %1621 = vperm.xlu0 %1620, %v1594
        %v1622 = vpop.permute.xlu0 %1621
        %1623 = vset.pattern.permute.xlu0 0
        %1624 = vperm.xlu0 %1623, %v1595
        %v1625 = vpop.permute.xlu0 %1624
        %1626 = vset.pattern.permute.xlu0 0
        %1627 = vperm.xlu0 %1626, %v1596
        %v1628 = vpop.permute.xlu0 %1627
        %1629 = vset.pattern.permute.xlu0 0
        %1630 = vperm.xlu0 %1629, %v1597
        %v1631 = vpop.permute.xlu0 %1630
        %1632 = vset.pattern.permute.xlu0 0
        %1633 = vperm.xlu0 %1632, %v1598
        %v1634 = vpop.permute.xlu0 %1633
        %1635 = vset.pattern.permute.xlu0 0
        %1636 = vperm.xlu0 %1635, %v1599
        %v1637 = vpop.permute.xlu0 %1636
        %1638 = vset.pattern.permute.xlu0 0
        %1639 = vperm.xlu0 %1638, %v1600
        %v1640 = vpop.permute.xlu0 %1639
        %1641 = vset.pattern.permute.xlu0 0
        %1642 = vperm.xlu0 %1641, %v1601
        %v1643 = vpop.permute.xlu0 %1642
        %1644 = vset.pattern.permute.xlu0 0
        %1645 = vperm.xlu0 %1644, %v1602
        %v1646 = vpop.permute.xlu0 %1645
        %1647 = vset.pattern.permute.xlu0 0
        %1648 = vperm.xlu0 %1647, %v1603
        %v1649 = vpop.permute.xlu0 %1648
        %1650 = vset.pattern.permute.xlu0 0
        %1651 = vperm.xlu0 %1650, %v1604
        %v1652 = vpop.permute.xlu0 %1651
        %vm1653 = vcmp.eq.s32.totalorder %v1607, 1
        %vm1654 = vcmp.eq.s32.totalorder %v1610, 1
        %vm1655 = vcmp.eq.s32.totalorder %v1613, 1
        %vm1656 = vcmp.eq.s32.totalorder %v1616, 1
        %vm1657 = vcmp.eq.s32.totalorder %v1619, 1
        %vm1658 = vcmp.eq.s32.totalorder %v1622, 1
        %vm1659 = vcmp.eq.s32.totalorder %v1625, 1
        %vm1660 = vcmp.eq.s32.totalorder %v1628, 1
        %vm1661 = vcmp.eq.s32.totalorder %v1631, 1
        %vm1662 = vcmp.eq.s32.totalorder %v1634, 1
        %vm1663 = vcmp.eq.s32.totalorder %v1637, 1
        %vm1664 = vcmp.eq.s32.totalorder %v1640, 1
        %vm1665 = vcmp.eq.s32.totalorder %v1643, 1
        %vm1666 = vcmp.eq.s32.totalorder %v1646, 1
        %vm1667 = vcmp.eq.s32.totalorder %v1649, 1
        %vm1668 = vcmp.eq.s32.totalorder %v1652, 1
        %v1669 = vsel %vm1653, %v1389, %v1573
        %v1670 = vsel %vm1654, %v1392, %v1574
        %v1671 = vsel %vm1655, %v1395, %v1575
        %v1672 = vsel %vm1656, %v1398, %v1576
        %v1673 = vsel %vm1657, %v1401, %v1577
        %v1674 = vsel %vm1658, %v1404, %v1578
        %v1675 = vsel %vm1659, %v1407, %v1579
        %v1676 = vsel %vm1660, %v1410, %v1580
        %v1677 = vsel %vm1661, %v1413, %v1581
        %v1678 = vsel %vm1662, %v1416, %v1582
        %v1679 = vsel %vm1663, %v1419, %v1583
        %v1680 = vsel %vm1664, %v1422, %v1584
        %v1681 = vsel %vm1665, %v1425, %v1585
        %v1682 = vsel %vm1666, %v1428, %v1586
        %v1683 = vsel %vm1667, %v1431, %v1587
        %v1684 = vsel %vm1668, %v1434, %v1588
        %vm1685 = vcmask 23552
        %1686 = vst.msk [vmem:[%s441] sm:$0xff] %vm1685, %v1669
        %1687 = vst.msk [vmem:[%s441 + $0x8] sm:$0xff] %vm1685, %v1670
        %1688 = vst.msk [vmem:[%s441 + $0x10] sm:$0xff] %vm1685, %v1671
        %1689 = vst.msk [vmem:[%s441 + $0x18] sm:$0xff] %vm1685, %v1672
        %1690 = vst.msk [vmem:[%s441 + $0x20] sm:$0xff] %vm1685, %v1673
        %1691 = vst.msk [vmem:[%s441 + $0x28] sm:$0xff] %vm1685, %v1674
        %1692 = vst.msk [vmem:[%s441 + $0x30] sm:$0xff] %vm1685, %v1675
        %1693 = vst.msk [vmem:[%s441 + $0x38] sm:$0xff] %vm1685, %v1676
        %1694 = vst.msk [vmem:[%s441 + $0x40] sm:$0xff] %vm1685, %v1677
        %1695 = vst.msk [vmem:[%s441 + $0x48] sm:$0xff] %vm1685, %v1678
        %1696 = vst.msk [vmem:[%s441 + $0x50] sm:$0xff] %vm1685, %v1679
        %1697 = vst.msk [vmem:[%s441 + $0x58] sm:$0xff] %vm1685, %v1680
        %1698 = vst.msk [vmem:[%s441 + $0x60] sm:$0xff] %vm1685, %v1681
        %1699 = vst.msk [vmem:[%s441 + $0x68] sm:$0xff] %vm1685, %v1682
        %1700 = vst.msk [vmem:[%s441 + $0x70] sm:$0xff] %vm1685, %v1683
        %1701 = vst.msk [vmem:[%s441 + $0x78] sm:$0xff] %vm1685, %v1684
      $region52: #{generator_forward.4} parent=39 // pred_fallthru
        _
      %s1702 = smul.u32 16, %s24
      %p1703 = scmp.lt.s32.totalorder %s23, 1
      %s1704 = scalar_select %p1703, %s23, 1
      %p1705 = scmp.lt.s32.totalorder %s1702, 31
      %s1706 = scalar_select %p1705, %s1702, 31
      %s1707 = smul.addr %s1704, 32
      %s1708 = sadd.s32 %s1706, %s1707
      %s1709 = smul.addr %s1708, 8
      %s1710 = scalar_lea.vmem %s5, %s1709
      %s1711 = smul.u32 16, %s24
      %p1712 = scmp.lt.s32.totalorder %s23, 1
      %s1713 = scalar_select %p1712, %s23, 1
      %p1714 = scmp.lt.s32.totalorder %s1711, 31
      %s1715 = scalar_select %p1714, %s1711, 31
      %s1716 = smul.addr %s1713, 32
      %s1717 = sadd.s32 %s1715, %s1716
      %s1718 = smul.addr %s1717, 8
      %s1719 = scalar_lea.vmem %s6, %s1718
      // Predicated region
      $region53: #{generator_forward.4} parent=39 // pred_check
        %p1720 = pneg %p195
      $region54: #{generator_forward.4} parent=39 // pred_check_branch
        %1722 = sbr.rel (%p1720) target = $region56
      $region55: #{generator_forward.4} parent=39 // pred_region
        %s1723 = smul.u32 16, %s24
      $region56: #{generator_forward.4} parent=39 // pred_fallthru
        _
      // Predicated region
      $region57: #{generator_forward.4} parent=39 // pred_check
        %p1724 = pneg %p223
      $region58: #{generator_forward.4} parent=39 // pred_check_branch
        %1726 = sbr.rel (%p1724) target = $region60
      $region59: #{generator_forward.4} parent=39 // pred_region
        %s1727 = smul.u32 16, %s24
      $region60: #{generator_forward.4} parent=39 // pred_fallthru
        _
    $region40: #{generator_forward.4} parent=5 // pred_fallthru
      _
    %p1728 = scmp.le.s32.totalorder 2, %s13
    // Predicated region
    $region61: #{generator_forward.4} parent=5 // pred_check
      %p1729 = pneg %p1728
    $region62: #{generator_forward.4} parent=5 // pred_check_branch
      %1731 = sbr.rel (%p1729) target = $region64
    $region63: #{generator_forward.4} parent=5 // pred_region
      %s1732 = ssub.s32 %s13, 2
      // Predicated region
      $region65: #{generator_forward.4} parent=63 // pred_check
        %p1733 = pneg %p201
      $region66: #{generator_forward.4} parent=63 // pred_check_branch
        %1735 = sbr.rel (%p1733) target = $region68
      $region67: #{generator_forward.4} parent=63 // pred_region
        %s1736 = smul.u32 16, %s27
        %p1737 = scmp.lt.s32.totalorder %s26, 1
        %s1738 = scalar_select %p1737, %s26, 1
        %p1739 = scmp.lt.s32.totalorder %s1736, 31
        %s1740 = scalar_select %p1739, %s1736, 31
        %s1741 = smul.addr %s1738, 32
        %s1742 = sadd.s32 %s1740, %s1741
        %s1743 = smul.addr %s1742, 8
        %s1744 = scalar_lea.vmem %s5, %s1743
      $region68: #{generator_forward.4} parent=63 // pred_fallthru
        _
      // Predicated region
      $region69: #{generator_forward.4} parent=63 // pred_check
        %p1745 = pneg %p229
      $region70: #{generator_forward.4} parent=63 // pred_check_branch
        %1747 = sbr.rel (%p1745) target = $region72
      $region71: #{generator_forward.4} parent=63 // pred_region
        %s1748 = smul.u32 16, %s27
        %p1749 = scmp.lt.s32.totalorder %s26, 1
        %s1750 = scalar_select %p1749, %s26, 1
        %p1751 = scmp.lt.s32.totalorder %s1748, 31
        %s1752 = scalar_select %p1751, %s1748, 31
        %s1753 = smul.addr %s1750, 32
        %s1754 = sadd.s32 %s1752, %s1753
        %s1755 = smul.addr %s1754, 8
        %s1756 = scalar_lea.vmem %s6, %s1755
      $region72: #{generator_forward.4} parent=63 // pred_fallthru
        _
    $region64: #{generator_forward.4} parent=5 // pred_fallthru
      _
  $region6: #{generator_forward.4} parent=0 // loop_footer
    %s17 = sadd.s32 1, %s13
  $region7: #{generator_forward.4} parent=0 // loop_footer_branch
    %12 = sbr.rel target = $region3
  $region8: #{generator_forward.4} parent=0 // loop_exit
    _

// kernel: generator_forward.5
$region0: #{generator_forward.5}
  #allocation0 [shape = 'u32[]', space=smem, size = 0x4, offset = 0x4, fixed_abs, tag = 'smem constant byte address 0x4 - core index']
  #allocation1 [shape = 'u32[72,128]{1,0:T(1,128)}', space=vmem, size = 0x9000, scoped, tag = 'internal scratch']
  %s0 = inlined_call_operand.vmem [shape: f32[512,3], index: 0, kind: input, shape index: {}]
  %s1 = inlined_call_operand.vmem [shape: f32[512,3], index: 1, kind: input, shape index: {}]
  %s2 = inlined_call_operand.vmem [shape: f32[512,1], index: 2, kind: input, shape index: {}]
  %s3 = inlined_call_operand.vmem [shape: f32[512,3], index: 3, kind: input, shape index: {}]
  %s4 = inlined_call_operand.vmem [shape: f32[512,1], index: 4, kind: input, shape index: {}]
  %s5 = inlined_call_operand.vmem [shape: f32[512,1], index: 5, kind: input, shape index: {}]
  %s6 = inlined_call_operand.vmem [shape: f32[512,1], index: 6, kind: input, shape index: {}]
  %s7 = inlined_call_operand.vmem [shape: f32[3,3], index: 7, kind: input, shape index: {}]
  %s8 = inlined_call_operand.vmem [shape: f32[3,3], index: 8, kind: input, shape index: {}]
  %s9 = inlined_call_operand.vmem [shape: f32[1,3], index: 9, kind: input, shape index: {}]
  %s10 = inlined_call_operand.vmem [shape: f32[3,3], index: 10, kind: input, shape index: {}]
  %s11 = inlined_call_operand.vmem [shape: f32[1,3], index: 11, kind: input, shape index: {}]
  %s12 = inlined_call_operand.vmem [shape: f32[1,3], index: 12, kind: input, shape index: {}]
  %s13 = inlined_call_operand.vmem [shape: f32[1,3], index: 13, kind: input, shape index: {}]
  %s14 = inlined_call_operand.vmem [shape: f32[512,3], index: 14, kind: output, shape index: {}]
  %s15 = sld [smem:[#allocation0]]
  $region66: #{generator_forward.5} parent=0
    _
  %s17 = ssub.s32 1, %s15
  %s18 = scalar_select 0, %s17, %s15
  // Predicated region
  $region2: #{generator_forward.5} parent=0 // pred_check
    _
  $region3: #{generator_forward.5} parent=0 // pred_check_branch
    %20 = sbr.rel (0) target = $region5
  $region4: #{generator_forward.5} parent=0 // pred_region
    _
  $region5: #{generator_forward.5} parent=0 // pred_fallthru
    _
  // Predicated region
  $region6: #{generator_forward.5} parent=0 // pred_check
    _
  $region7: #{generator_forward.5} parent=0 // pred_check_branch
    %22 = sbr.rel (0) target = $region9
  $region8: #{generator_forward.5} parent=0 // pred_region
    _
  $region9: #{generator_forward.5} parent=0 // pred_fallthru
    _
  // Predicated region
  $region10: #{generator_forward.5} parent=0 // pred_check
    _
  $region11: #{generator_forward.5} parent=0 // pred_check_branch
    %24 = sbr.rel (0) target = $region13
  $region12: #{generator_forward.5} parent=0 // pred_region
    _
  $region13: #{generator_forward.5} parent=0 // pred_fallthru
    _
  // Predicated region
  $region14: #{generator_forward.5} parent=0 // pred_check
    _
  $region15: #{generator_forward.5} parent=0 // pred_check_branch
    %26 = sbr.rel (0) target = $region17
  $region16: #{generator_forward.5} parent=0 // pred_region
    _
  $region17: #{generator_forward.5} parent=0 // pred_fallthru
    _
  // Predicated region
  $region18: #{generator_forward.5} parent=0 // pred_check
    _
  $region19: #{generator_forward.5} parent=0 // pred_check_branch
    %28 = sbr.rel (0) target = $region21
  $region20: #{generator_forward.5} parent=0 // pred_region
    _
  $region21: #{generator_forward.5} parent=0 // pred_fallthru
    _
  // Predicated region
  $region22: #{generator_forward.5} parent=0 // pred_check
    _
  $region23: #{generator_forward.5} parent=0 // pred_check_branch
    %30 = sbr.rel (0) target = $region25
  $region24: #{generator_forward.5} parent=0 // pred_region
    _
  $region25: #{generator_forward.5} parent=0 // pred_fallthru
    _
  // Predicated region
  $region26: #{generator_forward.5} parent=0 // pred_check
    _
  $region27: #{generator_forward.5} parent=0 // pred_check_branch
    %32 = sbr.rel (0) target = $region29
  $region28: #{generator_forward.5} parent=0 // pred_region
    _
  $region29: #{generator_forward.5} parent=0 // pred_fallthru
    _
  // Predicated region
  $region30: #{generator_forward.5} parent=0 // pred_check
    _
  $region31: #{generator_forward.5} parent=0 // pred_check_branch
    %34 = sbr.rel (0) target = $region33
  $region32: #{generator_forward.5} parent=0 // pred_region
    _
  $region33: #{generator_forward.5} parent=0 // pred_fallthru
    _
  // Predicated region
  $region34: #{generator_forward.5} parent=0 // pred_check
    _
  $region35: #{generator_forward.5} parent=0 // pred_check_branch
    %36 = sbr.rel (0) target = $region37
  $region36: #{generator_forward.5} parent=0 // pred_region
    _
  $region37: #{generator_forward.5} parent=0 // pred_fallthru
    _
  // Predicated region
  $region38: #{generator_forward.5} parent=0 // pred_check
    _
  $region39: #{generator_forward.5} parent=0 // pred_check_branch
    %38 = sbr.rel (0) target = $region41
  $region40: #{generator_forward.5} parent=0 // pred_region
    _
  $region41: #{generator_forward.5} parent=0 // pred_fallthru
    _
  // Predicated region
  $region42: #{generator_forward.5} parent=0 // pred_check
    _
  $region43: #{generator_forward.5} parent=0 // pred_check_branch
    %40 = sbr.rel (0) target = $region45
  $region44: #{generator_forward.5} parent=0 // pred_region
    _
  $region45: #{generator_forward.5} parent=0 // pred_fallthru
    _
  // Predicated region
  $region46: #{generator_forward.5} parent=0 // pred_check
    _
  $region47: #{generator_forward.5} parent=0 // pred_check_branch
    %42 = sbr.rel (0) target = $region49
  $region48: #{generator_forward.5} parent=0 // pred_region
    _
  $region49: #{generator_forward.5} parent=0 // pred_fallthru
    _
  // Predicated region
  $region50: #{generator_forward.5} parent=0 // pred_check
    _
  $region51: #{generator_forward.5} parent=0 // pred_check_branch
    %44 = sbr.rel (0) target = $region53
  $region52: #{generator_forward.5} parent=0 // pred_region
    _
  $region53: #{generator_forward.5} parent=0 // pred_fallthru
    _
  // Predicated region
  $region54: #{generator_forward.5} parent=0 // pred_check
    _
  $region55: #{generator_forward.5} parent=0 // pred_check_branch
    %46 = sbr.rel (0) target = $region57
  $region56: #{generator_forward.5} parent=0 // pred_region
    _
  $region57: #{generator_forward.5} parent=0 // pred_fallthru
    _
  %v47 = vld [vmem:[%s2] sm:$0xff]
  %v48 = vld [vmem:[%s2 + $0x8] sm:$0xff]
  %v49 = vld [vmem:[%s2 + $0x10] sm:$0xff]
  %v50 = vld [vmem:[%s2 + $0x18] sm:$0xff]
  %v51 = vld [vmem:[%s2 + $0x20] sm:$0xff]
  %v52 = vld [vmem:[%s2 + $0x28] sm:$0xff]
  %v53 = vld [vmem:[%s2 + $0x30] sm:$0xff]
  %v54 = vld [vmem:[%s2 + $0x38] sm:$0xff]
  %v55 = vld [vmem:[%s2 + $0x40] sm:$0xff]
  %v56 = vld [vmem:[%s2 + $0x48] sm:$0xff]
  %v57 = vld [vmem:[%s2 + $0x50] sm:$0xff]
  %v58 = vld [vmem:[%s2 + $0x58] sm:$0xff]
  %v59 = vld [vmem:[%s2 + $0x60] sm:$0xff]
  %v60 = vld [vmem:[%s2 + $0x68] sm:$0xff]
  %v61 = vld [vmem:[%s2 + $0x70] sm:$0xff]
  %v62 = vld [vmem:[%s2 + $0x78] sm:$0xff]
  %v63 = vld [vmem:[%s2 + $0x80] sm:$0xff]
  %v64 = vld [vmem:[%s2 + $0x88] sm:$0xff]
  %v65 = vld [vmem:[%s2 + $0x90] sm:$0xff]
  %v66 = vld [vmem:[%s2 + $0x98] sm:$0xff]
  %v67 = vld [vmem:[%s2 + $0xa0] sm:$0xff]
  %v68 = vld [vmem:[%s2 + $0xa8] sm:$0xff]
  %v69 = vld [vmem:[%s2 + $0xb0] sm:$0xff]
  %v70 = vld [vmem:[%s2 + $0xb8] sm:$0xff]
  %v71 = vld [vmem:[%s2 + $0xc0] sm:$0xff]
  %v72 = vld [vmem:[%s2 + $0xc8] sm:$0xff]
  %v73 = vld [vmem:[%s2 + $0xd0] sm:$0xff]
  %v74 = vld [vmem:[%s2 + $0xd8] sm:$0xff]
  %v75 = vld [vmem:[%s2 + $0xe0] sm:$0xff]
  %v76 = vld [vmem:[%s2 + $0xe8] sm:$0xff]
  %v77 = vld [vmem:[%s2 + $0xf0] sm:$0xff]
  %v78 = vld [vmem:[%s2 + $0xf8] sm:$0xff]
  %v79 = vld [vmem:[%s2 + $0x100] sm:$0xff]
  %v80 = vld [vmem:[%s2 + $0x108] sm:$0xff]
  %v81 = vld [vmem:[%s2 + $0x110] sm:$0xff]
  %v82 = vld [vmem:[%s2 + $0x118] sm:$0xff]
  %v83 = vld [vmem:[%s2 + $0x120] sm:$0xff]
  %v84 = vld [vmem:[%s2 + $0x128] sm:$0xff]
  %v85 = vld [vmem:[%s2 + $0x130] sm:$0xff]
  %v86 = vld [vmem:[%s2 + $0x138] sm:$0xff]
  %v87 = vld [vmem:[%s2 + $0x140] sm:$0xff]
  %v88 = vld [vmem:[%s2 + $0x148] sm:$0xff]
  %v89 = vld [vmem:[%s2 + $0x150] sm:$0xff]
  %v90 = vld [vmem:[%s2 + $0x158] sm:$0xff]
  %v91 = vld [vmem:[%s2 + $0x160] sm:$0xff]
  %v92 = vld [vmem:[%s2 + $0x168] sm:$0xff]
  %v93 = vld [vmem:[%s2 + $0x170] sm:$0xff]
  %v94 = vld [vmem:[%s2 + $0x178] sm:$0xff]
  %v95 = vld [vmem:[%s2 + $0x180] sm:$0xff]
  %v96 = vld [vmem:[%s2 + $0x188] sm:$0xff]
  %v97 = vld [vmem:[%s2 + $0x190] sm:$0xff]
  %v98 = vld [vmem:[%s2 + $0x198] sm:$0xff]
  %v99 = vld [vmem:[%s2 + $0x1a0] sm:$0xff]
  %v100 = vld [vmem:[%s2 + $0x1a8] sm:$0xff]
  %v101 = vld [vmem:[%s2 + $0x1b0] sm:$0xff]
  %v102 = vld [vmem:[%s2 + $0x1b8] sm:$0xff]
  %v103 = vld [vmem:[%s2 + $0x1c0] sm:$0xff]
  %v104 = vld [vmem:[%s2 + $0x1c8] sm:$0xff]
  %v105 = vld [vmem:[%s2 + $0x1d0] sm:$0xff]
  %v106 = vld [vmem:[%s2 + $0x1d8] sm:$0xff]
  %v107 = vld [vmem:[%s2 + $0x1e0] sm:$0xff]
  %v108 = vld [vmem:[%s2 + $0x1e8] sm:$0xff]
  %v109 = vld [vmem:[%s2 + $0x1f0] sm:$0xff]
  %v110 = vld [vmem:[%s2 + $0x1f8] sm:$0xff]
  %v111 = vld [vmem:[%s3] sm:$0xff]
  %v112 = vld [vmem:[%s3 + $0x8] sm:$0xff]
  %v113 = vld [vmem:[%s3 + $0x10] sm:$0xff]
  %v114 = vld [vmem:[%s3 + $0x18] sm:$0xff]
  %v115 = vld [vmem:[%s3 + $0x20] sm:$0xff]
  %v116 = vld [vmem:[%s3 + $0x28] sm:$0xff]
  %v117 = vld [vmem:[%s3 + $0x30] sm:$0xff]
  %v118 = vld [vmem:[%s3 + $0x38] sm:$0xff]
  %v119 = vld [vmem:[%s3 + $0x40] sm:$0xff]
  %v120 = vld [vmem:[%s3 + $0x48] sm:$0xff]
  %v121 = vld [vmem:[%s3 + $0x50] sm:$0xff]
  %v122 = vld [vmem:[%s3 + $0x58] sm:$0xff]
  %v123 = vld [vmem:[%s3 + $0x60] sm:$0xff]
  %v124 = vld [vmem:[%s3 + $0x68] sm:$0xff]
  %v125 = vld [vmem:[%s3 + $0x70] sm:$0xff]
  %v126 = vld [vmem:[%s3 + $0x78] sm:$0xff]
  %v127 = vld [vmem:[%s3 + $0x80] sm:$0xff]
  %v128 = vld [vmem:[%s3 + $0x88] sm:$0xff]
  %v129 = vld [vmem:[%s3 + $0x90] sm:$0xff]
  %v130 = vld [vmem:[%s3 + $0x98] sm:$0xff]
  %v131 = vld [vmem:[%s3 + $0xa0] sm:$0xff]
  %v132 = vld [vmem:[%s3 + $0xa8] sm:$0xff]
  %v133 = vld [vmem:[%s3 + $0xb0] sm:$0xff]
  %v134 = vld [vmem:[%s3 + $0xb8] sm:$0xff]
  %v135 = vld [vmem:[%s3 + $0xc0] sm:$0xff]
  %v136 = vld [vmem:[%s3 + $0xc8] sm:$0xff]
  %v137 = vld [vmem:[%s3 + $0xd0] sm:$0xff]
  %v138 = vld [vmem:[%s3 + $0xd8] sm:$0xff]
  %v139 = vld [vmem:[%s3 + $0xe0] sm:$0xff]
  %v140 = vld [vmem:[%s3 + $0xe8] sm:$0xff]
  %v141 = vld [vmem:[%s3 + $0xf0] sm:$0xff]
  %v142 = vld [vmem:[%s3 + $0xf8] sm:$0xff]
  %v143 = vld [vmem:[%s3 + $0x100] sm:$0xff]
  %v144 = vld [vmem:[%s3 + $0x108] sm:$0xff]
  %v145 = vld [vmem:[%s3 + $0x110] sm:$0xff]
  %v146 = vld [vmem:[%s3 + $0x118] sm:$0xff]
  %v147 = vld [vmem:[%s3 + $0x120] sm:$0xff]
  %v148 = vld [vmem:[%s3 + $0x128] sm:$0xff]
  %v149 = vld [vmem:[%s3 + $0x130] sm:$0xff]
  %v150 = vld [vmem:[%s3 + $0x138] sm:$0xff]
  %v151 = vld [vmem:[%s3 + $0x140] sm:$0xff]
  %v152 = vld [vmem:[%s3 + $0x148] sm:$0xff]
  %v153 = vld [vmem:[%s3 + $0x150] sm:$0xff]
  %v154 = vld [vmem:[%s3 + $0x158] sm:$0xff]
  %v155 = vld [vmem:[%s3 + $0x160] sm:$0xff]
  %v156 = vld [vmem:[%s3 + $0x168] sm:$0xff]
  %v157 = vld [vmem:[%s3 + $0x170] sm:$0xff]
  %v158 = vld [vmem:[%s3 + $0x178] sm:$0xff]
  %v159 = vld [vmem:[%s3 + $0x180] sm:$0xff]
  %v160 = vld [vmem:[%s3 + $0x188] sm:$0xff]
  %v161 = vld [vmem:[%s3 + $0x190] sm:$0xff]
  %v162 = vld [vmem:[%s3 + $0x198] sm:$0xff]
  %v163 = vld [vmem:[%s3 + $0x1a0] sm:$0xff]
  %v164 = vld [vmem:[%s3 + $0x1a8] sm:$0xff]
  %v165 = vld [vmem:[%s3 + $0x1b0] sm:$0xff]
  %v166 = vld [vmem:[%s3 + $0x1b8] sm:$0xff]
  %v167 = vld [vmem:[%s3 + $0x1c0] sm:$0xff]
  %v168 = vld [vmem:[%s3 + $0x1c8] sm:$0xff]
  %v169 = vld [vmem:[%s3 + $0x1d0] sm:$0xff]
  %v170 = vld [vmem:[%s3 + $0x1d8] sm:$0xff]
  %v171 = vld [vmem:[%s3 + $0x1e0] sm:$0xff]
  %v172 = vld [vmem:[%s3 + $0x1e8] sm:$0xff]
  %v173 = vld [vmem:[%s3 + $0x1f0] sm:$0xff]
  %v174 = vld [vmem:[%s3 + $0x1f8] sm:$0xff]
  %v175 = vld [vmem:[%s4] sm:$0xff]
  %v176 = vld [vmem:[%s4 + $0x8] sm:$0xff]
  %v177 = vld [vmem:[%s4 + $0x10] sm:$0xff]
  %v178 = vld [vmem:[%s4 + $0x18] sm:$0xff]
  %v179 = vld [vmem:[%s4 + $0x20] sm:$0xff]
  %v180 = vld [vmem:[%s4 + $0x28] sm:$0xff]
  %v181 = vld [vmem:[%s4 + $0x30] sm:$0xff]
  %v182 = vld [vmem:[%s4 + $0x38] sm:$0xff]
  %v183 = vld [vmem:[%s4 + $0x40] sm:$0xff]
  %v184 = vld [vmem:[%s4 + $0x48] sm:$0xff]
  %v185 = vld [vmem:[%s4 + $0x50] sm:$0xff]
  %v186 = vld [vmem:[%s4 + $0x58] sm:$0xff]
  %v187 = vld [vmem:[%s4 + $0x60] sm:$0xff]
  %v188 = vld [vmem:[%s4 + $0x68] sm:$0xff]
  %v189 = vld [vmem:[%s4 + $0x70] sm:$0xff]
  %v190 = vld [vmem:[%s4 + $0x78] sm:$0xff]
  %v191 = vld [vmem:[%s4 + $0x80] sm:$0xff]
  %v192 = vld [vmem:[%s4 + $0x88] sm:$0xff]
  %v193 = vld [vmem:[%s4 + $0x90] sm:$0xff]
  %v194 = vld [vmem:[%s4 + $0x98] sm:$0xff]
  %v195 = vld [vmem:[%s4 + $0xa0] sm:$0xff]
  %v196 = vld [vmem:[%s4 + $0xa8] sm:$0xff]
  %v197 = vld [vmem:[%s4 + $0xb0] sm:$0xff]
  %v198 = vld [vmem:[%s4 + $0xb8] sm:$0xff]
  %v199 = vld [vmem:[%s4 + $0xc0] sm:$0xff]
  %v200 = vld [vmem:[%s4 + $0xc8] sm:$0xff]
  %v201 = vld [vmem:[%s4 + $0xd0] sm:$0xff]
  %v202 = vld [vmem:[%s4 + $0xd8] sm:$0xff]
  %v203 = vld [vmem:[%s4 + $0xe0] sm:$0xff]
  %v204 = vld [vmem:[%s4 + $0xe8] sm:$0xff]
  %v205 = vld [vmem:[%s4 + $0xf0] sm:$0xff]
  %v206 = vld [vmem:[%s4 + $0xf8] sm:$0xff]
  %v207 = vld [vmem:[%s4 + $0x100] sm:$0xff]
  %v208 = vld [vmem:[%s4 + $0x108] sm:$0xff]
  %v209 = vld [vmem:[%s4 + $0x110] sm:$0xff]
  %v210 = vld [vmem:[%s4 + $0x118] sm:$0xff]
  %v211 = vld [vmem:[%s4 + $0x120] sm:$0xff]
  %v212 = vld [vmem:[%s4 + $0x128] sm:$0xff]
  %v213 = vld [vmem:[%s4 + $0x130] sm:$0xff]
  %v214 = vld [vmem:[%s4 + $0x138] sm:$0xff]
  %v215 = vld [vmem:[%s4 + $0x140] sm:$0xff]
  %v216 = vld [vmem:[%s4 + $0x148] sm:$0xff]
  %v217 = vld [vmem:[%s4 + $0x150] sm:$0xff]
  %v218 = vld [vmem:[%s4 + $0x158] sm:$0xff]
  %v219 = vld [vmem:[%s4 + $0x160] sm:$0xff]
  %v220 = vld [vmem:[%s4 + $0x168] sm:$0xff]
  %v221 = vld [vmem:[%s4 + $0x170] sm:$0xff]
  %v222 = vld [vmem:[%s4 + $0x178] sm:$0xff]
  %v223 = vld [vmem:[%s4 + $0x180] sm:$0xff]
  %v224 = vld [vmem:[%s4 + $0x188] sm:$0xff]
  %v225 = vld [vmem:[%s4 + $0x190] sm:$0xff]
  %v226 = vld [vmem:[%s4 + $0x198] sm:$0xff]
  %v227 = vld [vmem:[%s4 + $0x1a0] sm:$0xff]
  %v228 = vld [vmem:[%s4 + $0x1a8] sm:$0xff]
  %v229 = vld [vmem:[%s4 + $0x1b0] sm:$0xff]
  %v230 = vld [vmem:[%s4 + $0x1b8] sm:$0xff]
  %v231 = vld [vmem:[%s4 + $0x1c0] sm:$0xff]
  %v232 = vld [vmem:[%s4 + $0x1c8] sm:$0xff]
  %v233 = vld [vmem:[%s4 + $0x1d0] sm:$0xff]
  %v234 = vld [vmem:[%s4 + $0x1d8] sm:$0xff]
  %v235 = vld [vmem:[%s4 + $0x1e0] sm:$0xff]
  %v236 = vld [vmem:[%s4 + $0x1e8] sm:$0xff]
  %v237 = vld [vmem:[%s4 + $0x1f0] sm:$0xff]
  %v238 = vld [vmem:[%s4 + $0x1f8] sm:$0xff]
  %v239 = vsub.f32 1.0, %v175
  %v240 = vsub.f32 1.0, %v176
  %v241 = vsub.f32 1.0, %v177
  %v242 = vsub.f32 1.0, %v178
  %v243 = vsub.f32 1.0, %v179
  %v244 = vsub.f32 1.0, %v180
  %v245 = vsub.f32 1.0, %v181
  %v246 = vsub.f32 1.0, %v182
  %v247 = vsub.f32 1.0, %v183
  %v248 = vsub.f32 1.0, %v184
  %v249 = vsub.f32 1.0, %v185
  %v250 = vsub.f32 1.0, %v186
  %v251 = vsub.f32 1.0, %v187
  %v252 = vsub.f32 1.0, %v188
  %v253 = vsub.f32 1.0, %v189
  %v254 = vsub.f32 1.0, %v190
  %v255 = vsub.f32 1.0, %v191
  %v256 = vsub.f32 1.0, %v192
  %v257 = vsub.f32 1.0, %v193
  %v258 = vsub.f32 1.0, %v194
  %v259 = vsub.f32 1.0, %v195
  %v260 = vsub.f32 1.0, %v196
  %v261 = vsub.f32 1.0, %v197
  %v262 = vsub.f32 1.0, %v198
  %v263 = vsub.f32 1.0, %v199
  %v264 = vsub.f32 1.0, %v200
  %v265 = vsub.f32 1.0, %v201
  %v266 = vsub.f32 1.0, %v202
  %v267 = vsub.f32 1.0, %v203
  %v268 = vsub.f32 1.0, %v204
  %v269 = vsub.f32 1.0, %v205
  %v270 = vsub.f32 1.0, %v206
  %v271 = vsub.f32 1.0, %v207
  %v272 = vsub.f32 1.0, %v208
  %v273 = vsub.f32 1.0, %v209
  %v274 = vsub.f32 1.0, %v210
  %v275 = vsub.f32 1.0, %v211
  %v276 = vsub.f32 1.0, %v212
  %v277 = vsub.f32 1.0, %v213
  %v278 = vsub.f32 1.0, %v214
  %v279 = vsub.f32 1.0, %v215
  %v280 = vsub.f32 1.0, %v216
  %v281 = vsub.f32 1.0, %v217
  %v282 = vsub.f32 1.0, %v218
  %v283 = vsub.f32 1.0, %v219
  %v284 = vsub.f32 1.0, %v220
  %v285 = vsub.f32 1.0, %v221
  %v286 = vsub.f32 1.0, %v222
  %v287 = vsub.f32 1.0, %v223
  %v288 = vsub.f32 1.0, %v224
  %v289 = vsub.f32 1.0, %v225
  %v290 = vsub.f32 1.0, %v226
  %v291 = vsub.f32 1.0, %v227
  %v292 = vsub.f32 1.0, %v228
  %v293 = vsub.f32 1.0, %v229
  %v294 = vsub.f32 1.0, %v230
  %v295 = vsub.f32 1.0, %v231
  %v296 = vsub.f32 1.0, %v232
  %v297 = vsub.f32 1.0, %v233
  %v298 = vsub.f32 1.0, %v234
  %v299 = vsub.f32 1.0, %v235
  %v300 = vsub.f32 1.0, %v236
  %v301 = vsub.f32 1.0, %v237
  %v302 = vsub.f32 1.0, %v238
  %304 = vset.pattern.permute.xlu0 0
  %305 = vperm.xlu0 %304, %v239
  %v306 = vpop.permute.xlu0 %305
  %309 = vset.pattern.permute.xlu0 0
  %310 = vperm.xlu0 %309, %v240
  %v311 = vpop.permute.xlu0 %310
  %314 = vset.pattern.permute.xlu0 0
  %315 = vperm.xlu0 %314, %v241
  %v316 = vpop.permute.xlu0 %315
  %319 = vset.pattern.permute.xlu0 0
  %320 = vperm.xlu0 %319, %v242
  %v321 = vpop.permute.xlu0 %320
  %324 = vset.pattern.permute.xlu0 0
  %325 = vperm.xlu0 %324, %v243
  %v326 = vpop.permute.xlu0 %325
  %329 = vset.pattern.permute.xlu0 0
  %330 = vperm.xlu0 %329, %v244
  %v331 = vpop.permute.xlu0 %330
  %334 = vset.pattern.permute.xlu0 0
  %335 = vperm.xlu0 %334, %v245
  %v336 = vpop.permute.xlu0 %335
  %339 = vset.pattern.permute.xlu0 0
  %340 = vperm.xlu0 %339, %v246
  %v341 = vpop.permute.xlu0 %340
  %344 = vset.pattern.permute.xlu0 0
  %345 = vperm.xlu0 %344, %v247
  %v346 = vpop.permute.xlu0 %345
  %349 = vset.pattern.permute.xlu0 0
  %350 = vperm.xlu0 %349, %v248
  %v351 = vpop.permute.xlu0 %350
  %354 = vset.pattern.permute.xlu0 0
  %355 = vperm.xlu0 %354, %v249
  %v356 = vpop.permute.xlu0 %355
  %359 = vset.pattern.permute.xlu0 0
  %360 = vperm.xlu0 %359, %v250
  %v361 = vpop.permute.xlu0 %360
  %364 = vset.pattern.permute.xlu0 0
  %365 = vperm.xlu0 %364, %v251
  %v366 = vpop.permute.xlu0 %365
  %369 = vset.pattern.permute.xlu0 0
  %370 = vperm.xlu0 %369, %v252
  %v371 = vpop.permute.xlu0 %370
  %374 = vset.pattern.permute.xlu0 0
  %375 = vperm.xlu0 %374, %v253
  %v376 = vpop.permute.xlu0 %375
  %379 = vset.pattern.permute.xlu0 0
  %380 = vperm.xlu0 %379, %v254
  %v381 = vpop.permute.xlu0 %380
  %384 = vset.pattern.permute.xlu0 0
  %385 = vperm.xlu0 %384, %v255
  %v386 = vpop.permute.xlu0 %385
  %389 = vset.pattern.permute.xlu0 0
  %390 = vperm.xlu0 %389, %v256
  %v391 = vpop.permute.xlu0 %390
  %394 = vset.pattern.permute.xlu0 0
  %395 = vperm.xlu0 %394, %v257
  %v396 = vpop.permute.xlu0 %395
  %399 = vset.pattern.permute.xlu0 0
  %400 = vperm.xlu0 %399, %v258
  %v401 = vpop.permute.xlu0 %400
  %404 = vset.pattern.permute.xlu0 0
  %405 = vperm.xlu0 %404, %v259
  %v406 = vpop.permute.xlu0 %405
  %409 = vset.pattern.permute.xlu0 0
  %410 = vperm.xlu0 %409, %v260
  %v411 = vpop.permute.xlu0 %410
  %414 = vset.pattern.permute.xlu0 0
  %415 = vperm.xlu0 %414, %v261
  %v416 = vpop.permute.xlu0 %415
  %419 = vset.pattern.permute.xlu0 0
  %420 = vperm.xlu0 %419, %v262
  %v421 = vpop.permute.xlu0 %420
  %424 = vset.pattern.permute.xlu0 0
  %425 = vperm.xlu0 %424, %v263
  %v426 = vpop.permute.xlu0 %425
  %429 = vset.pattern.permute.xlu0 0
  %430 = vperm.xlu0 %429, %v264
  %v431 = vpop.permute.xlu0 %430
  %434 = vset.pattern.permute.xlu0 0
  %435 = vperm.xlu0 %434, %v265
  %v436 = vpop.permute.xlu0 %435
  %439 = vset.pattern.permute.xlu0 0
  %440 = vperm.xlu0 %439, %v266
  %v441 = vpop.permute.xlu0 %440
  %444 = vset.pattern.permute.xlu0 0
  %445 = vperm.xlu0 %444, %v267
  %v446 = vpop.permute.xlu0 %445
  %449 = vset.pattern.permute.xlu0 0
  %450 = vperm.xlu0 %449, %v268
  %v451 = vpop.permute.xlu0 %450
  %454 = vset.pattern.permute.xlu0 0
  %455 = vperm.xlu0 %454, %v269
  %v456 = vpop.permute.xlu0 %455
  %459 = vset.pattern.permute.xlu0 0
  %460 = vperm.xlu0 %459, %v270
  %v461 = vpop.permute.xlu0 %460
  %464 = vset.pattern.permute.xlu0 0
  %465 = vperm.xlu0 %464, %v271
  %v466 = vpop.permute.xlu0 %465
  %469 = vset.pattern.permute.xlu0 0
  %470 = vperm.xlu0 %469, %v272
  %v471 = vpop.permute.xlu0 %470
  %474 = vset.pattern.permute.xlu0 0
  %475 = vperm.xlu0 %474, %v273
  %v476 = vpop.permute.xlu0 %475
  %479 = vset.pattern.permute.xlu0 0
  %480 = vperm.xlu0 %479, %v274
  %v481 = vpop.permute.xlu0 %480
  %484 = vset.pattern.permute.xlu0 0
  %485 = vperm.xlu0 %484, %v275
  %v486 = vpop.permute.xlu0 %485
  %489 = vset.pattern.permute.xlu0 0
  %490 = vperm.xlu0 %489, %v276
  %v491 = vpop.permute.xlu0 %490
  %494 = vset.pattern.permute.xlu0 0
  %495 = vperm.xlu0 %494, %v277
  %v496 = vpop.permute.xlu0 %495
  %499 = vset.pattern.permute.xlu0 0
  %500 = vperm.xlu0 %499, %v278
  %v501 = vpop.permute.xlu0 %500
  %504 = vset.pattern.permute.xlu0 0
  %505 = vperm.xlu0 %504, %v279
  %v506 = vpop.permute.xlu0 %505
  %509 = vset.pattern.permute.xlu0 0
  %510 = vperm.xlu0 %509, %v280
  %v511 = vpop.permute.xlu0 %510
  %514 = vset.pattern.permute.xlu0 0
  %515 = vperm.xlu0 %514, %v281
  %v516 = vpop.permute.xlu0 %515
  %519 = vset.pattern.permute.xlu0 0
  %520 = vperm.xlu0 %519, %v282
  %v521 = vpop.permute.xlu0 %520
  %524 = vset.pattern.permute.xlu0 0
  %525 = vperm.xlu0 %524, %v283
  %v526 = vpop.permute.xlu0 %525
  %529 = vset.pattern.permute.xlu0 0
  %530 = vperm.xlu0 %529, %v284
  %v531 = vpop.permute.xlu0 %530
  %534 = vset.pattern.permute.xlu0 0
  %535 = vperm.xlu0 %534, %v285
  %v536 = vpop.permute.xlu0 %535
  %539 = vset.pattern.permute.xlu0 0
  %540 = vperm.xlu0 %539, %v286
  %v541 = vpop.permute.xlu0 %540
  %544 = vset.pattern.permute.xlu0 0
  %545 = vperm.xlu0 %544, %v287
  %v546 = vpop.permute.xlu0 %545
  %549 = vset.pattern.permute.xlu0 0
  %550 = vperm.xlu0 %549, %v288
  %v551 = vpop.permute.xlu0 %550
  %554 = vset.pattern.permute.xlu0 0
  %555 = vperm.xlu0 %554, %v289
  %v556 = vpop.permute.xlu0 %555
  %559 = vset.pattern.permute.xlu0 0
  %560 = vperm.xlu0 %559, %v290
  %v561 = vpop.permute.xlu0 %560
  %564 = vset.pattern.permute.xlu0 0
  %565 = vperm.xlu0 %564, %v291
  %v566 = vpop.permute.xlu0 %565
  %569 = vset.pattern.permute.xlu0 0
  %570 = vperm.xlu0 %569, %v292
  %v571 = vpop.permute.xlu0 %570
  %574 = vset.pattern.permute.xlu0 0
  %575 = vperm.xlu0 %574, %v293
  %v576 = vpop.permute.xlu0 %575
  %579 = vset.pattern.permute.xlu0 0
  %580 = vperm.xlu0 %579, %v294
  %v581 = vpop.permute.xlu0 %580
  %584 = vset.pattern.permute.xlu0 0
  %585 = vperm.xlu0 %584, %v295
  %v586 = vpop.permute.xlu0 %585
  %589 = vset.pattern.permute.xlu0 0
  %590 = vperm.xlu0 %589, %v296
  %v591 = vpop.permute.xlu0 %590
  %594 = vset.pattern.permute.xlu0 0
  %595 = vperm.xlu0 %594, %v297
  %v596 = vpop.permute.xlu0 %595
  %599 = vset.pattern.permute.xlu0 0
  %600 = vperm.xlu0 %599, %v298
  %v601 = vpop.permute.xlu0 %600
  %604 = vset.pattern.permute.xlu0 0
  %605 = vperm.xlu0 %604, %v299
  %v606 = vpop.permute.xlu0 %605
  %609 = vset.pattern.permute.xlu0 0
  %610 = vperm.xlu0 %609, %v300
  %v611 = vpop.permute.xlu0 %610
  %614 = vset.pattern.permute.xlu0 0
  %615 = vperm.xlu0 %614, %v301
  %v616 = vpop.permute.xlu0 %615
  %619 = vset.pattern.permute.xlu0 0
  %620 = vperm.xlu0 %619, %v302
  %v621 = vpop.permute.xlu0 %620
  %v623 = vmul.f32 %v111, %v306
  %v624 = vmul.f32 %v112, %v311
  %v625 = vmul.f32 %v113, %v316
  %v626 = vmul.f32 %v114, %v321
  %v627 = vmul.f32 %v115, %v326
  %v628 = vmul.f32 %v116, %v331
  %v629 = vmul.f32 %v117, %v336
  %v630 = vmul.f32 %v118, %v341
  %v631 = vmul.f32 %v119, %v346
  %v632 = vmul.f32 %v120, %v351
  %v633 = vmul.f32 %v121, %v356
  %v634 = vmul.f32 %v122, %v361
  %v635 = vmul.f32 %v123, %v366
  %v636 = vmul.f32 %v124, %v371
  %v637 = vmul.f32 %v125, %v376
  %v638 = vmul.f32 %v126, %v381
  %v639 = vmul.f32 %v127, %v386
  %v640 = vmul.f32 %v128, %v391
  %v641 = vmul.f32 %v129, %v396
  %v642 = vmul.f32 %v130, %v401
  %v643 = vmul.f32 %v131, %v406
  %v644 = vmul.f32 %v132, %v411
  %v645 = vmul.f32 %v133, %v416
  %v646 = vmul.f32 %v134, %v421
  %v647 = vmul.f32 %v135, %v426
  %v648 = vmul.f32 %v136, %v431
  %v649 = vmul.f32 %v137, %v436
  %v650 = vmul.f32 %v138, %v441
  %v651 = vmul.f32 %v139, %v446
  %v652 = vmul.f32 %v140, %v451
  %v653 = vmul.f32 %v141, %v456
  %v654 = vmul.f32 %v142, %v461
  %v655 = vmul.f32 %v143, %v466
  %v656 = vmul.f32 %v144, %v471
  %v657 = vmul.f32 %v145, %v476
  %v658 = vmul.f32 %v146, %v481
  %v659 = vmul.f32 %v147, %v486
  %v660 = vmul.f32 %v148, %v491
  %v661 = vmul.f32 %v149, %v496
  %v662 = vmul.f32 %v150, %v501
  %v663 = vmul.f32 %v151, %v506
  %v664 = vmul.f32 %v152, %v511
  %v665 = vmul.f32 %v153, %v516
  %v666 = vmul.f32 %v154, %v521
  %v667 = vmul.f32 %v155, %v526
  %v668 = vmul.f32 %v156, %v531
  %v669 = vmul.f32 %v157, %v536
  %v670 = vmul.f32 %v158, %v541
  %v671 = vmul.f32 %v159, %v546
  %v672 = vmul.f32 %v160, %v551
  %v673 = vmul.f32 %v161, %v556
  %v674 = vmul.f32 %v162, %v561
  %v675 = vmul.f32 %v163, %v566
  %v676 = vmul.f32 %v164, %v571
  %v677 = vmul.f32 %v165, %v576
  %v678 = vmul.f32 %v166, %v581
  %v679 = vmul.f32 %v167, %v586
  %v680 = vmul.f32 %v168, %v591
  %v681 = vmul.f32 %v169, %v596
  %v682 = vmul.f32 %v170, %v601
  %v683 = vmul.f32 %v171, %v606
  %v684 = vmul.f32 %v172, %v611
  %v685 = vmul.f32 %v173, %v616
  %v686 = vmul.f32 %v174, %v621
  %v687 = vld [vmem:[%s6] sm:$0xff]
  %v688 = vld [vmem:[%s6 + $0x8] sm:$0xff]
  %v689 = vld [vmem:[%s6 + $0x10] sm:$0xff]
  %v690 = vld [vmem:[%s6 + $0x18] sm:$0xff]
  %v691 = vld [vmem:[%s6 + $0x20] sm:$0xff]
  %v692 = vld [vmem:[%s6 + $0x28] sm:$0xff]
  %v693 = vld [vmem:[%s6 + $0x30] sm:$0xff]
  %v694 = vld [vmem:[%s6 + $0x38] sm:$0xff]
  %v695 = vld [vmem:[%s6 + $0x40] sm:$0xff]
  %v696 = vld [vmem:[%s6 + $0x48] sm:$0xff]
  %v697 = vld [vmem:[%s6 + $0x50] sm:$0xff]
  %v698 = vld [vmem:[%s6 + $0x58] sm:$0xff]
  %v699 = vld [vmem:[%s6 + $0x60] sm:$0xff]
  %v700 = vld [vmem:[%s6 + $0x68] sm:$0xff]
  %v701 = vld [vmem:[%s6 + $0x70] sm:$0xff]
  %v702 = vld [vmem:[%s6 + $0x78] sm:$0xff]
  %v703 = vld [vmem:[%s6 + $0x80] sm:$0xff]
  %v704 = vld [vmem:[%s6 + $0x88] sm:$0xff]
  %v705 = vld [vmem:[%s6 + $0x90] sm:$0xff]
  %v706 = vld [vmem:[%s6 + $0x98] sm:$0xff]
  %v707 = vld [vmem:[%s6 + $0xa0] sm:$0xff]
  %v708 = vld [vmem:[%s6 + $0xa8] sm:$0xff]
  %v709 = vld [vmem:[%s6 + $0xb0] sm:$0xff]
  %v710 = vld [vmem:[%s6 + $0xb8] sm:$0xff]
  %v711 = vld [vmem:[%s6 + $0xc0] sm:$0xff]
  %v712 = vld [vmem:[%s6 + $0xc8] sm:$0xff]
  %v713 = vld [vmem:[%s6 + $0xd0] sm:$0xff]
  %v714 = vld [vmem:[%s6 + $0xd8] sm:$0xff]
  %v715 = vld [vmem:[%s6 + $0xe0] sm:$0xff]
  %v716 = vld [vmem:[%s6 + $0xe8] sm:$0xff]
  %v717 = vld [vmem:[%s6 + $0xf0] sm:$0xff]
  %v718 = vld [vmem:[%s6 + $0xf8] sm:$0xff]
  %v719 = vld [vmem:[%s6 + $0x100] sm:$0xff]
  %v720 = vld [vmem:[%s6 + $0x108] sm:$0xff]
  %v721 = vld [vmem:[%s6 + $0x110] sm:$0xff]
  %v722 = vld [vmem:[%s6 + $0x118] sm:$0xff]
  %v723 = vld [vmem:[%s6 + $0x120] sm:$0xff]
  %v724 = vld [vmem:[%s6 + $0x128] sm:$0xff]
  %v725 = vld [vmem:[%s6 + $0x130] sm:$0xff]
  %v726 = vld [vmem:[%s6 + $0x138] sm:$0xff]
  %v727 = vld [vmem:[%s6 + $0x140] sm:$0xff]
  %v728 = vld [vmem:[%s6 + $0x148] sm:$0xff]
  %v729 = vld [vmem:[%s6 + $0x150] sm:$0xff]
  %v730 = vld [vmem:[%s6 + $0x158] sm:$0xff]
  %v731 = vld [vmem:[%s6 + $0x160] sm:$0xff]
  %v732 = vld [vmem:[%s6 + $0x168] sm:$0xff]
  %v733 = vld [vmem:[%s6 + $0x170] sm:$0xff]
  %v734 = vld [vmem:[%s6 + $0x178] sm:$0xff]
  %v735 = vld [vmem:[%s6 + $0x180] sm:$0xff]
  %v736 = vld [vmem:[%s6 + $0x188] sm:$0xff]
  %v737 = vld [vmem:[%s6 + $0x190] sm:$0xff]
  %v738 = vld [vmem:[%s6 + $0x198] sm:$0xff]
  %v739 = vld [vmem:[%s6 + $0x1a0] sm:$0xff]
  %v740 = vld [vmem:[%s6 + $0x1a8] sm:$0xff]
  %v741 = vld [vmem:[%s6 + $0x1b0] sm:$0xff]
  %v742 = vld [vmem:[%s6 + $0x1b8] sm:$0xff]
  %v743 = vld [vmem:[%s6 + $0x1c0] sm:$0xff]
  %v744 = vld [vmem:[%s6 + $0x1c8] sm:$0xff]
  %v745 = vld [vmem:[%s6 + $0x1d0] sm:$0xff]
  %v746 = vld [vmem:[%s6 + $0x1d8] sm:$0xff]
  %v747 = vld [vmem:[%s6 + $0x1e0] sm:$0xff]
  %v748 = vld [vmem:[%s6 + $0x1e8] sm:$0xff]
  %v749 = vld [vmem:[%s6 + $0x1f0] sm:$0xff]
  %v750 = vld [vmem:[%s6 + $0x1f8] sm:$0xff]
  %v751 = vmul.f32 %v687, %v47
  %v752 = vmul.f32 %v688, %v48
  %v753 = vmul.f32 %v689, %v49
  %v754 = vmul.f32 %v690, %v50
  %v755 = vmul.f32 %v691, %v51
  %v756 = vmul.f32 %v692, %v52
  %v757 = vmul.f32 %v693, %v53
  %v758 = vmul.f32 %v694, %v54
  %v759 = vmul.f32 %v695, %v55
  %v760 = vmul.f32 %v696, %v56
  %v761 = vmul.f32 %v697, %v57
  %v762 = vmul.f32 %v698, %v58
  %v763 = vmul.f32 %v699, %v59
  %v764 = vmul.f32 %v700, %v60
  %v765 = vmul.f32 %v701, %v61
  %v766 = vmul.f32 %v702, %v62
  %v767 = vmul.f32 %v703, %v63
  %v768 = vmul.f32 %v704, %v64
  %v769 = vmul.f32 %v705, %v65
  %v770 = vmul.f32 %v706, %v66
  %v771 = vmul.f32 %v707, %v67
  %v772 = vmul.f32 %v708, %v68
  %v773 = vmul.f32 %v709, %v69
  %v774 = vmul.f32 %v710, %v70
  %v775 = vmul.f32 %v711, %v71
  %v776 = vmul.f32 %v712, %v72
  %v777 = vmul.f32 %v713, %v73
  %v778 = vmul.f32 %v714, %v74
  %v779 = vmul.f32 %v715, %v75
  %v780 = vmul.f32 %v716, %v76
  %v781 = vmul.f32 %v717, %v77
  %v782 = vmul.f32 %v718, %v78
  %v783 = vmul.f32 %v719, %v79
  %v784 = vmul.f32 %v720, %v80
  %v785 = vmul.f32 %v721, %v81
  %v786 = vmul.f32 %v722, %v82
  %v787 = vmul.f32 %v723, %v83
  %v788 = vmul.f32 %v724, %v84
  %v789 = vmul.f32 %v725, %v85
  %v790 = vmul.f32 %v726, %v86
  %v791 = vmul.f32 %v727, %v87
  %v792 = vmul.f32 %v728, %v88
  %v793 = vmul.f32 %v729, %v89
  %v794 = vmul.f32 %v730, %v90
  %v795 = vmul.f32 %v731, %v91
  %v796 = vmul.f32 %v732, %v92
  %v797 = vmul.f32 %v733, %v93
  %v798 = vmul.f32 %v734, %v94
  %v799 = vmul.f32 %v735, %v95
  %v800 = vmul.f32 %v736, %v96
  %v801 = vmul.f32 %v737, %v97
  %v802 = vmul.f32 %v738, %v98
  %v803 = vmul.f32 %v739, %v99
  %v804 = vmul.f32 %v740, %v100
  %v805 = vmul.f32 %v741, %v101
  %v806 = vmul.f32 %v742, %v102
  %v807 = vmul.f32 %v743, %v103
  %v808 = vmul.f32 %v744, %v104
  %v809 = vmul.f32 %v745, %v105
  %v810 = vmul.f32 %v746, %v106
  %v811 = vmul.f32 %v747, %v107
  %v812 = vmul.f32 %v748, %v108
  %v813 = vmul.f32 %v749, %v109
  %v814 = vmul.f32 %v750, %v110
  %v815 = vld [vmem:[%s0] sm:$0xff]
  %v816 = vld [vmem:[%s0 + $0x8] sm:$0xff]
  %v817 = vld [vmem:[%s0 + $0x10] sm:$0xff]
  %v818 = vld [vmem:[%s0 + $0x18] sm:$0xff]
  %v819 = vld [vmem:[%s0 + $0x20] sm:$0xff]
  %v820 = vld [vmem:[%s0 + $0x28] sm:$0xff]
  %v821 = vld [vmem:[%s0 + $0x30] sm:$0xff]
  %v822 = vld [vmem:[%s0 + $0x38] sm:$0xff]
  %v823 = vld [vmem:[%s0 + $0x40] sm:$0xff]
  %v824 = vld [vmem:[%s0 + $0x48] sm:$0xff]
  %v825 = vld [vmem:[%s0 + $0x50] sm:$0xff]
  %v826 = vld [vmem:[%s0 + $0x58] sm:$0xff]
  %v827 = vld [vmem:[%s0 + $0x60] sm:$0xff]
  %v828 = vld [vmem:[%s0 + $0x68] sm:$0xff]
  %v829 = vld [vmem:[%s0 + $0x70] sm:$0xff]
  %v830 = vld [vmem:[%s0 + $0x78] sm:$0xff]
  %v831 = vld [vmem:[%s0 + $0x80] sm:$0xff]
  %v832 = vld [vmem:[%s0 + $0x88] sm:$0xff]
  %v833 = vld [vmem:[%s0 + $0x90] sm:$0xff]
  %v834 = vld [vmem:[%s0 + $0x98] sm:$0xff]
  %v835 = vld [vmem:[%s0 + $0xa0] sm:$0xff]
  %v836 = vld [vmem:[%s0 + $0xa8] sm:$0xff]
  %v837 = vld [vmem:[%s0 + $0xb0] sm:$0xff]
  %v838 = vld [vmem:[%s0 + $0xb8] sm:$0xff]
  %v839 = vld [vmem:[%s0 + $0xc0] sm:$0xff]
  %v840 = vld [vmem:[%s0 + $0xc8] sm:$0xff]
  %v841 = vld [vmem:[%s0 + $0xd0] sm:$0xff]
  %v842 = vld [vmem:[%s0 + $0xd8] sm:$0xff]
  %v843 = vld [vmem:[%s0 + $0xe0] sm:$0xff]
  %v844 = vld [vmem:[%s0 + $0xe8] sm:$0xff]
  %v845 = vld [vmem:[%s0 + $0xf0] sm:$0xff]
  %v846 = vld [vmem:[%s0 + $0xf8] sm:$0xff]
  %v847 = vld [vmem:[%s0 + $0x100] sm:$0xff]
  %v848 = vld [vmem:[%s0 + $0x108] sm:$0xff]
  %v849 = vld [vmem:[%s0 + $0x110] sm:$0xff]
  %v850 = vld [vmem:[%s0 + $0x118] sm:$0xff]
  %v851 = vld [vmem:[%s0 + $0x120] sm:$0xff]
  %v852 = vld [vmem:[%s0 + $0x128] sm:$0xff]
  %v853 = vld [vmem:[%s0 + $0x130] sm:$0xff]
  %v854 = vld [vmem:[%s0 + $0x138] sm:$0xff]
  %v855 = vld [vmem:[%s0 + $0x140] sm:$0xff]
  %v856 = vld [vmem:[%s0 + $0x148] sm:$0xff]
  %v857 = vld [vmem:[%s0 + $0x150] sm:$0xff]
  %v858 = vld [vmem:[%s0 + $0x158] sm:$0xff]
  %v859 = vld [vmem:[%s0 + $0x160] sm:$0xff]
  %v860 = vld [vmem:[%s0 + $0x168] sm:$0xff]
  %v861 = vld [vmem:[%s0 + $0x170] sm:$0xff]
  %v862 = vld [vmem:[%s0 + $0x178] sm:$0xff]
  %v863 = vld [vmem:[%s0 + $0x180] sm:$0xff]
  %v864 = vld [vmem:[%s0 + $0x188] sm:$0xff]
  %v865 = vld [vmem:[%s0 + $0x190] sm:$0xff]
  %v866 = vld [vmem:[%s0 + $0x198] sm:$0xff]
  %v867 = vld [vmem:[%s0 + $0x1a0] sm:$0xff]
  %v868 = vld [vmem:[%s0 + $0x1a8] sm:$0xff]
  %v869 = vld [vmem:[%s0 + $0x1b0] sm:$0xff]
  %v870 = vld [vmem:[%s0 + $0x1b8] sm:$0xff]
  %v871 = vld [vmem:[%s0 + $0x1c0] sm:$0xff]
  %v872 = vld [vmem:[%s0 + $0x1c8] sm:$0xff]
  %v873 = vld [vmem:[%s0 + $0x1d0] sm:$0xff]
  %v874 = vld [vmem:[%s0 + $0x1d8] sm:$0xff]
  %v875 = vld [vmem:[%s0 + $0x1e0] sm:$0xff]
  %v876 = vld [vmem:[%s0 + $0x1e8] sm:$0xff]
  %v877 = vld [vmem:[%s0 + $0x1f0] sm:$0xff]
  %v878 = vld [vmem:[%s0 + $0x1f8] sm:$0xff]
  %v879 = vld [vmem:[%s7] sm:$0x7]
  %v880 = vld [vmem:[%s1] sm:$0xff]
  %v881 = vld [vmem:[%s1 + $0x8] sm:$0xff]
  %v882 = vld [vmem:[%s1 + $0x10] sm:$0xff]
  %v883 = vld [vmem:[%s1 + $0x18] sm:$0xff]
  %v884 = vld [vmem:[%s1 + $0x20] sm:$0xff]
  %v885 = vld [vmem:[%s1 + $0x28] sm:$0xff]
  %v886 = vld [vmem:[%s1 + $0x30] sm:$0xff]
  %v887 = vld [vmem:[%s1 + $0x38] sm:$0xff]
  %v888 = vld [vmem:[%s1 + $0x40] sm:$0xff]
  %v889 = vld [vmem:[%s1 + $0x48] sm:$0xff]
  %v890 = vld [vmem:[%s1 + $0x50] sm:$0xff]
  %v891 = vld [vmem:[%s1 + $0x58] sm:$0xff]
  %v892 = vld [vmem:[%s1 + $0x60] sm:$0xff]
  %v893 = vld [vmem:[%s1 + $0x68] sm:$0xff]
  %v894 = vld [vmem:[%s1 + $0x70] sm:$0xff]
  %v895 = vld [vmem:[%s1 + $0x78] sm:$0xff]
  %v896 = vld [vmem:[%s1 + $0x80] sm:$0xff]
  %v897 = vld [vmem:[%s1 + $0x88] sm:$0xff]
  %v898 = vld [vmem:[%s1 + $0x90] sm:$0xff]
  %v899 = vld [vmem:[%s1 + $0x98] sm:$0xff]
  %v900 = vld [vmem:[%s1 + $0xa0] sm:$0xff]
  %v901 = vld [vmem:[%s1 + $0xa8] sm:$0xff]
  %v902 = vld [vmem:[%s1 + $0xb0] sm:$0xff]
  %v903 = vld [vmem:[%s1 + $0xb8] sm:$0xff]
  %v904 = vld [vmem:[%s1 + $0xc0] sm:$0xff]
  %v905 = vld [vmem:[%s1 + $0xc8] sm:$0xff]
  %v906 = vld [vmem:[%s1 + $0xd0] sm:$0xff]
  %v907 = vld [vmem:[%s1 + $0xd8] sm:$0xff]
  %v908 = vld [vmem:[%s1 + $0xe0] sm:$0xff]
  %v909 = vld [vmem:[%s1 + $0xe8] sm:$0xff]
  %v910 = vld [vmem:[%s1 + $0xf0] sm:$0xff]
  %v911 = vld [vmem:[%s1 + $0xf8] sm:$0xff]
  %v912 = vld [vmem:[%s1 + $0x100] sm:$0xff]
  %v913 = vld [vmem:[%s1 + $0x108] sm:$0xff]
  %v914 = vld [vmem:[%s1 + $0x110] sm:$0xff]
  %v915 = vld [vmem:[%s1 + $0x118] sm:$0xff]
  %v916 = vld [vmem:[%s1 + $0x120] sm:$0xff]
  %v917 = vld [vmem:[%s1 + $0x128] sm:$0xff]
  %v918 = vld [vmem:[%s1 + $0x130] sm:$0xff]
  %v919 = vld [vmem:[%s1 + $0x138] sm:$0xff]
  %v920 = vld [vmem:[%s1 + $0x140] sm:$0xff]
  %v921 = vld [vmem:[%s1 + $0x148] sm:$0xff]
  %v922 = vld [vmem:[%s1 + $0x150] sm:$0xff]
  %v923 = vld [vmem:[%s1 + $0x158] sm:$0xff]
  %v924 = vld [vmem:[%s1 + $0x160] sm:$0xff]
  %v925 = vld [vmem:[%s1 + $0x168] sm:$0xff]
  %v926 = vld [vmem:[%s1 + $0x170] sm:$0xff]
  %v927 = vld [vmem:[%s1 + $0x178] sm:$0xff]
  %v928 = vld [vmem:[%s1 + $0x180] sm:$0xff]
  %v929 = vld [vmem:[%s1 + $0x188] sm:$0xff]
  %v930 = vld [vmem:[%s1 + $0x190] sm:$0xff]
  %v931 = vld [vmem:[%s1 + $0x198] sm:$0xff]
  %v932 = vld [vmem:[%s1 + $0x1a0] sm:$0xff]
  %v933 = vld [vmem:[%s1 + $0x1a8] sm:$0xff]
  %v934 = vld [vmem:[%s1 + $0x1b0] sm:$0xff]
  %v935 = vld [vmem:[%s1 + $0x1b8] sm:$0xff]
  %v936 = vld [vmem:[%s1 + $0x1c0] sm:$0xff]
  %v937 = vld [vmem:[%s1 + $0x1c8] sm:$0xff]
  %v938 = vld [vmem:[%s1 + $0x1d0] sm:$0xff]
  %v939 = vld [vmem:[%s1 + $0x1d8] sm:$0xff]
  %v940 = vld [vmem:[%s1 + $0x1e0] sm:$0xff]
  %v941 = vld [vmem:[%s1 + $0x1e8] sm:$0xff]
  %v942 = vld [vmem:[%s1 + $0x1f0] sm:$0xff]
  %v943 = vld [vmem:[%s1 + $0x1f8] sm:$0xff]
  %v944 = vld [vmem:[%s8] sm:$0x7]
  %vm945 = vcmask 23552
  %v947 = vsel %vm945, %v880, 0
  %v950 = vsel %vm945, %v881, 0
  %v953 = vsel %vm945, %v882, 0
  %v956 = vsel %vm945, %v883, 0
  %v959 = vsel %vm945, %v884, 0
  %v962 = vsel %vm945, %v885, 0
  %v965 = vsel %vm945, %v886, 0
  %v968 = vsel %vm945, %v887, 0
  %v971 = vsel %vm945, %v888, 0
  %v974 = vsel %vm945, %v889, 0
  %v977 = vsel %vm945, %v890, 0
  %v980 = vsel %vm945, %v891, 0
  %v983 = vsel %vm945, %v892, 0
  %v986 = vsel %vm945, %v893, 0
  %v989 = vsel %vm945, %v894, 0
  %v992 = vsel %vm945, %v895, 0
  %v995 = vsel %vm945, %v896, 0
  %v998 = vsel %vm945, %v897, 0
  %v1001 = vsel %vm945, %v898, 0
  %v1004 = vsel %vm945, %v899, 0
  %v1007 = vsel %vm945, %v900, 0
  %v1010 = vsel %vm945, %v901, 0
  %v1013 = vsel %vm945, %v902, 0
  %v1016 = vsel %vm945, %v903, 0
  %v1019 = vsel %vm945, %v904, 0
  %v1022 = vsel %vm945, %v905, 0
  %v1025 = vsel %vm945, %v906, 0
  %v1028 = vsel %vm945, %v907, 0
  %v1031 = vsel %vm945, %v908, 0
  %v1034 = vsel %vm945, %v909, 0
  %v1037 = vsel %vm945, %v910, 0
  %v1040 = vsel %vm945, %v911, 0
  %v1043 = vsel %vm945, %v912, 0
  %v1046 = vsel %vm945, %v913, 0
  %v1049 = vsel %vm945, %v914, 0
  %v1052 = vsel %vm945, %v915, 0
  %v1055 = vsel %vm945, %v916, 0
  %v1058 = vsel %vm945, %v917, 0
  %v1061 = vsel %vm945, %v918, 0
  %v1064 = vsel %vm945, %v919, 0
  %v1067 = vsel %vm945, %v920, 0
  %v1070 = vsel %vm945, %v921, 0
  %v1073 = vsel %vm945, %v922, 0
  %v1076 = vsel %vm945, %v923, 0
  %v1079 = vsel %vm945, %v924, 0
  %v1082 = vsel %vm945, %v925, 0
  %v1085 = vsel %vm945, %v926, 0
  %v1088 = vsel %vm945, %v927, 0
  %v1091 = vsel %vm945, %v928, 0
  %v1094 = vsel %vm945, %v929, 0
  %v1097 = vsel %vm945, %v930, 0
  %v1100 = vsel %vm945, %v931, 0
  %v1103 = vsel %vm945, %v932, 0
  %v1106 = vsel %vm945, %v933, 0
  %v1109 = vsel %vm945, %v934, 0
  %v1112 = vsel %vm945, %v935, 0
  %v1115 = vsel %vm945, %v936, 0
  %v1118 = vsel %vm945, %v937, 0
  %v1121 = vsel %vm945, %v938, 0
  %v1124 = vsel %vm945, %v939, 0
  %v1127 = vsel %vm945, %v940, 0
  %v1130 = vsel %vm945, %v941, 0
  %v1133 = vsel %vm945, %v942, 0
  %v1136 = vsel %vm945, %v943, 0
  %vm1138 = vcmask 1042432
  %v1140 = vsel %vm1138, %v944, 0
  %1142 = vmatpush.msra.mxu0 0.0
  %1143 = vmatpush.msra.mxu0 0.0
  %1144 = vmatpush.msra.mxu0 0.0
  %1145 = vmatpush.msra.mxu0 0.0
  %1146 = vmatpush.msra.mxu0 0.0
  %1147 = vmatpush.msra.mxu0 0.0
  %1148 = vmatpush.msra.mxu0 0.0
  %1149 = vmatpush.msra.mxu0 0.0
  %1150 = vmatpush.msra.mxu0 0.0
  %1151 = vmatpush.msra.mxu0 0.0
  %1152 = vmatpush.msra.mxu0 0.0
  %1153 = vmatpush.msra.mxu0 0.0
  %1154 = vmatpush.msra.mxu0 0.0
  %1155 = vmatpush.msra.mxu0 0.0
  %1156 = vmatpush.msra.mxu0 0.0
  %1157 = vmatpush.msra.mxu0 %v1140
  %1158 = vmatmul.f32.gmra.mxu0 %v947
  %v1159 = vpop.f32.mrf.mxu0
  %v1160 = vadd.f32 0.0, %v1159
  %1161 = vmatmul.f32.gmra.mxu0 %v950
  %v1162 = vpop.f32.mrf.mxu0
  %v1163 = vadd.f32 0.0, %v1162
  %1164 = vmatmul.f32.gmra.mxu0 %v953
  %v1165 = vpop.f32.mrf.mxu0
  %v1166 = vadd.f32 0.0, %v1165
  %1167 = vmatmul.f32.gmra.mxu0 %v956
  %v1168 = vpop.f32.mrf.mxu0
  %v1169 = vadd.f32 0.0, %v1168
  %1170 = vmatmul.f32.gmra.mxu0 %v959
  %v1171 = vpop.f32.mrf.mxu0
  %v1172 = vadd.f32 0.0, %v1171
  %1173 = vmatmul.f32.gmra.mxu0 %v962
  %v1174 = vpop.f32.mrf.mxu0
  %v1175 = vadd.f32 0.0, %v1174
  %1176 = vmatmul.f32.gmra.mxu0 %v965
  %v1177 = vpop.f32.mrf.mxu0
  %v1178 = vadd.f32 0.0, %v1177
  %1179 = vmatmul.f32.gmra.mxu0 %v968
  %v1180 = vpop.f32.mrf.mxu0
  %v1181 = vadd.f32 0.0, %v1180
  %1182 = vmatmul.f32.gmra.mxu0 %v971
  %v1183 = vpop.f32.mrf.mxu0
  %v1184 = vadd.f32 0.0, %v1183
  %1185 = vmatmul.f32.gmra.mxu0 %v974
  %v1186 = vpop.f32.mrf.mxu0
  %v1187 = vadd.f32 0.0, %v1186
  %1188 = vmatmul.f32.gmra.mxu0 %v977
  %v1189 = vpop.f32.mrf.mxu0
  %v1190 = vadd.f32 0.0, %v1189
  %1191 = vmatmul.f32.gmra.mxu0 %v980
  %v1192 = vpop.f32.mrf.mxu0
  %v1193 = vadd.f32 0.0, %v1192
  %1194 = vmatmul.f32.gmra.mxu0 %v983
  %v1195 = vpop.f32.mrf.mxu0
  %v1196 = vadd.f32 0.0, %v1195
  %1197 = vmatmul.f32.gmra.mxu0 %v986
  %v1198 = vpop.f32.mrf.mxu0
  %v1199 = vadd.f32 0.0, %v1198
  %1200 = vmatmul.f32.gmra.mxu0 %v989
  %v1201 = vpop.f32.mrf.mxu0
  %v1202 = vadd.f32 0.0, %v1201
  %1203 = vmatmul.f32.gmra.mxu0 %v992
  %v1204 = vpop.f32.mrf.mxu0
  %v1205 = vadd.f32 0.0, %v1204
  %1206 = vmatmul.f32.gmra.mxu0 %v995
  %v1207 = vpop.f32.mrf.mxu0
  %v1208 = vadd.f32 0.0, %v1207
  %1209 = vmatmul.f32.gmra.mxu0 %v998
  %v1210 = vpop.f32.mrf.mxu0
  %v1211 = vadd.f32 0.0, %v1210
  %1212 = vmatmul.f32.gmra.mxu0 %v1001
  %v1213 = vpop.f32.mrf.mxu0
  %v1214 = vadd.f32 0.0, %v1213
  %1215 = vmatmul.f32.gmra.mxu0 %v1004
  %v1216 = vpop.f32.mrf.mxu0
  %v1217 = vadd.f32 0.0, %v1216
  %1218 = vmatmul.f32.gmra.mxu0 %v1007
  %v1219 = vpop.f32.mrf.mxu0
  %v1220 = vadd.f32 0.0, %v1219
  %1221 = vmatmul.f32.gmra.mxu0 %v1010
  %v1222 = vpop.f32.mrf.mxu0
  %v1223 = vadd.f32 0.0, %v1222
  %1224 = vmatmul.f32.gmra.mxu0 %v1013
  %v1225 = vpop.f32.mrf.mxu0
  %v1226 = vadd.f32 0.0, %v1225
  %1227 = vmatmul.f32.gmra.mxu0 %v1016
  %v1228 = vpop.f32.mrf.mxu0
  %v1229 = vadd.f32 0.0, %v1228
  %1230 = vmatmul.f32.gmra.mxu0 %v1019
  %v1231 = vpop.f32.mrf.mxu0
  %v1232 = vadd.f32 0.0, %v1231
  %1233 = vmatmul.f32.gmra.mxu0 %v1022
  %v1234 = vpop.f32.mrf.mxu0
  %v1235 = vadd.f32 0.0, %v1234
  %1236 = vmatmul.f32.gmra.mxu0 %v1025
  %v1237 = vpop.f32.mrf.mxu0
  %v1238 = vadd.f32 0.0, %v1237
  %1239 = vmatmul.f32.gmra.mxu0 %v1028
  %v1240 = vpop.f32.mrf.mxu0
  %v1241 = vadd.f32 0.0, %v1240
  %1242 = vmatmul.f32.gmra.mxu0 %v1031
  %v1243 = vpop.f32.mrf.mxu0
  %v1244 = vadd.f32 0.0, %v1243
  %1245 = vmatmul.f32.gmra.mxu0 %v1034
  %v1246 = vpop.f32.mrf.mxu0
  %v1247 = vadd.f32 0.0, %v1246
  %1248 = vmatmul.f32.gmra.mxu0 %v1037
  %v1249 = vpop.f32.mrf.mxu0
  %v1250 = vadd.f32 0.0, %v1249
  %1251 = vmatmul.f32.gmra.mxu0 %v1040
  %v1252 = vpop.f32.mrf.mxu0
  %v1253 = vadd.f32 0.0, %v1252
  %1254 = vmatmul.f32.gmra.mxu0 %v1043
  %v1255 = vpop.f32.mrf.mxu0
  %v1256 = vadd.f32 0.0, %v1255
  %1257 = vmatmul.f32.gmra.mxu0 %v1046
  %v1258 = vpop.f32.mrf.mxu0
  %v1259 = vadd.f32 0.0, %v1258
  %1260 = vmatmul.f32.gmra.mxu0 %v1049
  %v1261 = vpop.f32.mrf.mxu0
  %v1262 = vadd.f32 0.0, %v1261
  %1263 = vmatmul.f32.gmra.mxu0 %v1052
  %v1264 = vpop.f32.mrf.mxu0
  %v1265 = vadd.f32 0.0, %v1264
  %1266 = vmatmul.f32.gmra.mxu0 %v1055
  %v1267 = vpop.f32.mrf.mxu0
  %v1268 = vadd.f32 0.0, %v1267
  %1269 = vmatmul.f32.gmra.mxu0 %v1058
  %v1270 = vpop.f32.mrf.mxu0
  %v1271 = vadd.f32 0.0, %v1270
  %1272 = vmatmul.f32.gmra.mxu0 %v1061
  %v1273 = vpop.f32.mrf.mxu0
  %v1274 = vadd.f32 0.0, %v1273
  %1275 = vmatmul.f32.gmra.mxu0 %v1064
  %v1276 = vpop.f32.mrf.mxu0
  %v1277 = vadd.f32 0.0, %v1276
  %1278 = vmatmul.f32.gmra.mxu0 %v1067
  %v1279 = vpop.f32.mrf.mxu0
  %v1280 = vadd.f32 0.0, %v1279
  %1281 = vmatmul.f32.gmra.mxu0 %v1070
  %v1282 = vpop.f32.mrf.mxu0
  %v1283 = vadd.f32 0.0, %v1282
  %1284 = vmatmul.f32.gmra.mxu0 %v1073
  %v1285 = vpop.f32.mrf.mxu0
  %v1286 = vadd.f32 0.0, %v1285
  %1287 = vmatmul.f32.gmra.mxu0 %v1076
  %v1288 = vpop.f32.mrf.mxu0
  %v1289 = vadd.f32 0.0, %v1288
  %1290 = vmatmul.f32.gmra.mxu0 %v1079
  %v1291 = vpop.f32.mrf.mxu0
  %v1292 = vadd.f32 0.0, %v1291
  %1293 = vmatmul.f32.gmra.mxu0 %v1082
  %v1294 = vpop.f32.mrf.mxu0
  %v1295 = vadd.f32 0.0, %v1294
  %1296 = vmatmul.f32.gmra.mxu0 %v1085
  %v1297 = vpop.f32.mrf.mxu0
  %v1298 = vadd.f32 0.0, %v1297
  %1299 = vmatmul.f32.gmra.mxu0 %v1088
  %v1300 = vpop.f32.mrf.mxu0
  %v1301 = vadd.f32 0.0, %v1300
  %1302 = vmatmul.f32.gmra.mxu0 %v1091
  %v1303 = vpop.f32.mrf.mxu0
  %v1304 = vadd.f32 0.0, %v1303
  %1305 = vmatmul.f32.gmra.mxu0 %v1094
  %v1306 = vpop.f32.mrf.mxu0
  %v1307 = vadd.f32 0.0, %v1306
  %1308 = vmatmul.f32.gmra.mxu0 %v1097
  %v1309 = vpop.f32.mrf.mxu0
  %v1310 = vadd.f32 0.0, %v1309
  %1311 = vmatmul.f32.gmra.mxu0 %v1100
  %v1312 = vpop.f32.mrf.mxu0
  %v1313 = vadd.f32 0.0, %v1312
  %1314 = vmatmul.f32.gmra.mxu0 %v1103
  %v1315 = vpop.f32.mrf.mxu0
  %v1316 = vadd.f32 0.0, %v1315
  %1317 = vmatmul.f32.gmra.mxu0 %v1106
  %v1318 = vpop.f32.mrf.mxu0
  %v1319 = vadd.f32 0.0, %v1318
  %1320 = vmatmul.f32.gmra.mxu0 %v1109
  %v1321 = vpop.f32.mrf.mxu0
  %v1322 = vadd.f32 0.0, %v1321
  %1323 = vmatmul.f32.gmra.mxu0 %v1112
  %v1324 = vpop.f32.mrf.mxu0
  %v1325 = vadd.f32 0.0, %v1324
  %1326 = vmatmul.f32.gmra.mxu0 %v1115
  %v1327 = vpop.f32.mrf.mxu0
  %v1328 = vadd.f32 0.0, %v1327
  %1329 = vmatmul.f32.gmra.mxu0 %v1118
  %v1330 = vpop.f32.mrf.mxu0
  %v1331 = vadd.f32 0.0, %v1330
  %1332 = vmatmul.f32.gmra.mxu0 %v1121
  %v1333 = vpop.f32.mrf.mxu0
  %v1334 = vadd.f32 0.0, %v1333
  %1335 = vmatmul.f32.gmra.mxu0 %v1124
  %v1336 = vpop.f32.mrf.mxu0
  %v1337 = vadd.f32 0.0, %v1336
  %1338 = vmatmul.f32.gmra.mxu0 %v1127
  %v1339 = vpop.f32.mrf.mxu0
  %v1340 = vadd.f32 0.0, %v1339
  %1341 = vmatmul.f32.gmra.mxu0 %v1130
  %v1342 = vpop.f32.mrf.mxu0
  %v1343 = vadd.f32 0.0, %v1342
  %1344 = vmatmul.f32.gmra.mxu0 %v1133
  %v1345 = vpop.f32.mrf.mxu0
  %v1346 = vadd.f32 0.0, %v1345
  %1347 = vmatmul.f32.gmra.mxu0 %v1136
  %v1348 = vpop.f32.mrf.mxu0
  %v1349 = vadd.f32 0.0, %v1348
  %1350 = vdwg.mxu0
  %v1352 = vsel %vm945, %v815, 0
  %v1355 = vsel %vm945, %v816, 0
  %v1358 = vsel %vm945, %v817, 0
  %v1361 = vsel %vm945, %v818, 0
  %v1364 = vsel %vm945, %v819, 0
  %v1367 = vsel %vm945, %v820, 0
  %v1370 = vsel %vm945, %v821, 0
  %v1373 = vsel %vm945, %v822, 0
  %v1376 = vsel %vm945, %v823, 0
  %v1379 = vsel %vm945, %v824, 0
  %v1382 = vsel %vm945, %v825, 0
  %v1385 = vsel %vm945, %v826, 0
  %v1388 = vsel %vm945, %v827, 0
  %v1391 = vsel %vm945, %v828, 0
  %v1394 = vsel %vm945, %v829, 0
  %v1397 = vsel %vm945, %v830, 0
  %v1400 = vsel %vm945, %v831, 0
  %v1403 = vsel %vm945, %v832, 0
  %v1406 = vsel %vm945, %v833, 0
  %v1409 = vsel %vm945, %v834, 0
  %v1412 = vsel %vm945, %v835, 0
  %v1415 = vsel %vm945, %v836, 0
  %v1418 = vsel %vm945, %v837, 0
  %v1421 = vsel %vm945, %v838, 0
  %v1424 = vsel %vm945, %v839, 0
  %v1427 = vsel %vm945, %v840, 0
  %v1430 = vsel %vm945, %v841, 0
  %v1433 = vsel %vm945, %v842, 0
  %v1436 = vsel %vm945, %v843, 0
  %v1439 = vsel %vm945, %v844, 0
  %v1442 = vsel %vm945, %v845, 0
  %v1445 = vsel %vm945, %v846, 0
  %v1448 = vsel %vm945, %v847, 0
  %v1451 = vsel %vm945, %v848, 0
  %v1454 = vsel %vm945, %v849, 0
  %v1457 = vsel %vm945, %v850, 0
  %v1460 = vsel %vm945, %v851, 0
  %v1463 = vsel %vm945, %v852, 0
  %v1466 = vsel %vm945, %v853, 0
  %v1469 = vsel %vm945, %v854, 0
  %v1472 = vsel %vm945, %v855, 0
  %v1475 = vsel %vm945, %v856, 0
  %v1478 = vsel %vm945, %v857, 0
  %v1481 = vsel %vm945, %v858, 0
  %v1484 = vsel %vm945, %v859, 0
  %v1487 = vsel %vm945, %v860, 0
  %v1490 = vsel %vm945, %v861, 0
  %v1493 = vsel %vm945, %v862, 0
  %v1496 = vsel %vm945, %v863, 0
  %v1499 = vsel %vm945, %v864, 0
  %v1502 = vsel %vm945, %v865, 0
  %v1505 = vsel %vm945, %v866, 0
  %v1508 = vsel %vm945, %v867, 0
  %v1511 = vsel %vm945, %v868, 0
  %v1514 = vsel %vm945, %v869, 0
  %v1517 = vsel %vm945, %v870, 0
  %v1520 = vsel %vm945, %v871, 0
  %v1523 = vsel %vm945, %v872, 0
  %v1526 = vsel %vm945, %v873, 0
  %v1529 = vsel %vm945, %v874, 0
  %v1532 = vsel %vm945, %v875, 0
  %v1535 = vsel %vm945, %v876, 0
  %v1538 = vsel %vm945, %v877, 0
  %v1541 = vsel %vm945, %v878, 0
  %v1544 = vsel %vm1138, %v879, 0
  %1546 = vmatpush.msra.mxu0 0.0
  %1547 = vmatpush.msra.mxu0 0.0
  %1548 = vmatpush.msra.mxu0 0.0
  %1549 = vmatpush.msra.mxu0 0.0
  %1550 = vmatpush.msra.mxu0 0.0
  %1551 = vmatpush.msra.mxu0 0.0
  %1552 = vmatpush.msra.mxu0 0.0
  %1553 = vmatpush.msra.mxu0 0.0
  %1554 = vmatpush.msra.mxu0 0.0
  %1555 = vmatpush.msra.mxu0 0.0
  %1556 = vmatpush.msra.mxu0 0.0
  %1557 = vmatpush.msra.mxu0 0.0
  %1558 = vmatpush.msra.mxu0 0.0
  %1559 = vmatpush.msra.mxu0 0.0
  %1560 = vmatpush.msra.mxu0 0.0
  %1561 = vmatpush.msra.mxu0 %v1544
  %1562 = vmatmul.f32.gmra.mxu0 %v1352
  %v1563 = vpop.f32.mrf.mxu0
  %v1564 = vadd.f32 %v1160, %v1563
  %1565 = vmatmul.f32.gmra.mxu0 %v1355
  %v1566 = vpop.f32.mrf.mxu0
  %v1567 = vadd.f32 %v1163, %v1566
  %1568 = vmatmul.f32.gmra.mxu0 %v1358
  %v1569 = vpop.f32.mrf.mxu0
  %v1570 = vadd.f32 %v1166, %v1569
  %1571 = vmatmul.f32.gmra.mxu0 %v1361
  %v1572 = vpop.f32.mrf.mxu0
  %v1573 = vadd.f32 %v1169, %v1572
  %1574 = vmatmul.f32.gmra.mxu0 %v1364
  %v1575 = vpop.f32.mrf.mxu0
  %v1576 = vadd.f32 %v1172, %v1575
  %1577 = vmatmul.f32.gmra.mxu0 %v1367
  %v1578 = vpop.f32.mrf.mxu0
  %v1579 = vadd.f32 %v1175, %v1578
  %1580 = vmatmul.f32.gmra.mxu0 %v1370
  %v1581 = vpop.f32.mrf.mxu0
  %v1582 = vadd.f32 %v1178, %v1581
  %1583 = vmatmul.f32.gmra.mxu0 %v1373
  %v1584 = vpop.f32.mrf.mxu0
  %v1585 = vadd.f32 %v1181, %v1584
  %1586 = vmatmul.f32.gmra.mxu0 %v1376
  %v1587 = vpop.f32.mrf.mxu0
  %v1588 = vadd.f32 %v1184, %v1587
  %1589 = vmatmul.f32.gmra.mxu0 %v1379
  %v1590 = vpop.f32.mrf.mxu0
  %v1591 = vadd.f32 %v1187, %v1590
  %1592 = vmatmul.f32.gmra.mxu0 %v1382
  %v1593 = vpop.f32.mrf.mxu0
  %v1594 = vadd.f32 %v1190, %v1593
  %1595 = vmatmul.f32.gmra.mxu0 %v1385
  %v1596 = vpop.f32.mrf.mxu0
  %v1597 = vadd.f32 %v1193, %v1596
  %1598 = vmatmul.f32.gmra.mxu0 %v1388
  %v1599 = vpop.f32.mrf.mxu0
  %v1600 = vadd.f32 %v1196, %v1599
  %1601 = vmatmul.f32.gmra.mxu0 %v1391
  %v1602 = vpop.f32.mrf.mxu0
  %v1603 = vadd.f32 %v1199, %v1602
  %1604 = vmatmul.f32.gmra.mxu0 %v1394
  %v1605 = vpop.f32.mrf.mxu0
  %v1606 = vadd.f32 %v1202, %v1605
  %1607 = vmatmul.f32.gmra.mxu0 %v1397
  %v1608 = vpop.f32.mrf.mxu0
  %v1609 = vadd.f32 %v1205, %v1608
  %1610 = vmatmul.f32.gmra.mxu0 %v1400
  %v1611 = vpop.f32.mrf.mxu0
  %v1612 = vadd.f32 %v1208, %v1611
  %1613 = vmatmul.f32.gmra.mxu0 %v1403
  %v1614 = vpop.f32.mrf.mxu0
  %v1615 = vadd.f32 %v1211, %v1614
  %1616 = vmatmul.f32.gmra.mxu0 %v1406
  %v1617 = vpop.f32.mrf.mxu0
  %v1618 = vadd.f32 %v1214, %v1617
  %1619 = vmatmul.f32.gmra.mxu0 %v1409
  %v1620 = vpop.f32.mrf.mxu0
  %v1621 = vadd.f32 %v1217, %v1620
  %1622 = vmatmul.f32.gmra.mxu0 %v1412
  %v1623 = vpop.f32.mrf.mxu0
  %v1624 = vadd.f32 %v1220, %v1623
  %1625 = vmatmul.f32.gmra.mxu0 %v1415
  %v1626 = vpop.f32.mrf.mxu0
  %v1627 = vadd.f32 %v1223, %v1626
  %1628 = vmatmul.f32.gmra.mxu0 %v1418
  %v1629 = vpop.f32.mrf.mxu0
  %v1630 = vadd.f32 %v1226, %v1629
  %1631 = vmatmul.f32.gmra.mxu0 %v1421
  %v1632 = vpop.f32.mrf.mxu0
  %v1633 = vadd.f32 %v1229, %v1632
  %1634 = vmatmul.f32.gmra.mxu0 %v1424
  %v1635 = vpop.f32.mrf.mxu0
  %v1636 = vadd.f32 %v1232, %v1635
  %1637 = vmatmul.f32.gmra.mxu0 %v1427
  %v1638 = vpop.f32.mrf.mxu0
  %v1639 = vadd.f32 %v1235, %v1638
  %1640 = vmatmul.f32.gmra.mxu0 %v1430
  %v1641 = vpop.f32.mrf.mxu0
  %v1642 = vadd.f32 %v1238, %v1641
  %1643 = vmatmul.f32.gmra.mxu0 %v1433
  %v1644 = vpop.f32.mrf.mxu0
  %v1645 = vadd.f32 %v1241, %v1644
  %1646 = vmatmul.f32.gmra.mxu0 %v1436
  %v1647 = vpop.f32.mrf.mxu0
  %v1648 = vadd.f32 %v1244, %v1647
  %1649 = vmatmul.f32.gmra.mxu0 %v1439
  %v1650 = vpop.f32.mrf.mxu0
  %v1651 = vadd.f32 %v1247, %v1650
  %1652 = vmatmul.f32.gmra.mxu0 %v1442
  %v1653 = vpop.f32.mrf.mxu0
  %v1654 = vadd.f32 %v1250, %v1653
  %1655 = vmatmul.f32.gmra.mxu0 %v1445
  %v1656 = vpop.f32.mrf.mxu0
  %v1657 = vadd.f32 %v1253, %v1656
  %1658 = vmatmul.f32.gmra.mxu0 %v1448
  %v1659 = vpop.f32.mrf.mxu0
  %v1660 = vadd.f32 %v1256, %v1659
  %1661 = vmatmul.f32.gmra.mxu0 %v1451
  %v1662 = vpop.f32.mrf.mxu0
  %v1663 = vadd.f32 %v1259, %v1662
  %1664 = vmatmul.f32.gmra.mxu0 %v1454
  %v1665 = vpop.f32.mrf.mxu0
  %v1666 = vadd.f32 %v1262, %v1665
  %1667 = vmatmul.f32.gmra.mxu0 %v1457
  %v1668 = vpop.f32.mrf.mxu0
  %v1669 = vadd.f32 %v1265, %v1668
  %1670 = vmatmul.f32.gmra.mxu0 %v1460
  %v1671 = vpop.f32.mrf.mxu0
  %v1672 = vadd.f32 %v1268, %v1671
  %1673 = vmatmul.f32.gmra.mxu0 %v1463
  %v1674 = vpop.f32.mrf.mxu0
  %v1675 = vadd.f32 %v1271, %v1674
  %1676 = vmatmul.f32.gmra.mxu0 %v1466
  %v1677 = vpop.f32.mrf.mxu0
  %v1678 = vadd.f32 %v1274, %v1677
  %1679 = vmatmul.f32.gmra.mxu0 %v1469
  %v1680 = vpop.f32.mrf.mxu0
  %v1681 = vadd.f32 %v1277, %v1680
  %1682 = vmatmul.f32.gmra.mxu0 %v1472
  %v1683 = vpop.f32.mrf.mxu0
  %v1684 = vadd.f32 %v1280, %v1683
  %1685 = vmatmul.f32.gmra.mxu0 %v1475
  %v1686 = vpop.f32.mrf.mxu0
  %v1687 = vadd.f32 %v1283, %v1686
  %1688 = vmatmul.f32.gmra.mxu0 %v1478
  %v1689 = vpop.f32.mrf.mxu0
  %v1690 = vadd.f32 %v1286, %v1689
  %1691 = vmatmul.f32.gmra.mxu0 %v1481
  %v1692 = vpop.f32.mrf.mxu0
  %v1693 = vadd.f32 %v1289, %v1692
  %1694 = vmatmul.f32.gmra.mxu0 %v1484
  %v1695 = vpop.f32.mrf.mxu0
  %v1696 = vadd.f32 %v1292, %v1695
  %1697 = vmatmul.f32.gmra.mxu0 %v1487
  %v1698 = vpop.f32.mrf.mxu0
  %v1699 = vadd.f32 %v1295, %v1698
  %1700 = vmatmul.f32.gmra.mxu0 %v1490
  %v1701 = vpop.f32.mrf.mxu0
  %v1702 = vadd.f32 %v1298, %v1701
  %1703 = vmatmul.f32.gmra.mxu0 %v1493
  %v1704 = vpop.f32.mrf.mxu0
  %v1705 = vadd.f32 %v1301, %v1704
  %1706 = vmatmul.f32.gmra.mxu0 %v1496
  %v1707 = vpop.f32.mrf.mxu0
  %v1708 = vadd.f32 %v1304, %v1707
  %1709 = vmatmul.f32.gmra.mxu0 %v1499
  %v1710 = vpop.f32.mrf.mxu0
  %v1711 = vadd.f32 %v1307, %v1710
  %1712 = vmatmul.f32.gmra.mxu0 %v1502
  %v1713 = vpop.f32.mrf.mxu0
  %v1714 = vadd.f32 %v1310, %v1713
  %1715 = vmatmul.f32.gmra.mxu0 %v1505
  %v1716 = vpop.f32.mrf.mxu0
  %v1717 = vadd.f32 %v1313, %v1716
  %1718 = vmatmul.f32.gmra.mxu0 %v1508
  %v1719 = vpop.f32.mrf.mxu0
  %v1720 = vadd.f32 %v1316, %v1719
  %1721 = vmatmul.f32.gmra.mxu0 %v1511
  %v1722 = vpop.f32.mrf.mxu0
  %v1723 = vadd.f32 %v1319, %v1722
  %1724 = vmatmul.f32.gmra.mxu0 %v1514
  %v1725 = vpop.f32.mrf.mxu0
  %v1726 = vadd.f32 %v1322, %v1725
  %1727 = vmatmul.f32.gmra.mxu0 %v1517
  %v1728 = vpop.f32.mrf.mxu0
  %v1729 = vadd.f32 %v1325, %v1728
  %1730 = vmatmul.f32.gmra.mxu0 %v1520
  %v1731 = vpop.f32.mrf.mxu0
  %v1732 = vadd.f32 %v1328, %v1731
  %1733 = vmatmul.f32.gmra.mxu0 %v1523
  %v1734 = vpop.f32.mrf.mxu0
  %v1735 = vadd.f32 %v1331, %v1734
  %1736 = vmatmul.f32.gmra.mxu0 %v1526
  %v1737 = vpop.f32.mrf.mxu0
  %v1738 = vadd.f32 %v1334, %v1737
  %1739 = vmatmul.f32.gmra.mxu0 %v1529
  %v1740 = vpop.f32.mrf.mxu0
  %v1741 = vadd.f32 %v1337, %v1740
  %1742 = vmatmul.f32.gmra.mxu0 %v1532
  %v1743 = vpop.f32.mrf.mxu0
  %v1744 = vadd.f32 %v1340, %v1743
  %1745 = vmatmul.f32.gmra.mxu0 %v1535
  %v1746 = vpop.f32.mrf.mxu0
  %v1747 = vadd.f32 %v1343, %v1746
  %1748 = vmatmul.f32.gmra.mxu0 %v1538
  %v1749 = vpop.f32.mrf.mxu0
  %v1750 = vadd.f32 %v1346, %v1749
  %1751 = vmatmul.f32.gmra.mxu0 %v1541
  %v1752 = vpop.f32.mrf.mxu0
  %v1753 = vadd.f32 %v1349, %v1752
  %1754 = vdwg.mxu0
  %v1755 = vld [vmem:[%s10] sm:$0x7]
  %v1757 = vsel %vm945, %v623, 0
  %v1760 = vsel %vm945, %v624, 0
  %v1763 = vsel %vm945, %v625, 0
  %v1766 = vsel %vm945, %v626, 0
  %v1769 = vsel %vm945, %v627, 0
  %v1772 = vsel %vm945, %v628, 0
  %v1775 = vsel %vm945, %v629, 0
  %v1778 = vsel %vm945, %v630, 0
  %v1781 = vsel %vm945, %v631, 0
  %v1784 = vsel %vm945, %v632, 0
  %v1787 = vsel %vm945, %v633, 0
  %v1790 = vsel %vm945, %v634, 0
  %v1793 = vsel %vm945, %v635, 0
  %v1796 = vsel %vm945, %v636, 0
  %v1799 = vsel %vm945, %v637, 0
  %v1802 = vsel %vm945, %v638, 0
  %v1805 = vsel %vm945, %v639, 0
  %v1808 = vsel %vm945, %v640, 0
  %v1811 = vsel %vm945, %v641, 0
  %v1814 = vsel %vm945, %v642, 0
  %v1817 = vsel %vm945, %v643, 0
  %v1820 = vsel %vm945, %v644, 0
  %v1823 = vsel %vm945, %v645, 0
  %v1826 = vsel %vm945, %v646, 0
  %v1829 = vsel %vm945, %v647, 0
  %v1832 = vsel %vm945, %v648, 0
  %v1835 = vsel %vm945, %v649, 0
  %v1838 = vsel %vm945, %v650, 0
  %v1841 = vsel %vm945, %v651, 0
  %v1844 = vsel %vm945, %v652, 0
  %v1847 = vsel %vm945, %v653, 0
  %v1850 = vsel %vm945, %v654, 0
  %v1853 = vsel %vm945, %v655, 0
  %v1856 = vsel %vm945, %v656, 0
  %v1859 = vsel %vm945, %v657, 0
  %v1862 = vsel %vm945, %v658, 0
  %v1865 = vsel %vm945, %v659, 0
  %v1868 = vsel %vm945, %v660, 0
  %v1871 = vsel %vm945, %v661, 0
  %v1874 = vsel %vm945, %v662, 0
  %v1877 = vsel %vm945, %v663, 0
  %v1880 = vsel %vm945, %v664, 0
  %v1883 = vsel %vm945, %v665, 0
  %v1886 = vsel %vm945, %v666, 0
  %v1889 = vsel %vm945, %v667, 0
  %v1892 = vsel %vm945, %v668, 0
  %v1895 = vsel %vm945, %v669, 0
  %v1898 = vsel %vm945, %v670, 0
  %v1901 = vsel %vm945, %v671, 0
  %v1904 = vsel %vm945, %v672, 0
  %v1907 = vsel %vm945, %v673, 0
  %v1910 = vsel %vm945, %v674, 0
  %v1913 = vsel %vm945, %v675, 0
  %v1916 = vsel %vm945, %v676, 0
  %v1919 = vsel %vm945, %v677, 0
  %v1922 = vsel %vm945, %v678, 0
  %v1925 = vsel %vm945, %v679, 0
  %v1928 = vsel %vm945, %v680, 0
  %v1931 = vsel %vm945, %v681, 0
  %v1934 = vsel %vm945, %v682, 0
  %v1937 = vsel %vm945, %v683, 0
  %v1940 = vsel %vm945, %v684, 0
  %v1943 = vsel %vm945, %v685, 0
  %v1946 = vsel %vm945, %v686, 0
  %v1949 = vsel %vm1138, %v1755, 0
  %1951 = vmatpush.msra.mxu0 0.0
  %1952 = vmatpush.msra.mxu0 0.0
  %1953 = vmatpush.msra.mxu0 0.0
  %1954 = vmatpush.msra.mxu0 0.0
  %1955 = vmatpush.msra.mxu0 0.0
  %1956 = vmatpush.msra.mxu0 0.0
  %1957 = vmatpush.msra.mxu0 0.0
  %1958 = vmatpush.msra.mxu0 0.0
  %1959 = vmatpush.msra.mxu0 0.0
  %1960 = vmatpush.msra.mxu0 0.0
  %1961 = vmatpush.msra.mxu0 0.0
  %1962 = vmatpush.msra.mxu0 0.0
  %1963 = vmatpush.msra.mxu0 0.0
  %1964 = vmatpush.msra.mxu0 0.0
  %1965 = vmatpush.msra.mxu0 0.0
  %1966 = vmatpush.msra.mxu0 %v1949
  %1967 = vmatmul.f32.gmra.mxu0 %v1757
  %v1968 = vpop.f32.mrf.mxu0
  %v1969 = vadd.f32 0.0, %v1968
  %1970 = vmatmul.f32.gmra.mxu0 %v1760
  %v1971 = vpop.f32.mrf.mxu0
  %v1972 = vadd.f32 0.0, %v1971
  %1973 = vmatmul.f32.gmra.mxu0 %v1763
  %v1974 = vpop.f32.mrf.mxu0
  %v1975 = vadd.f32 0.0, %v1974
  %1976 = vmatmul.f32.gmra.mxu0 %v1766
  %v1977 = vpop.f32.mrf.mxu0
  %v1978 = vadd.f32 0.0, %v1977
  %1979 = vmatmul.f32.gmra.mxu0 %v1769
  %v1980 = vpop.f32.mrf.mxu0
  %v1981 = vadd.f32 0.0, %v1980
  %1982 = vmatmul.f32.gmra.mxu0 %v1772
  %v1983 = vpop.f32.mrf.mxu0
  %v1984 = vadd.f32 0.0, %v1983
  %1985 = vmatmul.f32.gmra.mxu0 %v1775
  %v1986 = vpop.f32.mrf.mxu0
  %v1987 = vadd.f32 0.0, %v1986
  %1988 = vmatmul.f32.gmra.mxu0 %v1778
  %v1989 = vpop.f32.mrf.mxu0
  %v1990 = vadd.f32 0.0, %v1989
  %1991 = vmatmul.f32.gmra.mxu0 %v1781
  %v1992 = vpop.f32.mrf.mxu0
  %v1993 = vadd.f32 0.0, %v1992
  %1994 = vmatmul.f32.gmra.mxu0 %v1784
  %v1995 = vpop.f32.mrf.mxu0
  %v1996 = vadd.f32 0.0, %v1995
  %1997 = vmatmul.f32.gmra.mxu0 %v1787
  %v1998 = vpop.f32.mrf.mxu0
  %v1999 = vadd.f32 0.0, %v1998
  %2000 = vmatmul.f32.gmra.mxu0 %v1790
  %v2001 = vpop.f32.mrf.mxu0
  %v2002 = vadd.f32 0.0, %v2001
  %2003 = vmatmul.f32.gmra.mxu0 %v1793
  %v2004 = vpop.f32.mrf.mxu0
  %v2005 = vadd.f32 0.0, %v2004
  %2006 = vmatmul.f32.gmra.mxu0 %v1796
  %v2007 = vpop.f32.mrf.mxu0
  %v2008 = vadd.f32 0.0, %v2007
  %2009 = vmatmul.f32.gmra.mxu0 %v1799
  %v2010 = vpop.f32.mrf.mxu0
  %v2011 = vadd.f32 0.0, %v2010
  %2012 = vmatmul.f32.gmra.mxu0 %v1802
  %v2013 = vpop.f32.mrf.mxu0
  %v2014 = vadd.f32 0.0, %v2013
  %2015 = vmatmul.f32.gmra.mxu0 %v1805
  %v2016 = vpop.f32.mrf.mxu0
  %v2017 = vadd.f32 0.0, %v2016
  %2018 = vmatmul.f32.gmra.mxu0 %v1808
  %v2019 = vpop.f32.mrf.mxu0
  %v2020 = vadd.f32 0.0, %v2019
  %2021 = vmatmul.f32.gmra.mxu0 %v1811
  %v2022 = vpop.f32.mrf.mxu0
  %v2023 = vadd.f32 0.0, %v2022
  %2024 = vmatmul.f32.gmra.mxu0 %v1814
  %v2025 = vpop.f32.mrf.mxu0
  %v2026 = vadd.f32 0.0, %v2025
  %2027 = vmatmul.f32.gmra.mxu0 %v1817
  %v2028 = vpop.f32.mrf.mxu0
  %v2029 = vadd.f32 0.0, %v2028
  %2030 = vmatmul.f32.gmra.mxu0 %v1820
  %v2031 = vpop.f32.mrf.mxu0
  %v2032 = vadd.f32 0.0, %v2031
  %2033 = vmatmul.f32.gmra.mxu0 %v1823
  %v2034 = vpop.f32.mrf.mxu0
  %v2035 = vadd.f32 0.0, %v2034
  %2036 = vmatmul.f32.gmra.mxu0 %v1826
  %v2037 = vpop.f32.mrf.mxu0
  %v2038 = vadd.f32 0.0, %v2037
  %2039 = vmatmul.f32.gmra.mxu0 %v1829
  %v2040 = vpop.f32.mrf.mxu0
  %v2041 = vadd.f32 0.0, %v2040
  %2042 = vmatmul.f32.gmra.mxu0 %v1832
  %v2043 = vpop.f32.mrf.mxu0
  %v2044 = vadd.f32 0.0, %v2043
  %2045 = vmatmul.f32.gmra.mxu0 %v1835
  %v2046 = vpop.f32.mrf.mxu0
  %v2047 = vadd.f32 0.0, %v2046
  %2048 = vmatmul.f32.gmra.mxu0 %v1838
  %v2049 = vpop.f32.mrf.mxu0
  %v2050 = vadd.f32 0.0, %v2049
  %2051 = vmatmul.f32.gmra.mxu0 %v1841
  %v2052 = vpop.f32.mrf.mxu0
  %v2053 = vadd.f32 0.0, %v2052
  %2054 = vmatmul.f32.gmra.mxu0 %v1844
  %v2055 = vpop.f32.mrf.mxu0
  %v2056 = vadd.f32 0.0, %v2055
  %2057 = vmatmul.f32.gmra.mxu0 %v1847
  %v2058 = vpop.f32.mrf.mxu0
  %v2059 = vadd.f32 0.0, %v2058
  %2060 = vmatmul.f32.gmra.mxu0 %v1850
  %v2061 = vpop.f32.mrf.mxu0
  %v2062 = vadd.f32 0.0, %v2061
  %2063 = vmatmul.f32.gmra.mxu0 %v1853
  %v2064 = vpop.f32.mrf.mxu0
  %v2065 = vadd.f32 0.0, %v2064
  %2066 = vmatmul.f32.gmra.mxu0 %v1856
  %v2067 = vpop.f32.mrf.mxu0
  %v2068 = vadd.f32 0.0, %v2067
  %2069 = vmatmul.f32.gmra.mxu0 %v1859
  %v2070 = vpop.f32.mrf.mxu0
  %v2071 = vadd.f32 0.0, %v2070
  %2072 = vmatmul.f32.gmra.mxu0 %v1862
  %v2073 = vpop.f32.mrf.mxu0
  %v2074 = vadd.f32 0.0, %v2073
  %2075 = vmatmul.f32.gmra.mxu0 %v1865
  %v2076 = vpop.f32.mrf.mxu0
  %v2077 = vadd.f32 0.0, %v2076
  %2078 = vmatmul.f32.gmra.mxu0 %v1868
  %v2079 = vpop.f32.mrf.mxu0
  %v2080 = vadd.f32 0.0, %v2079
  %2081 = vmatmul.f32.gmra.mxu0 %v1871
  %v2082 = vpop.f32.mrf.mxu0
  %v2083 = vadd.f32 0.0, %v2082
  %2084 = vmatmul.f32.gmra.mxu0 %v1874
  %v2085 = vpop.f32.mrf.mxu0
  %v2086 = vadd.f32 0.0, %v2085
  %2087 = vmatmul.f32.gmra.mxu0 %v1877
  %v2088 = vpop.f32.mrf.mxu0
  %v2089 = vadd.f32 0.0, %v2088
  %2090 = vmatmul.f32.gmra.mxu0 %v1880
  %v2091 = vpop.f32.mrf.mxu0
  %v2092 = vadd.f32 0.0, %v2091
  %2093 = vmatmul.f32.gmra.mxu0 %v1883
  %v2094 = vpop.f32.mrf.mxu0
  %v2095 = vadd.f32 0.0, %v2094
  %2096 = vmatmul.f32.gmra.mxu0 %v1886
  %v2097 = vpop.f32.mrf.mxu0
  %v2098 = vadd.f32 0.0, %v2097
  %2099 = vmatmul.f32.gmra.mxu0 %v1889
  %v2100 = vpop.f32.mrf.mxu0
  %v2101 = vadd.f32 0.0, %v2100
  %2102 = vmatmul.f32.gmra.mxu0 %v1892
  %v2103 = vpop.f32.mrf.mxu0
  %v2104 = vadd.f32 0.0, %v2103
  %2105 = vmatmul.f32.gmra.mxu0 %v1895
  %v2106 = vpop.f32.mrf.mxu0
  %v2107 = vadd.f32 0.0, %v2106
  %2108 = vmatmul.f32.gmra.mxu0 %v1898
  %v2109 = vpop.f32.mrf.mxu0
  %v2110 = vadd.f32 0.0, %v2109
  %2111 = vmatmul.f32.gmra.mxu0 %v1901
  %v2112 = vpop.f32.mrf.mxu0
  %v2113 = vadd.f32 0.0, %v2112
  %2114 = vmatmul.f32.gmra.mxu0 %v1904
  %v2115 = vpop.f32.mrf.mxu0
  %v2116 = vadd.f32 0.0, %v2115
  %2117 = vmatmul.f32.gmra.mxu0 %v1907
  %v2118 = vpop.f32.mrf.mxu0
  %v2119 = vadd.f32 0.0, %v2118
  %2120 = vmatmul.f32.gmra.mxu0 %v1910
  %v2121 = vpop.f32.mrf.mxu0
  %v2122 = vadd.f32 0.0, %v2121
  %2123 = vmatmul.f32.gmra.mxu0 %v1913
  %v2124 = vpop.f32.mrf.mxu0
  %v2125 = vadd.f32 0.0, %v2124
  %2126 = vmatmul.f32.gmra.mxu0 %v1916
  %v2127 = vpop.f32.mrf.mxu0
  %v2128 = vadd.f32 0.0, %v2127
  %2129 = vmatmul.f32.gmra.mxu0 %v1919
  %v2130 = vpop.f32.mrf.mxu0
  %v2131 = vadd.f32 0.0, %v2130
  %2132 = vmatmul.f32.gmra.mxu0 %v1922
  %v2133 = vpop.f32.mrf.mxu0
  %v2134 = vadd.f32 0.0, %v2133
  %2135 = vmatmul.f32.gmra.mxu0 %v1925
  %v2136 = vpop.f32.mrf.mxu0
  %v2137 = vadd.f32 0.0, %v2136
  %2138 = vmatmul.f32.gmra.mxu0 %v1928
  %v2139 = vpop.f32.mrf.mxu0
  %v2140 = vadd.f32 0.0, %v2139
  %2141 = vmatmul.f32.gmra.mxu0 %v1931
  %v2142 = vpop.f32.mrf.mxu0
  %v2143 = vadd.f32 0.0, %v2142
  %2144 = vmatmul.f32.gmra.mxu0 %v1934
  %v2145 = vpop.f32.mrf.mxu0
  %v2146 = vadd.f32 0.0, %v2145
  %2147 = vmatmul.f32.gmra.mxu0 %v1937
  %v2148 = vpop.f32.mrf.mxu0
  %v2149 = vadd.f32 0.0, %v2148
  %2150 = vmatmul.f32.gmra.mxu0 %v1940
  %v2151 = vpop.f32.mrf.mxu0
  %v2152 = vadd.f32 0.0, %v2151
  %2153 = vmatmul.f32.gmra.mxu0 %v1943
  %v2154 = vpop.f32.mrf.mxu0
  %v2155 = vadd.f32 0.0, %v2154
  %2156 = vmatmul.f32.gmra.mxu0 %v1946
  %v2157 = vpop.f32.mrf.mxu0
  %v2158 = vadd.f32 0.0, %v2157
  %2159 = vdwg.mxu0
  %v2160 = vadd.f32 %v1564, %v1969
  %v2161 = vadd.f32 %v1567, %v1972
  %v2162 = vadd.f32 %v1570, %v1975
  %v2163 = vadd.f32 %v1573, %v1978
  %v2164 = vadd.f32 %v1576, %v1981
  %v2165 = vadd.f32 %v1579, %v1984
  %v2166 = vadd.f32 %v1582, %v1987
  %v2167 = vadd.f32 %v1585, %v1990
  %v2168 = vadd.f32 %v1588, %v1993
  %v2169 = vadd.f32 %v1591, %v1996
  %v2170 = vadd.f32 %v1594, %v1999
  %v2171 = vadd.f32 %v1597, %v2002
  %v2172 = vadd.f32 %v1600, %v2005
  %v2173 = vadd.f32 %v1603, %v2008
  %v2174 = vadd.f32 %v1606, %v2011
  %v2175 = vadd.f32 %v1609, %v2014
  %v2176 = vadd.f32 %v1612, %v2017
  %v2177 = vadd.f32 %v1615, %v2020
  %v2178 = vadd.f32 %v1618, %v2023
  %v2179 = vadd.f32 %v1621, %v2026
  %v2180 = vadd.f32 %v1624, %v2029
  %v2181 = vadd.f32 %v1627, %v2032
  %v2182 = vadd.f32 %v1630, %v2035
  %v2183 = vadd.f32 %v1633, %v2038
  %v2184 = vadd.f32 %v1636, %v2041
  %v2185 = vadd.f32 %v1639, %v2044
  %v2186 = vadd.f32 %v1642, %v2047
  %v2187 = vadd.f32 %v1645, %v2050
  %v2188 = vadd.f32 %v1648, %v2053
  %v2189 = vadd.f32 %v1651, %v2056
  %v2190 = vadd.f32 %v1654, %v2059
  %v2191 = vadd.f32 %v1657, %v2062
  %v2192 = vadd.f32 %v1660, %v2065
  %v2193 = vadd.f32 %v1663, %v2068
  %v2194 = vadd.f32 %v1666, %v2071
  %v2195 = vadd.f32 %v1669, %v2074
  %v2196 = vadd.f32 %v1672, %v2077
  %v2197 = vadd.f32 %v1675, %v2080
  %v2198 = vadd.f32 %v1678, %v2083
  %v2199 = vadd.f32 %v1681, %v2086
  %v2200 = vadd.f32 %v1684, %v2089
  %v2201 = vadd.f32 %v1687, %v2092
  %v2202 = vadd.f32 %v1690, %v2095
  %v2203 = vadd.f32 %v1693, %v2098
  %v2204 = vadd.f32 %v1696, %v2101
  %v2205 = vadd.f32 %v1699, %v2104
  %v2206 = vadd.f32 %v1702, %v2107
  %v2207 = vadd.f32 %v1705, %v2110
  %v2208 = vadd.f32 %v1708, %v2113
  %v2209 = vadd.f32 %v1711, %v2116
  %v2210 = vadd.f32 %v1714, %v2119
  %v2211 = vadd.f32 %v1717, %v2122
  %v2212 = vadd.f32 %v1720, %v2125
  %v2213 = vadd.f32 %v1723, %v2128
  %v2214 = vadd.f32 %v1726, %v2131
  %v2215 = vadd.f32 %v1729, %v2134
  %v2216 = vadd.f32 %v1732, %v2137
  %v2217 = vadd.f32 %v1735, %v2140
  %v2218 = vadd.f32 %v1738, %v2143
  %v2219 = vadd.f32 %v1741, %v2146
  %v2220 = vadd.f32 %v1744, %v2149
  %v2221 = vadd.f32 %v1747, %v2152
  %v2222 = vadd.f32 %v1750, %v2155
  %v2223 = vadd.f32 %v1753, %v2158
  %v2224 = vld [vmem:[%s9] sm:$0x1]
  %2226 = vset.pattern.permute.xlu0 0
  %2227 = vperm.xlu0 %2226, %v47
  %v2228 = vpop.permute.xlu0 %2227
  %2231 = vset.pattern.permute.xlu0 0
  %2232 = vperm.xlu0 %2231, %v48
  %v2233 = vpop.permute.xlu0 %2232
  %2236 = vset.pattern.permute.xlu0 0
  %2237 = vperm.xlu0 %2236, %v49
  %v2238 = vpop.permute.xlu0 %2237
  %2241 = vset.pattern.permute.xlu0 0
  %2242 = vperm.xlu0 %2241, %v50
  %v2243 = vpop.permute.xlu0 %2242
  %2246 = vset.pattern.permute.xlu0 0
  %2247 = vperm.xlu0 %2246, %v51
  %v2248 = vpop.permute.xlu0 %2247
  %2251 = vset.pattern.permute.xlu0 0
  %2252 = vperm.xlu0 %2251, %v52
  %v2253 = vpop.permute.xlu0 %2252
  %2256 = vset.pattern.permute.xlu0 0
  %2257 = vperm.xlu0 %2256, %v53
  %v2258 = vpop.permute.xlu0 %2257
  %2261 = vset.pattern.permute.xlu0 0
  %2262 = vperm.xlu0 %2261, %v54
  %v2263 = vpop.permute.xlu0 %2262
  %2266 = vset.pattern.permute.xlu0 0
  %2267 = vperm.xlu0 %2266, %v55
  %v2268 = vpop.permute.xlu0 %2267
  %2271 = vset.pattern.permute.xlu0 0
  %2272 = vperm.xlu0 %2271, %v56
  %v2273 = vpop.permute.xlu0 %2272
  %2276 = vset.pattern.permute.xlu0 0
  %2277 = vperm.xlu0 %2276, %v57
  %v2278 = vpop.permute.xlu0 %2277
  %2281 = vset.pattern.permute.xlu0 0
  %2282 = vperm.xlu0 %2281, %v58
  %v2283 = vpop.permute.xlu0 %2282
  %2286 = vset.pattern.permute.xlu0 0
  %2287 = vperm.xlu0 %2286, %v59
  %v2288 = vpop.permute.xlu0 %2287
  %2291 = vset.pattern.permute.xlu0 0
  %2292 = vperm.xlu0 %2291, %v60
  %v2293 = vpop.permute.xlu0 %2292
  %2296 = vset.pattern.permute.xlu0 0
  %2297 = vperm.xlu0 %2296, %v61
  %v2298 = vpop.permute.xlu0 %2297
  %2301 = vset.pattern.permute.xlu0 0
  %2302 = vperm.xlu0 %2301, %v62
  %v2303 = vpop.permute.xlu0 %2302
  %2306 = vset.pattern.permute.xlu0 0
  %2307 = vperm.xlu0 %2306, %v63
  %v2308 = vpop.permute.xlu0 %2307
  %2311 = vset.pattern.permute.xlu0 0
  %2312 = vperm.xlu0 %2311, %v64
  %v2313 = vpop.permute.xlu0 %2312
  %2316 = vset.pattern.permute.xlu0 0
  %2317 = vperm.xlu0 %2316, %v65
  %v2318 = vpop.permute.xlu0 %2317
  %2321 = vset.pattern.permute.xlu0 0
  %2322 = vperm.xlu0 %2321, %v66
  %v2323 = vpop.permute.xlu0 %2322
  %2326 = vset.pattern.permute.xlu0 0
  %2327 = vperm.xlu0 %2326, %v67
  %v2328 = vpop.permute.xlu0 %2327
  %2331 = vset.pattern.permute.xlu0 0
  %2332 = vperm.xlu0 %2331, %v68
  %v2333 = vpop.permute.xlu0 %2332
  %2336 = vset.pattern.permute.xlu0 0
  %2337 = vperm.xlu0 %2336, %v69
  %v2338 = vpop.permute.xlu0 %2337
  %2341 = vset.pattern.permute.xlu0 0
  %2342 = vperm.xlu0 %2341, %v70
  %v2343 = vpop.permute.xlu0 %2342
  %2346 = vset.pattern.permute.xlu0 0
  %2347 = vperm.xlu0 %2346, %v71
  %v2348 = vpop.permute.xlu0 %2347
  %2351 = vset.pattern.permute.xlu0 0
  %2352 = vperm.xlu0 %2351, %v72
  %v2353 = vpop.permute.xlu0 %2352
  %2356 = vset.pattern.permute.xlu0 0
  %2357 = vperm.xlu0 %2356, %v73
  %v2358 = vpop.permute.xlu0 %2357
  %2361 = vset.pattern.permute.xlu0 0
  %2362 = vperm.xlu0 %2361, %v74
  %v2363 = vpop.permute.xlu0 %2362
  %2366 = vset.pattern.permute.xlu0 0
  %2367 = vperm.xlu0 %2366, %v75
  %v2368 = vpop.permute.xlu0 %2367
  %2371 = vset.pattern.permute.xlu0 0
  %2372 = vperm.xlu0 %2371, %v76
  %v2373 = vpop.permute.xlu0 %2372
  %2376 = vset.pattern.permute.xlu0 0
  %2377 = vperm.xlu0 %2376, %v77
  %v2378 = vpop.permute.xlu0 %2377
  %2381 = vset.pattern.permute.xlu0 0
  %2382 = vperm.xlu0 %2381, %v78
  %v2383 = vpop.permute.xlu0 %2382
  %2386 = vset.pattern.permute.xlu0 0
  %2387 = vperm.xlu0 %2386, %v79
  %v2388 = vpop.permute.xlu0 %2387
  %2391 = vset.pattern.permute.xlu0 0
  %2392 = vperm.xlu0 %2391, %v80
  %v2393 = vpop.permute.xlu0 %2392
  %2396 = vset.pattern.permute.xlu0 0
  %2397 = vperm.xlu0 %2396, %v81
  %v2398 = vpop.permute.xlu0 %2397
  %2401 = vset.pattern.permute.xlu0 0
  %2402 = vperm.xlu0 %2401, %v82
  %v2403 = vpop.permute.xlu0 %2402
  %2406 = vset.pattern.permute.xlu0 0
  %2407 = vperm.xlu0 %2406, %v83
  %v2408 = vpop.permute.xlu0 %2407
  %2411 = vset.pattern.permute.xlu0 0
  %2412 = vperm.xlu0 %2411, %v84
  %v2413 = vpop.permute.xlu0 %2412
  %2416 = vset.pattern.permute.xlu0 0
  %2417 = vperm.xlu0 %2416, %v85
  %v2418 = vpop.permute.xlu0 %2417
  %2421 = vset.pattern.permute.xlu0 0
  %2422 = vperm.xlu0 %2421, %v86
  %v2423 = vpop.permute.xlu0 %2422
  %2426 = vset.pattern.permute.xlu0 0
  %2427 = vperm.xlu0 %2426, %v87
  %v2428 = vpop.permute.xlu0 %2427
  %2431 = vset.pattern.permute.xlu0 0
  %2432 = vperm.xlu0 %2431, %v88
  %v2433 = vpop.permute.xlu0 %2432
  %2436 = vset.pattern.permute.xlu0 0
  %2437 = vperm.xlu0 %2436, %v89
  %v2438 = vpop.permute.xlu0 %2437
  %2441 = vset.pattern.permute.xlu0 0
  %2442 = vperm.xlu0 %2441, %v90
  %v2443 = vpop.permute.xlu0 %2442
  %2446 = vset.pattern.permute.xlu0 0
  %2447 = vperm.xlu0 %2446, %v91
  %v2448 = vpop.permute.xlu0 %2447
  %2451 = vset.pattern.permute.xlu0 0
  %2452 = vperm.xlu0 %2451, %v92
  %v2453 = vpop.permute.xlu0 %2452
  %2456 = vset.pattern.permute.xlu0 0
  %2457 = vperm.xlu0 %2456, %v93
  %v2458 = vpop.permute.xlu0 %2457
  %2461 = vset.pattern.permute.xlu0 0
  %2462 = vperm.xlu0 %2461, %v94
  %v2463 = vpop.permute.xlu0 %2462
  %2466 = vset.pattern.permute.xlu0 0
  %2467 = vperm.xlu0 %2466, %v95
  %v2468 = vpop.permute.xlu0 %2467
  %2471 = vset.pattern.permute.xlu0 0
  %2472 = vperm.xlu0 %2471, %v96
  %v2473 = vpop.permute.xlu0 %2472
  %2476 = vset.pattern.permute.xlu0 0
  %2477 = vperm.xlu0 %2476, %v97
  %v2478 = vpop.permute.xlu0 %2477
  %2481 = vset.pattern.permute.xlu0 0
  %2482 = vperm.xlu0 %2481, %v98
  %v2483 = vpop.permute.xlu0 %2482
  %2486 = vset.pattern.permute.xlu0 0
  %2487 = vperm.xlu0 %2486, %v99
  %v2488 = vpop.permute.xlu0 %2487
  %2491 = vset.pattern.permute.xlu0 0
  %2492 = vperm.xlu0 %2491, %v100
  %v2493 = vpop.permute.xlu0 %2492
  %2496 = vset.pattern.permute.xlu0 0
  %2497 = vperm.xlu0 %2496, %v101
  %v2498 = vpop.permute.xlu0 %2497
  %2501 = vset.pattern.permute.xlu0 0
  %2502 = vperm.xlu0 %2501, %v102
  %v2503 = vpop.permute.xlu0 %2502
  %2506 = vset.pattern.permute.xlu0 0
  %2507 = vperm.xlu0 %2506, %v103
  %v2508 = vpop.permute.xlu0 %2507
  %2511 = vset.pattern.permute.xlu0 0
  %2512 = vperm.xlu0 %2511, %v104
  %v2513 = vpop.permute.xlu0 %2512
  %2516 = vset.pattern.permute.xlu0 0
  %2517 = vperm.xlu0 %2516, %v105
  %v2518 = vpop.permute.xlu0 %2517
  %2521 = vset.pattern.permute.xlu0 0
  %2522 = vperm.xlu0 %2521, %v106
  %v2523 = vpop.permute.xlu0 %2522
  %2526 = vset.pattern.permute.xlu0 0
  %2527 = vperm.xlu0 %2526, %v107
  %v2528 = vpop.permute.xlu0 %2527
  %2531 = vset.pattern.permute.xlu0 0
  %2532 = vperm.xlu0 %2531, %v108
  %v2533 = vpop.permute.xlu0 %2532
  %2536 = vset.pattern.permute.xlu0 0
  %2537 = vperm.xlu0 %2536, %v109
  %v2538 = vpop.permute.xlu0 %2537
  %2541 = vset.pattern.permute.xlu0 0
  %2542 = vperm.xlu0 %2541, %v110
  %v2543 = vpop.permute.xlu0 %2542
  %v2546 = vperm.slane %v2224, 0
  %v2548 = vmul.f32 %v2228, %v2546
  %v2549 = vmul.f32 %v2233, %v2546
  %v2550 = vmul.f32 %v2238, %v2546
  %v2551 = vmul.f32 %v2243, %v2546
  %v2552 = vmul.f32 %v2248, %v2546
  %v2553 = vmul.f32 %v2253, %v2546
  %v2554 = vmul.f32 %v2258, %v2546
  %v2555 = vmul.f32 %v2263, %v2546
  %v2556 = vmul.f32 %v2268, %v2546
  %v2557 = vmul.f32 %v2273, %v2546
  %v2558 = vmul.f32 %v2278, %v2546
  %v2559 = vmul.f32 %v2283, %v2546
  %v2560 = vmul.f32 %v2288, %v2546
  %v2561 = vmul.f32 %v2293, %v2546
  %v2562 = vmul.f32 %v2298, %v2546
  %v2563 = vmul.f32 %v2303, %v2546
  %v2564 = vmul.f32 %v2308, %v2546
  %v2565 = vmul.f32 %v2313, %v2546
  %v2566 = vmul.f32 %v2318, %v2546
  %v2567 = vmul.f32 %v2323, %v2546
  %v2568 = vmul.f32 %v2328, %v2546
  %v2569 = vmul.f32 %v2333, %v2546
  %v2570 = vmul.f32 %v2338, %v2546
  %v2571 = vmul.f32 %v2343, %v2546
  %v2572 = vmul.f32 %v2348, %v2546
  %v2573 = vmul.f32 %v2353, %v2546
  %v2574 = vmul.f32 %v2358, %v2546
  %v2575 = vmul.f32 %v2363, %v2546
  %v2576 = vmul.f32 %v2368, %v2546
  %v2577 = vmul.f32 %v2373, %v2546
  %v2578 = vmul.f32 %v2378, %v2546
  %v2579 = vmul.f32 %v2383, %v2546
  %v2580 = vmul.f32 %v2388, %v2546
  %v2581 = vmul.f32 %v2393, %v2546
  %v2582 = vmul.f32 %v2398, %v2546
  %v2583 = vmul.f32 %v2403, %v2546
  %v2584 = vmul.f32 %v2408, %v2546
  %v2585 = vmul.f32 %v2413, %v2546
  %v2586 = vmul.f32 %v2418, %v2546
  %v2587 = vmul.f32 %v2423, %v2546
  %v2588 = vmul.f32 %v2428, %v2546
  %v2589 = vmul.f32 %v2433, %v2546
  %v2590 = vmul.f32 %v2438, %v2546
  %v2591 = vmul.f32 %v2443, %v2546
  %v2592 = vmul.f32 %v2448, %v2546
  %v2593 = vmul.f32 %v2453, %v2546
  %v2594 = vmul.f32 %v2458, %v2546
  %v2595 = vmul.f32 %v2463, %v2546
  %v2596 = vmul.f32 %v2468, %v2546
  %v2597 = vmul.f32 %v2473, %v2546
  %v2598 = vmul.f32 %v2478, %v2546
  %v2599 = vmul.f32 %v2483, %v2546
  %v2600 = vmul.f32 %v2488, %v2546
  %v2601 = vmul.f32 %v2493, %v2546
  %v2602 = vmul.f32 %v2498, %v2546
  %v2603 = vmul.f32 %v2503, %v2546
  %v2604 = vmul.f32 %v2508, %v2546
  %v2605 = vmul.f32 %v2513, %v2546
  %v2606 = vmul.f32 %v2518, %v2546
  %v2607 = vmul.f32 %v2523, %v2546
  %v2608 = vmul.f32 %v2528, %v2546
  %v2609 = vmul.f32 %v2533, %v2546
  %v2610 = vmul.f32 %v2538, %v2546
  %v2611 = vmul.f32 %v2543, %v2546
  %v2612 = vadd.f32 %v2160, %v2548
  %v2613 = vadd.f32 %v2161, %v2549
  %v2614 = vadd.f32 %v2162, %v2550
  %v2615 = vadd.f32 %v2163, %v2551
  %v2616 = vadd.f32 %v2164, %v2552
  %v2617 = vadd.f32 %v2165, %v2553
  %v2618 = vadd.f32 %v2166, %v2554
  %v2619 = vadd.f32 %v2167, %v2555
  %v2620 = vadd.f32 %v2168, %v2556
  %v2621 = vadd.f32 %v2169, %v2557
  %v2622 = vadd.f32 %v2170, %v2558
  %v2623 = vadd.f32 %v2171, %v2559
  %v2624 = vadd.f32 %v2172, %v2560
  %v2625 = vadd.f32 %v2173, %v2561
  %v2626 = vadd.f32 %v2174, %v2562
  %v2627 = vadd.f32 %v2175, %v2563
  %v2628 = vadd.f32 %v2176, %v2564
  %v2629 = vadd.f32 %v2177, %v2565
  %v2630 = vadd.f32 %v2178, %v2566
  %v2631 = vadd.f32 %v2179, %v2567
  %v2632 = vadd.f32 %v2180, %v2568
  %v2633 = vadd.f32 %v2181, %v2569
  %v2634 = vadd.f32 %v2182, %v2570
  %v2635 = vadd.f32 %v2183, %v2571
  %v2636 = vadd.f32 %v2184, %v2572
  %v2637 = vadd.f32 %v2185, %v2573
  %v2638 = vadd.f32 %v2186, %v2574
  %v2639 = vadd.f32 %v2187, %v2575
  %v2640 = vadd.f32 %v2188, %v2576
  %v2641 = vadd.f32 %v2189, %v2577
  %v2642 = vadd.f32 %v2190, %v2578
  %v2643 = vadd.f32 %v2191, %v2579
  %v2644 = vadd.f32 %v2192, %v2580
  %v2645 = vadd.f32 %v2193, %v2581
  %v2646 = vadd.f32 %v2194, %v2582
  %v2647 = vadd.f32 %v2195, %v2583
  %v2648 = vadd.f32 %v2196, %v2584
  %v2649 = vadd.f32 %v2197, %v2585
  %v2650 = vadd.f32 %v2198, %v2586
  %v2651 = vadd.f32 %v2199, %v2587
  %v2652 = vadd.f32 %v2200, %v2588
  %v2653 = vadd.f32 %v2201, %v2589
  %v2654 = vadd.f32 %v2202, %v2590
  %v2655 = vadd.f32 %v2203, %v2591
  %v2656 = vadd.f32 %v2204, %v2592
  %v2657 = vadd.f32 %v2205, %v2593
  %v2658 = vadd.f32 %v2206, %v2594
  %v2659 = vadd.f32 %v2207, %v2595
  %v2660 = vadd.f32 %v2208, %v2596
  %v2661 = vadd.f32 %v2209, %v2597
  %v2662 = vadd.f32 %v2210, %v2598
  %v2663 = vadd.f32 %v2211, %v2599
  %v2664 = vadd.f32 %v2212, %v2600
  %v2665 = vadd.f32 %v2213, %v2601
  %v2666 = vadd.f32 %v2214, %v2602
  %v2667 = vadd.f32 %v2215, %v2603
  %v2668 = vadd.f32 %v2216, %v2604
  %v2669 = vadd.f32 %v2217, %v2605
  %v2670 = vadd.f32 %v2218, %v2606
  %v2671 = vadd.f32 %v2219, %v2607
  %v2672 = vadd.f32 %v2220, %v2608
  %v2673 = vadd.f32 %v2221, %v2609
  %v2674 = vadd.f32 %v2222, %v2610
  %v2675 = vadd.f32 %v2223, %v2611
  %v2676 = vld [vmem:[%s5] sm:$0xff]
  %v2677 = vld [vmem:[%s5 + $0x8] sm:$0xff]
  %v2678 = vld [vmem:[%s5 + $0x10] sm:$0xff]
  %v2679 = vld [vmem:[%s5 + $0x18] sm:$0xff]
  %v2680 = vld [vmem:[%s5 + $0x20] sm:$0xff]
  %v2681 = vld [vmem:[%s5 + $0x28] sm:$0xff]
  %v2682 = vld [vmem:[%s5 + $0x30] sm:$0xff]
  %v2683 = vld [vmem:[%s5 + $0x38] sm:$0xff]
  %v2684 = vld [vmem:[%s5 + $0x40] sm:$0xff]
  %v2685 = vld [vmem:[%s5 + $0x48] sm:$0xff]
  %v2686 = vld [vmem:[%s5 + $0x50] sm:$0xff]
  %v2687 = vld [vmem:[%s5 + $0x58] sm:$0xff]
  %v2688 = vld [vmem:[%s5 + $0x60] sm:$0xff]
  %v2689 = vld [vmem:[%s5 + $0x68] sm:$0xff]
  %v2690 = vld [vmem:[%s5 + $0x70] sm:$0xff]
  %v2691 = vld [vmem:[%s5 + $0x78] sm:$0xff]
  %v2692 = vld [vmem:[%s5 + $0x80] sm:$0xff]
  %v2693 = vld [vmem:[%s5 + $0x88] sm:$0xff]
  %v2694 = vld [vmem:[%s5 + $0x90] sm:$0xff]
  %v2695 = vld [vmem:[%s5 + $0x98] sm:$0xff]
  %v2696 = vld [vmem:[%s5 + $0xa0] sm:$0xff]
  %v2697 = vld [vmem:[%s5 + $0xa8] sm:$0xff]
  %v2698 = vld [vmem:[%s5 + $0xb0] sm:$0xff]
  %v2699 = vld [vmem:[%s5 + $0xb8] sm:$0xff]
  %v2700 = vld [vmem:[%s5 + $0xc0] sm:$0xff]
  %v2701 = vld [vmem:[%s5 + $0xc8] sm:$0xff]
  %v2702 = vld [vmem:[%s5 + $0xd0] sm:$0xff]
  %v2703 = vld [vmem:[%s5 + $0xd8] sm:$0xff]
  %v2704 = vld [vmem:[%s5 + $0xe0] sm:$0xff]
  %v2705 = vld [vmem:[%s5 + $0xe8] sm:$0xff]
  %v2706 = vld [vmem:[%s5 + $0xf0] sm:$0xff]
  %v2707 = vld [vmem:[%s5 + $0xf8] sm:$0xff]
  %v2708 = vld [vmem:[%s5 + $0x100] sm:$0xff]
  %v2709 = vld [vmem:[%s5 + $0x108] sm:$0xff]
  %v2710 = vld [vmem:[%s5 + $0x110] sm:$0xff]
  %v2711 = vld [vmem:[%s5 + $0x118] sm:$0xff]
  %v2712 = vld [vmem:[%s5 + $0x120] sm:$0xff]
  %v2713 = vld [vmem:[%s5 + $0x128] sm:$0xff]
  %v2714 = vld [vmem:[%s5 + $0x130] sm:$0xff]
  %v2715 = vld [vmem:[%s5 + $0x138] sm:$0xff]
  %v2716 = vld [vmem:[%s5 + $0x140] sm:$0xff]
  %v2717 = vld [vmem:[%s5 + $0x148] sm:$0xff]
  %v2718 = vld [vmem:[%s5 + $0x150] sm:$0xff]
  %v2719 = vld [vmem:[%s5 + $0x158] sm:$0xff]
  %v2720 = vld [vmem:[%s5 + $0x160] sm:$0xff]
  %v2721 = vld [vmem:[%s5 + $0x168] sm:$0xff]
  %v2722 = vld [vmem:[%s5 + $0x170] sm:$0xff]
  %v2723 = vld [vmem:[%s5 + $0x178] sm:$0xff]
  %v2724 = vld [vmem:[%s5 + $0x180] sm:$0xff]
  %v2725 = vld [vmem:[%s5 + $0x188] sm:$0xff]
  %v2726 = vld [vmem:[%s5 + $0x190] sm:$0xff]
  %v2727 = vld [vmem:[%s5 + $0x198] sm:$0xff]
  %v2728 = vld [vmem:[%s5 + $0x1a0] sm:$0xff]
  %v2729 = vld [vmem:[%s5 + $0x1a8] sm:$0xff]
  %v2730 = vld [vmem:[%s5 + $0x1b0] sm:$0xff]
  %v2731 = vld [vmem:[%s5 + $0x1b8] sm:$0xff]
  %v2732 = vld [vmem:[%s5 + $0x1c0] sm:$0xff]
  %v2733 = vld [vmem:[%s5 + $0x1c8] sm:$0xff]
  %v2734 = vld [vmem:[%s5 + $0x1d0] sm:$0xff]
  %v2735 = vld [vmem:[%s5 + $0x1d8] sm:$0xff]
  %v2736 = vld [vmem:[%s5 + $0x1e0] sm:$0xff]
  %v2737 = vld [vmem:[%s5 + $0x1e8] sm:$0xff]
  %v2738 = vld [vmem:[%s5 + $0x1f0] sm:$0xff]
  %v2739 = vld [vmem:[%s5 + $0x1f8] sm:$0xff]
  %v2740 = vld [vmem:[%s11] sm:$0x1]
  %2742 = vset.pattern.permute.xlu0 0
  %2743 = vperm.xlu0 %2742, %v2676
  %v2744 = vpop.permute.xlu0 %2743
  %2747 = vset.pattern.permute.xlu0 0
  %2748 = vperm.xlu0 %2747, %v2677
  %v2749 = vpop.permute.xlu0 %2748
  %2752 = vset.pattern.permute.xlu0 0
  %2753 = vperm.xlu0 %2752, %v2678
  %v2754 = vpop.permute.xlu0 %2753
  %2757 = vset.pattern.permute.xlu0 0
  %2758 = vperm.xlu0 %2757, %v2679
  %v2759 = vpop.permute.xlu0 %2758
  %2762 = vset.pattern.permute.xlu0 0
  %2763 = vperm.xlu0 %2762, %v2680
  %v2764 = vpop.permute.xlu0 %2763
  %2767 = vset.pattern.permute.xlu0 0
  %2768 = vperm.xlu0 %2767, %v2681
  %v2769 = vpop.permute.xlu0 %2768
  %2772 = vset.pattern.permute.xlu0 0
  %2773 = vperm.xlu0 %2772, %v2682
  %v2774 = vpop.permute.xlu0 %2773
  %2777 = vset.pattern.permute.xlu0 0
  %2778 = vperm.xlu0 %2777, %v2683
  %v2779 = vpop.permute.xlu0 %2778
  %2782 = vset.pattern.permute.xlu0 0
  %2783 = vperm.xlu0 %2782, %v2684
  %v2784 = vpop.permute.xlu0 %2783
  %2787 = vset.pattern.permute.xlu0 0
  %2788 = vperm.xlu0 %2787, %v2685
  %v2789 = vpop.permute.xlu0 %2788
  %2792 = vset.pattern.permute.xlu0 0
  %2793 = vperm.xlu0 %2792, %v2686
  %v2794 = vpop.permute.xlu0 %2793
  %2797 = vset.pattern.permute.xlu0 0
  %2798 = vperm.xlu0 %2797, %v2687
  %v2799 = vpop.permute.xlu0 %2798
  %2802 = vset.pattern.permute.xlu0 0
  %2803 = vperm.xlu0 %2802, %v2688
  %v2804 = vpop.permute.xlu0 %2803
  %2807 = vset.pattern.permute.xlu0 0
  %2808 = vperm.xlu0 %2807, %v2689
  %v2809 = vpop.permute.xlu0 %2808
  %2812 = vset.pattern.permute.xlu0 0
  %2813 = vperm.xlu0 %2812, %v2690
  %v2814 = vpop.permute.xlu0 %2813
  %2817 = vset.pattern.permute.xlu0 0
  %2818 = vperm.xlu0 %2817, %v2691
  %v2819 = vpop.permute.xlu0 %2818
  %2822 = vset.pattern.permute.xlu0 0
  %2823 = vperm.xlu0 %2822, %v2692
  %v2824 = vpop.permute.xlu0 %2823
  %2827 = vset.pattern.permute.xlu0 0
  %2828 = vperm.xlu0 %2827, %v2693
  %v2829 = vpop.permute.xlu0 %2828
  %2832 = vset.pattern.permute.xlu0 0
  %2833 = vperm.xlu0 %2832, %v2694
  %v2834 = vpop.permute.xlu0 %2833
  %2837 = vset.pattern.permute.xlu0 0
  %2838 = vperm.xlu0 %2837, %v2695
  %v2839 = vpop.permute.xlu0 %2838
  %2842 = vset.pattern.permute.xlu0 0
  %2843 = vperm.xlu0 %2842, %v2696
  %v2844 = vpop.permute.xlu0 %2843
  %2847 = vset.pattern.permute.xlu0 0
  %2848 = vperm.xlu0 %2847, %v2697
  %v2849 = vpop.permute.xlu0 %2848
  %2852 = vset.pattern.permute.xlu0 0
  %2853 = vperm.xlu0 %2852, %v2698
  %v2854 = vpop.permute.xlu0 %2853
  %2857 = vset.pattern.permute.xlu0 0
  %2858 = vperm.xlu0 %2857, %v2699
  %v2859 = vpop.permute.xlu0 %2858
  %2862 = vset.pattern.permute.xlu0 0
  %2863 = vperm.xlu0 %2862, %v2700
  %v2864 = vpop.permute.xlu0 %2863
  %2867 = vset.pattern.permute.xlu0 0
  %2868 = vperm.xlu0 %2867, %v2701
  %v2869 = vpop.permute.xlu0 %2868
  %2872 = vset.pattern.permute.xlu0 0
  %2873 = vperm.xlu0 %2872, %v2702
  %v2874 = vpop.permute.xlu0 %2873
  %2877 = vset.pattern.permute.xlu0 0
  %2878 = vperm.xlu0 %2877, %v2703
  %v2879 = vpop.permute.xlu0 %2878
  %2882 = vset.pattern.permute.xlu0 0
  %2883 = vperm.xlu0 %2882, %v2704
  %v2884 = vpop.permute.xlu0 %2883
  %2887 = vset.pattern.permute.xlu0 0
  %2888 = vperm.xlu0 %2887, %v2705
  %v2889 = vpop.permute.xlu0 %2888
  %2892 = vset.pattern.permute.xlu0 0
  %2893 = vperm.xlu0 %2892, %v2706
  %v2894 = vpop.permute.xlu0 %2893
  %2897 = vset.pattern.permute.xlu0 0
  %2898 = vperm.xlu0 %2897, %v2707
  %v2899 = vpop.permute.xlu0 %2898
  %2902 = vset.pattern.permute.xlu0 0
  %2903 = vperm.xlu0 %2902, %v2708
  %v2904 = vpop.permute.xlu0 %2903
  %2907 = vset.pattern.permute.xlu0 0
  %2908 = vperm.xlu0 %2907, %v2709
  %v2909 = vpop.permute.xlu0 %2908
  %2912 = vset.pattern.permute.xlu0 0
  %2913 = vperm.xlu0 %2912, %v2710
  %v2914 = vpop.permute.xlu0 %2913
  %2917 = vset.pattern.permute.xlu0 0
  %2918 = vperm.xlu0 %2917, %v2711
  %v2919 = vpop.permute.xlu0 %2918
  %2922 = vset.pattern.permute.xlu0 0
  %2923 = vperm.xlu0 %2922, %v2712
  %v2924 = vpop.permute.xlu0 %2923
  %2927 = vset.pattern.permute.xlu0 0
  %2928 = vperm.xlu0 %2927, %v2713
  %v2929 = vpop.permute.xlu0 %2928
  %2932 = vset.pattern.permute.xlu0 0
  %2933 = vperm.xlu0 %2932, %v2714
  %v2934 = vpop.permute.xlu0 %2933
  %2937 = vset.pattern.permute.xlu0 0
  %2938 = vperm.xlu0 %2937, %v2715
  %v2939 = vpop.permute.xlu0 %2938
  %2942 = vset.pattern.permute.xlu0 0
  %2943 = vperm.xlu0 %2942, %v2716
  %v2944 = vpop.permute.xlu0 %2943
  %2947 = vset.pattern.permute.xlu0 0
  %2948 = vperm.xlu0 %2947, %v2717
  %v2949 = vpop.permute.xlu0 %2948
  %2952 = vset.pattern.permute.xlu0 0
  %2953 = vperm.xlu0 %2952, %v2718
  %v2954 = vpop.permute.xlu0 %2953
  %2957 = vset.pattern.permute.xlu0 0
  %2958 = vperm.xlu0 %2957, %v2719
  %v2959 = vpop.permute.xlu0 %2958
  %2962 = vset.pattern.permute.xlu0 0
  %2963 = vperm.xlu0 %2962, %v2720
  %v2964 = vpop.permute.xlu0 %2963
  %2967 = vset.pattern.permute.xlu0 0
  %2968 = vperm.xlu0 %2967, %v2721
  %v2969 = vpop.permute.xlu0 %2968
  %2972 = vset.pattern.permute.xlu0 0
  %2973 = vperm.xlu0 %2972, %v2722
  %v2974 = vpop.permute.xlu0 %2973
  %2977 = vset.pattern.permute.xlu0 0
  %2978 = vperm.xlu0 %2977, %v2723
  %v2979 = vpop.permute.xlu0 %2978
  %2982 = vset.pattern.permute.xlu0 0
  %2983 = vperm.xlu0 %2982, %v2724
  %v2984 = vpop.permute.xlu0 %2983
  %2987 = vset.pattern.permute.xlu0 0
  %2988 = vperm.xlu0 %2987, %v2725
  %v2989 = vpop.permute.xlu0 %2988
  %2992 = vset.pattern.permute.xlu0 0
  %2993 = vperm.xlu0 %2992, %v2726
  %v2994 = vpop.permute.xlu0 %2993
  %2997 = vset.pattern.permute.xlu0 0
  %2998 = vperm.xlu0 %2997, %v2727
  %v2999 = vpop.permute.xlu0 %2998
  %3002 = vset.pattern.permute.xlu0 0
  %3003 = vperm.xlu0 %3002, %v2728
  %v3004 = vpop.permute.xlu0 %3003
  %3007 = vset.pattern.permute.xlu0 0
  %3008 = vperm.xlu0 %3007, %v2729
  %v3009 = vpop.permute.xlu0 %3008
  %3012 = vset.pattern.permute.xlu0 0
  %3013 = vperm.xlu0 %3012, %v2730
  %v3014 = vpop.permute.xlu0 %3013
  %3017 = vset.pattern.permute.xlu0 0
  %3018 = vperm.xlu0 %3017, %v2731
  %v3019 = vpop.permute.xlu0 %3018
  %3022 = vset.pattern.permute.xlu0 0
  %3023 = vperm.xlu0 %3022, %v2732
  %v3024 = vpop.permute.xlu0 %3023
  %3027 = vset.pattern.permute.xlu0 0
  %3028 = vperm.xlu0 %3027, %v2733
  %v3029 = vpop.permute.xlu0 %3028
  %3032 = vset.pattern.permute.xlu0 0
  %3033 = vperm.xlu0 %3032, %v2734
  %v3034 = vpop.permute.xlu0 %3033
  %3037 = vset.pattern.permute.xlu0 0
  %3038 = vperm.xlu0 %3037, %v2735
  %v3039 = vpop.permute.xlu0 %3038
  %3042 = vset.pattern.permute.xlu0 0
  %3043 = vperm.xlu0 %3042, %v2736
  %v3044 = vpop.permute.xlu0 %3043
  %3047 = vset.pattern.permute.xlu0 0
  %3048 = vperm.xlu0 %3047, %v2737
  %v3049 = vpop.permute.xlu0 %3048
  %3052 = vset.pattern.permute.xlu0 0
  %3053 = vperm.xlu0 %3052, %v2738
  %v3054 = vpop.permute.xlu0 %3053
  %3057 = vset.pattern.permute.xlu0 0
  %3058 = vperm.xlu0 %3057, %v2739
  %v3059 = vpop.permute.xlu0 %3058
  %v3062 = vperm.slane %v2740, 0
  %v3064 = vmul.f32 %v2744, %v3062
  %v3065 = vmul.f32 %v2749, %v3062
  %v3066 = vmul.f32 %v2754, %v3062
  %v3067 = vmul.f32 %v2759, %v3062
  %v3068 = vmul.f32 %v2764, %v3062
  %v3069 = vmul.f32 %v2769, %v3062
  %v3070 = vmul.f32 %v2774, %v3062
  %v3071 = vmul.f32 %v2779, %v3062
  %v3072 = vmul.f32 %v2784, %v3062
  %v3073 = vmul.f32 %v2789, %v3062
  %v3074 = vmul.f32 %v2794, %v3062
  %v3075 = vmul.f32 %v2799, %v3062
  %v3076 = vmul.f32 %v2804, %v3062
  %v3077 = vmul.f32 %v2809, %v3062
  %v3078 = vmul.f32 %v2814, %v3062
  %v3079 = vmul.f32 %v2819, %v3062
  %v3080 = vmul.f32 %v2824, %v3062
  %v3081 = vmul.f32 %v2829, %v3062
  %v3082 = vmul.f32 %v2834, %v3062
  %v3083 = vmul.f32 %v2839, %v3062
  %v3084 = vmul.f32 %v2844, %v3062
  %v3085 = vmul.f32 %v2849, %v3062
  %v3086 = vmul.f32 %v2854, %v3062
  %v3087 = vmul.f32 %v2859, %v3062
  %v3088 = vmul.f32 %v2864, %v3062
  %v3089 = vmul.f32 %v2869, %v3062
  %v3090 = vmul.f32 %v2874, %v3062
  %v3091 = vmul.f32 %v2879, %v3062
  %v3092 = vmul.f32 %v2884, %v3062
  %v3093 = vmul.f32 %v2889, %v3062
  %v3094 = vmul.f32 %v2894, %v3062
  %v3095 = vmul.f32 %v2899, %v3062
  %v3096 = vmul.f32 %v2904, %v3062
  %v3097 = vmul.f32 %v2909, %v3062
  %v3098 = vmul.f32 %v2914, %v3062
  %v3099 = vmul.f32 %v2919, %v3062
  %v3100 = vmul.f32 %v2924, %v3062
  %v3101 = vmul.f32 %v2929, %v3062
  %v3102 = vmul.f32 %v2934, %v3062
  %v3103 = vmul.f32 %v2939, %v3062
  %v3104 = vmul.f32 %v2944, %v3062
  %v3105 = vmul.f32 %v2949, %v3062
  %v3106 = vmul.f32 %v2954, %v3062
  %v3107 = vmul.f32 %v2959, %v3062
  %v3108 = vmul.f32 %v2964, %v3062
  %v3109 = vmul.f32 %v2969, %v3062
  %v3110 = vmul.f32 %v2974, %v3062
  %v3111 = vmul.f32 %v2979, %v3062
  %v3112 = vmul.f32 %v2984, %v3062
  %v3113 = vmul.f32 %v2989, %v3062
  %v3114 = vmul.f32 %v2994, %v3062
  %v3115 = vmul.f32 %v2999, %v3062
  %v3116 = vmul.f32 %v3004, %v3062
  %v3117 = vmul.f32 %v3009, %v3062
  %v3118 = vmul.f32 %v3014, %v3062
  %v3119 = vmul.f32 %v3019, %v3062
  %v3120 = vmul.f32 %v3024, %v3062
  %v3121 = vmul.f32 %v3029, %v3062
  %v3122 = vmul.f32 %v3034, %v3062
  %v3123 = vmul.f32 %v3039, %v3062
  %v3124 = vmul.f32 %v3044, %v3062
  %v3125 = vmul.f32 %v3049, %v3062
  %v3126 = vmul.f32 %v3054, %v3062
  %v3127 = vmul.f32 %v3059, %v3062
  %v3128 = vadd.f32 %v2612, %v3064
  %v3129 = vadd.f32 %v2613, %v3065
  %v3130 = vadd.f32 %v2614, %v3066
  %v3131 = vadd.f32 %v2615, %v3067
  %v3132 = vadd.f32 %v2616, %v3068
  %v3133 = vadd.f32 %v2617, %v3069
  %v3134 = vadd.f32 %v2618, %v3070
  %v3135 = vadd.f32 %v2619, %v3071
  %v3136 = vadd.f32 %v2620, %v3072
  %v3137 = vadd.f32 %v2621, %v3073
  %v3138 = vadd.f32 %v2622, %v3074
  %v3139 = vadd.f32 %v2623, %v3075
  %v3140 = vadd.f32 %v2624, %v3076
  %v3141 = vadd.f32 %v2625, %v3077
  %v3142 = vadd.f32 %v2626, %v3078
  %v3143 = vadd.f32 %v2627, %v3079
  %v3144 = vadd.f32 %v2628, %v3080
  %v3145 = vadd.f32 %v2629, %v3081
  %v3146 = vadd.f32 %v2630, %v3082
  %v3147 = vadd.f32 %v2631, %v3083
  %v3148 = vadd.f32 %v2632, %v3084
  %v3149 = vadd.f32 %v2633, %v3085
  %v3150 = vadd.f32 %v2634, %v3086
  %v3151 = vadd.f32 %v2635, %v3087
  %v3152 = vadd.f32 %v2636, %v3088
  %v3153 = vadd.f32 %v2637, %v3089
  %v3154 = vadd.f32 %v2638, %v3090
  %v3155 = vadd.f32 %v2639, %v3091
  %v3156 = vadd.f32 %v2640, %v3092
  %v3157 = vadd.f32 %v2641, %v3093
  %v3158 = vadd.f32 %v2642, %v3094
  %v3159 = vadd.f32 %v2643, %v3095
  %v3160 = vadd.f32 %v2644, %v3096
  %v3161 = vadd.f32 %v2645, %v3097
  %v3162 = vadd.f32 %v2646, %v3098
  %v3163 = vadd.f32 %v2647, %v3099
  %v3164 = vadd.f32 %v2648, %v3100
  %v3165 = vadd.f32 %v2649, %v3101
  %v3166 = vadd.f32 %v2650, %v3102
  %v3167 = vadd.f32 %v2651, %v3103
  %v3168 = vadd.f32 %v2652, %v3104
  %v3169 = vadd.f32 %v2653, %v3105
  %v3170 = vadd.f32 %v2654, %v3106
  %v3171 = vadd.f32 %v2655, %v3107
  %v3172 = vadd.f32 %v2656, %v3108
  %v3173 = vadd.f32 %v2657, %v3109
  %v3174 = vadd.f32 %v2658, %v3110
  %v3175 = vadd.f32 %v2659, %v3111
  %v3176 = vadd.f32 %v2660, %v3112
  %v3177 = vadd.f32 %v2661, %v3113
  %v3178 = vadd.f32 %v2662, %v3114
  %v3179 = vadd.f32 %v2663, %v3115
  %v3180 = vadd.f32 %v2664, %v3116
  %v3181 = vadd.f32 %v2665, %v3117
  %v3182 = vadd.f32 %v2666, %v3118
  %v3183 = vadd.f32 %v2667, %v3119
  %v3184 = vadd.f32 %v2668, %v3120
  %v3185 = vadd.f32 %v2669, %v3121
  %v3186 = vadd.f32 %v2670, %v3122
  %v3187 = vadd.f32 %v2671, %v3123
  %v3188 = vadd.f32 %v2672, %v3124
  %v3189 = vadd.f32 %v2673, %v3125
  %v3190 = vadd.f32 %v2674, %v3126
  %v3191 = vadd.f32 %v2675, %v3127
  %v3192 = vld [vmem:[%s12] sm:$0x1]
  %3194 = vset.pattern.permute.xlu0 0
  %3195 = vperm.xlu0 %3194, %v751
  %v3196 = vpop.permute.xlu0 %3195
  %3199 = vset.pattern.permute.xlu0 0
  %3200 = vperm.xlu0 %3199, %v752
  %v3201 = vpop.permute.xlu0 %3200
  %3204 = vset.pattern.permute.xlu0 0
  %3205 = vperm.xlu0 %3204, %v753
  %v3206 = vpop.permute.xlu0 %3205
  %3209 = vset.pattern.permute.xlu0 0
  %3210 = vperm.xlu0 %3209, %v754
  %v3211 = vpop.permute.xlu0 %3210
  %3214 = vset.pattern.permute.xlu0 0
  %3215 = vperm.xlu0 %3214, %v755
  %v3216 = vpop.permute.xlu0 %3215
  %3219 = vset.pattern.permute.xlu0 0
  %3220 = vperm.xlu0 %3219, %v756
  %v3221 = vpop.permute.xlu0 %3220
  %3224 = vset.pattern.permute.xlu0 0
  %3225 = vperm.xlu0 %3224, %v757
  %v3226 = vpop.permute.xlu0 %3225
  %3229 = vset.pattern.permute.xlu0 0
  %3230 = vperm.xlu0 %3229, %v758
  %v3231 = vpop.permute.xlu0 %3230
  %3234 = vset.pattern.permute.xlu0 0
  %3235 = vperm.xlu0 %3234, %v759
  %v3236 = vpop.permute.xlu0 %3235
  %3239 = vset.pattern.permute.xlu0 0
  %3240 = vperm.xlu0 %3239, %v760
  %v3241 = vpop.permute.xlu0 %3240
  %3244 = vset.pattern.permute.xlu0 0
  %3245 = vperm.xlu0 %3244, %v761
  %v3246 = vpop.permute.xlu0 %3245
  %3249 = vset.pattern.permute.xlu0 0
  %3250 = vperm.xlu0 %3249, %v762
  %v3251 = vpop.permute.xlu0 %3250
  %3254 = vset.pattern.permute.xlu0 0
  %3255 = vperm.xlu0 %3254, %v763
  %v3256 = vpop.permute.xlu0 %3255
  %3259 = vset.pattern.permute.xlu0 0
  %3260 = vperm.xlu0 %3259, %v764
  %v3261 = vpop.permute.xlu0 %3260
  %3264 = vset.pattern.permute.xlu0 0
  %3265 = vperm.xlu0 %3264, %v765
  %v3266 = vpop.permute.xlu0 %3265
  %3269 = vset.pattern.permute.xlu0 0
  %3270 = vperm.xlu0 %3269, %v766
  %v3271 = vpop.permute.xlu0 %3270
  %3274 = vset.pattern.permute.xlu0 0
  %3275 = vperm.xlu0 %3274, %v767
  %v3276 = vpop.permute.xlu0 %3275
  %3279 = vset.pattern.permute.xlu0 0
  %3280 = vperm.xlu0 %3279, %v768
  %v3281 = vpop.permute.xlu0 %3280
  %3284 = vset.pattern.permute.xlu0 0
  %3285 = vperm.xlu0 %3284, %v769
  %v3286 = vpop.permute.xlu0 %3285
  %3289 = vset.pattern.permute.xlu0 0
  %3290 = vperm.xlu0 %3289, %v770
  %v3291 = vpop.permute.xlu0 %3290
  %3294 = vset.pattern.permute.xlu0 0
  %3295 = vperm.xlu0 %3294, %v771
  %v3296 = vpop.permute.xlu0 %3295
  %3299 = vset.pattern.permute.xlu0 0
  %3300 = vperm.xlu0 %3299, %v772
  %v3301 = vpop.permute.xlu0 %3300
  %3304 = vset.pattern.permute.xlu0 0
  %3305 = vperm.xlu0 %3304, %v773
  %v3306 = vpop.permute.xlu0 %3305
  %3309 = vset.pattern.permute.xlu0 0
  %3310 = vperm.xlu0 %3309, %v774
  %v3311 = vpop.permute.xlu0 %3310
  %3314 = vset.pattern.permute.xlu0 0
  %3315 = vperm.xlu0 %3314, %v775
  %v3316 = vpop.permute.xlu0 %3315
  %3319 = vset.pattern.permute.xlu0 0
  %3320 = vperm.xlu0 %3319, %v776
  %v3321 = vpop.permute.xlu0 %3320
  %3324 = vset.pattern.permute.xlu0 0
  %3325 = vperm.xlu0 %3324, %v777
  %v3326 = vpop.permute.xlu0 %3325
  %3329 = vset.pattern.permute.xlu0 0
  %3330 = vperm.xlu0 %3329, %v778
  %v3331 = vpop.permute.xlu0 %3330
  %3334 = vset.pattern.permute.xlu0 0
  %3335 = vperm.xlu0 %3334, %v779
  %v3336 = vpop.permute.xlu0 %3335
  %3339 = vset.pattern.permute.xlu0 0
  %3340 = vperm.xlu0 %3339, %v780
  %v3341 = vpop.permute.xlu0 %3340
  %3344 = vset.pattern.permute.xlu0 0
  %3345 = vperm.xlu0 %3344, %v781
  %v3346 = vpop.permute.xlu0 %3345
  %3349 = vset.pattern.permute.xlu0 0
  %3350 = vperm.xlu0 %3349, %v782
  %v3351 = vpop.permute.xlu0 %3350
  %3354 = vset.pattern.permute.xlu0 0
  %3355 = vperm.xlu0 %3354, %v783
  %v3356 = vpop.permute.xlu0 %3355
  %3359 = vset.pattern.permute.xlu0 0
  %3360 = vperm.xlu0 %3359, %v784
  %v3361 = vpop.permute.xlu0 %3360
  %3364 = vset.pattern.permute.xlu0 0
  %3365 = vperm.xlu0 %3364, %v785
  %v3366 = vpop.permute.xlu0 %3365
  %3369 = vset.pattern.permute.xlu0 0
  %3370 = vperm.xlu0 %3369, %v786
  %v3371 = vpop.permute.xlu0 %3370
  %3374 = vset.pattern.permute.xlu0 0
  %3375 = vperm.xlu0 %3374, %v787
  %v3376 = vpop.permute.xlu0 %3375
  %3379 = vset.pattern.permute.xlu0 0
  %3380 = vperm.xlu0 %3379, %v788
  %v3381 = vpop.permute.xlu0 %3380
  %3384 = vset.pattern.permute.xlu0 0
  %3385 = vperm.xlu0 %3384, %v789
  %v3386 = vpop.permute.xlu0 %3385
  %3389 = vset.pattern.permute.xlu0 0
  %3390 = vperm.xlu0 %3389, %v790
  %v3391 = vpop.permute.xlu0 %3390
  %3394 = vset.pattern.permute.xlu0 0
  %3395 = vperm.xlu0 %3394, %v791
  %v3396 = vpop.permute.xlu0 %3395
  %3399 = vset.pattern.permute.xlu0 0
  %3400 = vperm.xlu0 %3399, %v792
  %v3401 = vpop.permute.xlu0 %3400
  %3404 = vset.pattern.permute.xlu0 0
  %3405 = vperm.xlu0 %3404, %v793
  %v3406 = vpop.permute.xlu0 %3405
  %3409 = vset.pattern.permute.xlu0 0
  %3410 = vperm.xlu0 %3409, %v794
  %v3411 = vpop.permute.xlu0 %3410
  %3414 = vset.pattern.permute.xlu0 0
  %3415 = vperm.xlu0 %3414, %v795
  %v3416 = vpop.permute.xlu0 %3415
  %3419 = vset.pattern.permute.xlu0 0
  %3420 = vperm.xlu0 %3419, %v796
  %v3421 = vpop.permute.xlu0 %3420
  %3424 = vset.pattern.permute.xlu0 0
  %3425 = vperm.xlu0 %3424, %v797
  %v3426 = vpop.permute.xlu0 %3425
  %3429 = vset.pattern.permute.xlu0 0
  %3430 = vperm.xlu0 %3429, %v798
  %v3431 = vpop.permute.xlu0 %3430
  %3434 = vset.pattern.permute.xlu0 0
  %3435 = vperm.xlu0 %3434, %v799
  %v3436 = vpop.permute.xlu0 %3435
  %3439 = vset.pattern.permute.xlu0 0
  %3440 = vperm.xlu0 %3439, %v800
  %v3441 = vpop.permute.xlu0 %3440
  %3444 = vset.pattern.permute.xlu0 0
  %3445 = vperm.xlu0 %3444, %v801
  %v3446 = vpop.permute.xlu0 %3445
  %3449 = vset.pattern.permute.xlu0 0
  %3450 = vperm.xlu0 %3449, %v802
  %v3451 = vpop.permute.xlu0 %3450
  %3454 = vset.pattern.permute.xlu0 0
  %3455 = vperm.xlu0 %3454, %v803
  %v3456 = vpop.permute.xlu0 %3455
  %3459 = vset.pattern.permute.xlu0 0
  %3460 = vperm.xlu0 %3459, %v804
  %v3461 = vpop.permute.xlu0 %3460
  %3464 = vset.pattern.permute.xlu0 0
  %3465 = vperm.xlu0 %3464, %v805
  %v3466 = vpop.permute.xlu0 %3465
  %3469 = vset.pattern.permute.xlu0 0
  %3470 = vperm.xlu0 %3469, %v806
  %v3471 = vpop.permute.xlu0 %3470
  %3474 = vset.pattern.permute.xlu0 0
  %3475 = vperm.xlu0 %3474, %v807
  %v3476 = vpop.permute.xlu0 %3475
  %3479 = vset.pattern.permute.xlu0 0
  %3480 = vperm.xlu0 %3479, %v808
  %v3481 = vpop.permute.xlu0 %3480
  %3484 = vset.pattern.permute.xlu0 0
  %3485 = vperm.xlu0 %3484, %v809
  %v3486 = vpop.permute.xlu0 %3485
  %3489 = vset.pattern.permute.xlu0 0
  %3490 = vperm.xlu0 %3489, %v810
  %v3491 = vpop.permute.xlu0 %3490
  %3494 = vset.pattern.permute.xlu0 0
  %3495 = vperm.xlu0 %3494, %v811
  %v3496 = vpop.permute.xlu0 %3495
  %3499 = vset.pattern.permute.xlu0 0
  %3500 = vperm.xlu0 %3499, %v812
  %v3501 = vpop.permute.xlu0 %3500
  %3504 = vset.pattern.permute.xlu0 0
  %3505 = vperm.xlu0 %3504, %v813
  %v3506 = vpop.permute.xlu0 %3505
  %3509 = vset.pattern.permute.xlu0 0
  %3510 = vperm.xlu0 %3509, %v814
  %v3511 = vpop.permute.xlu0 %3510
  %v3514 = vperm.slane %v3192, 0
  %v3516 = vmul.f32 %v3196, %v3514
  %v3517 = vmul.f32 %v3201, %v3514
  %v3518 = vmul.f32 %v3206, %v3514
  %v3519 = vmul.f32 %v3211, %v3514
  %v3520 = vmul.f32 %v3216, %v3514
  %v3521 = vmul.f32 %v3221, %v3514
  %v3522 = vmul.f32 %v3226, %v3514
  %v3523 = vmul.f32 %v3231, %v3514
  %v3524 = vmul.f32 %v3236, %v3514
  %v3525 = vmul.f32 %v3241, %v3514
  %v3526 = vmul.f32 %v3246, %v3514
  %v3527 = vmul.f32 %v3251, %v3514
  %v3528 = vmul.f32 %v3256, %v3514
  %v3529 = vmul.f32 %v3261, %v3514
  %v3530 = vmul.f32 %v3266, %v3514
  %v3531 = vmul.f32 %v3271, %v3514
  %v3532 = vmul.f32 %v3276, %v3514
  %v3533 = vmul.f32 %v3281, %v3514
  %v3534 = vmul.f32 %v3286, %v3514
  %v3535 = vmul.f32 %v3291, %v3514
  %v3536 = vmul.f32 %v3296, %v3514
  %v3537 = vmul.f32 %v3301, %v3514
  %v3538 = vmul.f32 %v3306, %v3514
  %v3539 = vmul.f32 %v3311, %v3514
  %v3540 = vmul.f32 %v3316, %v3514
  %v3541 = vmul.f32 %v3321, %v3514
  %v3542 = vmul.f32 %v3326, %v3514
  %v3543 = vmul.f32 %v3331, %v3514
  %v3544 = vmul.f32 %v3336, %v3514
  %v3545 = vmul.f32 %v3341, %v3514
  %v3546 = vmul.f32 %v3346, %v3514
  %v3547 = vmul.f32 %v3351, %v3514
  %v3548 = vmul.f32 %v3356, %v3514
  %v3549 = vmul.f32 %v3361, %v3514
  %v3550 = vmul.f32 %v3366, %v3514
  %v3551 = vmul.f32 %v3371, %v3514
  %v3552 = vmul.f32 %v3376, %v3514
  %v3553 = vmul.f32 %v3381, %v3514
  %v3554 = vmul.f32 %v3386, %v3514
  %v3555 = vmul.f32 %v3391, %v3514
  %v3556 = vmul.f32 %v3396, %v3514
  %v3557 = vmul.f32 %v3401, %v3514
  %v3558 = vmul.f32 %v3406, %v3514
  %v3559 = vmul.f32 %v3411, %v3514
  %v3560 = vmul.f32 %v3416, %v3514
  %v3561 = vmul.f32 %v3421, %v3514
  %v3562 = vmul.f32 %v3426, %v3514
  %v3563 = vmul.f32 %v3431, %v3514
  %v3564 = vmul.f32 %v3436, %v3514
  %v3565 = vmul.f32 %v3441, %v3514
  %v3566 = vmul.f32 %v3446, %v3514
  %v3567 = vmul.f32 %v3451, %v3514
  %v3568 = vmul.f32 %v3456, %v3514
  %v3569 = vmul.f32 %v3461, %v3514
  %v3570 = vmul.f32 %v3466, %v3514
  %v3571 = vmul.f32 %v3471, %v3514
  %v3572 = vmul.f32 %v3476, %v3514
  %v3573 = vmul.f32 %v3481, %v3514
  %v3574 = vmul.f32 %v3486, %v3514
  %v3575 = vmul.f32 %v3491, %v3514
  %v3576 = vmul.f32 %v3496, %v3514
  %v3577 = vmul.f32 %v3501, %v3514
  %v3578 = vmul.f32 %v3506, %v3514
  %v3579 = vmul.f32 %v3511, %v3514
  %v3580 = vadd.f32 %v3128, %v3516
  %v3581 = vadd.f32 %v3129, %v3517
  %v3582 = vadd.f32 %v3130, %v3518
  %v3583 = vadd.f32 %v3131, %v3519
  %v3584 = vadd.f32 %v3132, %v3520
  %v3585 = vadd.f32 %v3133, %v3521
  %v3586 = vadd.f32 %v3134, %v3522
  %v3587 = vadd.f32 %v3135, %v3523
  %v3588 = vadd.f32 %v3136, %v3524
  %v3589 = vadd.f32 %v3137, %v3525
  %v3590 = vadd.f32 %v3138, %v3526
  %v3591 = vadd.f32 %v3139, %v3527
  %v3592 = vadd.f32 %v3140, %v3528
  %v3593 = vadd.f32 %v3141, %v3529
  %v3594 = vadd.f32 %v3142, %v3530
  %v3595 = vadd.f32 %v3143, %v3531
  %v3596 = vadd.f32 %v3144, %v3532
  %v3597 = vadd.f32 %v3145, %v3533
  %v3598 = vadd.f32 %v3146, %v3534
  %v3599 = vadd.f32 %v3147, %v3535
  %v3600 = vadd.f32 %v3148, %v3536
  %v3601 = vadd.f32 %v3149, %v3537
  %v3602 = vadd.f32 %v3150, %v3538
  %v3603 = vadd.f32 %v3151, %v3539
  %v3604 = vadd.f32 %v3152, %v3540
  %v3605 = vadd.f32 %v3153, %v3541
  %v3606 = vadd.f32 %v3154, %v3542
  %v3607 = vadd.f32 %v3155, %v3543
  %v3608 = vadd.f32 %v3156, %v3544
  %v3609 = vadd.f32 %v3157, %v3545
  %v3610 = vadd.f32 %v3158, %v3546
  %v3611 = vadd.f32 %v3159, %v3547
  %v3612 = vadd.f32 %v3160, %v3548
  %v3613 = vadd.f32 %v3161, %v3549
  %v3614 = vadd.f32 %v3162, %v3550
  %v3615 = vadd.f32 %v3163, %v3551
  %v3616 = vadd.f32 %v3164, %v3552
  %v3617 = vadd.f32 %v3165, %v3553
  %v3618 = vadd.f32 %v3166, %v3554
  %v3619 = vadd.f32 %v3167, %v3555
  %v3620 = vadd.f32 %v3168, %v3556
  %v3621 = vadd.f32 %v3169, %v3557
  %v3622 = vadd.f32 %v3170, %v3558
  %v3623 = vadd.f32 %v3171, %v3559
  %v3624 = vadd.f32 %v3172, %v3560
  %v3625 = vadd.f32 %v3173, %v3561
  %v3626 = vadd.f32 %v3174, %v3562
  %v3627 = vadd.f32 %v3175, %v3563
  %v3628 = vadd.f32 %v3176, %v3564
  %v3629 = vadd.f32 %v3177, %v3565
  %v3630 = vadd.f32 %v3178, %v3566
  %v3631 = vadd.f32 %v3179, %v3567
  %v3632 = vadd.f32 %v3180, %v3568
  %v3633 = vadd.f32 %v3181, %v3569
  %v3634 = vadd.f32 %v3182, %v3570
  %v3635 = vadd.f32 %v3183, %v3571
  %v3636 = vadd.f32 %v3184, %v3572
  %v3637 = vadd.f32 %v3185, %v3573
  %v3638 = vadd.f32 %v3186, %v3574
  %v3639 = vadd.f32 %v3187, %v3575
  %v3640 = vadd.f32 %v3188, %v3576
  %v3641 = vadd.f32 %v3189, %v3577
  %v3642 = vadd.f32 %v3190, %v3578
  %v3643 = vadd.f32 %v3191, %v3579
  %v3644 = vld [vmem:[%s13] sm:$0x1]
  %v3646 = vperm.slane %v3644, 0
  %v3648 = vadd.f32 %v3580, %v3646
  %v3649 = vadd.f32 %v3581, %v3646
  %v3650 = vadd.f32 %v3582, %v3646
  %v3651 = vadd.f32 %v3583, %v3646
  %v3652 = vadd.f32 %v3584, %v3646
  %v3653 = vadd.f32 %v3585, %v3646
  %v3654 = vadd.f32 %v3586, %v3646
  %v3655 = vadd.f32 %v3587, %v3646
  %v3656 = vadd.f32 %v3588, %v3646
  %v3657 = vadd.f32 %v3589, %v3646
  %v3658 = vadd.f32 %v3590, %v3646
  %v3659 = vadd.f32 %v3591, %v3646
  %v3660 = vadd.f32 %v3592, %v3646
  %v3661 = vadd.f32 %v3593, %v3646
  %v3662 = vadd.f32 %v3594, %v3646
  %v3663 = vadd.f32 %v3595, %v3646
  %v3664 = vadd.f32 %v3596, %v3646
  %v3665 = vadd.f32 %v3597, %v3646
  %v3666 = vadd.f32 %v3598, %v3646
  %v3667 = vadd.f32 %v3599, %v3646
  %v3668 = vadd.f32 %v3600, %v3646
  %v3669 = vadd.f32 %v3601, %v3646
  %v3670 = vadd.f32 %v3602, %v3646
  %v3671 = vadd.f32 %v3603, %v3646
  %v3672 = vadd.f32 %v3604, %v3646
  %v3673 = vadd.f32 %v3605, %v3646
  %v3674 = vadd.f32 %v3606, %v3646
  %v3675 = vadd.f32 %v3607, %v3646
  %v3676 = vadd.f32 %v3608, %v3646
  %v3677 = vadd.f32 %v3609, %v3646
  %v3678 = vadd.f32 %v3610, %v3646
  %v3679 = vadd.f32 %v3611, %v3646
  %v3680 = vadd.f32 %v3612, %v3646
  %v3681 = vadd.f32 %v3613, %v3646
  %v3682 = vadd.f32 %v3614, %v3646
  %v3683 = vadd.f32 %v3615, %v3646
  %v3684 = vadd.f32 %v3616, %v3646
  %v3685 = vadd.f32 %v3617, %v3646
  %v3686 = vadd.f32 %v3618, %v3646
  %v3687 = vadd.f32 %v3619, %v3646
  %v3688 = vadd.f32 %v3620, %v3646
  %v3689 = vadd.f32 %v3621, %v3646
  %v3690 = vadd.f32 %v3622, %v3646
  %v3691 = vadd.f32 %v3623, %v3646
  %v3692 = vadd.f32 %v3624, %v3646
  %v3693 = vadd.f32 %v3625, %v3646
  %v3694 = vadd.f32 %v3626, %v3646
  %v3695 = vadd.f32 %v3627, %v3646
  %v3696 = vadd.f32 %v3628, %v3646
  %v3697 = vadd.f32 %v3629, %v3646
  %v3698 = vadd.f32 %v3630, %v3646
  %v3699 = vadd.f32 %v3631, %v3646
  %v3700 = vadd.f32 %v3632, %v3646
  %v3701 = vadd.f32 %v3633, %v3646
  %v3702 = vadd.f32 %v3634, %v3646
  %v3703 = vadd.f32 %v3635, %v3646
  %v3704 = vadd.f32 %v3636, %v3646
  %v3705 = vadd.f32 %v3637, %v3646
  %v3706 = vadd.f32 %v3638, %v3646
  %v3707 = vadd.f32 %v3639, %v3646
  %v3708 = vadd.f32 %v3640, %v3646
  %v3709 = vadd.f32 %v3641, %v3646
  %v3710 = vadd.f32 %v3642, %v3646
  %v3711 = vadd.f32 %v3643, %v3646
  %v3712 = vtanh.pop %v3648
  %v3713 = vtanh.pop %v3649
  %v3714 = vtanh.pop %v3650
  %v3715 = vtanh.pop %v3651
  %v3716 = vtanh.pop %v3652
  %v3717 = vtanh.pop %v3653
  %v3718 = vtanh.pop %v3654
  %v3719 = vtanh.pop %v3655
  %v3720 = vtanh.pop %v3656
  %v3721 = vtanh.pop %v3657
  %v3722 = vtanh.pop %v3658
  %v3723 = vtanh.pop %v3659
  %v3724 = vtanh.pop %v3660
  %v3725 = vtanh.pop %v3661
  %v3726 = vtanh.pop %v3662
  %v3727 = vtanh.pop %v3663
  %v3728 = vtanh.pop %v3664
  %v3729 = vtanh.pop %v3665
  %v3730 = vtanh.pop %v3666
  %v3731 = vtanh.pop %v3667
  %v3732 = vtanh.pop %v3668
  %v3733 = vtanh.pop %v3669
  %v3734 = vtanh.pop %v3670
  %v3735 = vtanh.pop %v3671
  %v3736 = vtanh.pop %v3672
  %v3737 = vtanh.pop %v3673
  %v3738 = vtanh.pop %v3674
  %v3739 = vtanh.pop %v3675
  %v3740 = vtanh.pop %v3676
  %v3741 = vtanh.pop %v3677
  %v3742 = vtanh.pop %v3678
  %v3743 = vtanh.pop %v3679
  %v3744 = vtanh.pop %v3680
  %v3745 = vtanh.pop %v3681
  %v3746 = vtanh.pop %v3682
  %v3747 = vtanh.pop %v3683
  %v3748 = vtanh.pop %v3684
  %v3749 = vtanh.pop %v3685
  %v3750 = vtanh.pop %v3686
  %v3751 = vtanh.pop %v3687
  %v3752 = vtanh.pop %v3688
  %v3753 = vtanh.pop %v3689
  %v3754 = vtanh.pop %v3690
  %v3755 = vtanh.pop %v3691
  %v3756 = vtanh.pop %v3692
  %v3757 = vtanh.pop %v3693
  %v3758 = vtanh.pop %v3694
  %v3759 = vtanh.pop %v3695
  %v3760 = vtanh.pop %v3696
  %v3761 = vtanh.pop %v3697
  %v3762 = vtanh.pop %v3698
  %v3763 = vtanh.pop %v3699
  %v3764 = vtanh.pop %v3700
  %v3765 = vtanh.pop %v3701
  %v3766 = vtanh.pop %v3702
  %v3767 = vtanh.pop %v3703
  %v3768 = vtanh.pop %v3704
  %v3769 = vtanh.pop %v3705
  %v3770 = vtanh.pop %v3706
  %v3771 = vtanh.pop %v3707
  %v3772 = vtanh.pop %v3708
  %v3773 = vtanh.pop %v3709
  %v3774 = vtanh.pop %v3710
  %v3775 = vtanh.pop %v3711
  %3776 = vst.msk [vmem:[%s14] sm:$0xff] %vm945, %v3712
  %3777 = vst.msk [vmem:[%s14 + $0x8] sm:$0xff] %vm945, %v3713
  %3778 = vst.msk [vmem:[%s14 + $0x10] sm:$0xff] %vm945, %v3714
  %3779 = vst.msk [vmem:[%s14 + $0x18] sm:$0xff] %vm945, %v3715
  %3780 = vst.msk [vmem:[%s14 + $0x20] sm:$0xff] %vm945, %v3716
  %3781 = vst.msk [vmem:[%s14 + $0x28] sm:$0xff] %vm945, %v3717
  %3782 = vst.msk [vmem:[%s14 + $0x30] sm:$0xff] %vm945, %v3718
  %3783 = vst.msk [vmem:[%s14 + $0x38] sm:$0xff] %vm945, %v3719
  %3784 = vst.msk [vmem:[%s14 + $0x40] sm:$0xff] %vm945, %v3720
  %3785 = vst.msk [vmem:[%s14 + $0x48] sm:$0xff] %vm945, %v3721
  %3786 = vst.msk [vmem:[%s14 + $0x50] sm:$0xff] %vm945, %v3722
  %3787 = vst.msk [vmem:[%s14 + $0x58] sm:$0xff] %vm945, %v3723
  %3788 = vst.msk [vmem:[%s14 + $0x60] sm:$0xff] %vm945, %v3724
  %3789 = vst.msk [vmem:[%s14 + $0x68] sm:$0xff] %vm945, %v3725
  %3790 = vst.msk [vmem:[%s14 + $0x70] sm:$0xff] %vm945, %v3726
  %3791 = vst.msk [vmem:[%s14 + $0x78] sm:$0xff] %vm945, %v3727
  %3792 = vst.msk [vmem:[%s14 + $0x80] sm:$0xff] %vm945, %v3728
  %3793 = vst.msk [vmem:[%s14 + $0x88] sm:$0xff] %vm945, %v3729
  %3794 = vst.msk [vmem:[%s14 + $0x90] sm:$0xff] %vm945, %v3730
  %3795 = vst.msk [vmem:[%s14 + $0x98] sm:$0xff] %vm945, %v3731
  %3796 = vst.msk [vmem:[%s14 + $0xa0] sm:$0xff] %vm945, %v3732
  %3797 = vst.msk [vmem:[%s14 + $0xa8] sm:$0xff] %vm945, %v3733
  %3798 = vst.msk [vmem:[%s14 + $0xb0] sm:$0xff] %vm945, %v3734
  %3799 = vst.msk [vmem:[%s14 + $0xb8] sm:$0xff] %vm945, %v3735
  %3800 = vst.msk [vmem:[%s14 + $0xc0] sm:$0xff] %vm945, %v3736
  %3801 = vst.msk [vmem:[%s14 + $0xc8] sm:$0xff] %vm945, %v3737
  %3802 = vst.msk [vmem:[%s14 + $0xd0] sm:$0xff] %vm945, %v3738
  %3803 = vst.msk [vmem:[%s14 + $0xd8] sm:$0xff] %vm945, %v3739
  %3804 = vst.msk [vmem:[%s14 + $0xe0] sm:$0xff] %vm945, %v3740
  %3805 = vst.msk [vmem:[%s14 + $0xe8] sm:$0xff] %vm945, %v3741
  %3806 = vst.msk [vmem:[%s14 + $0xf0] sm:$0xff] %vm945, %v3742
  %3807 = vst.msk [vmem:[%s14 + $0xf8] sm:$0xff] %vm945, %v3743
  %3808 = vst.msk [vmem:[%s14 + $0x100] sm:$0xff] %vm945, %v3744
  %3809 = vst.msk [vmem:[%s14 + $0x108] sm:$0xff] %vm945, %v3745
  %3810 = vst.msk [vmem:[%s14 + $0x110] sm:$0xff] %vm945, %v3746
  %3811 = vst.msk [vmem:[%s14 + $0x118] sm:$0xff] %vm945, %v3747
  %3812 = vst.msk [vmem:[%s14 + $0x120] sm:$0xff] %vm945, %v3748
  %3813 = vst.msk [vmem:[%s14 + $0x128] sm:$0xff] %vm945, %v3749
  %3814 = vst.msk [vmem:[%s14 + $0x130] sm:$0xff] %vm945, %v3750
  %3815 = vst.msk [vmem:[%s14 + $0x138] sm:$0xff] %vm945, %v3751
  %3816 = vst.msk [vmem:[%s14 + $0x140] sm:$0xff] %vm945, %v3752
  %3817 = vst.msk [vmem:[%s14 + $0x148] sm:$0xff] %vm945, %v3753
  %3818 = vst.msk [vmem:[%s14 + $0x150] sm:$0xff] %vm945, %v3754
  %3819 = vst.msk [vmem:[%s14 + $0x158] sm:$0xff] %vm945, %v3755
  %3820 = vst.msk [vmem:[%s14 + $0x160] sm:$0xff] %vm945, %v3756
  %3821 = vst.msk [vmem:[%s14 + $0x168] sm:$0xff] %vm945, %v3757
  %3822 = vst.msk [vmem:[%s14 + $0x170] sm:$0xff] %vm945, %v3758
  %3823 = vst.msk [vmem:[%s14 + $0x178] sm:$0xff] %vm945, %v3759
  %3824 = vst.msk [vmem:[%s14 + $0x180] sm:$0xff] %vm945, %v3760
  %3825 = vst.msk [vmem:[%s14 + $0x188] sm:$0xff] %vm945, %v3761
  %3826 = vst.msk [vmem:[%s14 + $0x190] sm:$0xff] %vm945, %v3762
  %3827 = vst.msk [vmem:[%s14 + $0x198] sm:$0xff] %vm945, %v3763
  %3828 = vst.msk [vmem:[%s14 + $0x1a0] sm:$0xff] %vm945, %v3764
  %3829 = vst.msk [vmem:[%s14 + $0x1a8] sm:$0xff] %vm945, %v3765
  %3830 = vst.msk [vmem:[%s14 + $0x1b0] sm:$0xff] %vm945, %v3766
  %3831 = vst.msk [vmem:[%s14 + $0x1b8] sm:$0xff] %vm945, %v3767
  %3832 = vst.msk [vmem:[%s14 + $0x1c0] sm:$0xff] %vm945, %v3768
  %3833 = vst.msk [vmem:[%s14 + $0x1c8] sm:$0xff] %vm945, %v3769
  %3834 = vst.msk [vmem:[%s14 + $0x1d0] sm:$0xff] %vm945, %v3770
  %3835 = vst.msk [vmem:[%s14 + $0x1d8] sm:$0xff] %vm945, %v3771
  %3836 = vst.msk [vmem:[%s14 + $0x1e0] sm:$0xff] %vm945, %v3772
  %3837 = vst.msk [vmem:[%s14 + $0x1e8] sm:$0xff] %vm945, %v3773
  %3838 = vst.msk [vmem:[%s14 + $0x1f0] sm:$0xff] %vm945, %v3774
  %3839 = vst.msk [vmem:[%s14 + $0x1f8] sm:$0xff] %vm945, %v3775
  // Predicated region
  $region58: #{generator_forward.5} parent=0 // pred_check
    _
  $region59: #{generator_forward.5} parent=0 // pred_check_branch
    %3841 = sbr.rel (0) target = $region61
  $region60: #{generator_forward.5} parent=0 // pred_region
    _
  $region61: #{generator_forward.5} parent=0 // pred_fallthru
    _
  // Predicated region
  $region62: #{generator_forward.5} parent=0 // pred_check
    _
  $region63: #{generator_forward.5} parent=0 // pred_check_branch
    %3843 = sbr.rel (0) target = $region65
  $region64: #{generator_forward.5} parent=0 // pred_region
    _
  $region65: #{generator_forward.5} parent=0 // pred_fallthru
    _

</llo_original>
